<compile_context>
chip_gen: v7x
topology: tpu7x:2x2x1
jax: 0.10.0
libtpu: 0.0.40
codegen_flags: <defaults>
</compile_context>

<pallas_src>
import functools

import numpy as np
import jax
import jax.numpy as jnp
from jax.experimental import pallas as pl
from jax.experimental.pallas import tpu as pltpu

VMEM = pltpu.MemorySpace.VMEM
COUT_PAD = 8   # conv outputs (dense_dim=8, pred=3) padded to one f32 sublane tile


# ------------------------------ fused kernel ---------------------------------

def _fused_head_kernel(x1_ref, x2_ref, s_ref, nw_ref, nb_ref, w_ref, b_ref,
                       o_ref, slab_ref, *, c_total, feat_out, x2_c, dense_dim):
    """Whole PredictionHead forward, lane-dense (C, N*H*W) layout.

    x1_ref  : (feat_dim, P)            transposed feature input
    x2_ref  : (x2_c, P)                transposed second input
    s_ref   : (9, P, P)                0/1 pixel-shift matrices (one per tap,
                                       SAME zero-pad border mask folded in)
    nw_ref  : (feat_out, feat_dim)     neck 1x1 weight (transposed, BN folded)
    nb_ref  : (feat_out, 1)            neck bias (BN folded)
    w_ref   : (L, 9*COUT_PAD, c_total) per-layer per-tap weights, transposed,
                                       front-zero-padded on the input-channel
                                       axis to the full slab width
    b_ref   : (L, COUT_PAD, 1)         per-layer bias (BN folded)
    o_ref   : (COUT_PAD, P)            predict_coords output (rows >=3 padding)
    slab_ref: (c_total, P)             VMEM-resident growing channel slab
    """
    P = x1_ref.shape[1]

    # Zero the slab once so zero-padded weight columns never multiply
    # uninitialized VMEM (NaN safety).  One ~36 KB store.
    slab_ref[...] = jnp.zeros_like(slab_ref)

    # neck: 1x1 conv + folded BN + ReLU (lane-dense matmul, 128 lanes).
    neck = jnp.dot(nw_ref[...], x1_ref[...], preferred_element_type=jnp.float32)
    neck = jnp.maximum(neck + nb_ref[...], 0.0)

    # Back-fill the slab tail with [neck_out | x2]: every layer's input is the
    # contiguous slab tail in exactly PyTorch's torch.cat((new, old), 1) order.
    base = c_total - (feat_out + x2_c)
    slab_ref[base:base + feat_out, :] = neck
    slab_ref[base + feat_out:c_total, :] = x2_ref[...]

    n_dense = len(dense_dim)
    off = base
    for li in range(n_dense + 1):          # conv0_c..conv4_c, then predict_coords
        x_in = slab_ref[...]               # (c_total, P); unwritten channels are 0
        # All 9 taps' per-output-channel contributions in a single MXU matmul.
        contribs = jnp.dot(w_ref[li], x_in, preferred_element_type=jnp.float32)
        acc = jnp.zeros((COUT_PAD, P), jnp.float32)
        for t in range(9):
            # Spatial shift + border mask via a 0/1 matmul on the MXU
            # (no unaligned slices/relayouts, no lane rolls).
            rows = contribs[t * COUT_PAD:(t + 1) * COUT_PAD, :]
            acc = acc + jnp.dot(rows, s_ref[t], preferred_element_type=jnp.float32)
        y = acc + b_ref[li]
        if li < n_dense:                   # conv_bn -> ReLU, prepend into the slab
            y = jnp.maximum(y, 0.0)
            off -= dense_dim[li]
            slab_ref[off:off + dense_dim[li], :] = y[:dense_dim[li], :]
        else:                              # predict_coords: bias only, no ReLU
            o_ref[...] = y


# ------------------------------ wrapper ---------------------------------------

def _make_shift_mats(N, H, W):
    """S[t, src, dst] = 1 iff output pixel dst takes tap t from source pixel src
    (SAME padding: out-of-image taps simply have no entry -> zero contribution)."""
    P = N * H * W
    s = np.zeros((9, P, P), np.float32)
    for dh in range(3):
        for dw in range(3):
            t = dh * 3 + dw
            for n in range(N):
                for h in range(H):
                    for w in range(W):
                        hs, ws = h + dh - 1, w + dw - 1
                        if 0 <= hs < H and 0 <= ws < W:
                            src = (n * H + hs) * W + ws
                            dst = (n * H + h) * W + w
                            s[t, src, dst] = 1.0
    return jnp.asarray(s)


def make_pallas_forward(cfg, dim, feat_dim, N, H, W):
    dd = list(np.cumsum(cfg.dense_dim))
    od = cfg.feat_out_dim + dim
    c_total = od + dd[-1]
    P = N * H * W
    assert max(list(cfg.dense_dim) + [3]) <= COUT_PAD
    s_mats = _make_shift_mats(N, H, W)

    kernel = functools.partial(
        _fused_head_kernel, c_total=c_total, feat_out=cfg.feat_out_dim,
        x2_c=dim, dense_dim=tuple(cfg.dense_dim))

    call = pl.pallas_call(
        kernel,
        out_shape=jax.ShapeDtypeStruct((COUT_PAD, P), jnp.float32),
        in_specs=[pl.BlockSpec(memory_space=VMEM)] * 7,
        out_specs=pl.BlockSpec(memory_space=VMEM),
        scratch_shapes=[pltpu.VMEM((c_total, P), jnp.float32)],
    )

    def forward(packed, x1, x2):
        nw, nb, w_all, b_all = packed
        # layout plumbing only: NHWC -> lane-dense (C, N*H*W)
        x1t = jnp.transpose(x1, (3, 0, 1, 2)).reshape(feat_dim, P)
        x2t = jnp.transpose(x2, (3, 0, 1, 2)).reshape(dim, P)
        out = call(x1t, x2t, s_mats, nw, nb, w_all, b_all)
        return jnp.transpose(out[:3].reshape(3, N, H, W), (1, 2, 3, 0))

    return forward


# --------------------------- parameter creation -------------------------------

def _fold_bn(w, b, gamma, beta, mean, var, eps=1e-5):
    scale = gamma / jnp.sqrt(var + eps)
    return w * scale, (b - mean) * scale + beta


def _init_conv(key, k, cin, cout, *, bias=True):
    kw, kb = jax.random.split(key)
    w = jax.random.normal(kw, (k, k, cin, cout), jnp.float32) / np.sqrt(k * k * cin)
    if bias:
        b = 0.01 * jax.random.normal(kb, (cout,), jnp.float32)
    else:
        b = jnp.zeros((cout,), jnp.float32)
    return w, b


def _init_conv_bn(key, k, cin, cout):
    # conv_bn = Conv2d(bias=True) + BatchNorm2d + ReLU; BN folded at inference
    # running stats (mean=0, var=1).
    # TODO(synk): training-mode BatchNorm (batch statistics) not implemented.
    kc, kg, kb = jax.random.split(key, 3)
    w, b = _init_conv(kc, k, cin, cout, bias=True)
    gamma = 1.0 + 0.1 * jax.random.normal(kg, (cout,), jnp.float32)
    beta = 0.1 * jax.random.normal(kb, (cout,), jnp.float32)
    return _fold_bn(w, b, gamma, beta, jnp.zeros((cout,)), jnp.ones((cout,)))


class Cfg:                      # stands in for the cfg passed to PredictionHead
    feat_out_dim = 16
    feat_out_dim2 = -1          # -1 -> no neck2 (od = feat_out_dim + dim)
    dense_dim = [8, 8, 8, 8, 8]


def init_prediction_head(key, cfg, dim, feat_dim):
    """BN-folded parameters matching PredictionHead.__init__ (HWIO weights)."""
    # TODO(synk): neck2 branch (cfg.feat_out_dim2 != -1) not implemented.
    assert cfg.feat_out_dim2 == -1
    dd = list(np.cumsum(cfg.dense_dim))
    od = cfg.feat_out_dim + dim
    keys = jax.random.split(key, 7)
    raw = {"neck": _init_conv_bn(keys[0], 1, feat_dim, cfg.feat_out_dim)}
    cins = [od, od + dd[0], od + dd[1], od + dd[2], od + dd[3]]
    for i in range(5):
        raw[f"conv{i}_c"] = _init_conv_bn(keys[1 + i], 3, cins[i], cfg.dense_dim[i])
    raw["pred"] = _init_conv(keys[6], 3, od + dd[4], 3, bias=True)
    return raw


def pack_params(raw, cfg, dim, feat_dim):
    """Repack BN-folded layer params into the fused kernel's stacked layout."""
    dd = list(np.cumsum(cfg.dense_dim))
    od = cfg.feat_out_dim + dim
    c_total = od + dd[-1]
    names = [f"conv{i}_c" for i in range(5)] + ["pred"]

    nw = jnp.asarray(raw["neck"][0]).reshape(feat_dim, cfg.feat_out_dim).T
    nb = jnp.asarray(raw["neck"][1]).reshape(cfg.feat_out_dim, 1)

    w_all = np.zeros((len(names), 9 * COUT_PAD, c_total), np.float32)
    b_all = np.zeros((len(names), COUT_PAD, 1), np.float32)
    for li, name in enumerate(names):
        w, b = raw[name]
        w = np.asarray(w)
        _, _, cin, cout = w.shape
        for dh in range(3):
            for dw in range(3):
                t = dh * 3 + dw
                # per-tap transposed weight, right-aligned (front zero-padded)
                # on the input-channel axis to match the back-filled slab.
                w_all[li, t * COUT_PAD:t * COUT_PAD + cout, c_total - cin:] = w[dh, dw].T
        b_all[li, :cout, 0] = np.asarray(b)
    return nw, nb, jnp.asarray(w_all), jnp.asarray(b_all)


# ----------------------- pure-JAX reference (checking) ------------------------

def _ref_conv(x, w, b, *, relu):
    y = jax.lax.conv_general_dilated(
        x, w, window_strides=(1, 1), padding="SAME",
        dimension_numbers=("NHWC", "HWIO", "NHWC"),
        precision=jax.lax.Precision.HIGHEST) + b
    return jnp.maximum(y, 0.0) if relu else y


def ref_forward(raw, x1, x2):
    """PyTorch PredictionHead.forward semantics (NHWC, BN folded)."""
    x1 = _ref_conv(x1, *raw["neck"], relu=True)
    x = jnp.concatenate([x1, x2], axis=-1)
    for i in range(5):
        y = _ref_conv(x, *raw[f"conv{i}_c"], relu=True)
        x = jnp.concatenate([y, x], axis=-1)        # torch.cat((conv_i(x), x), 1)
    return _ref_conv(x, *raw["pred"], relu=False)


# ---------------------------------- main --------------------------------------

if __name__ == "__main__":
    cfg = Cfg()
    N, H, W = 2, 8, 8            # P = N*H*W = 128 pixels -> one full lane tile
    feat_dim = 12                # x1 (feature) channels
    dim = 16                     # x2 channels

    key = jax.random.PRNGKey(0)
    kp, k1, k2 = jax.random.split(key, 3)
    raw = init_prediction_head(kp, cfg, dim, feat_dim)
    packed = pack_params(raw, cfg, dim, feat_dim)

    x1 = jax.random.normal(k1, (N, H, W, feat_dim), jnp.float32)
    x2 = jax.random.normal(k2, (N, H, W, dim), jnp.float32)

    fwd_pallas = jax.jit(make_pallas_forward(cfg, dim, feat_dim, N, H, W))
    coords = fwd_pallas(packed, x1, x2)
    jax.block_until_ready(coords)

    coords_ref = jax.jit(ref_forward)(raw, x1, x2)
    jax.block_until_ready(coords_ref)

    assert coords.shape == (N, H, W, 3)
    err = float(jnp.max(jnp.abs(coords - coords_ref)))
    assert err < 1e-3, f"max abs err {err}"   # tightened from 5e-2 per review

    print("KERNEL_OK")
</pallas_src>

<mosaic_0001>
module attributes {stable_mosaic.version = 11 : i64} {
  func.func @_fused_head_kernel(%arg0: memref<12x128xf32, #tpu.memory_space<vmem>>, %arg1: memref<16x128xf32, #tpu.memory_space<vmem>>, %arg2: memref<9x128x128xf32, #tpu.memory_space<vmem>>, %arg3: memref<16x12xf32, #tpu.memory_space<vmem>>, %arg4: memref<16x1xf32, #tpu.memory_space<vmem>>, %arg5: memref<6x72x72xf32, #tpu.memory_space<vmem>>, %arg6: memref<6x8x1xf32, #tpu.memory_space<vmem>>, %arg7: memref<8x128xf32, #tpu.memory_space<vmem>>, %arg8: memref<72x128xf32, #tpu.memory_space<vmem>>) attributes {dimension_semantics = [], scalar_prefetch = 0 : i64, scratch_operands = 1 : i64, tpu.core_type = #tpu.core_type<tc>} {
    %cst = arith.constant 0.000000e+00 : f32
    %0 = vector.broadcast %cst : f32 to vector<72x128xf32>
    %c0 = arith.constant 0 : index
    %c0_0 = arith.constant 0 : index
    %1 = vector.load %arg8[%c0, %c0_0] : memref<72x128xf32, #tpu.memory_space<vmem>>, vector<72x128xf32>
    tpu.vector_store %arg8[%c0, %c0_0], %0 {strides = array<i32>} : memref<72x128xf32, #tpu.memory_space<vmem>>, vector<72x128xf32>,
    %c0_1 = arith.constant 0 : index
    %c0_2 = arith.constant 0 : index
    %2 = vector.load %arg3[%c0_1, %c0_2] : memref<16x12xf32, #tpu.memory_space<vmem>>, vector<16x12xf32>
    %c0_3 = arith.constant 0 : index
    %c0_4 = arith.constant 0 : index
    %3 = vector.load %arg0[%c0_3, %c0_4] : memref<12x128xf32, #tpu.memory_space<vmem>>, vector<12x128xf32>
    %cst_5 = arith.constant dense<0.000000e+00> : vector<16x128xf32>
    %4 = tpu.matmul %2, %3, %cst_5 {dimension_numbers = #tpu.dot_dimension_numbers<[1], [0], [0], [1], [0, 0, 1, 1], [], []>} : vector<16x12xf32>, vector<12x128xf32>, vector<16x128xf32> -> vector<16x128xf32>
    %c0_6 = arith.constant 0 : index
    %c0_7 = arith.constant 0 : index
    %5 = vector.load %arg4[%c0_6, %c0_7] : memref<16x1xf32, #tpu.memory_space<vmem>>, vector<16x1xf32>
    %6 = vector.broadcast %5 : vector<16x1xf32> to vector<16x128xf32>
    %7 = arith.addf %4, %6 : vector<16x128xf32>
    %cst_8 = arith.constant 0.000000e+00 : f32
    %8 = vector.broadcast %cst_8 : f32 to vector<16x128xf32>
    %9 = arith.maximumf %7, %8 : vector<16x128xf32>
    %c40 = arith.constant 40 : index
    %c0_9 = arith.constant 0 : index
    %10 = vector.load %arg8[%c40, %c0_9] : memref<72x128xf32, #tpu.memory_space<vmem>>, vector<16x128xf32>
    tpu.vector_store %arg8[%c40, %c0_9], %9 {strides = array<i32>} : memref<72x128xf32, #tpu.memory_space<vmem>>, vector<16x128xf32>,
    %c0_10 = arith.constant 0 : index
    %c0_11 = arith.constant 0 : index
    %11 = vector.load %arg1[%c0_10, %c0_11] : memref<16x128xf32, #tpu.memory_space<vmem>>, vector<16x128xf32>
    %c56 = arith.constant 56 : index
    %c0_12 = arith.constant 0 : index
    %12 = vector.load %arg8[%c56, %c0_12] : memref<72x128xf32, #tpu.memory_space<vmem>>, vector<16x128xf32>
    tpu.vector_store %arg8[%c56, %c0_12], %11 {strides = array<i32>} : memref<72x128xf32, #tpu.memory_space<vmem>>, vector<16x128xf32>,
    %c0_13 = arith.constant 0 : index
    %c0_14 = arith.constant 0 : index
    %13 = vector.load %arg8[%c0_13, %c0_14] : memref<72x128xf32, #tpu.memory_space<vmem>>, vector<72x128xf32>
    %c0_15 = arith.constant 0 : index
    %c0_16 = arith.constant 0 : index
    %c0_17 = arith.constant 0 : index
    %14 = vector.load %arg5[%c0_15, %c0_16, %c0_17] : memref<6x72x72xf32, #tpu.memory_space<vmem>>, vector<1x72x72xf32>
    %15 = vector.shape_cast %14 : vector<1x72x72xf32> to vector<72x72xf32>
    %cst_18 = arith.constant dense<0.000000e+00> : vector<72x128xf32>
    %16 = tpu.matmul %15, %13, %cst_18 {dimension_numbers = #tpu.dot_dimension_numbers<[1], [0], [0], [1], [0, 0, 1, 1], [], []>} : vector<72x72xf32>, vector<72x128xf32>, vector<72x128xf32> -> vector<72x128xf32>
    %cst_19 = arith.constant 0.000000e+00 : f32
    %17 = vector.broadcast %cst_19 : f32 to vector<8x128xf32>
    %18 = vector.extract_strided_slice %16 {offsets = [0, 0], sizes = [8, 128], strides = [1, 1]} : vector<72x128xf32> to vector<8x128xf32>
    %c0_20 = arith.constant 0 : index
    %c0_21 = arith.constant 0 : index
    %c0_22 = arith.constant 0 : index
    %19 = vector.load %arg2[%c0_20, %c0_21, %c0_22] : memref<9x128x128xf32, #tpu.memory_space<vmem>>, vector<1x128x128xf32>
    %20 = vector.shape_cast %19 : vector<1x128x128xf32> to vector<128x128xf32>
    %cst_23 = arith.constant dense<0.000000e+00> : vector<8x128xf32>
    %21 = tpu.matmul %18, %20, %cst_23 {dimension_numbers = #tpu.dot_dimension_numbers<[1], [0], [0], [1], [0, 0, 1, 1], [], []>} : vector<8x128xf32>, vector<128x128xf32>, vector<8x128xf32> -> vector<8x128xf32>
    %22 = arith.addf %17, %21 : vector<8x128xf32>
    %23 = vector.extract_strided_slice %16 {offsets = [8, 0], sizes = [8, 128], strides = [1, 1]} : vector<72x128xf32> to vector<8x128xf32>
    %c1 = arith.constant 1 : index
    %c0_24 = arith.constant 0 : index
    %c0_25 = arith.constant 0 : index
    %24 = vector.load %arg2[%c1, %c0_24, %c0_25] : memref<9x128x128xf32, #tpu.memory_space<vmem>>, vector<1x128x128xf32>
    %25 = vector.shape_cast %24 : vector<1x128x128xf32> to vector<128x128xf32>
    %cst_26 = arith.constant dense<0.000000e+00> : vector<8x128xf32>
    %26 = tpu.matmul %23, %25, %cst_26 {dimension_numbers = #tpu.dot_dimension_numbers<[1], [0], [0], [1], [0, 0, 1, 1], [], []>} : vector<8x128xf32>, vector<128x128xf32>, vector<8x128xf32> -> vector<8x128xf32>
    %27 = arith.addf %22, %26 : vector<8x128xf32>
    %28 = vector.extract_strided_slice %16 {offsets = [16, 0], sizes = [8, 128], strides = [1, 1]} : vector<72x128xf32> to vector<8x128xf32>
    %c2 = arith.constant 2 : index
    %c0_27 = arith.constant 0 : index
    %c0_28 = arith.constant 0 : index
    %29 = vector.load %arg2[%c2, %c0_27, %c0_28] : memref<9x128x128xf32, #tpu.memory_space<vmem>>, vector<1x128x128xf32>
    %30 = vector.shape_cast %29 : vector<1x128x128xf32> to vector<128x128xf32>
    %cst_29 = arith.constant dense<0.000000e+00> : vector<8x128xf32>
    %31 = tpu.matmul %28, %30, %cst_29 {dimension_numbers = #tpu.dot_dimension_numbers<[1], [0], [0], [1], [0, 0, 1, 1], [], []>} : vector<8x128xf32>, vector<128x128xf32>, vector<8x128xf32> -> vector<8x128xf32>
    %32 = arith.addf %27, %31 : vector<8x128xf32>
    %33 = vector.extract_strided_slice %16 {offsets = [24, 0], sizes = [8, 128], strides = [1, 1]} : vector<72x128xf32> to vector<8x128xf32>
    %c3 = arith.constant 3 : index
    %c0_30 = arith.constant 0 : index
    %c0_31 = arith.constant 0 : index
    %34 = vector.load %arg2[%c3, %c0_30, %c0_31] : memref<9x128x128xf32, #tpu.memory_space<vmem>>, vector<1x128x128xf32>
    %35 = vector.shape_cast %34 : vector<1x128x128xf32> to vector<128x128xf32>
    %cst_32 = arith.constant dense<0.000000e+00> : vector<8x128xf32>
    %36 = tpu.matmul %33, %35, %cst_32 {dimension_numbers = #tpu.dot_dimension_numbers<[1], [0], [0], [1], [0, 0, 1, 1], [], []>} : vector<8x128xf32>, vector<128x128xf32>, vector<8x128xf32> -> vector<8x128xf32>
    %37 = arith.addf %32, %36 : vector<8x128xf32>
    %38 = vector.extract_strided_slice %16 {offsets = [32, 0], sizes = [8, 128], strides = [1, 1]} : vector<72x128xf32> to vector<8x128xf32>
    %c4 = arith.constant 4 : index
    %c0_33 = arith.constant 0 : index
    %c0_34 = arith.constant 0 : index
    %39 = vector.load %arg2[%c4, %c0_33, %c0_34] : memref<9x128x128xf32, #tpu.memory_space<vmem>>, vector<1x128x128xf32>
    %40 = vector.shape_cast %39 : vector<1x128x128xf32> to vector<128x128xf32>
    %cst_35 = arith.constant dense<0.000000e+00> : vector<8x128xf32>
    %41 = tpu.matmul %38, %40, %cst_35 {dimension_numbers = #tpu.dot_dimension_numbers<[1], [0], [0], [1], [0, 0, 1, 1], [], []>} : vector<8x128xf32>, vector<128x128xf32>, vector<8x128xf32> -> vector<8x128xf32>
    %42 = arith.addf %37, %41 : vector<8x128xf32>
    %43 = vector.extract_strided_slice %16 {offsets = [40, 0], sizes = [8, 128], strides = [1, 1]} : vector<72x128xf32> to vector<8x128xf32>
    %c5 = arith.constant 5 : index
    %c0_36 = arith.constant 0 : index
    %c0_37 = arith.constant 0 : index
    %44 = vector.load %arg2[%c5, %c0_36, %c0_37] : memref<9x128x128xf32, #tpu.memory_space<vmem>>, vector<1x128x128xf32>
    %45 = vector.shape_cast %44 : vector<1x128x128xf32> to vector<128x128xf32>
    %cst_38 = arith.constant dense<0.000000e+00> : vector<8x128xf32>
    %46 = tpu.matmul %43, %45, %cst_38 {dimension_numbers = #tpu.dot_dimension_numbers<[1], [0], [0], [1], [0, 0, 1, 1], [], []>} : vector<8x128xf32>, vector<128x128xf32>, vector<8x128xf32> -> vector<8x128xf32>
    %47 = arith.addf %42, %46 : vector<8x128xf32>
    %48 = vector.extract_strided_slice %16 {offsets = [48, 0], sizes = [8, 128], strides = [1, 1]} : vector<72x128xf32> to vector<8x128xf32>
    %c6 = arith.constant 6 : index
    %c0_39 = arith.constant 0 : index
    %c0_40 = arith.constant 0 : index
    %49 = vector.load %arg2[%c6, %c0_39, %c0_40] : memref<9x128x128xf32, #tpu.memory_space<vmem>>, vector<1x128x128xf32>
    %50 = vector.shape_cast %49 : vector<1x128x128xf32> to vector<128x128xf32>
    %cst_41 = arith.constant dense<0.000000e+00> : vector<8x128xf32>
    %51 = tpu.matmul %48, %50, %cst_41 {dimension_numbers = #tpu.dot_dimension_numbers<[1], [0], [0], [1], [0, 0, 1, 1], [], []>} : vector<8x128xf32>, vector<128x128xf32>, vector<8x128xf32> -> vector<8x128xf32>
    %52 = arith.addf %47, %51 : vector<8x128xf32>
    %53 = vector.extract_strided_slice %16 {offsets = [56, 0], sizes = [8, 128], strides = [1, 1]} : vector<72x128xf32> to vector<8x128xf32>
    %c7 = arith.constant 7 : index
    %c0_42 = arith.constant 0 : index
    %c0_43 = arith.constant 0 : index
    %54 = vector.load %arg2[%c7, %c0_42, %c0_43] : memref<9x128x128xf32, #tpu.memory_space<vmem>>, vector<1x128x128xf32>
    %55 = vector.shape_cast %54 : vector<1x128x128xf32> to vector<128x128xf32>
    %cst_44 = arith.constant dense<0.000000e+00> : vector<8x128xf32>
    %56 = tpu.matmul %53, %55, %cst_44 {dimension_numbers = #tpu.dot_dimension_numbers<[1], [0], [0], [1], [0, 0, 1, 1], [], []>} : vector<8x128xf32>, vector<128x128xf32>, vector<8x128xf32> -> vector<8x128xf32>
    %57 = arith.addf %52, %56 : vector<8x128xf32>
    %58 = vector.extract_strided_slice %16 {offsets = [64, 0], sizes = [8, 128], strides = [1, 1]} : vector<72x128xf32> to vector<8x128xf32>
    %c8 = arith.constant 8 : index
    %c0_45 = arith.constant 0 : index
    %c0_46 = arith.constant 0 : index
    %59 = vector.load %arg2[%c8, %c0_45, %c0_46] : memref<9x128x128xf32, #tpu.memory_space<vmem>>, vector<1x128x128xf32>
    %60 = vector.shape_cast %59 : vector<1x128x128xf32> to vector<128x128xf32>
    %cst_47 = arith.constant dense<0.000000e+00> : vector<8x128xf32>
    %61 = tpu.matmul %58, %60, %cst_47 {dimension_numbers = #tpu.dot_dimension_numbers<[1], [0], [0], [1], [0, 0, 1, 1], [], []>} : vector<8x128xf32>, vector<128x128xf32>, vector<8x128xf32> -> vector<8x128xf32>
    %62 = arith.addf %57, %61 : vector<8x128xf32>
    %c0_48 = arith.constant 0 : index
    %c0_49 = arith.constant 0 : index
    %c0_50 = arith.constant 0 : index
    %63 = vector.load %arg6[%c0_48, %c0_49, %c0_50] : memref<6x8x1xf32, #tpu.memory_space<vmem>>, vector<1x8x1xf32>
    %64 = vector.shape_cast %63 : vector<1x8x1xf32> to vector<8x1xf32>
    %65 = vector.broadcast %64 : vector<8x1xf32> to vector<8x128xf32>
    %66 = arith.addf %62, %65 : vector<8x128xf32>
    %cst_51 = arith.constant 0.000000e+00 : f32
    %67 = vector.broadcast %cst_51 : f32 to vector<8x128xf32>
    %68 = arith.maximumf %66, %67 : vector<8x128xf32>
    %c32 = arith.constant 32 : index
    %c0_52 = arith.constant 0 : index
    %69 = vector.load %arg8[%c32, %c0_52] : memref<72x128xf32, #tpu.memory_space<vmem>>, vector<8x128xf32>
    tpu.vector_store %arg8[%c32, %c0_52], %68 {strides = array<i32>} : memref<72x128xf32, #tpu.memory_space<vmem>>, vector<8x128xf32>,
    %c0_53 = arith.constant 0 : index
    %c0_54 = arith.constant 0 : index
    %70 = vector.load %arg8[%c0_53, %c0_54] : memref<72x128xf32, #tpu.memory_space<vmem>>, vector<72x128xf32>
    %c1_55 = arith.constant 1 : index
    %c0_56 = arith.constant 0 : index
    %c0_57 = arith.constant 0 : index
    %71 = vector.load %arg5[%c1_55, %c0_56, %c0_57] : memref<6x72x72xf32, #tpu.memory_space<vmem>>, vector<1x72x72xf32>
    %72 = vector.shape_cast %71 : vector<1x72x72xf32> to vector<72x72xf32>
    %cst_58 = arith.constant dense<0.000000e+00> : vector<72x128xf32>
    %73 = tpu.matmul %72, %70, %cst_58 {dimension_numbers = #tpu.dot_dimension_numbers<[1], [0], [0], [1], [0, 0, 1, 1], [], []>} : vector<72x72xf32>, vector<72x128xf32>, vector<72x128xf32> -> vector<72x128xf32>
    %cst_59 = arith.constant 0.000000e+00 : f32
    %74 = vector.broadcast %cst_59 : f32 to vector<8x128xf32>
    %75 = vector.extract_strided_slice %73 {offsets = [0, 0], sizes = [8, 128], strides = [1, 1]} : vector<72x128xf32> to vector<8x128xf32>
    %c0_60 = arith.constant 0 : index
    %c0_61 = arith.constant 0 : index
    %c0_62 = arith.constant 0 : index
    %76 = vector.load %arg2[%c0_60, %c0_61, %c0_62] : memref<9x128x128xf32, #tpu.memory_space<vmem>>, vector<1x128x128xf32>
    %77 = vector.shape_cast %76 : vector<1x128x128xf32> to vector<128x128xf32>
    %cst_63 = arith.constant dense<0.000000e+00> : vector<8x128xf32>
    %78 = tpu.matmul %75, %77, %cst_63 {dimension_numbers = #tpu.dot_dimension_numbers<[1], [0], [0], [1], [0, 0, 1, 1], [], []>} : vector<8x128xf32>, vector<128x128xf32>, vector<8x128xf32> -> vector<8x128xf32>
    %79 = arith.addf %74, %78 : vector<8x128xf32>
    %80 = vector.extract_strided_slice %73 {offsets = [8, 0], sizes = [8, 128], strides = [1, 1]} : vector<72x128xf32> to vector<8x128xf32>
    %c1_64 = arith.constant 1 : index
    %c0_65 = arith.constant 0 : index
    %c0_66 = arith.constant 0 : index
    %81 = vector.load %arg2[%c1_64, %c0_65, %c0_66] : memref<9x128x128xf32, #tpu.memory_space<vmem>>, vector<1x128x128xf32>
    %82 = vector.shape_cast %81 : vector<1x128x128xf32> to vector<128x128xf32>
    %cst_67 = arith.constant dense<0.000000e+00> : vector<8x128xf32>
    %83 = tpu.matmul %80, %82, %cst_67 {dimension_numbers = #tpu.dot_dimension_numbers<[1], [0], [0], [1], [0, 0, 1, 1], [], []>} : vector<8x128xf32>, vector<128x128xf32>, vector<8x128xf32> -> vector<8x128xf32>
    %84 = arith.addf %79, %83 : vector<8x128xf32>
    %85 = vector.extract_strided_slice %73 {offsets = [16, 0], sizes = [8, 128], strides = [1, 1]} : vector<72x128xf32> to vector<8x128xf32>
    %c2_68 = arith.constant 2 : index
    %c0_69 = arith.constant 0 : index
    %c0_70 = arith.constant 0 : index
    %86 = vector.load %arg2[%c2_68, %c0_69, %c0_70] : memref<9x128x128xf32, #tpu.memory_space<vmem>>, vector<1x128x128xf32>
    %87 = vector.shape_cast %86 : vector<1x128x128xf32> to vector<128x128xf32>
    %cst_71 = arith.constant dense<0.000000e+00> : vector<8x128xf32>
    %88 = tpu.matmul %85, %87, %cst_71 {dimension_numbers = #tpu.dot_dimension_numbers<[1], [0], [0], [1], [0, 0, 1, 1], [], []>} : vector<8x128xf32>, vector<128x128xf32>, vector<8x128xf32> -> vector<8x128xf32>
    %89 = arith.addf %84, %88 : vector<8x128xf32>
    %90 = vector.extract_strided_slice %73 {offsets = [24, 0], sizes = [8, 128], strides = [1, 1]} : vector<72x128xf32> to vector<8x128xf32>
    %c3_72 = arith.constant 3 : index
    %c0_73 = arith.constant 0 : index
    %c0_74 = arith.constant 0 : index
    %91 = vector.load %arg2[%c3_72, %c0_73, %c0_74] : memref<9x128x128xf32, #tpu.memory_space<vmem>>, vector<1x128x128xf32>
    %92 = vector.shape_cast %91 : vector<1x128x128xf32> to vector<128x128xf32>
    %cst_75 = arith.constant dense<0.000000e+00> : vector<8x128xf32>
    %93 = tpu.matmul %90, %92, %cst_75 {dimension_numbers = #tpu.dot_dimension_numbers<[1], [0], [0], [1], [0, 0, 1, 1], [], []>} : vector<8x128xf32>, vector<128x128xf32>, vector<8x128xf32> -> vector<8x128xf32>
    %94 = arith.addf %89, %93 : vector<8x128xf32>
    %95 = vector.extract_strided_slice %73 {offsets = [32, 0], sizes = [8, 128], strides = [1, 1]} : vector<72x128xf32> to vector<8x128xf32>
    %c4_76 = arith.constant 4 : index
    %c0_77 = arith.constant 0 : index
    %c0_78 = arith.constant 0 : index
    %96 = vector.load %arg2[%c4_76, %c0_77, %c0_78] : memref<9x128x128xf32, #tpu.memory_space<vmem>>, vector<1x128x128xf32>
    %97 = vector.shape_cast %96 : vector<1x128x128xf32> to vector<128x128xf32>
    %cst_79 = arith.constant dense<0.000000e+00> : vector<8x128xf32>
    %98 = tpu.matmul %95, %97, %cst_79 {dimension_numbers = #tpu.dot_dimension_numbers<[1], [0], [0], [1], [0, 0, 1, 1], [], []>} : vector<8x128xf32>, vector<128x128xf32>, vector<8x128xf32> -> vector<8x128xf32>
    %99 = arith.addf %94, %98 : vector<8x128xf32>
    %100 = vector.extract_strided_slice %73 {offsets = [40, 0], sizes = [8, 128], strides = [1, 1]} : vector<72x128xf32> to vector<8x128xf32>
    %c5_80 = arith.constant 5 : index
    %c0_81 = arith.constant 0 : index
    %c0_82 = arith.constant 0 : index
    %101 = vector.load %arg2[%c5_80, %c0_81, %c0_82] : memref<9x128x128xf32, #tpu.memory_space<vmem>>, vector<1x128x128xf32>
    %102 = vector.shape_cast %101 : vector<1x128x128xf32> to vector<128x128xf32>
    %cst_83 = arith.constant dense<0.000000e+00> : vector<8x128xf32>
    %103 = tpu.matmul %100, %102, %cst_83 {dimension_numbers = #tpu.dot_dimension_numbers<[1], [0], [0], [1], [0, 0, 1, 1], [], []>} : vector<8x128xf32>, vector<128x128xf32>, vector<8x128xf32> -> vector<8x128xf32>
    %104 = arith.addf %99, %103 : vector<8x128xf32>
    %105 = vector.extract_strided_slice %73 {offsets = [48, 0], sizes = [8, 128], strides = [1, 1]} : vector<72x128xf32> to vector<8x128xf32>
    %c6_84 = arith.constant 6 : index
    %c0_85 = arith.constant 0 : index
    %c0_86 = arith.constant 0 : index
    %106 = vector.load %arg2[%c6_84, %c0_85, %c0_86] : memref<9x128x128xf32, #tpu.memory_space<vmem>>, vector<1x128x128xf32>
    %107 = vector.shape_cast %106 : vector<1x128x128xf32> to vector<128x128xf32>
    %cst_87 = arith.constant dense<0.000000e+00> : vector<8x128xf32>
    %108 = tpu.matmul %105, %107, %cst_87 {dimension_numbers = #tpu.dot_dimension_numbers<[1], [0], [0], [1], [0, 0, 1, 1], [], []>} : vector<8x128xf32>, vector<128x128xf32>, vector<8x128xf32> -> vector<8x128xf32>
    %109 = arith.addf %104, %108 : vector<8x128xf32>
    %110 = vector.extract_strided_slice %73 {offsets = [56, 0], sizes = [8, 128], strides = [1, 1]} : vector<72x128xf32> to vector<8x128xf32>
    %c7_88 = arith.constant 7 : index
    %c0_89 = arith.constant 0 : index
    %c0_90 = arith.constant 0 : index
    %111 = vector.load %arg2[%c7_88, %c0_89, %c0_90] : memref<9x128x128xf32, #tpu.memory_space<vmem>>, vector<1x128x128xf32>
    %112 = vector.shape_cast %111 : vector<1x128x128xf32> to vector<128x128xf32>
    %cst_91 = arith.constant dense<0.000000e+00> : vector<8x128xf32>
    %113 = tpu.matmul %110, %112, %cst_91 {dimension_numbers = #tpu.dot_dimension_numbers<[1], [0], [0], [1], [0, 0, 1, 1], [], []>} : vector<8x128xf32>, vector<128x128xf32>, vector<8x128xf32> -> vector<8x128xf32>
    %114 = arith.addf %109, %113 : vector<8x128xf32>
    %115 = vector.extract_strided_slice %73 {offsets = [64, 0], sizes = [8, 128], strides = [1, 1]} : vector<72x128xf32> to vector<8x128xf32>
    %c8_92 = arith.constant 8 : index
    %c0_93 = arith.constant 0 : index
    %c0_94 = arith.constant 0 : index
    %116 = vector.load %arg2[%c8_92, %c0_93, %c0_94] : memref<9x128x128xf32, #tpu.memory_space<vmem>>, vector<1x128x128xf32>
    %117 = vector.shape_cast %116 : vector<1x128x128xf32> to vector<128x128xf32>
    %cst_95 = arith.constant dense<0.000000e+00> : vector<8x128xf32>
    %118 = tpu.matmul %115, %117, %cst_95 {dimension_numbers = #tpu.dot_dimension_numbers<[1], [0], [0], [1], [0, 0, 1, 1], [], []>} : vector<8x128xf32>, vector<128x128xf32>, vector<8x128xf32> -> vector<8x128xf32>
    %119 = arith.addf %114, %118 : vector<8x128xf32>
    %c1_96 = arith.constant 1 : index
    %c0_97 = arith.constant 0 : index
    %c0_98 = arith.constant 0 : index
    %120 = vector.load %arg6[%c1_96, %c0_97, %c0_98] : memref<6x8x1xf32, #tpu.memory_space<vmem>>, vector<1x8x1xf32>
    %121 = vector.shape_cast %120 : vector<1x8x1xf32> to vector<8x1xf32>
    %122 = vector.broadcast %121 : vector<8x1xf32> to vector<8x128xf32>
    %123 = arith.addf %119, %122 : vector<8x128xf32>
    %cst_99 = arith.constant 0.000000e+00 : f32
    %124 = vector.broadcast %cst_99 : f32 to vector<8x128xf32>
    %125 = arith.maximumf %123, %124 : vector<8x128xf32>
    %c24 = arith.constant 24 : index
    %c0_100 = arith.constant 0 : index
    %126 = vector.load %arg8[%c24, %c0_100] : memref<72x128xf32, #tpu.memory_space<vmem>>, vector<8x128xf32>
    tpu.vector_store %arg8[%c24, %c0_100], %125 {strides = array<i32>} : memref<72x128xf32, #tpu.memory_space<vmem>>, vector<8x128xf32>,
    %c0_101 = arith.constant 0 : index
    %c0_102 = arith.constant 0 : index
    %127 = vector.load %arg8[%c0_101, %c0_102] : memref<72x128xf32, #tpu.memory_space<vmem>>, vector<72x128xf32>
    %c2_103 = arith.constant 2 : index
    %c0_104 = arith.constant 0 : index
    %c0_105 = arith.constant 0 : index
    %128 = vector.load %arg5[%c2_103, %c0_104, %c0_105] : memref<6x72x72xf32, #tpu.memory_space<vmem>>, vector<1x72x72xf32>
    %129 = vector.shape_cast %128 : vector<1x72x72xf32> to vector<72x72xf32>
    %cst_106 = arith.constant dense<0.000000e+00> : vector<72x128xf32>
    %130 = tpu.matmul %129, %127, %cst_106 {dimension_numbers = #tpu.dot_dimension_numbers<[1], [0], [0], [1], [0, 0, 1, 1], [], []>} : vector<72x72xf32>, vector<72x128xf32>, vector<72x128xf32> -> vector<72x128xf32>
    %cst_107 = arith.constant 0.000000e+00 : f32
    %131 = vector.broadcast %cst_107 : f32 to vector<8x128xf32>
    %132 = vector.extract_strided_slice %130 {offsets = [0, 0], sizes = [8, 128], strides = [1, 1]} : vector<72x128xf32> to vector<8x128xf32>
    %c0_108 = arith.constant 0 : index
    %c0_109 = arith.constant 0 : index
    %c0_110 = arith.constant 0 : index
    %133 = vector.load %arg2[%c0_108, %c0_109, %c0_110] : memref<9x128x128xf32, #tpu.memory_space<vmem>>, vector<1x128x128xf32>
    %134 = vector.shape_cast %133 : vector<1x128x128xf32> to vector<128x128xf32>
    %cst_111 = arith.constant dense<0.000000e+00> : vector<8x128xf32>
    %135 = tpu.matmul %132, %134, %cst_111 {dimension_numbers = #tpu.dot_dimension_numbers<[1], [0], [0], [1], [0, 0, 1, 1], [], []>} : vector<8x128xf32>, vector<128x128xf32>, vector<8x128xf32> -> vector<8x128xf32>
    %136 = arith.addf %131, %135 : vector<8x128xf32>
    %137 = vector.extract_strided_slice %130 {offsets = [8, 0], sizes = [8, 128], strides = [1, 1]} : vector<72x128xf32> to vector<8x128xf32>
    %c1_112 = arith.constant 1 : index
    %c0_113 = arith.constant 0 : index
    %c0_114 = arith.constant 0 : index
    %138 = vector.load %arg2[%c1_112, %c0_113, %c0_114] : memref<9x128x128xf32, #tpu.memory_space<vmem>>, vector<1x128x128xf32>
    %139 = vector.shape_cast %138 : vector<1x128x128xf32> to vector<128x128xf32>
    %cst_115 = arith.constant dense<0.000000e+00> : vector<8x128xf32>
    %140 = tpu.matmul %137, %139, %cst_115 {dimension_numbers = #tpu.dot_dimension_numbers<[1], [0], [0], [1], [0, 0, 1, 1], [], []>} : vector<8x128xf32>, vector<128x128xf32>, vector<8x128xf32> -> vector<8x128xf32>
    %141 = arith.addf %136, %140 : vector<8x128xf32>
    %142 = vector.extract_strided_slice %130 {offsets = [16, 0], sizes = [8, 128], strides = [1, 1]} : vector<72x128xf32> to vector<8x128xf32>
    %c2_116 = arith.constant 2 : index
    %c0_117 = arith.constant 0 : index
    %c0_118 = arith.constant 0 : index
    %143 = vector.load %arg2[%c2_116, %c0_117, %c0_118] : memref<9x128x128xf32, #tpu.memory_space<vmem>>, vector<1x128x128xf32>
    %144 = vector.shape_cast %143 : vector<1x128x128xf32> to vector<128x128xf32>
    %cst_119 = arith.constant dense<0.000000e+00> : vector<8x128xf32>
    %145 = tpu.matmul %142, %144, %cst_119 {dimension_numbers = #tpu.dot_dimension_numbers<[1], [0], [0], [1], [0, 0, 1, 1], [], []>} : vector<8x128xf32>, vector<128x128xf32>, vector<8x128xf32> -> vector<8x128xf32>
    %146 = arith.addf %141, %145 : vector<8x128xf32>
    %147 = vector.extract_strided_slice %130 {offsets = [24, 0], sizes = [8, 128], strides = [1, 1]} : vector<72x128xf32> to vector<8x128xf32>
    %c3_120 = arith.constant 3 : index
    %c0_121 = arith.constant 0 : index
    %c0_122 = arith.constant 0 : index
    %148 = vector.load %arg2[%c3_120, %c0_121, %c0_122] : memref<9x128x128xf32, #tpu.memory_space<vmem>>, vector<1x128x128xf32>
    %149 = vector.shape_cast %148 : vector<1x128x128xf32> to vector<128x128xf32>
    %cst_123 = arith.constant dense<0.000000e+00> : vector<8x128xf32>
    %150 = tpu.matmul %147, %149, %cst_123 {dimension_numbers = #tpu.dot_dimension_numbers<[1], [0], [0], [1], [0, 0, 1, 1], [], []>} : vector<8x128xf32>, vector<128x128xf32>, vector<8x128xf32> -> vector<8x128xf32>
    %151 = arith.addf %146, %150 : vector<8x128xf32>
    %152 = vector.extract_strided_slice %130 {offsets = [32, 0], sizes = [8, 128], strides = [1, 1]} : vector<72x128xf32> to vector<8x128xf32>
    %c4_124 = arith.constant 4 : index
    %c0_125 = arith.constant 0 : index
    %c0_126 = arith.constant 0 : index
    %153 = vector.load %arg2[%c4_124, %c0_125, %c0_126] : memref<9x128x128xf32, #tpu.memory_space<vmem>>, vector<1x128x128xf32>
    %154 = vector.shape_cast %153 : vector<1x128x128xf32> to vector<128x128xf32>
    %cst_127 = arith.constant dense<0.000000e+00> : vector<8x128xf32>
    %155 = tpu.matmul %152, %154, %cst_127 {dimension_numbers = #tpu.dot_dimension_numbers<[1], [0], [0], [1], [0, 0, 1, 1], [], []>} : vector<8x128xf32>, vector<128x128xf32>, vector<8x128xf32> -> vector<8x128xf32>
    %156 = arith.addf %151, %155 : vector<8x128xf32>
    %157 = vector.extract_strided_slice %130 {offsets = [40, 0], sizes = [8, 128], strides = [1, 1]} : vector<72x128xf32> to vector<8x128xf32>
    %c5_128 = arith.constant 5 : index
    %c0_129 = arith.constant 0 : index
    %c0_130 = arith.constant 0 : index
    %158 = vector.load %arg2[%c5_128, %c0_129, %c0_130] : memref<9x128x128xf32, #tpu.memory_space<vmem>>, vector<1x128x128xf32>
    %159 = vector.shape_cast %158 : vector<1x128x128xf32> to vector<128x128xf32>
    %cst_131 = arith.constant dense<0.000000e+00> : vector<8x128xf32>
    %160 = tpu.matmul %157, %159, %cst_131 {dimension_numbers = #tpu.dot_dimension_numbers<[1], [0], [0], [1], [0, 0, 1, 1], [], []>} : vector<8x128xf32>, vector<128x128xf32>, vector<8x128xf32> -> vector<8x128xf32>
    %161 = arith.addf %156, %160 : vector<8x128xf32>
    %162 = vector.extract_strided_slice %130 {offsets = [48, 0], sizes = [8, 128], strides = [1, 1]} : vector<72x128xf32> to vector<8x128xf32>
    %c6_132 = arith.constant 6 : index
    %c0_133 = arith.constant 0 : index
    %c0_134 = arith.constant 0 : index
    %163 = vector.load %arg2[%c6_132, %c0_133, %c0_134] : memref<9x128x128xf32, #tpu.memory_space<vmem>>, vector<1x128x128xf32>
    %164 = vector.shape_cast %163 : vector<1x128x128xf32> to vector<128x128xf32>
    %cst_135 = arith.constant dense<0.000000e+00> : vector<8x128xf32>
    %165 = tpu.matmul %162, %164, %cst_135 {dimension_numbers = #tpu.dot_dimension_numbers<[1], [0], [0], [1], [0, 0, 1, 1], [], []>} : vector<8x128xf32>, vector<128x128xf32>, vector<8x128xf32> -> vector<8x128xf32>
    %166 = arith.addf %161, %165 : vector<8x128xf32>
    %167 = vector.extract_strided_slice %130 {offsets = [56, 0], sizes = [8, 128], strides = [1, 1]} : vector<72x128xf32> to vector<8x128xf32>
    %c7_136 = arith.constant 7 : index
    %c0_137 = arith.constant 0 : index
    %c0_138 = arith.constant 0 : index
    %168 = vector.load %arg2[%c7_136, %c0_137, %c0_138] : memref<9x128x128xf32, #tpu.memory_space<vmem>>, vector<1x128x128xf32>
    %169 = vector.shape_cast %168 : vector<1x128x128xf32> to vector<128x128xf32>
    %cst_139 = arith.constant dense<0.000000e+00> : vector<8x128xf32>
    %170 = tpu.matmul %167, %169, %cst_139 {dimension_numbers = #tpu.dot_dimension_numbers<[1], [0], [0], [1], [0, 0, 1, 1], [], []>} : vector<8x128xf32>, vector<128x128xf32>, vector<8x128xf32> -> vector<8x128xf32>
    %171 = arith.addf %166, %170 : vector<8x128xf32>
    %172 = vector.extract_strided_slice %130 {offsets = [64, 0], sizes = [8, 128], strides = [1, 1]} : vector<72x128xf32> to vector<8x128xf32>
    %c8_140 = arith.constant 8 : index
    %c0_141 = arith.constant 0 : index
    %c0_142 = arith.constant 0 : index
    %173 = vector.load %arg2[%c8_140, %c0_141, %c0_142] : memref<9x128x128xf32, #tpu.memory_space<vmem>>, vector<1x128x128xf32>
    %174 = vector.shape_cast %173 : vector<1x128x128xf32> to vector<128x128xf32>
    %cst_143 = arith.constant dense<0.000000e+00> : vector<8x128xf32>
    %175 = tpu.matmul %172, %174, %cst_143 {dimension_numbers = #tpu.dot_dimension_numbers<[1], [0], [0], [1], [0, 0, 1, 1], [], []>} : vector<8x128xf32>, vector<128x128xf32>, vector<8x128xf32> -> vector<8x128xf32>
    %176 = arith.addf %171, %175 : vector<8x128xf32>
    %c2_144 = arith.constant 2 : index
    %c0_145 = arith.constant 0 : index
    %c0_146 = arith.constant 0 : index
    %177 = vector.load %arg6[%c2_144, %c0_145, %c0_146] : memref<6x8x1xf32, #tpu.memory_space<vmem>>, vector<1x8x1xf32>
    %178 = vector.shape_cast %177 : vector<1x8x1xf32> to vector<8x1xf32>
    %179 = vector.broadcast %178 : vector<8x1xf32> to vector<8x128xf32>
    %180 = arith.addf %176, %179 : vector<8x128xf32>
    %cst_147 = arith.constant 0.000000e+00 : f32
    %181 = vector.broadcast %cst_147 : f32 to vector<8x128xf32>
    %182 = arith.maximumf %180, %181 : vector<8x128xf32>
    %c16 = arith.constant 16 : index
    %c0_148 = arith.constant 0 : index
    %183 = vector.load %arg8[%c16, %c0_148] : memref<72x128xf32, #tpu.memory_space<vmem>>, vector<8x128xf32>
    tpu.vector_store %arg8[%c16, %c0_148], %182 {strides = array<i32>} : memref<72x128xf32, #tpu.memory_space<vmem>>, vector<8x128xf32>,
    %c0_149 = arith.constant 0 : index
    %c0_150 = arith.constant 0 : index
    %184 = vector.load %arg8[%c0_149, %c0_150] : memref<72x128xf32, #tpu.memory_space<vmem>>, vector<72x128xf32>
    %c3_151 = arith.constant 3 : index
    %c0_152 = arith.constant 0 : index
    %c0_153 = arith.constant 0 : index
    %185 = vector.load %arg5[%c3_151, %c0_152, %c0_153] : memref<6x72x72xf32, #tpu.memory_space<vmem>>, vector<1x72x72xf32>
    %186 = vector.shape_cast %185 : vector<1x72x72xf32> to vector<72x72xf32>
    %cst_154 = arith.constant dense<0.000000e+00> : vector<72x128xf32>
    %187 = tpu.matmul %186, %184, %cst_154 {dimension_numbers = #tpu.dot_dimension_numbers<[1], [0], [0], [1], [0, 0, 1, 1], [], []>} : vector<72x72xf32>, vector<72x128xf32>, vector<72x128xf32> -> vector<72x128xf32>
    %cst_155 = arith.constant 0.000000e+00 : f32
    %188 = vector.broadcast %cst_155 : f32 to vector<8x128xf32>
    %189 = vector.extract_strided_slice %187 {offsets = [0, 0], sizes = [8, 128], strides = [1, 1]} : vector<72x128xf32> to vector<8x128xf32>
    %c0_156 = arith.constant 0 : index
    %c0_157 = arith.constant 0 : index
    %c0_158 = arith.constant 0 : index
    %190 = vector.load %arg2[%c0_156, %c0_157, %c0_158] : memref<9x128x128xf32, #tpu.memory_space<vmem>>, vector<1x128x128xf32>
    %191 = vector.shape_cast %190 : vector<1x128x128xf32> to vector<128x128xf32>
    %cst_159 = arith.constant dense<0.000000e+00> : vector<8x128xf32>
    %192 = tpu.matmul %189, %191, %cst_159 {dimension_numbers = #tpu.dot_dimension_numbers<[1], [0], [0], [1], [0, 0, 1, 1], [], []>} : vector<8x128xf32>, vector<128x128xf32>, vector<8x128xf32> -> vector<8x128xf32>
    %193 = arith.addf %188, %192 : vector<8x128xf32>
    %194 = vector.extract_strided_slice %187 {offsets = [8, 0], sizes = [8, 128], strides = [1, 1]} : vector<72x128xf32> to vector<8x128xf32>
    %c1_160 = arith.constant 1 : index
    %c0_161 = arith.constant 0 : index
    %c0_162 = arith.constant 0 : index
    %195 = vector.load %arg2[%c1_160, %c0_161, %c0_162] : memref<9x128x128xf32, #tpu.memory_space<vmem>>, vector<1x128x128xf32>
    %196 = vector.shape_cast %195 : vector<1x128x128xf32> to vector<128x128xf32>
    %cst_163 = arith.constant dense<0.000000e+00> : vector<8x128xf32>
    %197 = tpu.matmul %194, %196, %cst_163 {dimension_numbers = #tpu.dot_dimension_numbers<[1], [0], [0], [1], [0, 0, 1, 1], [], []>} : vector<8x128xf32>, vector<128x128xf32>, vector<8x128xf32> -> vector<8x128xf32>
    %198 = arith.addf %193, %197 : vector<8x128xf32>
    %199 = vector.extract_strided_slice %187 {offsets = [16, 0], sizes = [8, 128], strides = [1, 1]} : vector<72x128xf32> to vector<8x128xf32>
    %c2_164 = arith.constant 2 : index
    %c0_165 = arith.constant 0 : index
    %c0_166 = arith.constant 0 : index
    %200 = vector.load %arg2[%c2_164, %c0_165, %c0_166] : memref<9x128x128xf32, #tpu.memory_space<vmem>>, vector<1x128x128xf32>
    %201 = vector.shape_cast %200 : vector<1x128x128xf32> to vector<128x128xf32>
    %cst_167 = arith.constant dense<0.000000e+00> : vector<8x128xf32>
    %202 = tpu.matmul %199, %201, %cst_167 {dimension_numbers = #tpu.dot_dimension_numbers<[1], [0], [0], [1], [0, 0, 1, 1], [], []>} : vector<8x128xf32>, vector<128x128xf32>, vector<8x128xf32> -> vector<8x128xf32>
    %203 = arith.addf %198, %202 : vector<8x128xf32>
    %204 = vector.extract_strided_slice %187 {offsets = [24, 0], sizes = [8, 128], strides = [1, 1]} : vector<72x128xf32> to vector<8x128xf32>
    %c3_168 = arith.constant 3 : index
    %c0_169 = arith.constant 0 : index
    %c0_170 = arith.constant 0 : index
    %205 = vector.load %arg2[%c3_168, %c0_169, %c0_170] : memref<9x128x128xf32, #tpu.memory_space<vmem>>, vector<1x128x128xf32>
    %206 = vector.shape_cast %205 : vector<1x128x128xf32> to vector<128x128xf32>
    %cst_171 = arith.constant dense<0.000000e+00> : vector<8x128xf32>
    %207 = tpu.matmul %204, %206, %cst_171 {dimension_numbers = #tpu.dot_dimension_numbers<[1], [0], [0], [1], [0, 0, 1, 1], [], []>} : vector<8x128xf32>, vector<128x128xf32>, vector<8x128xf32> -> vector<8x128xf32>
    %208 = arith.addf %203, %207 : vector<8x128xf32>
    %209 = vector.extract_strided_slice %187 {offsets = [32, 0], sizes = [8, 128], strides = [1, 1]} : vector<72x128xf32> to vector<8x128xf32>
    %c4_172 = arith.constant 4 : index
    %c0_173 = arith.constant 0 : index
    %c0_174 = arith.constant 0 : index
    %210 = vector.load %arg2[%c4_172, %c0_173, %c0_174] : memref<9x128x128xf32, #tpu.memory_space<vmem>>, vector<1x128x128xf32>
    %211 = vector.shape_cast %210 : vector<1x128x128xf32> to vector<128x128xf32>
    %cst_175 = arith.constant dense<0.000000e+00> : vector<8x128xf32>
    %212 = tpu.matmul %209, %211, %cst_175 {dimension_numbers = #tpu.dot_dimension_numbers<[1], [0], [0], [1], [0, 0, 1, 1], [], []>} : vector<8x128xf32>, vector<128x128xf32>, vector<8x128xf32> -> vector<8x128xf32>
    %213 = arith.addf %208, %212 : vector<8x128xf32>
    %214 = vector.extract_strided_slice %187 {offsets = [40, 0], sizes = [8, 128], strides = [1, 1]} : vector<72x128xf32> to vector<8x128xf32>
    %c5_176 = arith.constant 5 : index
    %c0_177 = arith.constant 0 : index
    %c0_178 = arith.constant 0 : index
    %215 = vector.load %arg2[%c5_176, %c0_177, %c0_178] : memref<9x128x128xf32, #tpu.memory_space<vmem>>, vector<1x128x128xf32>
    %216 = vector.shape_cast %215 : vector<1x128x128xf32> to vector<128x128xf32>
    %cst_179 = arith.constant dense<0.000000e+00> : vector<8x128xf32>
    %217 = tpu.matmul %214, %216, %cst_179 {dimension_numbers = #tpu.dot_dimension_numbers<[1], [0], [0], [1], [0, 0, 1, 1], [], []>} : vector<8x128xf32>, vector<128x128xf32>, vector<8x128xf32> -> vector<8x128xf32>
    %218 = arith.addf %213, %217 : vector<8x128xf32>
    %219 = vector.extract_strided_slice %187 {offsets = [48, 0], sizes = [8, 128], strides = [1, 1]} : vector<72x128xf32> to vector<8x128xf32>
    %c6_180 = arith.constant 6 : index
    %c0_181 = arith.constant 0 : index
    %c0_182 = arith.constant 0 : index
    %220 = vector.load %arg2[%c6_180, %c0_181, %c0_182] : memref<9x128x128xf32, #tpu.memory_space<vmem>>, vector<1x128x128xf32>
    %221 = vector.shape_cast %220 : vector<1x128x128xf32> to vector<128x128xf32>
    %cst_183 = arith.constant dense<0.000000e+00> : vector<8x128xf32>
    %222 = tpu.matmul %219, %221, %cst_183 {dimension_numbers = #tpu.dot_dimension_numbers<[1], [0], [0], [1], [0, 0, 1, 1], [], []>} : vector<8x128xf32>, vector<128x128xf32>, vector<8x128xf32> -> vector<8x128xf32>
    %223 = arith.addf %218, %222 : vector<8x128xf32>
    %224 = vector.extract_strided_slice %187 {offsets = [56, 0], sizes = [8, 128], strides = [1, 1]} : vector<72x128xf32> to vector<8x128xf32>
    %c7_184 = arith.constant 7 : index
    %c0_185 = arith.constant 0 : index
    %c0_186 = arith.constant 0 : index
    %225 = vector.load %arg2[%c7_184, %c0_185, %c0_186] : memref<9x128x128xf32, #tpu.memory_space<vmem>>, vector<1x128x128xf32>
    %226 = vector.shape_cast %225 : vector<1x128x128xf32> to vector<128x128xf32>
    %cst_187 = arith.constant dense<0.000000e+00> : vector<8x128xf32>
    %227 = tpu.matmul %224, %226, %cst_187 {dimension_numbers = #tpu.dot_dimension_numbers<[1], [0], [0], [1], [0, 0, 1, 1], [], []>} : vector<8x128xf32>, vector<128x128xf32>, vector<8x128xf32> -> vector<8x128xf32>
    %228 = arith.addf %223, %227 : vector<8x128xf32>
    %229 = vector.extract_strided_slice %187 {offsets = [64, 0], sizes = [8, 128], strides = [1, 1]} : vector<72x128xf32> to vector<8x128xf32>
    %c8_188 = arith.constant 8 : index
    %c0_189 = arith.constant 0 : index
    %c0_190 = arith.constant 0 : index
    %230 = vector.load %arg2[%c8_188, %c0_189, %c0_190] : memref<9x128x128xf32, #tpu.memory_space<vmem>>, vector<1x128x128xf32>
    %231 = vector.shape_cast %230 : vector<1x128x128xf32> to vector<128x128xf32>
    %cst_191 = arith.constant dense<0.000000e+00> : vector<8x128xf32>
    %232 = tpu.matmul %229, %231, %cst_191 {dimension_numbers = #tpu.dot_dimension_numbers<[1], [0], [0], [1], [0, 0, 1, 1], [], []>} : vector<8x128xf32>, vector<128x128xf32>, vector<8x128xf32> -> vector<8x128xf32>
    %233 = arith.addf %228, %232 : vector<8x128xf32>
    %c3_192 = arith.constant 3 : index
    %c0_193 = arith.constant 0 : index
    %c0_194 = arith.constant 0 : index
    %234 = vector.load %arg6[%c3_192, %c0_193, %c0_194] : memref<6x8x1xf32, #tpu.memory_space<vmem>>, vector<1x8x1xf32>
    %235 = vector.shape_cast %234 : vector<1x8x1xf32> to vector<8x1xf32>
    %236 = vector.broadcast %235 : vector<8x1xf32> to vector<8x128xf32>
    %237 = arith.addf %233, %236 : vector<8x128xf32>
    %cst_195 = arith.constant 0.000000e+00 : f32
    %238 = vector.broadcast %cst_195 : f32 to vector<8x128xf32>
    %239 = arith.maximumf %237, %238 : vector<8x128xf32>
    %c8_196 = arith.constant 8 : index
    %c0_197 = arith.constant 0 : index
    %240 = vector.load %arg8[%c8_196, %c0_197] : memref<72x128xf32, #tpu.memory_space<vmem>>, vector<8x128xf32>
    tpu.vector_store %arg8[%c8_196, %c0_197], %239 {strides = array<i32>} : memref<72x128xf32, #tpu.memory_space<vmem>>, vector<8x128xf32>,
    %c0_198 = arith.constant 0 : index
    %c0_199 = arith.constant 0 : index
    %241 = vector.load %arg8[%c0_198, %c0_199] : memref<72x128xf32, #tpu.memory_space<vmem>>, vector<72x128xf32>
    %c4_200 = arith.constant 4 : index
    %c0_201 = arith.constant 0 : index
    %c0_202 = arith.constant 0 : index
    %242 = vector.load %arg5[%c4_200, %c0_201, %c0_202] : memref<6x72x72xf32, #tpu.memory_space<vmem>>, vector<1x72x72xf32>
    %243 = vector.shape_cast %242 : vector<1x72x72xf32> to vector<72x72xf32>
    %cst_203 = arith.constant dense<0.000000e+00> : vector<72x128xf32>
    %244 = tpu.matmul %243, %241, %cst_203 {dimension_numbers = #tpu.dot_dimension_numbers<[1], [0], [0], [1], [0, 0, 1, 1], [], []>} : vector<72x72xf32>, vector<72x128xf32>, vector<72x128xf32> -> vector<72x128xf32>
    %cst_204 = arith.constant 0.000000e+00 : f32
    %245 = vector.broadcast %cst_204 : f32 to vector<8x128xf32>
    %246 = vector.extract_strided_slice %244 {offsets = [0, 0], sizes = [8, 128], strides = [1, 1]} : vector<72x128xf32> to vector<8x128xf32>
    %c0_205 = arith.constant 0 : index
    %c0_206 = arith.constant 0 : index
    %c0_207 = arith.constant 0 : index
    %247 = vector.load %arg2[%c0_205, %c0_206, %c0_207] : memref<9x128x128xf32, #tpu.memory_space<vmem>>, vector<1x128x128xf32>
    %248 = vector.shape_cast %247 : vector<1x128x128xf32> to vector<128x128xf32>
    %cst_208 = arith.constant dense<0.000000e+00> : vector<8x128xf32>
    %249 = tpu.matmul %246, %248, %cst_208 {dimension_numbers = #tpu.dot_dimension_numbers<[1], [0], [0], [1], [0, 0, 1, 1], [], []>} : vector<8x128xf32>, vector<128x128xf32>, vector<8x128xf32> -> vector<8x128xf32>
    %250 = arith.addf %245, %249 : vector<8x128xf32>
    %251 = vector.extract_strided_slice %244 {offsets = [8, 0], sizes = [8, 128], strides = [1, 1]} : vector<72x128xf32> to vector<8x128xf32>
    %c1_209 = arith.constant 1 : index
    %c0_210 = arith.constant 0 : index
    %c0_211 = arith.constant 0 : index
    %252 = vector.load %arg2[%c1_209, %c0_210, %c0_211] : memref<9x128x128xf32, #tpu.memory_space<vmem>>, vector<1x128x128xf32>
    %253 = vector.shape_cast %252 : vector<1x128x128xf32> to vector<128x128xf32>
    %cst_212 = arith.constant dense<0.000000e+00> : vector<8x128xf32>
    %254 = tpu.matmul %251, %253, %cst_212 {dimension_numbers = #tpu.dot_dimension_numbers<[1], [0], [0], [1], [0, 0, 1, 1], [], []>} : vector<8x128xf32>, vector<128x128xf32>, vector<8x128xf32> -> vector<8x128xf32>
    %255 = arith.addf %250, %254 : vector<8x128xf32>
    %256 = vector.extract_strided_slice %244 {offsets = [16, 0], sizes = [8, 128], strides = [1, 1]} : vector<72x128xf32> to vector<8x128xf32>
    %c2_213 = arith.constant 2 : index
    %c0_214 = arith.constant 0 : index
    %c0_215 = arith.constant 0 : index
    %257 = vector.load %arg2[%c2_213, %c0_214, %c0_215] : memref<9x128x128xf32, #tpu.memory_space<vmem>>, vector<1x128x128xf32>
    %258 = vector.shape_cast %257 : vector<1x128x128xf32> to vector<128x128xf32>
    %cst_216 = arith.constant dense<0.000000e+00> : vector<8x128xf32>
    %259 = tpu.matmul %256, %258, %cst_216 {dimension_numbers = #tpu.dot_dimension_numbers<[1], [0], [0], [1], [0, 0, 1, 1], [], []>} : vector<8x128xf32>, vector<128x128xf32>, vector<8x128xf32> -> vector<8x128xf32>
    %260 = arith.addf %255, %259 : vector<8x128xf32>
    %261 = vector.extract_strided_slice %244 {offsets = [24, 0], sizes = [8, 128], strides = [1, 1]} : vector<72x128xf32> to vector<8x128xf32>
    %c3_217 = arith.constant 3 : index
    %c0_218 = arith.constant 0 : index
    %c0_219 = arith.constant 0 : index
    %262 = vector.load %arg2[%c3_217, %c0_218, %c0_219] : memref<9x128x128xf32, #tpu.memory_space<vmem>>, vector<1x128x128xf32>
    %263 = vector.shape_cast %262 : vector<1x128x128xf32> to vector<128x128xf32>
    %cst_220 = arith.constant dense<0.000000e+00> : vector<8x128xf32>
    %264 = tpu.matmul %261, %263, %cst_220 {dimension_numbers = #tpu.dot_dimension_numbers<[1], [0], [0], [1], [0, 0, 1, 1], [], []>} : vector<8x128xf32>, vector<128x128xf32>, vector<8x128xf32> -> vector<8x128xf32>
    %265 = arith.addf %260, %264 : vector<8x128xf32>
    %266 = vector.extract_strided_slice %244 {offsets = [32, 0], sizes = [8, 128], strides = [1, 1]} : vector<72x128xf32> to vector<8x128xf32>
    %c4_221 = arith.constant 4 : index
    %c0_222 = arith.constant 0 : index
    %c0_223 = arith.constant 0 : index
    %267 = vector.load %arg2[%c4_221, %c0_222, %c0_223] : memref<9x128x128xf32, #tpu.memory_space<vmem>>, vector<1x128x128xf32>
    %268 = vector.shape_cast %267 : vector<1x128x128xf32> to vector<128x128xf32>
    %cst_224 = arith.constant dense<0.000000e+00> : vector<8x128xf32>
    %269 = tpu.matmul %266, %268, %cst_224 {dimension_numbers = #tpu.dot_dimension_numbers<[1], [0], [0], [1], [0, 0, 1, 1], [], []>} : vector<8x128xf32>, vector<128x128xf32>, vector<8x128xf32> -> vector<8x128xf32>
    %270 = arith.addf %265, %269 : vector<8x128xf32>
    %271 = vector.extract_strided_slice %244 {offsets = [40, 0], sizes = [8, 128], strides = [1, 1]} : vector<72x128xf32> to vector<8x128xf32>
    %c5_225 = arith.constant 5 : index
    %c0_226 = arith.constant 0 : index
    %c0_227 = arith.constant 0 : index
    %272 = vector.load %arg2[%c5_225, %c0_226, %c0_227] : memref<9x128x128xf32, #tpu.memory_space<vmem>>, vector<1x128x128xf32>
    %273 = vector.shape_cast %272 : vector<1x128x128xf32> to vector<128x128xf32>
    %cst_228 = arith.constant dense<0.000000e+00> : vector<8x128xf32>
    %274 = tpu.matmul %271, %273, %cst_228 {dimension_numbers = #tpu.dot_dimension_numbers<[1], [0], [0], [1], [0, 0, 1, 1], [], []>} : vector<8x128xf32>, vector<128x128xf32>, vector<8x128xf32> -> vector<8x128xf32>
    %275 = arith.addf %270, %274 : vector<8x128xf32>
    %276 = vector.extract_strided_slice %244 {offsets = [48, 0], sizes = [8, 128], strides = [1, 1]} : vector<72x128xf32> to vector<8x128xf32>
    %c6_229 = arith.constant 6 : index
    %c0_230 = arith.constant 0 : index
    %c0_231 = arith.constant 0 : index
    %277 = vector.load %arg2[%c6_229, %c0_230, %c0_231] : memref<9x128x128xf32, #tpu.memory_space<vmem>>, vector<1x128x128xf32>
    %278 = vector.shape_cast %277 : vector<1x128x128xf32> to vector<128x128xf32>
    %cst_232 = arith.constant dense<0.000000e+00> : vector<8x128xf32>
    %279 = tpu.matmul %276, %278, %cst_232 {dimension_numbers = #tpu.dot_dimension_numbers<[1], [0], [0], [1], [0, 0, 1, 1], [], []>} : vector<8x128xf32>, vector<128x128xf32>, vector<8x128xf32> -> vector<8x128xf32>
    %280 = arith.addf %275, %279 : vector<8x128xf32>
    %281 = vector.extract_strided_slice %244 {offsets = [56, 0], sizes = [8, 128], strides = [1, 1]} : vector<72x128xf32> to vector<8x128xf32>
    %c7_233 = arith.constant 7 : index
    %c0_234 = arith.constant 0 : index
    %c0_235 = arith.constant 0 : index
    %282 = vector.load %arg2[%c7_233, %c0_234, %c0_235] : memref<9x128x128xf32, #tpu.memory_space<vmem>>, vector<1x128x128xf32>
    %283 = vector.shape_cast %282 : vector<1x128x128xf32> to vector<128x128xf32>
    %cst_236 = arith.constant dense<0.000000e+00> : vector<8x128xf32>
    %284 = tpu.matmul %281, %283, %cst_236 {dimension_numbers = #tpu.dot_dimension_numbers<[1], [0], [0], [1], [0, 0, 1, 1], [], []>} : vector<8x128xf32>, vector<128x128xf32>, vector<8x128xf32> -> vector<8x128xf32>
    %285 = arith.addf %280, %284 : vector<8x128xf32>
    %286 = vector.extract_strided_slice %244 {offsets = [64, 0], sizes = [8, 128], strides = [1, 1]} : vector<72x128xf32> to vector<8x128xf32>
    %c8_237 = arith.constant 8 : index
    %c0_238 = arith.constant 0 : index
    %c0_239 = arith.constant 0 : index
    %287 = vector.load %arg2[%c8_237, %c0_238, %c0_239] : memref<9x128x128xf32, #tpu.memory_space<vmem>>, vector<1x128x128xf32>
    %288 = vector.shape_cast %287 : vector<1x128x128xf32> to vector<128x128xf32>
    %cst_240 = arith.constant dense<0.000000e+00> : vector<8x128xf32>
    %289 = tpu.matmul %286, %288, %cst_240 {dimension_numbers = #tpu.dot_dimension_numbers<[1], [0], [0], [1], [0, 0, 1, 1], [], []>} : vector<8x128xf32>, vector<128x128xf32>, vector<8x128xf32> -> vector<8x128xf32>
    %290 = arith.addf %285, %289 : vector<8x128xf32>
    %c4_241 = arith.constant 4 : index
    %c0_242 = arith.constant 0 : index
    %c0_243 = arith.constant 0 : index
    %291 = vector.load %arg6[%c4_241, %c0_242, %c0_243] : memref<6x8x1xf32, #tpu.memory_space<vmem>>, vector<1x8x1xf32>
    %292 = vector.shape_cast %291 : vector<1x8x1xf32> to vector<8x1xf32>
    %293 = vector.broadcast %292 : vector<8x1xf32> to vector<8x128xf32>
    %294 = arith.addf %290, %293 : vector<8x128xf32>
    %cst_244 = arith.constant 0.000000e+00 : f32
    %295 = vector.broadcast %cst_244 : f32 to vector<8x128xf32>
    %296 = arith.maximumf %294, %295 : vector<8x128xf32>
    %c0_245 = arith.constant 0 : index
    %c0_246 = arith.constant 0 : index
    %297 = vector.load %arg8[%c0_245, %c0_246] : memref<72x128xf32, #tpu.memory_space<vmem>>, vector<8x128xf32>
    tpu.vector_store %arg8[%c0_245, %c0_246], %296 {strides = array<i32>} : memref<72x128xf32, #tpu.memory_space<vmem>>, vector<8x128xf32>,
    %c0_247 = arith.constant 0 : index
    %c0_248 = arith.constant 0 : index
    %298 = vector.load %arg8[%c0_247, %c0_248] : memref<72x128xf32, #tpu.memory_space<vmem>>, vector<72x128xf32>
    %c5_249 = arith.constant 5 : index
    %c0_250 = arith.constant 0 : index
    %c0_251 = arith.constant 0 : index
    %299 = vector.load %arg5[%c5_249, %c0_250, %c0_251] : memref<6x72x72xf32, #tpu.memory_space<vmem>>, vector<1x72x72xf32>
    %300 = vector.shape_cast %299 : vector<1x72x72xf32> to vector<72x72xf32>
    %cst_252 = arith.constant dense<0.000000e+00> : vector<72x128xf32>
    %301 = tpu.matmul %300, %298, %cst_252 {dimension_numbers = #tpu.dot_dimension_numbers<[1], [0], [0], [1], [0, 0, 1, 1], [], []>} : vector<72x72xf32>, vector<72x128xf32>, vector<72x128xf32> -> vector<72x128xf32>
    %cst_253 = arith.constant 0.000000e+00 : f32
    %302 = vector.broadcast %cst_253 : f32 to vector<8x128xf32>
    %303 = vector.extract_strided_slice %301 {offsets = [0, 0], sizes = [8, 128], strides = [1, 1]} : vector<72x128xf32> to vector<8x128xf32>
    %c0_254 = arith.constant 0 : index
    %c0_255 = arith.constant 0 : index
    %c0_256 = arith.constant 0 : index
    %304 = vector.load %arg2[%c0_254, %c0_255, %c0_256] : memref<9x128x128xf32, #tpu.memory_space<vmem>>, vector<1x128x128xf32>
    %305 = vector.shape_cast %304 : vector<1x128x128xf32> to vector<128x128xf32>
    %cst_257 = arith.constant dense<0.000000e+00> : vector<8x128xf32>
    %306 = tpu.matmul %303, %305, %cst_257 {dimension_numbers = #tpu.dot_dimension_numbers<[1], [0], [0], [1], [0, 0, 1, 1], [], []>} : vector<8x128xf32>, vector<128x128xf32>, vector<8x128xf32> -> vector<8x128xf32>
    %307 = arith.addf %302, %306 : vector<8x128xf32>
    %308 = vector.extract_strided_slice %301 {offsets = [8, 0], sizes = [8, 128], strides = [1, 1]} : vector<72x128xf32> to vector<8x128xf32>
    %c1_258 = arith.constant 1 : index
    %c0_259 = arith.constant 0 : index
    %c0_260 = arith.constant 0 : index
    %309 = vector.load %arg2[%c1_258, %c0_259, %c0_260] : memref<9x128x128xf32, #tpu.memory_space<vmem>>, vector<1x128x128xf32>
    %310 = vector.shape_cast %309 : vector<1x128x128xf32> to vector<128x128xf32>
    %cst_261 = arith.constant dense<0.000000e+00> : vector<8x128xf32>
    %311 = tpu.matmul %308, %310, %cst_261 {dimension_numbers = #tpu.dot_dimension_numbers<[1], [0], [0], [1], [0, 0, 1, 1], [], []>} : vector<8x128xf32>, vector<128x128xf32>, vector<8x128xf32> -> vector<8x128xf32>
    %312 = arith.addf %307, %311 : vector<8x128xf32>
    %313 = vector.extract_strided_slice %301 {offsets = [16, 0], sizes = [8, 128], strides = [1, 1]} : vector<72x128xf32> to vector<8x128xf32>
    %c2_262 = arith.constant 2 : index
    %c0_263 = arith.constant 0 : index
    %c0_264 = arith.constant 0 : index
    %314 = vector.load %arg2[%c2_262, %c0_263, %c0_264] : memref<9x128x128xf32, #tpu.memory_space<vmem>>, vector<1x128x128xf32>
    %315 = vector.shape_cast %314 : vector<1x128x128xf32> to vector<128x128xf32>
    %cst_265 = arith.constant dense<0.000000e+00> : vector<8x128xf32>
    %316 = tpu.matmul %313, %315, %cst_265 {dimension_numbers = #tpu.dot_dimension_numbers<[1], [0], [0], [1], [0, 0, 1, 1], [], []>} : vector<8x128xf32>, vector<128x128xf32>, vector<8x128xf32> -> vector<8x128xf32>
    %317 = arith.addf %312, %316 : vector<8x128xf32>
    %318 = vector.extract_strided_slice %301 {offsets = [24, 0], sizes = [8, 128], strides = [1, 1]} : vector<72x128xf32> to vector<8x128xf32>
    %c3_266 = arith.constant 3 : index
    %c0_267 = arith.constant 0 : index
    %c0_268 = arith.constant 0 : index
    %319 = vector.load %arg2[%c3_266, %c0_267, %c0_268] : memref<9x128x128xf32, #tpu.memory_space<vmem>>, vector<1x128x128xf32>
    %320 = vector.shape_cast %319 : vector<1x128x128xf32> to vector<128x128xf32>
    %cst_269 = arith.constant dense<0.000000e+00> : vector<8x128xf32>
    %321 = tpu.matmul %318, %320, %cst_269 {dimension_numbers = #tpu.dot_dimension_numbers<[1], [0], [0], [1], [0, 0, 1, 1], [], []>} : vector<8x128xf32>, vector<128x128xf32>, vector<8x128xf32> -> vector<8x128xf32>
    %322 = arith.addf %317, %321 : vector<8x128xf32>
    %323 = vector.extract_strided_slice %301 {offsets = [32, 0], sizes = [8, 128], strides = [1, 1]} : vector<72x128xf32> to vector<8x128xf32>
    %c4_270 = arith.constant 4 : index
    %c0_271 = arith.constant 0 : index
    %c0_272 = arith.constant 0 : index
    %324 = vector.load %arg2[%c4_270, %c0_271, %c0_272] : memref<9x128x128xf32, #tpu.memory_space<vmem>>, vector<1x128x128xf32>
    %325 = vector.shape_cast %324 : vector<1x128x128xf32> to vector<128x128xf32>
    %cst_273 = arith.constant dense<0.000000e+00> : vector<8x128xf32>
    %326 = tpu.matmul %323, %325, %cst_273 {dimension_numbers = #tpu.dot_dimension_numbers<[1], [0], [0], [1], [0, 0, 1, 1], [], []>} : vector<8x128xf32>, vector<128x128xf32>, vector<8x128xf32> -> vector<8x128xf32>
    %327 = arith.addf %322, %326 : vector<8x128xf32>
    %328 = vector.extract_strided_slice %301 {offsets = [40, 0], sizes = [8, 128], strides = [1, 1]} : vector<72x128xf32> to vector<8x128xf32>
    %c5_274 = arith.constant 5 : index
    %c0_275 = arith.constant 0 : index
    %c0_276 = arith.constant 0 : index
    %329 = vector.load %arg2[%c5_274, %c0_275, %c0_276] : memref<9x128x128xf32, #tpu.memory_space<vmem>>, vector<1x128x128xf32>
    %330 = vector.shape_cast %329 : vector<1x128x128xf32> to vector<128x128xf32>
    %cst_277 = arith.constant dense<0.000000e+00> : vector<8x128xf32>
    %331 = tpu.matmul %328, %330, %cst_277 {dimension_numbers = #tpu.dot_dimension_numbers<[1], [0], [0], [1], [0, 0, 1, 1], [], []>} : vector<8x128xf32>, vector<128x128xf32>, vector<8x128xf32> -> vector<8x128xf32>
    %332 = arith.addf %327, %331 : vector<8x128xf32>
    %333 = vector.extract_strided_slice %301 {offsets = [48, 0], sizes = [8, 128], strides = [1, 1]} : vector<72x128xf32> to vector<8x128xf32>
    %c6_278 = arith.constant 6 : index
    %c0_279 = arith.constant 0 : index
    %c0_280 = arith.constant 0 : index
    %334 = vector.load %arg2[%c6_278, %c0_279, %c0_280] : memref<9x128x128xf32, #tpu.memory_space<vmem>>, vector<1x128x128xf32>
    %335 = vector.shape_cast %334 : vector<1x128x128xf32> to vector<128x128xf32>
    %cst_281 = arith.constant dense<0.000000e+00> : vector<8x128xf32>
    %336 = tpu.matmul %333, %335, %cst_281 {dimension_numbers = #tpu.dot_dimension_numbers<[1], [0], [0], [1], [0, 0, 1, 1], [], []>} : vector<8x128xf32>, vector<128x128xf32>, vector<8x128xf32> -> vector<8x128xf32>
    %337 = arith.addf %332, %336 : vector<8x128xf32>
    %338 = vector.extract_strided_slice %301 {offsets = [56, 0], sizes = [8, 128], strides = [1, 1]} : vector<72x128xf32> to vector<8x128xf32>
    %c7_282 = arith.constant 7 : index
    %c0_283 = arith.constant 0 : index
    %c0_284 = arith.constant 0 : index
    %339 = vector.load %arg2[%c7_282, %c0_283, %c0_284] : memref<9x128x128xf32, #tpu.memory_space<vmem>>, vector<1x128x128xf32>
    %340 = vector.shape_cast %339 : vector<1x128x128xf32> to vector<128x128xf32>
    %cst_285 = arith.constant dense<0.000000e+00> : vector<8x128xf32>
    %341 = tpu.matmul %338, %340, %cst_285 {dimension_numbers = #tpu.dot_dimension_numbers<[1], [0], [0], [1], [0, 0, 1, 1], [], []>} : vector<8x128xf32>, vector<128x128xf32>, vector<8x128xf32> -> vector<8x128xf32>
    %342 = arith.addf %337, %341 : vector<8x128xf32>
    %343 = vector.extract_strided_slice %301 {offsets = [64, 0], sizes = [8, 128], strides = [1, 1]} : vector<72x128xf32> to vector<8x128xf32>
    %c8_286 = arith.constant 8 : index
    %c0_287 = arith.constant 0 : index
    %c0_288 = arith.constant 0 : index
    %344 = vector.load %arg2[%c8_286, %c0_287, %c0_288] : memref<9x128x128xf32, #tpu.memory_space<vmem>>, vector<1x128x128xf32>
    %345 = vector.shape_cast %344 : vector<1x128x128xf32> to vector<128x128xf32>
    %cst_289 = arith.constant dense<0.000000e+00> : vector<8x128xf32>
    %346 = tpu.matmul %343, %345, %cst_289 {dimension_numbers = #tpu.dot_dimension_numbers<[1], [0], [0], [1], [0, 0, 1, 1], [], []>} : vector<8x128xf32>, vector<128x128xf32>, vector<8x128xf32> -> vector<8x128xf32>
    %347 = arith.addf %342, %346 : vector<8x128xf32>
    %c5_290 = arith.constant 5 : index
    %c0_291 = arith.constant 0 : index
    %c0_292 = arith.constant 0 : index
    %348 = vector.load %arg6[%c5_290, %c0_291, %c0_292] : memref<6x8x1xf32, #tpu.memory_space<vmem>>, vector<1x8x1xf32>
    %349 = vector.shape_cast %348 : vector<1x8x1xf32> to vector<8x1xf32>
    %350 = vector.broadcast %349 : vector<8x1xf32> to vector<8x128xf32>
    %351 = arith.addf %347, %350 : vector<8x128xf32>
    %c0_293 = arith.constant 0 : index
    %c0_294 = arith.constant 0 : index
    %352 = vector.load %arg7[%c0_293, %c0_294] : memref<8x128xf32, #tpu.memory_space<vmem>>, vector<8x128xf32>
    tpu.vector_store %arg7[%c0_293, %c0_294], %351 {strides = array<i32>} : memref<8x128xf32, #tpu.memory_space<vmem>>, vector<8x128xf32>,
    return
  }
}

</mosaic_0001>

<llo_original>
// kernel: forward.1
$region0: #{forward.1}
  #allocation0 [shape = 'u32[]', space=smem, size = 0x4, offset = 0x4, fixed_abs, tag = 'smem constant byte address 0x4 - core index']
  #allocation1 [shape = 'u32[144,128]{1,0:T(1,128)}', space=vmem, size = 0x12000, scoped, tag = 'internal scratch']
  #allocation2 [shape = 'f32[72,128]{1,0:T(8,128)}', space=vmem, size = 0x9000, scoped, tag = 'scratch operand']
  %s0 = inlined_call_operand.vmem [shape: f32[12,128], index: 0, kind: input, shape index: {}]
  %s1 = inlined_call_operand.vmem [shape: f32[16,128], index: 1, kind: input, shape index: {}]
  %s2 = inlined_call_operand.hbm [shape: f32[9,128,128], index: 2, kind: input, shape index: {}]
  %s3 = inlined_call_operand.vmem [shape: f32[16,12], index: 3, kind: input, shape index: {}]
  %s4 = inlined_call_operand.vmem [shape: f32[16,1], index: 4, kind: input, shape index: {}]
  %s5 = inlined_call_operand.hbm [shape: f32[6,72,72], index: 5, kind: input, shape index: {}]
  %s6 = inlined_call_operand.vmem [shape: f32[6,8,1], index: 6, kind: input, shape index: {}]
  %s7 = inlined_call_operand.vmem [shape: f32[8,128], index: 7, kind: output, shape index: {}]
  %s8 = sld [smem:[#allocation0]]
  $region46: #{forward.1} parent=0
    _
  %s10 = ssub.s32 1, %s8
  %s11 = scalar_select 0, %s10, %s8
  $region1: #{forward.1} parent=0
    #allocation3 [shape = 'u8[589824]{0}', space=vmem, size = 0x90000, scoped, tag = 'input window, operand 2, single buffered']
    #allocation4 [shape = 's32[1]{0}', space=sflag, size = 0x4, scoped, tag = 'scoped memory for forward.1']
    #allocation5 [shape = 'u8[221184]{0}', space=vmem, size = 0x36000, scoped, tag = 'input window, operand 5, single buffered']
    #allocation6 [shape = 's32[1]{0}', space=sflag, size = 0x4, scoped, tag = 'scoped memory for forward.1']
    %12 = vsyncpa [#allocation4], 0
    %13 = vsyncpa [#allocation6], 0
    // Predicated region
    $region2: #{forward.1} parent=1 // pred_check
      _
    $region3: #{forward.1} parent=1 // pred_check_branch
      %15 = sbr.rel (0) target = $region5
    $region4: #{forward.1} parent=1 // pred_region
      _
    $region5: #{forward.1} parent=1 // pred_fallthru
      _
    // Predicated region
    $region6: #{forward.1} parent=1 // pred_check
      _
    $region7: #{forward.1} parent=1 // pred_check_branch
      %17 = sbr.rel (0) target = $region9
    $region8: #{forward.1} parent=1 // pred_region
      _
    $region9: #{forward.1} parent=1 // pred_fallthru
      _
    // Predicated region
    $region10: #{forward.1} parent=1 // pred_check
      _
    $region11: #{forward.1} parent=1 // pred_check_branch
      %19 = sbr.rel (0) target = $region13
    $region12: #{forward.1} parent=1 // pred_region
      %s21 = ssub.s32 18432, 18432
      %22 = vsyncadd [#allocation4], %s21
      %s23 = sshll.u32 [#allocation3], 4
      %s24 = int_to_ptr.vmem [resolvable:$true] %s23
      %29 = dma.hbm_to_vmem [thread:$0]  %s2, 18432, %s24, [#allocation4], 128, 128, 8
    $region13: #{forward.1} parent=1 // pred_fallthru
      _
    // Predicated region
    $region14: #{forward.1} parent=1 // pred_check
      _
    $region15: #{forward.1} parent=1 // pred_check_branch
      %31 = sbr.rel (0) target = $region17
    $region16: #{forward.1} parent=1 // pred_region
      _
    $region17: #{forward.1} parent=1 // pred_fallthru
      _
    // Predicated region
    $region18: #{forward.1} parent=1 // pred_check
      _
    $region19: #{forward.1} parent=1 // pred_check_branch
      %33 = sbr.rel (0) target = $region21
    $region20: #{forward.1} parent=1 // pred_region
      _
    $region21: #{forward.1} parent=1 // pred_fallthru
      _
    // Predicated region
    $region22: #{forward.1} parent=1 // pred_check
      _
    $region23: #{forward.1} parent=1 // pred_check_branch
      %35 = sbr.rel (0) target = $region25
    $region24: #{forward.1} parent=1 // pred_region
      %s37 = ssub.s32 6912, 6912
      %38 = vsyncadd [#allocation6], %s37
      %s39 = sshll.u32 [#allocation5], 4
      %s40 = int_to_ptr.vmem [resolvable:$true] %s39
      %45 = dma.hbm_to_vmem [thread:$0]  %s5, 6912, %s40, [#allocation6], 128, 128, 8
    $region25: #{forward.1} parent=1 // pred_fallthru
      _
    // Predicated region
    $region26: #{forward.1} parent=1 // pred_check
      _
    $region27: #{forward.1} parent=1 // pred_check_branch
      %47 = sbr.rel (0) target = $region29
    $region28: #{forward.1} parent=1 // pred_region
      _
    $region29: #{forward.1} parent=1 // pred_fallthru
      _
    // Predicated region
    $region30: #{forward.1} parent=1 // pred_check
      _
    $region31: #{forward.1} parent=1 // pred_check_branch
      %49 = sbr.rel (0) target = $region33
    $region32: #{forward.1} parent=1 // pred_region
      %50 = dma.done [#allocation4], 18432
    $region33: #{forward.1} parent=1 // pred_fallthru
      _
    // Predicated region
    $region34: #{forward.1} parent=1 // pred_check
      _
    $region35: #{forward.1} parent=1 // pred_check_branch
      %52 = sbr.rel (0) target = $region37
    $region36: #{forward.1} parent=1 // pred_region
      %53 = dma.done [#allocation6], 6912
    $region37: #{forward.1} parent=1 // pred_fallthru
      _
    %54 = vst [vmem:[#allocation2] sm:$0xff] 0.0
    %55 = vst [vmem:[#allocation2 + $0x8] sm:$0xff] 0.0
    %56 = vst [vmem:[#allocation2 + $0x10] sm:$0xff] 0.0
    %57 = vst [vmem:[#allocation2 + $0x18] sm:$0xff] 0.0
    %58 = vst [vmem:[#allocation2 + $0x20] sm:$0xff] 0.0
    %59 = vst [vmem:[#allocation2 + $0x28] sm:$0xff] 0.0
    %60 = vst [vmem:[#allocation2 + $0x30] sm:$0xff] 0.0
    %61 = vst [vmem:[#allocation2 + $0x38] sm:$0xff] 0.0
    %62 = vst [vmem:[#allocation2 + $0x40] sm:$0xff] 0.0
    %v63 = vld [vmem:[%s3] sm:$0xff]
    %v64 = vld [vmem:[%s3 + $0x8] sm:$0xff]
    %v65 = vld [vmem:[%s0] sm:$0xff]
    %v66 = vld [vmem:[%s0 + $0x8] sm:$0xf]
    %v67 = vld [vmem:[%s4] sm:$0xff]
    %v68 = vld [vmem:[%s4 + $0x8] sm:$0xff]
    %70 = vset.pattern.permute.xlu0 0
    %71 = vperm.xlu0 %70, %v67
    %v72 = vpop.permute.xlu0 %71
    %75 = vset.pattern.permute.xlu0 0
    %76 = vperm.xlu0 %75, %v68
    %v77 = vpop.permute.xlu0 %76
    %vm79 = vcmask 97280
    %v81 = vsel %vm79, %v63, 0
    %v84 = vsel %vm79, %v64, 0
    %vm86 = vcmask 1043456
    %v88 = vsel %vm86, %v66, 0
    %90 = vmatprep.subr.mxu0 0.0
    %91 = vmatpush1.msra.mxu0 %v65
    %92 = vmatprep.subr.mxu0 0.0
    %93 = vmatpush1.msra.mxu0 %v88
    %94 = vmatprep.subr.mxu0 0.0
    %95 = vmatpush1.msra.mxu0 0.0
    %96 = vmatprep.subr.mxu0 0.0
    %97 = vmatpush1.msra.mxu0 0.0
    %98 = vmatprep.subr.mxu0 0.0
    %99 = vmatpush1.msra.mxu0 0.0
    %100 = vmatprep.subr.mxu0 0.0
    %101 = vmatpush1.msra.mxu0 0.0
    %102 = vmatprep.subr.mxu0 0.0
    %103 = vmatpush1.msra.mxu0 0.0
    %104 = vmatprep.subr.mxu0 0.0
    %105 = vmatpush1.msra.mxu0 0.0
    %106 = vmatprep.subr.mxu0 0.0
    %107 = vmatpush1.msra.mxu0 0.0
    %108 = vmatprep.subr.mxu0 0.0
    %109 = vmatpush1.msra.mxu0 0.0
    %110 = vmatprep.subr.mxu0 0.0
    %111 = vmatpush1.msra.mxu0 0.0
    %112 = vmatprep.subr.mxu0 0.0
    %113 = vmatpush1.msra.mxu0 0.0
    %114 = vmatprep.subr.mxu0 0.0
    %115 = vmatpush1.msra.mxu0 0.0
    %116 = vmatprep.subr.mxu0 0.0
    %117 = vmatpush1.msra.mxu0 0.0
    %118 = vmatprep.subr.mxu0 0.0
    %119 = vmatpush1.msra.mxu0 0.0
    %120 = vmatprep.subr.mxu0 0.0
    %121 = vmatpush1.msra.mxu0 0.0
    %122 = vmatprep.subr.mxu0 0.0
    %123 = vmatpush1.msra.mxu0 0.0
    %124 = vmatprep.subr.mxu0 0.0
    %125 = vmatpush1.msra.mxu0 0.0
    %126 = vmatprep.subr.mxu0 0.0
    %127 = vmatpush1.msra.mxu0 0.0
    %128 = vmatprep.subr.mxu0 0.0
    %129 = vmatpush1.msra.mxu0 0.0
    %130 = vmatprep.subr.mxu0 0.0
    %131 = vmatpush1.msra.mxu0 0.0
    %132 = vmatprep.subr.mxu0 0.0
    %133 = vmatpush1.msra.mxu0 0.0
    %134 = vmatprep.subr.mxu0 0.0
    %135 = vmatpush1.msra.mxu0 0.0
    %136 = vmatprep.subr.mxu0 0.0
    %137 = vmatpush1.msra.mxu0 0.0
    %138 = vmatprep.subr.mxu0 0.0
    %139 = vmatpush1.msra.mxu0 0.0
    %140 = vmatprep.subr.mxu0 0.0
    %141 = vmatpush1.msra.mxu0 0.0
    %142 = vmatprep.subr.mxu0 0.0
    %143 = vmatpush1.msra.mxu0 0.0
    %144 = vmatprep.subr.mxu0 0.0
    %145 = vmatpush1.msra.mxu0 0.0
    %146 = vmatprep.subr.mxu0 0.0
    %147 = vmatpush1.msra.mxu0 0.0
    %148 = vmatprep.subr.mxu0 0.0
    %149 = vmatpush1.msra.mxu0 0.0
    %150 = vmatprep.subr.mxu0 0.0
    %151 = vmatpush1.msra.mxu0 0.0
    %152 = vmatprep.subr.mxu0 0.0
    %153 = vmatpush1.msra.mxu0 0.0
    %154 = vmatprep.mubr.f32.mxu0 0.0
    %155 = vmatmul.mubr.f32.gmra.mrb[0].mxu0 %v81
    %v156 = vpop.f32.mrb[0].mxu0
    %v157 = vadd.f32 %v72, %v156
    %v158 = vpop.f32.mrb[0].mxu0
    %159 = vmatprep.mubr.f32.mxu0 0.0
    %160 = vmatmul.mubr.f32.gmra.mrb[0].mxu0 %v84
    %v161 = vpop.f32.mrb[0].mxu0
    %v162 = vadd.f32 %v77, %v161
    %v163 = vpop.f32.mrb[0].mxu0
    %164 = vdwg.mxu0
    %v165 = vmax.f32 %v157, 0.0
    %v166 = vmax.f32 %v162, 0.0
    %167 = vst [vmem:[#allocation2 + $0x28] sm:$0xff] %v165
    %168 = vst [vmem:[#allocation2 + $0x30] sm:$0xff] %v166
    %v169 = vld [vmem:[%s1] sm:$0xff]
    %v170 = vld [vmem:[%s1 + $0x8] sm:$0xff]
    %171 = vst [vmem:[#allocation2 + $0x38] sm:$0xff] %v169
    %172 = vst [vmem:[#allocation2 + $0x40] sm:$0xff] %v170
    %v173 = vld [vmem:[#allocation2] sm:$0xff]
    %v174 = vld [vmem:[#allocation2 + $0x8] sm:$0xff]
    %v175 = vld [vmem:[#allocation2 + $0x10] sm:$0xff]
    %v176 = vld [vmem:[#allocation2 + $0x18] sm:$0xff]
    %v177 = vld [vmem:[#allocation2 + $0x20] sm:$0xff]
    %v178 = vld [vmem:[#allocation2 + $0x28] sm:$0xff]
    %v179 = vld [vmem:[#allocation2 + $0x30] sm:$0xff]
    %v180 = vld [vmem:[#allocation2 + $0x38] sm:$0xff]
    %v181 = vld [vmem:[#allocation2 + $0x40] sm:$0xff]
    %v182 = vld [vmem:[#allocation5] sm:$0xff]
    %v183 = vld [vmem:[#allocation5 + $0x8] sm:$0xff]
    %v184 = vld [vmem:[#allocation5 + $0x10] sm:$0xff]
    %v185 = vld [vmem:[#allocation5 + $0x18] sm:$0xff]
    %v186 = vld [vmem:[#allocation5 + $0x20] sm:$0xff]
    %v187 = vld [vmem:[#allocation5 + $0x28] sm:$0xff]
    %v188 = vld [vmem:[#allocation5 + $0x30] sm:$0xff]
    %v189 = vld [vmem:[#allocation5 + $0x38] sm:$0xff]
    %v190 = vld [vmem:[#allocation5 + $0x40] sm:$0xff]
    %vm191 = vcmask 588800
    %v193 = vsel %vm191, %v182, 0
    %v196 = vsel %vm191, %v183, 0
    %v199 = vsel %vm191, %v184, 0
    %v202 = vsel %vm191, %v185, 0
    %v205 = vsel %vm191, %v186, 0
    %v208 = vsel %vm191, %v187, 0
    %v211 = vsel %vm191, %v188, 0
    %v214 = vsel %vm191, %v189, 0
    %v217 = vsel %vm191, %v190, 0
    %219 = vmatprep.subr.mxu0 0.0
    %220 = vmatpush1.msra.mxu0 %v173
    %221 = vmatprep.subr.mxu0 0.0
    %222 = vmatpush1.msra.mxu0 %v174
    %223 = vmatprep.subr.mxu0 0.0
    %224 = vmatpush1.msra.mxu0 %v175
    %225 = vmatprep.subr.mxu0 0.0
    %226 = vmatpush1.msra.mxu0 %v176
    %227 = vmatprep.subr.mxu0 0.0
    %228 = vmatpush1.msra.mxu0 %v177
    %229 = vmatprep.subr.mxu0 0.0
    %230 = vmatpush1.msra.mxu0 %v178
    %231 = vmatprep.subr.mxu0 0.0
    %232 = vmatpush1.msra.mxu0 %v179
    %233 = vmatprep.subr.mxu0 0.0
    %234 = vmatpush1.msra.mxu0 %v180
    %235 = vmatprep.subr.mxu0 0.0
    %236 = vmatpush1.msra.mxu0 %v181
    %237 = vmatprep.subr.mxu0 0.0
    %238 = vmatpush1.msra.mxu0 0.0
    %239 = vmatprep.subr.mxu0 0.0
    %240 = vmatpush1.msra.mxu0 0.0
    %241 = vmatprep.subr.mxu0 0.0
    %242 = vmatpush1.msra.mxu0 0.0
    %243 = vmatprep.subr.mxu0 0.0
    %244 = vmatpush1.msra.mxu0 0.0
    %245 = vmatprep.subr.mxu0 0.0
    %246 = vmatpush1.msra.mxu0 0.0
    %247 = vmatprep.subr.mxu0 0.0
    %248 = vmatpush1.msra.mxu0 0.0
    %249 = vmatprep.subr.mxu0 0.0
    %250 = vmatpush1.msra.mxu0 0.0
    %251 = vmatprep.subr.mxu0 0.0
    %252 = vmatpush1.msra.mxu0 0.0
    %253 = vmatprep.subr.mxu0 0.0
    %254 = vmatpush1.msra.mxu0 0.0
    %255 = vmatprep.subr.mxu0 0.0
    %256 = vmatpush1.msra.mxu0 0.0
    %257 = vmatprep.subr.mxu0 0.0
    %258 = vmatpush1.msra.mxu0 0.0
    %259 = vmatprep.subr.mxu0 0.0
    %260 = vmatpush1.msra.mxu0 0.0
    %261 = vmatprep.subr.mxu0 0.0
    %262 = vmatpush1.msra.mxu0 0.0
    %263 = vmatprep.subr.mxu0 0.0
    %264 = vmatpush1.msra.mxu0 0.0
    %265 = vmatprep.subr.mxu0 0.0
    %266 = vmatpush1.msra.mxu0 0.0
    %267 = vmatprep.subr.mxu0 0.0
    %268 = vmatpush1.msra.mxu0 0.0
    %269 = vmatprep.subr.mxu0 0.0
    %270 = vmatpush1.msra.mxu0 0.0
    %271 = vmatprep.subr.mxu0 0.0
    %272 = vmatpush1.msra.mxu0 0.0
    %273 = vmatprep.subr.mxu0 0.0
    %274 = vmatpush1.msra.mxu0 0.0
    %275 = vmatprep.subr.mxu0 0.0
    %276 = vmatpush1.msra.mxu0 0.0
    %277 = vmatprep.subr.mxu0 0.0
    %278 = vmatpush1.msra.mxu0 0.0
    %279 = vmatprep.subr.mxu0 0.0
    %280 = vmatpush1.msra.mxu0 0.0
    %281 = vmatprep.subr.mxu0 0.0
    %282 = vmatpush1.msra.mxu0 0.0
    %283 = vmatprep.mubr.f32.mxu0 0.0
    %284 = vmatmul.mubr.f32.gmra.mrb[0].mxu0 %v193
    %v285 = vpop.f32.mrb[0].mxu0
    %v286 = vadd.f32 0.0, %v285
    %v287 = vpop.f32.mrb[0].mxu0
    %288 = vmatprep.mubr.f32.mxu0 0.0
    %289 = vmatmul.mubr.f32.gmra.mrb[0].mxu0 %v196
    %v290 = vpop.f32.mrb[0].mxu0
    %v291 = vadd.f32 0.0, %v290
    %v292 = vpop.f32.mrb[0].mxu0
    %293 = vmatprep.mubr.f32.mxu0 0.0
    %294 = vmatmul.mubr.f32.gmra.mrb[0].mxu0 %v199
    %v295 = vpop.f32.mrb[0].mxu0
    %v296 = vadd.f32 0.0, %v295
    %v297 = vpop.f32.mrb[0].mxu0
    %298 = vmatprep.mubr.f32.mxu0 0.0
    %299 = vmatmul.mubr.f32.gmra.mrb[0].mxu0 %v202
    %v300 = vpop.f32.mrb[0].mxu0
    %v301 = vadd.f32 0.0, %v300
    %v302 = vpop.f32.mrb[0].mxu0
    %303 = vmatprep.mubr.f32.mxu0 0.0
    %304 = vmatmul.mubr.f32.gmra.mrb[0].mxu0 %v205
    %v305 = vpop.f32.mrb[0].mxu0
    %v306 = vadd.f32 0.0, %v305
    %v307 = vpop.f32.mrb[0].mxu0
    %308 = vmatprep.mubr.f32.mxu0 0.0
    %309 = vmatmul.mubr.f32.gmra.mrb[0].mxu0 %v208
    %v310 = vpop.f32.mrb[0].mxu0
    %v311 = vadd.f32 0.0, %v310
    %v312 = vpop.f32.mrb[0].mxu0
    %313 = vmatprep.mubr.f32.mxu0 0.0
    %314 = vmatmul.mubr.f32.gmra.mrb[0].mxu0 %v211
    %v315 = vpop.f32.mrb[0].mxu0
    %v316 = vadd.f32 0.0, %v315
    %v317 = vpop.f32.mrb[0].mxu0
    %318 = vmatprep.mubr.f32.mxu0 0.0
    %319 = vmatmul.mubr.f32.gmra.mrb[0].mxu0 %v214
    %v320 = vpop.f32.mrb[0].mxu0
    %v321 = vadd.f32 0.0, %v320
    %v322 = vpop.f32.mrb[0].mxu0
    %323 = vmatprep.mubr.f32.mxu0 0.0
    %324 = vmatmul.mubr.f32.gmra.mrb[0].mxu0 %v217
    %v325 = vpop.f32.mrb[0].mxu0
    %v326 = vadd.f32 0.0, %v325
    %v327 = vpop.f32.mrb[0].mxu0
    %328 = vdwg.mxu0
    %v329 = vld [vmem:[#allocation3] sm:$0xff]
    %v330 = vld [vmem:[#allocation3 + $0x8] sm:$0xff]
    %v331 = vld [vmem:[#allocation3 + $0x10] sm:$0xff]
    %v332 = vld [vmem:[#allocation3 + $0x18] sm:$0xff]
    %v333 = vld [vmem:[#allocation3 + $0x20] sm:$0xff]
    %v334 = vld [vmem:[#allocation3 + $0x28] sm:$0xff]
    %v335 = vld [vmem:[#allocation3 + $0x30] sm:$0xff]
    %v336 = vld [vmem:[#allocation3 + $0x38] sm:$0xff]
    %v337 = vld [vmem:[#allocation3 + $0x40] sm:$0xff]
    %v338 = vld [vmem:[#allocation3 + $0x48] sm:$0xff]
    %v339 = vld [vmem:[#allocation3 + $0x50] sm:$0xff]
    %v340 = vld [vmem:[#allocation3 + $0x58] sm:$0xff]
    %v341 = vld [vmem:[#allocation3 + $0x60] sm:$0xff]
    %v342 = vld [vmem:[#allocation3 + $0x68] sm:$0xff]
    %v343 = vld [vmem:[#allocation3 + $0x70] sm:$0xff]
    %v344 = vld [vmem:[#allocation3 + $0x78] sm:$0xff]
    %s345 = scalar_lea.vmem [#allocation3], 128
    %v346 = vld [vmem:[%s345] sm:$0xff]
    %v347 = vld [vmem:[%s345 + $0x8] sm:$0xff]
    %v348 = vld [vmem:[%s345 + $0x10] sm:$0xff]
    %v349 = vld [vmem:[%s345 + $0x18] sm:$0xff]
    %v350 = vld [vmem:[%s345 + $0x20] sm:$0xff]
    %v351 = vld [vmem:[%s345 + $0x28] sm:$0xff]
    %v352 = vld [vmem:[%s345 + $0x30] sm:$0xff]
    %v353 = vld [vmem:[%s345 + $0x38] sm:$0xff]
    %v354 = vld [vmem:[%s345 + $0x40] sm:$0xff]
    %v355 = vld [vmem:[%s345 + $0x48] sm:$0xff]
    %v356 = vld [vmem:[%s345 + $0x50] sm:$0xff]
    %v357 = vld [vmem:[%s345 + $0x58] sm:$0xff]
    %v358 = vld [vmem:[%s345 + $0x60] sm:$0xff]
    %v359 = vld [vmem:[%s345 + $0x68] sm:$0xff]
    %v360 = vld [vmem:[%s345 + $0x70] sm:$0xff]
    %v361 = vld [vmem:[%s345 + $0x78] sm:$0xff]
    %362 = vmatprep.subr.mxu0 0.0
    %363 = vmatpush1.msra.mxu0 %v346
    %364 = vmatprep.subr.mxu0 0.0
    %365 = vmatpush1.msra.mxu0 %v347
    %366 = vmatprep.subr.mxu0 0.0
    %367 = vmatpush1.msra.mxu0 %v348
    %368 = vmatprep.subr.mxu0 0.0
    %369 = vmatpush1.msra.mxu0 %v349
    %370 = vmatprep.subr.mxu0 0.0
    %371 = vmatpush1.msra.mxu0 %v350
    %372 = vmatprep.subr.mxu0 0.0
    %373 = vmatpush1.msra.mxu0 %v351
    %374 = vmatprep.subr.mxu0 0.0
    %375 = vmatpush1.msra.mxu0 %v352
    %376 = vmatprep.subr.mxu0 0.0
    %377 = vmatpush1.msra.mxu0 %v353
    %378 = vmatprep.subr.mxu0 0.0
    %379 = vmatpush1.msra.mxu0 %v354
    %380 = vmatprep.subr.mxu0 0.0
    %381 = vmatpush1.msra.mxu0 %v355
    %382 = vmatprep.subr.mxu0 0.0
    %383 = vmatpush1.msra.mxu0 %v356
    %384 = vmatprep.subr.mxu0 0.0
    %385 = vmatpush1.msra.mxu0 %v357
    %386 = vmatprep.subr.mxu0 0.0
    %387 = vmatpush1.msra.mxu0 %v358
    %388 = vmatprep.subr.mxu0 0.0
    %389 = vmatpush1.msra.mxu0 %v359
    %390 = vmatprep.subr.mxu0 0.0
    %391 = vmatpush1.msra.mxu0 %v360
    %392 = vmatprep.subr.mxu0 0.0
    %393 = vmatpush1.msra.mxu0 %v361
    %394 = vmatprep.subr.mxu0 0.0
    %395 = vmatpush1.msra.mxu0 0.0
    %396 = vmatprep.subr.mxu0 0.0
    %397 = vmatpush1.msra.mxu0 0.0
    %398 = vmatprep.subr.mxu0 0.0
    %399 = vmatpush1.msra.mxu0 0.0
    %400 = vmatprep.subr.mxu0 0.0
    %401 = vmatpush1.msra.mxu0 0.0
    %402 = vmatprep.subr.mxu0 0.0
    %403 = vmatpush1.msra.mxu0 0.0
    %404 = vmatprep.subr.mxu0 0.0
    %405 = vmatpush1.msra.mxu0 0.0
    %406 = vmatprep.subr.mxu0 0.0
    %407 = vmatpush1.msra.mxu0 0.0
    %408 = vmatprep.subr.mxu0 0.0
    %409 = vmatpush1.msra.mxu0 0.0
    %410 = vmatprep.subr.mxu0 0.0
    %411 = vmatpush1.msra.mxu0 0.0
    %412 = vmatprep.subr.mxu0 0.0
    %413 = vmatpush1.msra.mxu0 0.0
    %414 = vmatprep.subr.mxu0 0.0
    %415 = vmatpush1.msra.mxu0 0.0
    %416 = vmatprep.subr.mxu0 0.0
    %417 = vmatpush1.msra.mxu0 0.0
    %418 = vmatprep.subr.mxu0 0.0
    %419 = vmatpush1.msra.mxu0 0.0
    %420 = vmatprep.subr.mxu0 0.0
    %421 = vmatpush1.msra.mxu0 0.0
    %422 = vmatprep.subr.mxu0 0.0
    %423 = vmatpush1.msra.mxu0 0.0
    %424 = vmatprep.subr.mxu0 0.0
    %425 = vmatpush1.msra.mxu0 0.0
    %426 = vmatprep.mubr.f32.mxu0 0.0
    %427 = vmatmul.mubr.f32.gmra.mrb[0].mxu0 %v291
    %v428 = vpop.f32.mrb[0].mxu0
    %v429 = vadd.f32 0.0, %v428
    %v430 = vpop.f32.mrb[0].mxu0
    %431 = vdwg.mxu0
    %432 = vmatprep.subr.mxu0 0.0
    %433 = vmatpush1.msra.mxu0 %v329
    %434 = vmatprep.subr.mxu0 0.0
    %435 = vmatpush1.msra.mxu0 %v330
    %436 = vmatprep.subr.mxu0 0.0
    %437 = vmatpush1.msra.mxu0 %v331
    %438 = vmatprep.subr.mxu0 0.0
    %439 = vmatpush1.msra.mxu0 %v332
    %440 = vmatprep.subr.mxu0 0.0
    %441 = vmatpush1.msra.mxu0 %v333
    %442 = vmatprep.subr.mxu0 0.0
    %443 = vmatpush1.msra.mxu0 %v334
    %444 = vmatprep.subr.mxu0 0.0
    %445 = vmatpush1.msra.mxu0 %v335
    %446 = vmatprep.subr.mxu0 0.0
    %447 = vmatpush1.msra.mxu0 %v336
    %448 = vmatprep.subr.mxu0 0.0
    %449 = vmatpush1.msra.mxu0 %v337
    %450 = vmatprep.subr.mxu0 0.0
    %451 = vmatpush1.msra.mxu0 %v338
    %452 = vmatprep.subr.mxu0 0.0
    %453 = vmatpush1.msra.mxu0 %v339
    %454 = vmatprep.subr.mxu0 0.0
    %455 = vmatpush1.msra.mxu0 %v340
    %456 = vmatprep.subr.mxu0 0.0
    %457 = vmatpush1.msra.mxu0 %v341
    %458 = vmatprep.subr.mxu0 0.0
    %459 = vmatpush1.msra.mxu0 %v342
    %460 = vmatprep.subr.mxu0 0.0
    %461 = vmatpush1.msra.mxu0 %v343
    %462 = vmatprep.subr.mxu0 0.0
    %463 = vmatpush1.msra.mxu0 %v344
    %464 = vmatprep.subr.mxu0 0.0
    %465 = vmatpush1.msra.mxu0 0.0
    %466 = vmatprep.subr.mxu0 0.0
    %467 = vmatpush1.msra.mxu0 0.0
    %468 = vmatprep.subr.mxu0 0.0
    %469 = vmatpush1.msra.mxu0 0.0
    %470 = vmatprep.subr.mxu0 0.0
    %471 = vmatpush1.msra.mxu0 0.0
    %472 = vmatprep.subr.mxu0 0.0
    %473 = vmatpush1.msra.mxu0 0.0
    %474 = vmatprep.subr.mxu0 0.0
    %475 = vmatpush1.msra.mxu0 0.0
    %476 = vmatprep.subr.mxu0 0.0
    %477 = vmatpush1.msra.mxu0 0.0
    %478 = vmatprep.subr.mxu0 0.0
    %479 = vmatpush1.msra.mxu0 0.0
    %480 = vmatprep.subr.mxu0 0.0
    %481 = vmatpush1.msra.mxu0 0.0
    %482 = vmatprep.subr.mxu0 0.0
    %483 = vmatpush1.msra.mxu0 0.0
    %484 = vmatprep.subr.mxu0 0.0
    %485 = vmatpush1.msra.mxu0 0.0
    %486 = vmatprep.subr.mxu0 0.0
    %487 = vmatpush1.msra.mxu0 0.0
    %488 = vmatprep.subr.mxu0 0.0
    %489 = vmatpush1.msra.mxu0 0.0
    %490 = vmatprep.subr.mxu0 0.0
    %491 = vmatpush1.msra.mxu0 0.0
    %492 = vmatprep.subr.mxu0 0.0
    %493 = vmatpush1.msra.mxu0 0.0
    %494 = vmatprep.subr.mxu0 0.0
    %495 = vmatpush1.msra.mxu0 0.0
    %496 = vmatprep.mubr.f32.mxu0 0.0
    %497 = vmatmul.mubr.f32.gmra.mrb[0].mxu0 %v286
    %v498 = vpop.f32.mrb[0].mxu0
    %v499 = vadd.f32 %v429, %v498
    %v500 = vpop.f32.mrb[0].mxu0
    %501 = vdwg.mxu0
    %s502 = scalar_lea.vmem [#allocation3], 256
    %v503 = vld [vmem:[%s502] sm:$0xff]
    %v504 = vld [vmem:[%s502 + $0x8] sm:$0xff]
    %v505 = vld [vmem:[%s502 + $0x10] sm:$0xff]
    %v506 = vld [vmem:[%s502 + $0x18] sm:$0xff]
    %v507 = vld [vmem:[%s502 + $0x20] sm:$0xff]
    %v508 = vld [vmem:[%s502 + $0x28] sm:$0xff]
    %v509 = vld [vmem:[%s502 + $0x30] sm:$0xff]
    %v510 = vld [vmem:[%s502 + $0x38] sm:$0xff]
    %v511 = vld [vmem:[%s502 + $0x40] sm:$0xff]
    %v512 = vld [vmem:[%s502 + $0x48] sm:$0xff]
    %v513 = vld [vmem:[%s502 + $0x50] sm:$0xff]
    %v514 = vld [vmem:[%s502 + $0x58] sm:$0xff]
    %v515 = vld [vmem:[%s502 + $0x60] sm:$0xff]
    %v516 = vld [vmem:[%s502 + $0x68] sm:$0xff]
    %v517 = vld [vmem:[%s502 + $0x70] sm:$0xff]
    %v518 = vld [vmem:[%s502 + $0x78] sm:$0xff]
    %519 = vmatprep.subr.mxu0 0.0
    %520 = vmatpush1.msra.mxu0 %v503
    %521 = vmatprep.subr.mxu0 0.0
    %522 = vmatpush1.msra.mxu0 %v504
    %523 = vmatprep.subr.mxu0 0.0
    %524 = vmatpush1.msra.mxu0 %v505
    %525 = vmatprep.subr.mxu0 0.0
    %526 = vmatpush1.msra.mxu0 %v506
    %527 = vmatprep.subr.mxu0 0.0
    %528 = vmatpush1.msra.mxu0 %v507
    %529 = vmatprep.subr.mxu0 0.0
    %530 = vmatpush1.msra.mxu0 %v508
    %531 = vmatprep.subr.mxu0 0.0
    %532 = vmatpush1.msra.mxu0 %v509
    %533 = vmatprep.subr.mxu0 0.0
    %534 = vmatpush1.msra.mxu0 %v510
    %535 = vmatprep.subr.mxu0 0.0
    %536 = vmatpush1.msra.mxu0 %v511
    %537 = vmatprep.subr.mxu0 0.0
    %538 = vmatpush1.msra.mxu0 %v512
    %539 = vmatprep.subr.mxu0 0.0
    %540 = vmatpush1.msra.mxu0 %v513
    %541 = vmatprep.subr.mxu0 0.0
    %542 = vmatpush1.msra.mxu0 %v514
    %543 = vmatprep.subr.mxu0 0.0
    %544 = vmatpush1.msra.mxu0 %v515
    %545 = vmatprep.subr.mxu0 0.0
    %546 = vmatpush1.msra.mxu0 %v516
    %547 = vmatprep.subr.mxu0 0.0
    %548 = vmatpush1.msra.mxu0 %v517
    %549 = vmatprep.subr.mxu0 0.0
    %550 = vmatpush1.msra.mxu0 %v518
    %551 = vmatprep.subr.mxu0 0.0
    %552 = vmatpush1.msra.mxu0 0.0
    %553 = vmatprep.subr.mxu0 0.0
    %554 = vmatpush1.msra.mxu0 0.0
    %555 = vmatprep.subr.mxu0 0.0
    %556 = vmatpush1.msra.mxu0 0.0
    %557 = vmatprep.subr.mxu0 0.0
    %558 = vmatpush1.msra.mxu0 0.0
    %559 = vmatprep.subr.mxu0 0.0
    %560 = vmatpush1.msra.mxu0 0.0
    %561 = vmatprep.subr.mxu0 0.0
    %562 = vmatpush1.msra.mxu0 0.0
    %563 = vmatprep.subr.mxu0 0.0
    %564 = vmatpush1.msra.mxu0 0.0
    %565 = vmatprep.subr.mxu0 0.0
    %566 = vmatpush1.msra.mxu0 0.0
    %567 = vmatprep.subr.mxu0 0.0
    %568 = vmatpush1.msra.mxu0 0.0
    %569 = vmatprep.subr.mxu0 0.0
    %570 = vmatpush1.msra.mxu0 0.0
    %571 = vmatprep.subr.mxu0 0.0
    %572 = vmatpush1.msra.mxu0 0.0
    %573 = vmatprep.subr.mxu0 0.0
    %574 = vmatpush1.msra.mxu0 0.0
    %575 = vmatprep.subr.mxu0 0.0
    %576 = vmatpush1.msra.mxu0 0.0
    %577 = vmatprep.subr.mxu0 0.0
    %578 = vmatpush1.msra.mxu0 0.0
    %579 = vmatprep.subr.mxu0 0.0
    %580 = vmatpush1.msra.mxu0 0.0
    %581 = vmatprep.subr.mxu0 0.0
    %582 = vmatpush1.msra.mxu0 0.0
    %583 = vmatprep.mubr.f32.mxu0 0.0
    %584 = vmatmul.mubr.f32.gmra.mrb[0].mxu0 %v296
    %v585 = vpop.f32.mrb[0].mxu0
    %v586 = vadd.f32 0.0, %v585
    %v587 = vpop.f32.mrb[0].mxu0
    %588 = vdwg.mxu0
    %v589 = vadd.f32 %v499, %v586
    %s590 = scalar_lea.vmem [#allocation3], 384
    %v591 = vld [vmem:[%s590] sm:$0xff]
    %v592 = vld [vmem:[%s590 + $0x8] sm:$0xff]
    %v593 = vld [vmem:[%s590 + $0x10] sm:$0xff]
    %v594 = vld [vmem:[%s590 + $0x18] sm:$0xff]
    %v595 = vld [vmem:[%s590 + $0x20] sm:$0xff]
    %v596 = vld [vmem:[%s590 + $0x28] sm:$0xff]
    %v597 = vld [vmem:[%s590 + $0x30] sm:$0xff]
    %v598 = vld [vmem:[%s590 + $0x38] sm:$0xff]
    %v599 = vld [vmem:[%s590 + $0x40] sm:$0xff]
    %v600 = vld [vmem:[%s590 + $0x48] sm:$0xff]
    %v601 = vld [vmem:[%s590 + $0x50] sm:$0xff]
    %v602 = vld [vmem:[%s590 + $0x58] sm:$0xff]
    %v603 = vld [vmem:[%s590 + $0x60] sm:$0xff]
    %v604 = vld [vmem:[%s590 + $0x68] sm:$0xff]
    %v605 = vld [vmem:[%s590 + $0x70] sm:$0xff]
    %v606 = vld [vmem:[%s590 + $0x78] sm:$0xff]
    %607 = vmatprep.subr.mxu0 0.0
    %608 = vmatpush1.msra.mxu0 %v591
    %609 = vmatprep.subr.mxu0 0.0
    %610 = vmatpush1.msra.mxu0 %v592
    %611 = vmatprep.subr.mxu0 0.0
    %612 = vmatpush1.msra.mxu0 %v593
    %613 = vmatprep.subr.mxu0 0.0
    %614 = vmatpush1.msra.mxu0 %v594
    %615 = vmatprep.subr.mxu0 0.0
    %616 = vmatpush1.msra.mxu0 %v595
    %617 = vmatprep.subr.mxu0 0.0
    %618 = vmatpush1.msra.mxu0 %v596
    %619 = vmatprep.subr.mxu0 0.0
    %620 = vmatpush1.msra.mxu0 %v597
    %621 = vmatprep.subr.mxu0 0.0
    %622 = vmatpush1.msra.mxu0 %v598
    %623 = vmatprep.subr.mxu0 0.0
    %624 = vmatpush1.msra.mxu0 %v599
    %625 = vmatprep.subr.mxu0 0.0
    %626 = vmatpush1.msra.mxu0 %v600
    %627 = vmatprep.subr.mxu0 0.0
    %628 = vmatpush1.msra.mxu0 %v601
    %629 = vmatprep.subr.mxu0 0.0
    %630 = vmatpush1.msra.mxu0 %v602
    %631 = vmatprep.subr.mxu0 0.0
    %632 = vmatpush1.msra.mxu0 %v603
    %633 = vmatprep.subr.mxu0 0.0
    %634 = vmatpush1.msra.mxu0 %v604
    %635 = vmatprep.subr.mxu0 0.0
    %636 = vmatpush1.msra.mxu0 %v605
    %637 = vmatprep.subr.mxu0 0.0
    %638 = vmatpush1.msra.mxu0 %v606
    %639 = vmatprep.subr.mxu0 0.0
    %640 = vmatpush1.msra.mxu0 0.0
    %641 = vmatprep.subr.mxu0 0.0
    %642 = vmatpush1.msra.mxu0 0.0
    %643 = vmatprep.subr.mxu0 0.0
    %644 = vmatpush1.msra.mxu0 0.0
    %645 = vmatprep.subr.mxu0 0.0
    %646 = vmatpush1.msra.mxu0 0.0
    %647 = vmatprep.subr.mxu0 0.0
    %648 = vmatpush1.msra.mxu0 0.0
    %649 = vmatprep.subr.mxu0 0.0
    %650 = vmatpush1.msra.mxu0 0.0
    %651 = vmatprep.subr.mxu0 0.0
    %652 = vmatpush1.msra.mxu0 0.0
    %653 = vmatprep.subr.mxu0 0.0
    %654 = vmatpush1.msra.mxu0 0.0
    %655 = vmatprep.subr.mxu0 0.0
    %656 = vmatpush1.msra.mxu0 0.0
    %657 = vmatprep.subr.mxu0 0.0
    %658 = vmatpush1.msra.mxu0 0.0
    %659 = vmatprep.subr.mxu0 0.0
    %660 = vmatpush1.msra.mxu0 0.0
    %661 = vmatprep.subr.mxu0 0.0
    %662 = vmatpush1.msra.mxu0 0.0
    %663 = vmatprep.subr.mxu0 0.0
    %664 = vmatpush1.msra.mxu0 0.0
    %665 = vmatprep.subr.mxu0 0.0
    %666 = vmatpush1.msra.mxu0 0.0
    %667 = vmatprep.subr.mxu0 0.0
    %668 = vmatpush1.msra.mxu0 0.0
    %669 = vmatprep.subr.mxu0 0.0
    %670 = vmatpush1.msra.mxu0 0.0
    %671 = vmatprep.mubr.f32.mxu0 0.0
    %672 = vmatmul.mubr.f32.gmra.mrb[0].mxu0 %v301
    %v673 = vpop.f32.mrb[0].mxu0
    %v674 = vadd.f32 0.0, %v673
    %v675 = vpop.f32.mrb[0].mxu0
    %676 = vdwg.mxu0
    %v677 = vadd.f32 %v589, %v674
    %s678 = scalar_lea.vmem [#allocation3], 512
    %v679 = vld [vmem:[%s678] sm:$0xff]
    %v680 = vld [vmem:[%s678 + $0x8] sm:$0xff]
    %v681 = vld [vmem:[%s678 + $0x10] sm:$0xff]
    %v682 = vld [vmem:[%s678 + $0x18] sm:$0xff]
    %v683 = vld [vmem:[%s678 + $0x20] sm:$0xff]
    %v684 = vld [vmem:[%s678 + $0x28] sm:$0xff]
    %v685 = vld [vmem:[%s678 + $0x30] sm:$0xff]
    %v686 = vld [vmem:[%s678 + $0x38] sm:$0xff]
    %v687 = vld [vmem:[%s678 + $0x40] sm:$0xff]
    %v688 = vld [vmem:[%s678 + $0x48] sm:$0xff]
    %v689 = vld [vmem:[%s678 + $0x50] sm:$0xff]
    %v690 = vld [vmem:[%s678 + $0x58] sm:$0xff]
    %v691 = vld [vmem:[%s678 + $0x60] sm:$0xff]
    %v692 = vld [vmem:[%s678 + $0x68] sm:$0xff]
    %v693 = vld [vmem:[%s678 + $0x70] sm:$0xff]
    %v694 = vld [vmem:[%s678 + $0x78] sm:$0xff]
    %695 = vmatprep.subr.mxu0 0.0
    %696 = vmatpush1.msra.mxu0 %v679
    %697 = vmatprep.subr.mxu0 0.0
    %698 = vmatpush1.msra.mxu0 %v680
    %699 = vmatprep.subr.mxu0 0.0
    %700 = vmatpush1.msra.mxu0 %v681
    %701 = vmatprep.subr.mxu0 0.0
    %702 = vmatpush1.msra.mxu0 %v682
    %703 = vmatprep.subr.mxu0 0.0
    %704 = vmatpush1.msra.mxu0 %v683
    %705 = vmatprep.subr.mxu0 0.0
    %706 = vmatpush1.msra.mxu0 %v684
    %707 = vmatprep.subr.mxu0 0.0
    %708 = vmatpush1.msra.mxu0 %v685
    %709 = vmatprep.subr.mxu0 0.0
    %710 = vmatpush1.msra.mxu0 %v686
    %711 = vmatprep.subr.mxu0 0.0
    %712 = vmatpush1.msra.mxu0 %v687
    %713 = vmatprep.subr.mxu0 0.0
    %714 = vmatpush1.msra.mxu0 %v688
    %715 = vmatprep.subr.mxu0 0.0
    %716 = vmatpush1.msra.mxu0 %v689
    %717 = vmatprep.subr.mxu0 0.0
    %718 = vmatpush1.msra.mxu0 %v690
    %719 = vmatprep.subr.mxu0 0.0
    %720 = vmatpush1.msra.mxu0 %v691
    %721 = vmatprep.subr.mxu0 0.0
    %722 = vmatpush1.msra.mxu0 %v692
    %723 = vmatprep.subr.mxu0 0.0
    %724 = vmatpush1.msra.mxu0 %v693
    %725 = vmatprep.subr.mxu0 0.0
    %726 = vmatpush1.msra.mxu0 %v694
    %727 = vmatprep.subr.mxu0 0.0
    %728 = vmatpush1.msra.mxu0 0.0
    %729 = vmatprep.subr.mxu0 0.0
    %730 = vmatpush1.msra.mxu0 0.0
    %731 = vmatprep.subr.mxu0 0.0
    %732 = vmatpush1.msra.mxu0 0.0
    %733 = vmatprep.subr.mxu0 0.0
    %734 = vmatpush1.msra.mxu0 0.0
    %735 = vmatprep.subr.mxu0 0.0
    %736 = vmatpush1.msra.mxu0 0.0
    %737 = vmatprep.subr.mxu0 0.0
    %738 = vmatpush1.msra.mxu0 0.0
    %739 = vmatprep.subr.mxu0 0.0
    %740 = vmatpush1.msra.mxu0 0.0
    %741 = vmatprep.subr.mxu0 0.0
    %742 = vmatpush1.msra.mxu0 0.0
    %743 = vmatprep.subr.mxu0 0.0
    %744 = vmatpush1.msra.mxu0 0.0
    %745 = vmatprep.subr.mxu0 0.0
    %746 = vmatpush1.msra.mxu0 0.0
    %747 = vmatprep.subr.mxu0 0.0
    %748 = vmatpush1.msra.mxu0 0.0
    %749 = vmatprep.subr.mxu0 0.0
    %750 = vmatpush1.msra.mxu0 0.0
    %751 = vmatprep.subr.mxu0 0.0
    %752 = vmatpush1.msra.mxu0 0.0
    %753 = vmatprep.subr.mxu0 0.0
    %754 = vmatpush1.msra.mxu0 0.0
    %755 = vmatprep.subr.mxu0 0.0
    %756 = vmatpush1.msra.mxu0 0.0
    %757 = vmatprep.subr.mxu0 0.0
    %758 = vmatpush1.msra.mxu0 0.0
    %759 = vmatprep.mubr.f32.mxu0 0.0
    %760 = vmatmul.mubr.f32.gmra.mrb[0].mxu0 %v306
    %v761 = vpop.f32.mrb[0].mxu0
    %v762 = vadd.f32 0.0, %v761
    %v763 = vpop.f32.mrb[0].mxu0
    %764 = vdwg.mxu0
    %v765 = vadd.f32 %v677, %v762
    %s766 = scalar_lea.vmem [#allocation3], 640
    %v767 = vld [vmem:[%s766] sm:$0xff]
    %v768 = vld [vmem:[%s766 + $0x8] sm:$0xff]
    %v769 = vld [vmem:[%s766 + $0x10] sm:$0xff]
    %v770 = vld [vmem:[%s766 + $0x18] sm:$0xff]
    %v771 = vld [vmem:[%s766 + $0x20] sm:$0xff]
    %v772 = vld [vmem:[%s766 + $0x28] sm:$0xff]
    %v773 = vld [vmem:[%s766 + $0x30] sm:$0xff]
    %v774 = vld [vmem:[%s766 + $0x38] sm:$0xff]
    %v775 = vld [vmem:[%s766 + $0x40] sm:$0xff]
    %v776 = vld [vmem:[%s766 + $0x48] sm:$0xff]
    %v777 = vld [vmem:[%s766 + $0x50] sm:$0xff]
    %v778 = vld [vmem:[%s766 + $0x58] sm:$0xff]
    %v779 = vld [vmem:[%s766 + $0x60] sm:$0xff]
    %v780 = vld [vmem:[%s766 + $0x68] sm:$0xff]
    %v781 = vld [vmem:[%s766 + $0x70] sm:$0xff]
    %v782 = vld [vmem:[%s766 + $0x78] sm:$0xff]
    %783 = vmatprep.subr.mxu0 0.0
    %784 = vmatpush1.msra.mxu0 %v767
    %785 = vmatprep.subr.mxu0 0.0
    %786 = vmatpush1.msra.mxu0 %v768
    %787 = vmatprep.subr.mxu0 0.0
    %788 = vmatpush1.msra.mxu0 %v769
    %789 = vmatprep.subr.mxu0 0.0
    %790 = vmatpush1.msra.mxu0 %v770
    %791 = vmatprep.subr.mxu0 0.0
    %792 = vmatpush1.msra.mxu0 %v771
    %793 = vmatprep.subr.mxu0 0.0
    %794 = vmatpush1.msra.mxu0 %v772
    %795 = vmatprep.subr.mxu0 0.0
    %796 = vmatpush1.msra.mxu0 %v773
    %797 = vmatprep.subr.mxu0 0.0
    %798 = vmatpush1.msra.mxu0 %v774
    %799 = vmatprep.subr.mxu0 0.0
    %800 = vmatpush1.msra.mxu0 %v775
    %801 = vmatprep.subr.mxu0 0.0
    %802 = vmatpush1.msra.mxu0 %v776
    %803 = vmatprep.subr.mxu0 0.0
    %804 = vmatpush1.msra.mxu0 %v777
    %805 = vmatprep.subr.mxu0 0.0
    %806 = vmatpush1.msra.mxu0 %v778
    %807 = vmatprep.subr.mxu0 0.0
    %808 = vmatpush1.msra.mxu0 %v779
    %809 = vmatprep.subr.mxu0 0.0
    %810 = vmatpush1.msra.mxu0 %v780
    %811 = vmatprep.subr.mxu0 0.0
    %812 = vmatpush1.msra.mxu0 %v781
    %813 = vmatprep.subr.mxu0 0.0
    %814 = vmatpush1.msra.mxu0 %v782
    %815 = vmatprep.subr.mxu0 0.0
    %816 = vmatpush1.msra.mxu0 0.0
    %817 = vmatprep.subr.mxu0 0.0
    %818 = vmatpush1.msra.mxu0 0.0
    %819 = vmatprep.subr.mxu0 0.0
    %820 = vmatpush1.msra.mxu0 0.0
    %821 = vmatprep.subr.mxu0 0.0
    %822 = vmatpush1.msra.mxu0 0.0
    %823 = vmatprep.subr.mxu0 0.0
    %824 = vmatpush1.msra.mxu0 0.0
    %825 = vmatprep.subr.mxu0 0.0
    %826 = vmatpush1.msra.mxu0 0.0
    %827 = vmatprep.subr.mxu0 0.0
    %828 = vmatpush1.msra.mxu0 0.0
    %829 = vmatprep.subr.mxu0 0.0
    %830 = vmatpush1.msra.mxu0 0.0
    %831 = vmatprep.subr.mxu0 0.0
    %832 = vmatpush1.msra.mxu0 0.0
    %833 = vmatprep.subr.mxu0 0.0
    %834 = vmatpush1.msra.mxu0 0.0
    %835 = vmatprep.subr.mxu0 0.0
    %836 = vmatpush1.msra.mxu0 0.0
    %837 = vmatprep.subr.mxu0 0.0
    %838 = vmatpush1.msra.mxu0 0.0
    %839 = vmatprep.subr.mxu0 0.0
    %840 = vmatpush1.msra.mxu0 0.0
    %841 = vmatprep.subr.mxu0 0.0
    %842 = vmatpush1.msra.mxu0 0.0
    %843 = vmatprep.subr.mxu0 0.0
    %844 = vmatpush1.msra.mxu0 0.0
    %845 = vmatprep.subr.mxu0 0.0
    %846 = vmatpush1.msra.mxu0 0.0
    %847 = vmatprep.mubr.f32.mxu0 0.0
    %848 = vmatmul.mubr.f32.gmra.mrb[0].mxu0 %v311
    %v849 = vpop.f32.mrb[0].mxu0
    %v850 = vadd.f32 0.0, %v849
    %v851 = vpop.f32.mrb[0].mxu0
    %852 = vdwg.mxu0
    %v853 = vadd.f32 %v765, %v850
    %s854 = scalar_lea.vmem [#allocation3], 768
    %v855 = vld [vmem:[%s854] sm:$0xff]
    %v856 = vld [vmem:[%s854 + $0x8] sm:$0xff]
    %v857 = vld [vmem:[%s854 + $0x10] sm:$0xff]
    %v858 = vld [vmem:[%s854 + $0x18] sm:$0xff]
    %v859 = vld [vmem:[%s854 + $0x20] sm:$0xff]
    %v860 = vld [vmem:[%s854 + $0x28] sm:$0xff]
    %v861 = vld [vmem:[%s854 + $0x30] sm:$0xff]
    %v862 = vld [vmem:[%s854 + $0x38] sm:$0xff]
    %v863 = vld [vmem:[%s854 + $0x40] sm:$0xff]
    %v864 = vld [vmem:[%s854 + $0x48] sm:$0xff]
    %v865 = vld [vmem:[%s854 + $0x50] sm:$0xff]
    %v866 = vld [vmem:[%s854 + $0x58] sm:$0xff]
    %v867 = vld [vmem:[%s854 + $0x60] sm:$0xff]
    %v868 = vld [vmem:[%s854 + $0x68] sm:$0xff]
    %v869 = vld [vmem:[%s854 + $0x70] sm:$0xff]
    %v870 = vld [vmem:[%s854 + $0x78] sm:$0xff]
    %871 = vmatprep.subr.mxu0 0.0
    %872 = vmatpush1.msra.mxu0 %v855
    %873 = vmatprep.subr.mxu0 0.0
    %874 = vmatpush1.msra.mxu0 %v856
    %875 = vmatprep.subr.mxu0 0.0
    %876 = vmatpush1.msra.mxu0 %v857
    %877 = vmatprep.subr.mxu0 0.0
    %878 = vmatpush1.msra.mxu0 %v858
    %879 = vmatprep.subr.mxu0 0.0
    %880 = vmatpush1.msra.mxu0 %v859
    %881 = vmatprep.subr.mxu0 0.0
    %882 = vmatpush1.msra.mxu0 %v860
    %883 = vmatprep.subr.mxu0 0.0
    %884 = vmatpush1.msra.mxu0 %v861
    %885 = vmatprep.subr.mxu0 0.0
    %886 = vmatpush1.msra.mxu0 %v862
    %887 = vmatprep.subr.mxu0 0.0
    %888 = vmatpush1.msra.mxu0 %v863
    %889 = vmatprep.subr.mxu0 0.0
    %890 = vmatpush1.msra.mxu0 %v864
    %891 = vmatprep.subr.mxu0 0.0
    %892 = vmatpush1.msra.mxu0 %v865
    %893 = vmatprep.subr.mxu0 0.0
    %894 = vmatpush1.msra.mxu0 %v866
    %895 = vmatprep.subr.mxu0 0.0
    %896 = vmatpush1.msra.mxu0 %v867
    %897 = vmatprep.subr.mxu0 0.0
    %898 = vmatpush1.msra.mxu0 %v868
    %899 = vmatprep.subr.mxu0 0.0
    %900 = vmatpush1.msra.mxu0 %v869
    %901 = vmatprep.subr.mxu0 0.0
    %902 = vmatpush1.msra.mxu0 %v870
    %903 = vmatprep.subr.mxu0 0.0
    %904 = vmatpush1.msra.mxu0 0.0
    %905 = vmatprep.subr.mxu0 0.0
    %906 = vmatpush1.msra.mxu0 0.0
    %907 = vmatprep.subr.mxu0 0.0
    %908 = vmatpush1.msra.mxu0 0.0
    %909 = vmatprep.subr.mxu0 0.0
    %910 = vmatpush1.msra.mxu0 0.0
    %911 = vmatprep.subr.mxu0 0.0
    %912 = vmatpush1.msra.mxu0 0.0
    %913 = vmatprep.subr.mxu0 0.0
    %914 = vmatpush1.msra.mxu0 0.0
    %915 = vmatprep.subr.mxu0 0.0
    %916 = vmatpush1.msra.mxu0 0.0
    %917 = vmatprep.subr.mxu0 0.0
    %918 = vmatpush1.msra.mxu0 0.0
    %919 = vmatprep.subr.mxu0 0.0
    %920 = vmatpush1.msra.mxu0 0.0
    %921 = vmatprep.subr.mxu0 0.0
    %922 = vmatpush1.msra.mxu0 0.0
    %923 = vmatprep.subr.mxu0 0.0
    %924 = vmatpush1.msra.mxu0 0.0
    %925 = vmatprep.subr.mxu0 0.0
    %926 = vmatpush1.msra.mxu0 0.0
    %927 = vmatprep.subr.mxu0 0.0
    %928 = vmatpush1.msra.mxu0 0.0
    %929 = vmatprep.subr.mxu0 0.0
    %930 = vmatpush1.msra.mxu0 0.0
    %931 = vmatprep.subr.mxu0 0.0
    %932 = vmatpush1.msra.mxu0 0.0
    %933 = vmatprep.subr.mxu0 0.0
    %934 = vmatpush1.msra.mxu0 0.0
    %935 = vmatprep.mubr.f32.mxu0 0.0
    %936 = vmatmul.mubr.f32.gmra.mrb[0].mxu0 %v316
    %v937 = vpop.f32.mrb[0].mxu0
    %v938 = vadd.f32 0.0, %v937
    %v939 = vpop.f32.mrb[0].mxu0
    %940 = vdwg.mxu0
    %v941 = vadd.f32 %v853, %v938
    %s942 = scalar_lea.vmem [#allocation3], 896
    %v943 = vld [vmem:[%s942] sm:$0xff]
    %v944 = vld [vmem:[%s942 + $0x8] sm:$0xff]
    %v945 = vld [vmem:[%s942 + $0x10] sm:$0xff]
    %v946 = vld [vmem:[%s942 + $0x18] sm:$0xff]
    %v947 = vld [vmem:[%s942 + $0x20] sm:$0xff]
    %v948 = vld [vmem:[%s942 + $0x28] sm:$0xff]
    %v949 = vld [vmem:[%s942 + $0x30] sm:$0xff]
    %v950 = vld [vmem:[%s942 + $0x38] sm:$0xff]
    %v951 = vld [vmem:[%s942 + $0x40] sm:$0xff]
    %v952 = vld [vmem:[%s942 + $0x48] sm:$0xff]
    %v953 = vld [vmem:[%s942 + $0x50] sm:$0xff]
    %v954 = vld [vmem:[%s942 + $0x58] sm:$0xff]
    %v955 = vld [vmem:[%s942 + $0x60] sm:$0xff]
    %v956 = vld [vmem:[%s942 + $0x68] sm:$0xff]
    %v957 = vld [vmem:[%s942 + $0x70] sm:$0xff]
    %v958 = vld [vmem:[%s942 + $0x78] sm:$0xff]
    %959 = vmatprep.subr.mxu0 0.0
    %960 = vmatpush1.msra.mxu0 %v943
    %961 = vmatprep.subr.mxu0 0.0
    %962 = vmatpush1.msra.mxu0 %v944
    %963 = vmatprep.subr.mxu0 0.0
    %964 = vmatpush1.msra.mxu0 %v945
    %965 = vmatprep.subr.mxu0 0.0
    %966 = vmatpush1.msra.mxu0 %v946
    %967 = vmatprep.subr.mxu0 0.0
    %968 = vmatpush1.msra.mxu0 %v947
    %969 = vmatprep.subr.mxu0 0.0
    %970 = vmatpush1.msra.mxu0 %v948
    %971 = vmatprep.subr.mxu0 0.0
    %972 = vmatpush1.msra.mxu0 %v949
    %973 = vmatprep.subr.mxu0 0.0
    %974 = vmatpush1.msra.mxu0 %v950
    %975 = vmatprep.subr.mxu0 0.0
    %976 = vmatpush1.msra.mxu0 %v951
    %977 = vmatprep.subr.mxu0 0.0
    %978 = vmatpush1.msra.mxu0 %v952
    %979 = vmatprep.subr.mxu0 0.0
    %980 = vmatpush1.msra.mxu0 %v953
    %981 = vmatprep.subr.mxu0 0.0
    %982 = vmatpush1.msra.mxu0 %v954
    %983 = vmatprep.subr.mxu0 0.0
    %984 = vmatpush1.msra.mxu0 %v955
    %985 = vmatprep.subr.mxu0 0.0
    %986 = vmatpush1.msra.mxu0 %v956
    %987 = vmatprep.subr.mxu0 0.0
    %988 = vmatpush1.msra.mxu0 %v957
    %989 = vmatprep.subr.mxu0 0.0
    %990 = vmatpush1.msra.mxu0 %v958
    %991 = vmatprep.subr.mxu0 0.0
    %992 = vmatpush1.msra.mxu0 0.0
    %993 = vmatprep.subr.mxu0 0.0
    %994 = vmatpush1.msra.mxu0 0.0
    %995 = vmatprep.subr.mxu0 0.0
    %996 = vmatpush1.msra.mxu0 0.0
    %997 = vmatprep.subr.mxu0 0.0
    %998 = vmatpush1.msra.mxu0 0.0
    %999 = vmatprep.subr.mxu0 0.0
    %1000 = vmatpush1.msra.mxu0 0.0
    %1001 = vmatprep.subr.mxu0 0.0
    %1002 = vmatpush1.msra.mxu0 0.0
    %1003 = vmatprep.subr.mxu0 0.0
    %1004 = vmatpush1.msra.mxu0 0.0
    %1005 = vmatprep.subr.mxu0 0.0
    %1006 = vmatpush1.msra.mxu0 0.0
    %1007 = vmatprep.subr.mxu0 0.0
    %1008 = vmatpush1.msra.mxu0 0.0
    %1009 = vmatprep.subr.mxu0 0.0
    %1010 = vmatpush1.msra.mxu0 0.0
    %1011 = vmatprep.subr.mxu0 0.0
    %1012 = vmatpush1.msra.mxu0 0.0
    %1013 = vmatprep.subr.mxu0 0.0
    %1014 = vmatpush1.msra.mxu0 0.0
    %1015 = vmatprep.subr.mxu0 0.0
    %1016 = vmatpush1.msra.mxu0 0.0
    %1017 = vmatprep.subr.mxu0 0.0
    %1018 = vmatpush1.msra.mxu0 0.0
    %1019 = vmatprep.subr.mxu0 0.0
    %1020 = vmatpush1.msra.mxu0 0.0
    %1021 = vmatprep.subr.mxu0 0.0
    %1022 = vmatpush1.msra.mxu0 0.0
    %1023 = vmatprep.mubr.f32.mxu0 0.0
    %1024 = vmatmul.mubr.f32.gmra.mrb[0].mxu0 %v321
    %v1025 = vpop.f32.mrb[0].mxu0
    %v1026 = vadd.f32 0.0, %v1025
    %v1027 = vpop.f32.mrb[0].mxu0
    %1028 = vdwg.mxu0
    %v1029 = vadd.f32 %v941, %v1026
    %s1030 = scalar_lea.vmem [#allocation3], 1024
    %v1031 = vld [vmem:[%s1030] sm:$0xff]
    %v1032 = vld [vmem:[%s1030 + $0x8] sm:$0xff]
    %v1033 = vld [vmem:[%s1030 + $0x10] sm:$0xff]
    %v1034 = vld [vmem:[%s1030 + $0x18] sm:$0xff]
    %v1035 = vld [vmem:[%s1030 + $0x20] sm:$0xff]
    %v1036 = vld [vmem:[%s1030 + $0x28] sm:$0xff]
    %v1037 = vld [vmem:[%s1030 + $0x30] sm:$0xff]
    %v1038 = vld [vmem:[%s1030 + $0x38] sm:$0xff]
    %v1039 = vld [vmem:[%s1030 + $0x40] sm:$0xff]
    %v1040 = vld [vmem:[%s1030 + $0x48] sm:$0xff]
    %v1041 = vld [vmem:[%s1030 + $0x50] sm:$0xff]
    %v1042 = vld [vmem:[%s1030 + $0x58] sm:$0xff]
    %v1043 = vld [vmem:[%s1030 + $0x60] sm:$0xff]
    %v1044 = vld [vmem:[%s1030 + $0x68] sm:$0xff]
    %v1045 = vld [vmem:[%s1030 + $0x70] sm:$0xff]
    %v1046 = vld [vmem:[%s1030 + $0x78] sm:$0xff]
    %1047 = vmatprep.subr.mxu0 0.0
    %1048 = vmatpush1.msra.mxu0 %v1031
    %1049 = vmatprep.subr.mxu0 0.0
    %1050 = vmatpush1.msra.mxu0 %v1032
    %1051 = vmatprep.subr.mxu0 0.0
    %1052 = vmatpush1.msra.mxu0 %v1033
    %1053 = vmatprep.subr.mxu0 0.0
    %1054 = vmatpush1.msra.mxu0 %v1034
    %1055 = vmatprep.subr.mxu0 0.0
    %1056 = vmatpush1.msra.mxu0 %v1035
    %1057 = vmatprep.subr.mxu0 0.0
    %1058 = vmatpush1.msra.mxu0 %v1036
    %1059 = vmatprep.subr.mxu0 0.0
    %1060 = vmatpush1.msra.mxu0 %v1037
    %1061 = vmatprep.subr.mxu0 0.0
    %1062 = vmatpush1.msra.mxu0 %v1038
    %1063 = vmatprep.subr.mxu0 0.0
    %1064 = vmatpush1.msra.mxu0 %v1039
    %1065 = vmatprep.subr.mxu0 0.0
    %1066 = vmatpush1.msra.mxu0 %v1040
    %1067 = vmatprep.subr.mxu0 0.0
    %1068 = vmatpush1.msra.mxu0 %v1041
    %1069 = vmatprep.subr.mxu0 0.0
    %1070 = vmatpush1.msra.mxu0 %v1042
    %1071 = vmatprep.subr.mxu0 0.0
    %1072 = vmatpush1.msra.mxu0 %v1043
    %1073 = vmatprep.subr.mxu0 0.0
    %1074 = vmatpush1.msra.mxu0 %v1044
    %1075 = vmatprep.subr.mxu0 0.0
    %1076 = vmatpush1.msra.mxu0 %v1045
    %1077 = vmatprep.subr.mxu0 0.0
    %1078 = vmatpush1.msra.mxu0 %v1046
    %1079 = vmatprep.subr.mxu0 0.0
    %1080 = vmatpush1.msra.mxu0 0.0
    %1081 = vmatprep.subr.mxu0 0.0
    %1082 = vmatpush1.msra.mxu0 0.0
    %1083 = vmatprep.subr.mxu0 0.0
    %1084 = vmatpush1.msra.mxu0 0.0
    %1085 = vmatprep.subr.mxu0 0.0
    %1086 = vmatpush1.msra.mxu0 0.0
    %1087 = vmatprep.subr.mxu0 0.0
    %1088 = vmatpush1.msra.mxu0 0.0
    %1089 = vmatprep.subr.mxu0 0.0
    %1090 = vmatpush1.msra.mxu0 0.0
    %1091 = vmatprep.subr.mxu0 0.0
    %1092 = vmatpush1.msra.mxu0 0.0
    %1093 = vmatprep.subr.mxu0 0.0
    %1094 = vmatpush1.msra.mxu0 0.0
    %1095 = vmatprep.subr.mxu0 0.0
    %1096 = vmatpush1.msra.mxu0 0.0
    %1097 = vmatprep.subr.mxu0 0.0
    %1098 = vmatpush1.msra.mxu0 0.0
    %1099 = vmatprep.subr.mxu0 0.0
    %1100 = vmatpush1.msra.mxu0 0.0
    %1101 = vmatprep.subr.mxu0 0.0
    %1102 = vmatpush1.msra.mxu0 0.0
    %1103 = vmatprep.subr.mxu0 0.0
    %1104 = vmatpush1.msra.mxu0 0.0
    %1105 = vmatprep.subr.mxu0 0.0
    %1106 = vmatpush1.msra.mxu0 0.0
    %1107 = vmatprep.subr.mxu0 0.0
    %1108 = vmatpush1.msra.mxu0 0.0
    %1109 = vmatprep.subr.mxu0 0.0
    %1110 = vmatpush1.msra.mxu0 0.0
    %1111 = vmatprep.mubr.f32.mxu0 0.0
    %1112 = vmatmul.mubr.f32.gmra.mrb[0].mxu0 %v326
    %v1113 = vpop.f32.mrb[0].mxu0
    %v1114 = vadd.f32 0.0, %v1113
    %v1115 = vpop.f32.mrb[0].mxu0
    %1116 = vdwg.mxu0
    %v1117 = vadd.f32 %v1029, %v1114
    %v1118 = vld [vmem:[%s6] sm:$0xff]
    %1120 = vset.pattern.permute.xlu0 0
    %1121 = vperm.xlu0 %1120, %v1118
    %v1122 = vpop.permute.xlu0 %1121
    %v1124 = vadd.f32 %v1117, %v1122
    %v1125 = vmax.f32 %v1124, 0.0
    %1126 = vst [vmem:[#allocation2 + $0x20] sm:$0xff] %v1125
    %v1127 = vld [vmem:[#allocation2] sm:$0xff]
    %v1128 = vld [vmem:[#allocation2 + $0x8] sm:$0xff]
    %v1129 = vld [vmem:[#allocation2 + $0x10] sm:$0xff]
    %v1130 = vld [vmem:[#allocation2 + $0x18] sm:$0xff]
    %v1131 = vld [vmem:[#allocation2 + $0x20] sm:$0xff]
    %v1132 = vld [vmem:[#allocation2 + $0x28] sm:$0xff]
    %v1133 = vld [vmem:[#allocation2 + $0x30] sm:$0xff]
    %v1134 = vld [vmem:[#allocation2 + $0x38] sm:$0xff]
    %v1135 = vld [vmem:[#allocation2 + $0x40] sm:$0xff]
    %s1136 = scalar_lea.vmem [#allocation5], 72
    %v1137 = vld [vmem:[%s1136] sm:$0xff]
    %v1138 = vld [vmem:[%s1136 + $0x8] sm:$0xff]
    %v1139 = vld [vmem:[%s1136 + $0x10] sm:$0xff]
    %v1140 = vld [vmem:[%s1136 + $0x18] sm:$0xff]
    %v1141 = vld [vmem:[%s1136 + $0x20] sm:$0xff]
    %v1142 = vld [vmem:[%s1136 + $0x28] sm:$0xff]
    %v1143 = vld [vmem:[%s1136 + $0x30] sm:$0xff]
    %v1144 = vld [vmem:[%s1136 + $0x38] sm:$0xff]
    %v1145 = vld [vmem:[%s1136 + $0x40] sm:$0xff]
    %v1147 = vsel %vm191, %v1137, 0
    %v1150 = vsel %vm191, %v1138, 0
    %v1153 = vsel %vm191, %v1139, 0
    %v1156 = vsel %vm191, %v1140, 0
    %v1159 = vsel %vm191, %v1141, 0
    %v1162 = vsel %vm191, %v1142, 0
    %v1165 = vsel %vm191, %v1143, 0
    %v1168 = vsel %vm191, %v1144, 0
    %v1171 = vsel %vm191, %v1145, 0
    %1173 = vmatprep.subr.mxu0 0.0
    %1174 = vmatpush1.msra.mxu0 %v1127
    %1175 = vmatprep.subr.mxu0 0.0
    %1176 = vmatpush1.msra.mxu0 %v1128
    %1177 = vmatprep.subr.mxu0 0.0
    %1178 = vmatpush1.msra.mxu0 %v1129
    %1179 = vmatprep.subr.mxu0 0.0
    %1180 = vmatpush1.msra.mxu0 %v1130
    %1181 = vmatprep.subr.mxu0 0.0
    %1182 = vmatpush1.msra.mxu0 %v1131
    %1183 = vmatprep.subr.mxu0 0.0
    %1184 = vmatpush1.msra.mxu0 %v1132
    %1185 = vmatprep.subr.mxu0 0.0
    %1186 = vmatpush1.msra.mxu0 %v1133
    %1187 = vmatprep.subr.mxu0 0.0
    %1188 = vmatpush1.msra.mxu0 %v1134
    %1189 = vmatprep.subr.mxu0 0.0
    %1190 = vmatpush1.msra.mxu0 %v1135
    %1191 = vmatprep.subr.mxu0 0.0
    %1192 = vmatpush1.msra.mxu0 0.0
    %1193 = vmatprep.subr.mxu0 0.0
    %1194 = vmatpush1.msra.mxu0 0.0
    %1195 = vmatprep.subr.mxu0 0.0
    %1196 = vmatpush1.msra.mxu0 0.0
    %1197 = vmatprep.subr.mxu0 0.0
    %1198 = vmatpush1.msra.mxu0 0.0
    %1199 = vmatprep.subr.mxu0 0.0
    %1200 = vmatpush1.msra.mxu0 0.0
    %1201 = vmatprep.subr.mxu0 0.0
    %1202 = vmatpush1.msra.mxu0 0.0
    %1203 = vmatprep.subr.mxu0 0.0
    %1204 = vmatpush1.msra.mxu0 0.0
    %1205 = vmatprep.subr.mxu0 0.0
    %1206 = vmatpush1.msra.mxu0 0.0
    %1207 = vmatprep.subr.mxu0 0.0
    %1208 = vmatpush1.msra.mxu0 0.0
    %1209 = vmatprep.subr.mxu0 0.0
    %1210 = vmatpush1.msra.mxu0 0.0
    %1211 = vmatprep.subr.mxu0 0.0
    %1212 = vmatpush1.msra.mxu0 0.0
    %1213 = vmatprep.subr.mxu0 0.0
    %1214 = vmatpush1.msra.mxu0 0.0
    %1215 = vmatprep.subr.mxu0 0.0
    %1216 = vmatpush1.msra.mxu0 0.0
    %1217 = vmatprep.subr.mxu0 0.0
    %1218 = vmatpush1.msra.mxu0 0.0
    %1219 = vmatprep.subr.mxu0 0.0
    %1220 = vmatpush1.msra.mxu0 0.0
    %1221 = vmatprep.subr.mxu0 0.0
    %1222 = vmatpush1.msra.mxu0 0.0
    %1223 = vmatprep.subr.mxu0 0.0
    %1224 = vmatpush1.msra.mxu0 0.0
    %1225 = vmatprep.subr.mxu0 0.0
    %1226 = vmatpush1.msra.mxu0 0.0
    %1227 = vmatprep.subr.mxu0 0.0
    %1228 = vmatpush1.msra.mxu0 0.0
    %1229 = vmatprep.subr.mxu0 0.0
    %1230 = vmatpush1.msra.mxu0 0.0
    %1231 = vmatprep.subr.mxu0 0.0
    %1232 = vmatpush1.msra.mxu0 0.0
    %1233 = vmatprep.subr.mxu0 0.0
    %1234 = vmatpush1.msra.mxu0 0.0
    %1235 = vmatprep.subr.mxu0 0.0
    %1236 = vmatpush1.msra.mxu0 0.0
    %1237 = vmatprep.mubr.f32.mxu0 0.0
    %1238 = vmatmul.mubr.f32.gmra.mrb[0].mxu0 %v1147
    %v1239 = vpop.f32.mrb[0].mxu0
    %v1240 = vadd.f32 0.0, %v1239
    %v1241 = vpop.f32.mrb[0].mxu0
    %1242 = vmatprep.mubr.f32.mxu0 0.0
    %1243 = vmatmul.mubr.f32.gmra.mrb[0].mxu0 %v1150
    %v1244 = vpop.f32.mrb[0].mxu0
    %v1245 = vadd.f32 0.0, %v1244
    %v1246 = vpop.f32.mrb[0].mxu0
    %1247 = vmatprep.mubr.f32.mxu0 0.0
    %1248 = vmatmul.mubr.f32.gmra.mrb[0].mxu0 %v1153
    %v1249 = vpop.f32.mrb[0].mxu0
    %v1250 = vadd.f32 0.0, %v1249
    %v1251 = vpop.f32.mrb[0].mxu0
    %1252 = vmatprep.mubr.f32.mxu0 0.0
    %1253 = vmatmul.mubr.f32.gmra.mrb[0].mxu0 %v1156
    %v1254 = vpop.f32.mrb[0].mxu0
    %v1255 = vadd.f32 0.0, %v1254
    %v1256 = vpop.f32.mrb[0].mxu0
    %1257 = vmatprep.mubr.f32.mxu0 0.0
    %1258 = vmatmul.mubr.f32.gmra.mrb[0].mxu0 %v1159
    %v1259 = vpop.f32.mrb[0].mxu0
    %v1260 = vadd.f32 0.0, %v1259
    %v1261 = vpop.f32.mrb[0].mxu0
    %1262 = vmatprep.mubr.f32.mxu0 0.0
    %1263 = vmatmul.mubr.f32.gmra.mrb[0].mxu0 %v1162
    %v1264 = vpop.f32.mrb[0].mxu0
    %v1265 = vadd.f32 0.0, %v1264
    %v1266 = vpop.f32.mrb[0].mxu0
    %1267 = vmatprep.mubr.f32.mxu0 0.0
    %1268 = vmatmul.mubr.f32.gmra.mrb[0].mxu0 %v1165
    %v1269 = vpop.f32.mrb[0].mxu0
    %v1270 = vadd.f32 0.0, %v1269
    %v1271 = vpop.f32.mrb[0].mxu0
    %1272 = vmatprep.mubr.f32.mxu0 0.0
    %1273 = vmatmul.mubr.f32.gmra.mrb[0].mxu0 %v1168
    %v1274 = vpop.f32.mrb[0].mxu0
    %v1275 = vadd.f32 0.0, %v1274
    %v1276 = vpop.f32.mrb[0].mxu0
    %1277 = vmatprep.mubr.f32.mxu0 0.0
    %1278 = vmatmul.mubr.f32.gmra.mrb[0].mxu0 %v1171
    %v1279 = vpop.f32.mrb[0].mxu0
    %v1280 = vadd.f32 0.0, %v1279
    %v1281 = vpop.f32.mrb[0].mxu0
    %1282 = vdwg.mxu0
    %v1283 = vld [vmem:[#allocation3] sm:$0xff]
    %v1284 = vld [vmem:[#allocation3 + $0x8] sm:$0xff]
    %v1285 = vld [vmem:[#allocation3 + $0x10] sm:$0xff]
    %v1286 = vld [vmem:[#allocation3 + $0x18] sm:$0xff]
    %v1287 = vld [vmem:[#allocation3 + $0x20] sm:$0xff]
    %v1288 = vld [vmem:[#allocation3 + $0x28] sm:$0xff]
    %v1289 = vld [vmem:[#allocation3 + $0x30] sm:$0xff]
    %v1290 = vld [vmem:[#allocation3 + $0x38] sm:$0xff]
    %v1291 = vld [vmem:[#allocation3 + $0x40] sm:$0xff]
    %v1292 = vld [vmem:[#allocation3 + $0x48] sm:$0xff]
    %v1293 = vld [vmem:[#allocation3 + $0x50] sm:$0xff]
    %v1294 = vld [vmem:[#allocation3 + $0x58] sm:$0xff]
    %v1295 = vld [vmem:[#allocation3 + $0x60] sm:$0xff]
    %v1296 = vld [vmem:[#allocation3 + $0x68] sm:$0xff]
    %v1297 = vld [vmem:[#allocation3 + $0x70] sm:$0xff]
    %v1298 = vld [vmem:[#allocation3 + $0x78] sm:$0xff]
    %v1299 = vld [vmem:[%s345] sm:$0xff]
    %v1300 = vld [vmem:[%s345 + $0x8] sm:$0xff]
    %v1301 = vld [vmem:[%s345 + $0x10] sm:$0xff]
    %v1302 = vld [vmem:[%s345 + $0x18] sm:$0xff]
    %v1303 = vld [vmem:[%s345 + $0x20] sm:$0xff]
    %v1304 = vld [vmem:[%s345 + $0x28] sm:$0xff]
    %v1305 = vld [vmem:[%s345 + $0x30] sm:$0xff]
    %v1306 = vld [vmem:[%s345 + $0x38] sm:$0xff]
    %v1307 = vld [vmem:[%s345 + $0x40] sm:$0xff]
    %v1308 = vld [vmem:[%s345 + $0x48] sm:$0xff]
    %v1309 = vld [vmem:[%s345 + $0x50] sm:$0xff]
    %v1310 = vld [vmem:[%s345 + $0x58] sm:$0xff]
    %v1311 = vld [vmem:[%s345 + $0x60] sm:$0xff]
    %v1312 = vld [vmem:[%s345 + $0x68] sm:$0xff]
    %v1313 = vld [vmem:[%s345 + $0x70] sm:$0xff]
    %v1314 = vld [vmem:[%s345 + $0x78] sm:$0xff]
    %1315 = vmatprep.subr.mxu0 0.0
    %1316 = vmatpush1.msra.mxu0 %v1299
    %1317 = vmatprep.subr.mxu0 0.0
    %1318 = vmatpush1.msra.mxu0 %v1300
    %1319 = vmatprep.subr.mxu0 0.0
    %1320 = vmatpush1.msra.mxu0 %v1301
    %1321 = vmatprep.subr.mxu0 0.0
    %1322 = vmatpush1.msra.mxu0 %v1302
    %1323 = vmatprep.subr.mxu0 0.0
    %1324 = vmatpush1.msra.mxu0 %v1303
    %1325 = vmatprep.subr.mxu0 0.0
    %1326 = vmatpush1.msra.mxu0 %v1304
    %1327 = vmatprep.subr.mxu0 0.0
    %1328 = vmatpush1.msra.mxu0 %v1305
    %1329 = vmatprep.subr.mxu0 0.0
    %1330 = vmatpush1.msra.mxu0 %v1306
    %1331 = vmatprep.subr.mxu0 0.0
    %1332 = vmatpush1.msra.mxu0 %v1307
    %1333 = vmatprep.subr.mxu0 0.0
    %1334 = vmatpush1.msra.mxu0 %v1308
    %1335 = vmatprep.subr.mxu0 0.0
    %1336 = vmatpush1.msra.mxu0 %v1309
    %1337 = vmatprep.subr.mxu0 0.0
    %1338 = vmatpush1.msra.mxu0 %v1310
    %1339 = vmatprep.subr.mxu0 0.0
    %1340 = vmatpush1.msra.mxu0 %v1311
    %1341 = vmatprep.subr.mxu0 0.0
    %1342 = vmatpush1.msra.mxu0 %v1312
    %1343 = vmatprep.subr.mxu0 0.0
    %1344 = vmatpush1.msra.mxu0 %v1313
    %1345 = vmatprep.subr.mxu0 0.0
    %1346 = vmatpush1.msra.mxu0 %v1314
    %1347 = vmatprep.subr.mxu0 0.0
    %1348 = vmatpush1.msra.mxu0 0.0
    %1349 = vmatprep.subr.mxu0 0.0
    %1350 = vmatpush1.msra.mxu0 0.0
    %1351 = vmatprep.subr.mxu0 0.0
    %1352 = vmatpush1.msra.mxu0 0.0
    %1353 = vmatprep.subr.mxu0 0.0
    %1354 = vmatpush1.msra.mxu0 0.0
    %1355 = vmatprep.subr.mxu0 0.0
    %1356 = vmatpush1.msra.mxu0 0.0
    %1357 = vmatprep.subr.mxu0 0.0
    %1358 = vmatpush1.msra.mxu0 0.0
    %1359 = vmatprep.subr.mxu0 0.0
    %1360 = vmatpush1.msra.mxu0 0.0
    %1361 = vmatprep.subr.mxu0 0.0
    %1362 = vmatpush1.msra.mxu0 0.0
    %1363 = vmatprep.subr.mxu0 0.0
    %1364 = vmatpush1.msra.mxu0 0.0
    %1365 = vmatprep.subr.mxu0 0.0
    %1366 = vmatpush1.msra.mxu0 0.0
    %1367 = vmatprep.subr.mxu0 0.0
    %1368 = vmatpush1.msra.mxu0 0.0
    %1369 = vmatprep.subr.mxu0 0.0
    %1370 = vmatpush1.msra.mxu0 0.0
    %1371 = vmatprep.subr.mxu0 0.0
    %1372 = vmatpush1.msra.mxu0 0.0
    %1373 = vmatprep.subr.mxu0 0.0
    %1374 = vmatpush1.msra.mxu0 0.0
    %1375 = vmatprep.subr.mxu0 0.0
    %1376 = vmatpush1.msra.mxu0 0.0
    %1377 = vmatprep.subr.mxu0 0.0
    %1378 = vmatpush1.msra.mxu0 0.0
    %1379 = vmatprep.mubr.f32.mxu0 0.0
    %1380 = vmatmul.mubr.f32.gmra.mrb[0].mxu0 %v1245
    %v1381 = vpop.f32.mrb[0].mxu0
    %v1382 = vadd.f32 0.0, %v1381
    %v1383 = vpop.f32.mrb[0].mxu0
    %1384 = vdwg.mxu0
    %1385 = vmatprep.subr.mxu0 0.0
    %1386 = vmatpush1.msra.mxu0 %v1283
    %1387 = vmatprep.subr.mxu0 0.0
    %1388 = vmatpush1.msra.mxu0 %v1284
    %1389 = vmatprep.subr.mxu0 0.0
    %1390 = vmatpush1.msra.mxu0 %v1285
    %1391 = vmatprep.subr.mxu0 0.0
    %1392 = vmatpush1.msra.mxu0 %v1286
    %1393 = vmatprep.subr.mxu0 0.0
    %1394 = vmatpush1.msra.mxu0 %v1287
    %1395 = vmatprep.subr.mxu0 0.0
    %1396 = vmatpush1.msra.mxu0 %v1288
    %1397 = vmatprep.subr.mxu0 0.0
    %1398 = vmatpush1.msra.mxu0 %v1289
    %1399 = vmatprep.subr.mxu0 0.0
    %1400 = vmatpush1.msra.mxu0 %v1290
    %1401 = vmatprep.subr.mxu0 0.0
    %1402 = vmatpush1.msra.mxu0 %v1291
    %1403 = vmatprep.subr.mxu0 0.0
    %1404 = vmatpush1.msra.mxu0 %v1292
    %1405 = vmatprep.subr.mxu0 0.0
    %1406 = vmatpush1.msra.mxu0 %v1293
    %1407 = vmatprep.subr.mxu0 0.0
    %1408 = vmatpush1.msra.mxu0 %v1294
    %1409 = vmatprep.subr.mxu0 0.0
    %1410 = vmatpush1.msra.mxu0 %v1295
    %1411 = vmatprep.subr.mxu0 0.0
    %1412 = vmatpush1.msra.mxu0 %v1296
    %1413 = vmatprep.subr.mxu0 0.0
    %1414 = vmatpush1.msra.mxu0 %v1297
    %1415 = vmatprep.subr.mxu0 0.0
    %1416 = vmatpush1.msra.mxu0 %v1298
    %1417 = vmatprep.subr.mxu0 0.0
    %1418 = vmatpush1.msra.mxu0 0.0
    %1419 = vmatprep.subr.mxu0 0.0
    %1420 = vmatpush1.msra.mxu0 0.0
    %1421 = vmatprep.subr.mxu0 0.0
    %1422 = vmatpush1.msra.mxu0 0.0
    %1423 = vmatprep.subr.mxu0 0.0
    %1424 = vmatpush1.msra.mxu0 0.0
    %1425 = vmatprep.subr.mxu0 0.0
    %1426 = vmatpush1.msra.mxu0 0.0
    %1427 = vmatprep.subr.mxu0 0.0
    %1428 = vmatpush1.msra.mxu0 0.0
    %1429 = vmatprep.subr.mxu0 0.0
    %1430 = vmatpush1.msra.mxu0 0.0
    %1431 = vmatprep.subr.mxu0 0.0
    %1432 = vmatpush1.msra.mxu0 0.0
    %1433 = vmatprep.subr.mxu0 0.0
    %1434 = vmatpush1.msra.mxu0 0.0
    %1435 = vmatprep.subr.mxu0 0.0
    %1436 = vmatpush1.msra.mxu0 0.0
    %1437 = vmatprep.subr.mxu0 0.0
    %1438 = vmatpush1.msra.mxu0 0.0
    %1439 = vmatprep.subr.mxu0 0.0
    %1440 = vmatpush1.msra.mxu0 0.0
    %1441 = vmatprep.subr.mxu0 0.0
    %1442 = vmatpush1.msra.mxu0 0.0
    %1443 = vmatprep.subr.mxu0 0.0
    %1444 = vmatpush1.msra.mxu0 0.0
    %1445 = vmatprep.subr.mxu0 0.0
    %1446 = vmatpush1.msra.mxu0 0.0
    %1447 = vmatprep.subr.mxu0 0.0
    %1448 = vmatpush1.msra.mxu0 0.0
    %1449 = vmatprep.mubr.f32.mxu0 0.0
    %1450 = vmatmul.mubr.f32.gmra.mrb[0].mxu0 %v1240
    %v1451 = vpop.f32.mrb[0].mxu0
    %v1452 = vadd.f32 %v1382, %v1451
    %v1453 = vpop.f32.mrb[0].mxu0
    %1454 = vdwg.mxu0
    %v1455 = vld [vmem:[%s502] sm:$0xff]
    %v1456 = vld [vmem:[%s502 + $0x8] sm:$0xff]
    %v1457 = vld [vmem:[%s502 + $0x10] sm:$0xff]
    %v1458 = vld [vmem:[%s502 + $0x18] sm:$0xff]
    %v1459 = vld [vmem:[%s502 + $0x20] sm:$0xff]
    %v1460 = vld [vmem:[%s502 + $0x28] sm:$0xff]
    %v1461 = vld [vmem:[%s502 + $0x30] sm:$0xff]
    %v1462 = vld [vmem:[%s502 + $0x38] sm:$0xff]
    %v1463 = vld [vmem:[%s502 + $0x40] sm:$0xff]
    %v1464 = vld [vmem:[%s502 + $0x48] sm:$0xff]
    %v1465 = vld [vmem:[%s502 + $0x50] sm:$0xff]
    %v1466 = vld [vmem:[%s502 + $0x58] sm:$0xff]
    %v1467 = vld [vmem:[%s502 + $0x60] sm:$0xff]
    %v1468 = vld [vmem:[%s502 + $0x68] sm:$0xff]
    %v1469 = vld [vmem:[%s502 + $0x70] sm:$0xff]
    %v1470 = vld [vmem:[%s502 + $0x78] sm:$0xff]
    %1471 = vmatprep.subr.mxu0 0.0
    %1472 = vmatpush1.msra.mxu0 %v1455
    %1473 = vmatprep.subr.mxu0 0.0
    %1474 = vmatpush1.msra.mxu0 %v1456
    %1475 = vmatprep.subr.mxu0 0.0
    %1476 = vmatpush1.msra.mxu0 %v1457
    %1477 = vmatprep.subr.mxu0 0.0
    %1478 = vmatpush1.msra.mxu0 %v1458
    %1479 = vmatprep.subr.mxu0 0.0
    %1480 = vmatpush1.msra.mxu0 %v1459
    %1481 = vmatprep.subr.mxu0 0.0
    %1482 = vmatpush1.msra.mxu0 %v1460
    %1483 = vmatprep.subr.mxu0 0.0
    %1484 = vmatpush1.msra.mxu0 %v1461
    %1485 = vmatprep.subr.mxu0 0.0
    %1486 = vmatpush1.msra.mxu0 %v1462
    %1487 = vmatprep.subr.mxu0 0.0
    %1488 = vmatpush1.msra.mxu0 %v1463
    %1489 = vmatprep.subr.mxu0 0.0
    %1490 = vmatpush1.msra.mxu0 %v1464
    %1491 = vmatprep.subr.mxu0 0.0
    %1492 = vmatpush1.msra.mxu0 %v1465
    %1493 = vmatprep.subr.mxu0 0.0
    %1494 = vmatpush1.msra.mxu0 %v1466
    %1495 = vmatprep.subr.mxu0 0.0
    %1496 = vmatpush1.msra.mxu0 %v1467
    %1497 = vmatprep.subr.mxu0 0.0
    %1498 = vmatpush1.msra.mxu0 %v1468
    %1499 = vmatprep.subr.mxu0 0.0
    %1500 = vmatpush1.msra.mxu0 %v1469
    %1501 = vmatprep.subr.mxu0 0.0
    %1502 = vmatpush1.msra.mxu0 %v1470
    %1503 = vmatprep.subr.mxu0 0.0
    %1504 = vmatpush1.msra.mxu0 0.0
    %1505 = vmatprep.subr.mxu0 0.0
    %1506 = vmatpush1.msra.mxu0 0.0
    %1507 = vmatprep.subr.mxu0 0.0
    %1508 = vmatpush1.msra.mxu0 0.0
    %1509 = vmatprep.subr.mxu0 0.0
    %1510 = vmatpush1.msra.mxu0 0.0
    %1511 = vmatprep.subr.mxu0 0.0
    %1512 = vmatpush1.msra.mxu0 0.0
    %1513 = vmatprep.subr.mxu0 0.0
    %1514 = vmatpush1.msra.mxu0 0.0
    %1515 = vmatprep.subr.mxu0 0.0
    %1516 = vmatpush1.msra.mxu0 0.0
    %1517 = vmatprep.subr.mxu0 0.0
    %1518 = vmatpush1.msra.mxu0 0.0
    %1519 = vmatprep.subr.mxu0 0.0
    %1520 = vmatpush1.msra.mxu0 0.0
    %1521 = vmatprep.subr.mxu0 0.0
    %1522 = vmatpush1.msra.mxu0 0.0
    %1523 = vmatprep.subr.mxu0 0.0
    %1524 = vmatpush1.msra.mxu0 0.0
    %1525 = vmatprep.subr.mxu0 0.0
    %1526 = vmatpush1.msra.mxu0 0.0
    %1527 = vmatprep.subr.mxu0 0.0
    %1528 = vmatpush1.msra.mxu0 0.0
    %1529 = vmatprep.subr.mxu0 0.0
    %1530 = vmatpush1.msra.mxu0 0.0
    %1531 = vmatprep.subr.mxu0 0.0
    %1532 = vmatpush1.msra.mxu0 0.0
    %1533 = vmatprep.subr.mxu0 0.0
    %1534 = vmatpush1.msra.mxu0 0.0
    %1535 = vmatprep.mubr.f32.mxu0 0.0
    %1536 = vmatmul.mubr.f32.gmra.mrb[0].mxu0 %v1250
    %v1537 = vpop.f32.mrb[0].mxu0
    %v1538 = vadd.f32 0.0, %v1537
    %v1539 = vpop.f32.mrb[0].mxu0
    %1540 = vdwg.mxu0
    %v1541 = vadd.f32 %v1452, %v1538
    %v1542 = vld [vmem:[%s590] sm:$0xff]
    %v1543 = vld [vmem:[%s590 + $0x8] sm:$0xff]
    %v1544 = vld [vmem:[%s590 + $0x10] sm:$0xff]
    %v1545 = vld [vmem:[%s590 + $0x18] sm:$0xff]
    %v1546 = vld [vmem:[%s590 + $0x20] sm:$0xff]
    %v1547 = vld [vmem:[%s590 + $0x28] sm:$0xff]
    %v1548 = vld [vmem:[%s590 + $0x30] sm:$0xff]
    %v1549 = vld [vmem:[%s590 + $0x38] sm:$0xff]
    %v1550 = vld [vmem:[%s590 + $0x40] sm:$0xff]
    %v1551 = vld [vmem:[%s590 + $0x48] sm:$0xff]
    %v1552 = vld [vmem:[%s590 + $0x50] sm:$0xff]
    %v1553 = vld [vmem:[%s590 + $0x58] sm:$0xff]
    %v1554 = vld [vmem:[%s590 + $0x60] sm:$0xff]
    %v1555 = vld [vmem:[%s590 + $0x68] sm:$0xff]
    %v1556 = vld [vmem:[%s590 + $0x70] sm:$0xff]
    %v1557 = vld [vmem:[%s590 + $0x78] sm:$0xff]
    %1558 = vmatprep.subr.mxu0 0.0
    %1559 = vmatpush1.msra.mxu0 %v1542
    %1560 = vmatprep.subr.mxu0 0.0
    %1561 = vmatpush1.msra.mxu0 %v1543
    %1562 = vmatprep.subr.mxu0 0.0
    %1563 = vmatpush1.msra.mxu0 %v1544
    %1564 = vmatprep.subr.mxu0 0.0
    %1565 = vmatpush1.msra.mxu0 %v1545
    %1566 = vmatprep.subr.mxu0 0.0
    %1567 = vmatpush1.msra.mxu0 %v1546
    %1568 = vmatprep.subr.mxu0 0.0
    %1569 = vmatpush1.msra.mxu0 %v1547
    %1570 = vmatprep.subr.mxu0 0.0
    %1571 = vmatpush1.msra.mxu0 %v1548
    %1572 = vmatprep.subr.mxu0 0.0
    %1573 = vmatpush1.msra.mxu0 %v1549
    %1574 = vmatprep.subr.mxu0 0.0
    %1575 = vmatpush1.msra.mxu0 %v1550
    %1576 = vmatprep.subr.mxu0 0.0
    %1577 = vmatpush1.msra.mxu0 %v1551
    %1578 = vmatprep.subr.mxu0 0.0
    %1579 = vmatpush1.msra.mxu0 %v1552
    %1580 = vmatprep.subr.mxu0 0.0
    %1581 = vmatpush1.msra.mxu0 %v1553
    %1582 = vmatprep.subr.mxu0 0.0
    %1583 = vmatpush1.msra.mxu0 %v1554
    %1584 = vmatprep.subr.mxu0 0.0
    %1585 = vmatpush1.msra.mxu0 %v1555
    %1586 = vmatprep.subr.mxu0 0.0
    %1587 = vmatpush1.msra.mxu0 %v1556
    %1588 = vmatprep.subr.mxu0 0.0
    %1589 = vmatpush1.msra.mxu0 %v1557
    %1590 = vmatprep.subr.mxu0 0.0
    %1591 = vmatpush1.msra.mxu0 0.0
    %1592 = vmatprep.subr.mxu0 0.0
    %1593 = vmatpush1.msra.mxu0 0.0
    %1594 = vmatprep.subr.mxu0 0.0
    %1595 = vmatpush1.msra.mxu0 0.0
    %1596 = vmatprep.subr.mxu0 0.0
    %1597 = vmatpush1.msra.mxu0 0.0
    %1598 = vmatprep.subr.mxu0 0.0
    %1599 = vmatpush1.msra.mxu0 0.0
    %1600 = vmatprep.subr.mxu0 0.0
    %1601 = vmatpush1.msra.mxu0 0.0
    %1602 = vmatprep.subr.mxu0 0.0
    %1603 = vmatpush1.msra.mxu0 0.0
    %1604 = vmatprep.subr.mxu0 0.0
    %1605 = vmatpush1.msra.mxu0 0.0
    %1606 = vmatprep.subr.mxu0 0.0
    %1607 = vmatpush1.msra.mxu0 0.0
    %1608 = vmatprep.subr.mxu0 0.0
    %1609 = vmatpush1.msra.mxu0 0.0
    %1610 = vmatprep.subr.mxu0 0.0
    %1611 = vmatpush1.msra.mxu0 0.0
    %1612 = vmatprep.subr.mxu0 0.0
    %1613 = vmatpush1.msra.mxu0 0.0
    %1614 = vmatprep.subr.mxu0 0.0
    %1615 = vmatpush1.msra.mxu0 0.0
    %1616 = vmatprep.subr.mxu0 0.0
    %1617 = vmatpush1.msra.mxu0 0.0
    %1618 = vmatprep.subr.mxu0 0.0
    %1619 = vmatpush1.msra.mxu0 0.0
    %1620 = vmatprep.subr.mxu0 0.0
    %1621 = vmatpush1.msra.mxu0 0.0
    %1622 = vmatprep.mubr.f32.mxu0 0.0
    %1623 = vmatmul.mubr.f32.gmra.mrb[0].mxu0 %v1255
    %v1624 = vpop.f32.mrb[0].mxu0
    %v1625 = vadd.f32 0.0, %v1624
    %v1626 = vpop.f32.mrb[0].mxu0
    %1627 = vdwg.mxu0
    %v1628 = vadd.f32 %v1541, %v1625
    %v1629 = vld [vmem:[%s678] sm:$0xff]
    %v1630 = vld [vmem:[%s678 + $0x8] sm:$0xff]
    %v1631 = vld [vmem:[%s678 + $0x10] sm:$0xff]
    %v1632 = vld [vmem:[%s678 + $0x18] sm:$0xff]
    %v1633 = vld [vmem:[%s678 + $0x20] sm:$0xff]
    %v1634 = vld [vmem:[%s678 + $0x28] sm:$0xff]
    %v1635 = vld [vmem:[%s678 + $0x30] sm:$0xff]
    %v1636 = vld [vmem:[%s678 + $0x38] sm:$0xff]
    %v1637 = vld [vmem:[%s678 + $0x40] sm:$0xff]
    %v1638 = vld [vmem:[%s678 + $0x48] sm:$0xff]
    %v1639 = vld [vmem:[%s678 + $0x50] sm:$0xff]
    %v1640 = vld [vmem:[%s678 + $0x58] sm:$0xff]
    %v1641 = vld [vmem:[%s678 + $0x60] sm:$0xff]
    %v1642 = vld [vmem:[%s678 + $0x68] sm:$0xff]
    %v1643 = vld [vmem:[%s678 + $0x70] sm:$0xff]
    %v1644 = vld [vmem:[%s678 + $0x78] sm:$0xff]
    %1645 = vmatprep.subr.mxu0 0.0
    %1646 = vmatpush1.msra.mxu0 %v1629
    %1647 = vmatprep.subr.mxu0 0.0
    %1648 = vmatpush1.msra.mxu0 %v1630
    %1649 = vmatprep.subr.mxu0 0.0
    %1650 = vmatpush1.msra.mxu0 %v1631
    %1651 = vmatprep.subr.mxu0 0.0
    %1652 = vmatpush1.msra.mxu0 %v1632
    %1653 = vmatprep.subr.mxu0 0.0
    %1654 = vmatpush1.msra.mxu0 %v1633
    %1655 = vmatprep.subr.mxu0 0.0
    %1656 = vmatpush1.msra.mxu0 %v1634
    %1657 = vmatprep.subr.mxu0 0.0
    %1658 = vmatpush1.msra.mxu0 %v1635
    %1659 = vmatprep.subr.mxu0 0.0
    %1660 = vmatpush1.msra.mxu0 %v1636
    %1661 = vmatprep.subr.mxu0 0.0
    %1662 = vmatpush1.msra.mxu0 %v1637
    %1663 = vmatprep.subr.mxu0 0.0
    %1664 = vmatpush1.msra.mxu0 %v1638
    %1665 = vmatprep.subr.mxu0 0.0
    %1666 = vmatpush1.msra.mxu0 %v1639
    %1667 = vmatprep.subr.mxu0 0.0
    %1668 = vmatpush1.msra.mxu0 %v1640
    %1669 = vmatprep.subr.mxu0 0.0
    %1670 = vmatpush1.msra.mxu0 %v1641
    %1671 = vmatprep.subr.mxu0 0.0
    %1672 = vmatpush1.msra.mxu0 %v1642
    %1673 = vmatprep.subr.mxu0 0.0
    %1674 = vmatpush1.msra.mxu0 %v1643
    %1675 = vmatprep.subr.mxu0 0.0
    %1676 = vmatpush1.msra.mxu0 %v1644
    %1677 = vmatprep.subr.mxu0 0.0
    %1678 = vmatpush1.msra.mxu0 0.0
    %1679 = vmatprep.subr.mxu0 0.0
    %1680 = vmatpush1.msra.mxu0 0.0
    %1681 = vmatprep.subr.mxu0 0.0
    %1682 = vmatpush1.msra.mxu0 0.0
    %1683 = vmatprep.subr.mxu0 0.0
    %1684 = vmatpush1.msra.mxu0 0.0
    %1685 = vmatprep.subr.mxu0 0.0
    %1686 = vmatpush1.msra.mxu0 0.0
    %1687 = vmatprep.subr.mxu0 0.0
    %1688 = vmatpush1.msra.mxu0 0.0
    %1689 = vmatprep.subr.mxu0 0.0
    %1690 = vmatpush1.msra.mxu0 0.0
    %1691 = vmatprep.subr.mxu0 0.0
    %1692 = vmatpush1.msra.mxu0 0.0
    %1693 = vmatprep.subr.mxu0 0.0
    %1694 = vmatpush1.msra.mxu0 0.0
    %1695 = vmatprep.subr.mxu0 0.0
    %1696 = vmatpush1.msra.mxu0 0.0
    %1697 = vmatprep.subr.mxu0 0.0
    %1698 = vmatpush1.msra.mxu0 0.0
    %1699 = vmatprep.subr.mxu0 0.0
    %1700 = vmatpush1.msra.mxu0 0.0
    %1701 = vmatprep.subr.mxu0 0.0
    %1702 = vmatpush1.msra.mxu0 0.0
    %1703 = vmatprep.subr.mxu0 0.0
    %1704 = vmatpush1.msra.mxu0 0.0
    %1705 = vmatprep.subr.mxu0 0.0
    %1706 = vmatpush1.msra.mxu0 0.0
    %1707 = vmatprep.subr.mxu0 0.0
    %1708 = vmatpush1.msra.mxu0 0.0
    %1709 = vmatprep.mubr.f32.mxu0 0.0
    %1710 = vmatmul.mubr.f32.gmra.mrb[0].mxu0 %v1260
    %v1711 = vpop.f32.mrb[0].mxu0
    %v1712 = vadd.f32 0.0, %v1711
    %v1713 = vpop.f32.mrb[0].mxu0
    %1714 = vdwg.mxu0
    %v1715 = vadd.f32 %v1628, %v1712
    %v1716 = vld [vmem:[%s766] sm:$0xff]
    %v1717 = vld [vmem:[%s766 + $0x8] sm:$0xff]
    %v1718 = vld [vmem:[%s766 + $0x10] sm:$0xff]
    %v1719 = vld [vmem:[%s766 + $0x18] sm:$0xff]
    %v1720 = vld [vmem:[%s766 + $0x20] sm:$0xff]
    %v1721 = vld [vmem:[%s766 + $0x28] sm:$0xff]
    %v1722 = vld [vmem:[%s766 + $0x30] sm:$0xff]
    %v1723 = vld [vmem:[%s766 + $0x38] sm:$0xff]
    %v1724 = vld [vmem:[%s766 + $0x40] sm:$0xff]
    %v1725 = vld [vmem:[%s766 + $0x48] sm:$0xff]
    %v1726 = vld [vmem:[%s766 + $0x50] sm:$0xff]
    %v1727 = vld [vmem:[%s766 + $0x58] sm:$0xff]
    %v1728 = vld [vmem:[%s766 + $0x60] sm:$0xff]
    %v1729 = vld [vmem:[%s766 + $0x68] sm:$0xff]
    %v1730 = vld [vmem:[%s766 + $0x70] sm:$0xff]
    %v1731 = vld [vmem:[%s766 + $0x78] sm:$0xff]
    %1732 = vmatprep.subr.mxu0 0.0
    %1733 = vmatpush1.msra.mxu0 %v1716
    %1734 = vmatprep.subr.mxu0 0.0
    %1735 = vmatpush1.msra.mxu0 %v1717
    %1736 = vmatprep.subr.mxu0 0.0
    %1737 = vmatpush1.msra.mxu0 %v1718
    %1738 = vmatprep.subr.mxu0 0.0
    %1739 = vmatpush1.msra.mxu0 %v1719
    %1740 = vmatprep.subr.mxu0 0.0
    %1741 = vmatpush1.msra.mxu0 %v1720
    %1742 = vmatprep.subr.mxu0 0.0
    %1743 = vmatpush1.msra.mxu0 %v1721
    %1744 = vmatprep.subr.mxu0 0.0
    %1745 = vmatpush1.msra.mxu0 %v1722
    %1746 = vmatprep.subr.mxu0 0.0
    %1747 = vmatpush1.msra.mxu0 %v1723
    %1748 = vmatprep.subr.mxu0 0.0
    %1749 = vmatpush1.msra.mxu0 %v1724
    %1750 = vmatprep.subr.mxu0 0.0
    %1751 = vmatpush1.msra.mxu0 %v1725
    %1752 = vmatprep.subr.mxu0 0.0
    %1753 = vmatpush1.msra.mxu0 %v1726
    %1754 = vmatprep.subr.mxu0 0.0
    %1755 = vmatpush1.msra.mxu0 %v1727
    %1756 = vmatprep.subr.mxu0 0.0
    %1757 = vmatpush1.msra.mxu0 %v1728
    %1758 = vmatprep.subr.mxu0 0.0
    %1759 = vmatpush1.msra.mxu0 %v1729
    %1760 = vmatprep.subr.mxu0 0.0
    %1761 = vmatpush1.msra.mxu0 %v1730
    %1762 = vmatprep.subr.mxu0 0.0
    %1763 = vmatpush1.msra.mxu0 %v1731
    %1764 = vmatprep.subr.mxu0 0.0
    %1765 = vmatpush1.msra.mxu0 0.0
    %1766 = vmatprep.subr.mxu0 0.0
    %1767 = vmatpush1.msra.mxu0 0.0
    %1768 = vmatprep.subr.mxu0 0.0
    %1769 = vmatpush1.msra.mxu0 0.0
    %1770 = vmatprep.subr.mxu0 0.0
    %1771 = vmatpush1.msra.mxu0 0.0
    %1772 = vmatprep.subr.mxu0 0.0
    %1773 = vmatpush1.msra.mxu0 0.0
    %1774 = vmatprep.subr.mxu0 0.0
    %1775 = vmatpush1.msra.mxu0 0.0
    %1776 = vmatprep.subr.mxu0 0.0
    %1777 = vmatpush1.msra.mxu0 0.0
    %1778 = vmatprep.subr.mxu0 0.0
    %1779 = vmatpush1.msra.mxu0 0.0
    %1780 = vmatprep.subr.mxu0 0.0
    %1781 = vmatpush1.msra.mxu0 0.0
    %1782 = vmatprep.subr.mxu0 0.0
    %1783 = vmatpush1.msra.mxu0 0.0
    %1784 = vmatprep.subr.mxu0 0.0
    %1785 = vmatpush1.msra.mxu0 0.0
    %1786 = vmatprep.subr.mxu0 0.0
    %1787 = vmatpush1.msra.mxu0 0.0
    %1788 = vmatprep.subr.mxu0 0.0
    %1789 = vmatpush1.msra.mxu0 0.0
    %1790 = vmatprep.subr.mxu0 0.0
    %1791 = vmatpush1.msra.mxu0 0.0
    %1792 = vmatprep.subr.mxu0 0.0
    %1793 = vmatpush1.msra.mxu0 0.0
    %1794 = vmatprep.subr.mxu0 0.0
    %1795 = vmatpush1.msra.mxu0 0.0
    %1796 = vmatprep.mubr.f32.mxu0 0.0
    %1797 = vmatmul.mubr.f32.gmra.mrb[0].mxu0 %v1265
    %v1798 = vpop.f32.mrb[0].mxu0
    %v1799 = vadd.f32 0.0, %v1798
    %v1800 = vpop.f32.mrb[0].mxu0
    %1801 = vdwg.mxu0
    %v1802 = vadd.f32 %v1715, %v1799
    %v1803 = vld [vmem:[%s854] sm:$0xff]
    %v1804 = vld [vmem:[%s854 + $0x8] sm:$0xff]
    %v1805 = vld [vmem:[%s854 + $0x10] sm:$0xff]
    %v1806 = vld [vmem:[%s854 + $0x18] sm:$0xff]
    %v1807 = vld [vmem:[%s854 + $0x20] sm:$0xff]
    %v1808 = vld [vmem:[%s854 + $0x28] sm:$0xff]
    %v1809 = vld [vmem:[%s854 + $0x30] sm:$0xff]
    %v1810 = vld [vmem:[%s854 + $0x38] sm:$0xff]
    %v1811 = vld [vmem:[%s854 + $0x40] sm:$0xff]
    %v1812 = vld [vmem:[%s854 + $0x48] sm:$0xff]
    %v1813 = vld [vmem:[%s854 + $0x50] sm:$0xff]
    %v1814 = vld [vmem:[%s854 + $0x58] sm:$0xff]
    %v1815 = vld [vmem:[%s854 + $0x60] sm:$0xff]
    %v1816 = vld [vmem:[%s854 + $0x68] sm:$0xff]
    %v1817 = vld [vmem:[%s854 + $0x70] sm:$0xff]
    %v1818 = vld [vmem:[%s854 + $0x78] sm:$0xff]
    %1819 = vmatprep.subr.mxu0 0.0
    %1820 = vmatpush1.msra.mxu0 %v1803
    %1821 = vmatprep.subr.mxu0 0.0
    %1822 = vmatpush1.msra.mxu0 %v1804
    %1823 = vmatprep.subr.mxu0 0.0
    %1824 = vmatpush1.msra.mxu0 %v1805
    %1825 = vmatprep.subr.mxu0 0.0
    %1826 = vmatpush1.msra.mxu0 %v1806
    %1827 = vmatprep.subr.mxu0 0.0
    %1828 = vmatpush1.msra.mxu0 %v1807
    %1829 = vmatprep.subr.mxu0 0.0
    %1830 = vmatpush1.msra.mxu0 %v1808
    %1831 = vmatprep.subr.mxu0 0.0
    %1832 = vmatpush1.msra.mxu0 %v1809
    %1833 = vmatprep.subr.mxu0 0.0
    %1834 = vmatpush1.msra.mxu0 %v1810
    %1835 = vmatprep.subr.mxu0 0.0
    %1836 = vmatpush1.msra.mxu0 %v1811
    %1837 = vmatprep.subr.mxu0 0.0
    %1838 = vmatpush1.msra.mxu0 %v1812
    %1839 = vmatprep.subr.mxu0 0.0
    %1840 = vmatpush1.msra.mxu0 %v1813
    %1841 = vmatprep.subr.mxu0 0.0
    %1842 = vmatpush1.msra.mxu0 %v1814
    %1843 = vmatprep.subr.mxu0 0.0
    %1844 = vmatpush1.msra.mxu0 %v1815
    %1845 = vmatprep.subr.mxu0 0.0
    %1846 = vmatpush1.msra.mxu0 %v1816
    %1847 = vmatprep.subr.mxu0 0.0
    %1848 = vmatpush1.msra.mxu0 %v1817
    %1849 = vmatprep.subr.mxu0 0.0
    %1850 = vmatpush1.msra.mxu0 %v1818
    %1851 = vmatprep.subr.mxu0 0.0
    %1852 = vmatpush1.msra.mxu0 0.0
    %1853 = vmatprep.subr.mxu0 0.0
    %1854 = vmatpush1.msra.mxu0 0.0
    %1855 = vmatprep.subr.mxu0 0.0
    %1856 = vmatpush1.msra.mxu0 0.0
    %1857 = vmatprep.subr.mxu0 0.0
    %1858 = vmatpush1.msra.mxu0 0.0
    %1859 = vmatprep.subr.mxu0 0.0
    %1860 = vmatpush1.msra.mxu0 0.0
    %1861 = vmatprep.subr.mxu0 0.0
    %1862 = vmatpush1.msra.mxu0 0.0
    %1863 = vmatprep.subr.mxu0 0.0
    %1864 = vmatpush1.msra.mxu0 0.0
    %1865 = vmatprep.subr.mxu0 0.0
    %1866 = vmatpush1.msra.mxu0 0.0
    %1867 = vmatprep.subr.mxu0 0.0
    %1868 = vmatpush1.msra.mxu0 0.0
    %1869 = vmatprep.subr.mxu0 0.0
    %1870 = vmatpush1.msra.mxu0 0.0
    %1871 = vmatprep.subr.mxu0 0.0
    %1872 = vmatpush1.msra.mxu0 0.0
    %1873 = vmatprep.subr.mxu0 0.0
    %1874 = vmatpush1.msra.mxu0 0.0
    %1875 = vmatprep.subr.mxu0 0.0
    %1876 = vmatpush1.msra.mxu0 0.0
    %1877 = vmatprep.subr.mxu0 0.0
    %1878 = vmatpush1.msra.mxu0 0.0
    %1879 = vmatprep.subr.mxu0 0.0
    %1880 = vmatpush1.msra.mxu0 0.0
    %1881 = vmatprep.subr.mxu0 0.0
    %1882 = vmatpush1.msra.mxu0 0.0
    %1883 = vmatprep.mubr.f32.mxu0 0.0
    %1884 = vmatmul.mubr.f32.gmra.mrb[0].mxu0 %v1270
    %v1885 = vpop.f32.mrb[0].mxu0
    %v1886 = vadd.f32 0.0, %v1885
    %v1887 = vpop.f32.mrb[0].mxu0
    %1888 = vdwg.mxu0
    %v1889 = vadd.f32 %v1802, %v1886
    %v1890 = vld [vmem:[%s942] sm:$0xff]
    %v1891 = vld [vmem:[%s942 + $0x8] sm:$0xff]
    %v1892 = vld [vmem:[%s942 + $0x10] sm:$0xff]
    %v1893 = vld [vmem:[%s942 + $0x18] sm:$0xff]
    %v1894 = vld [vmem:[%s942 + $0x20] sm:$0xff]
    %v1895 = vld [vmem:[%s942 + $0x28] sm:$0xff]
    %v1896 = vld [vmem:[%s942 + $0x30] sm:$0xff]
    %v1897 = vld [vmem:[%s942 + $0x38] sm:$0xff]
    %v1898 = vld [vmem:[%s942 + $0x40] sm:$0xff]
    %v1899 = vld [vmem:[%s942 + $0x48] sm:$0xff]
    %v1900 = vld [vmem:[%s942 + $0x50] sm:$0xff]
    %v1901 = vld [vmem:[%s942 + $0x58] sm:$0xff]
    %v1902 = vld [vmem:[%s942 + $0x60] sm:$0xff]
    %v1903 = vld [vmem:[%s942 + $0x68] sm:$0xff]
    %v1904 = vld [vmem:[%s942 + $0x70] sm:$0xff]
    %v1905 = vld [vmem:[%s942 + $0x78] sm:$0xff]
    %1906 = vmatprep.subr.mxu0 0.0
    %1907 = vmatpush1.msra.mxu0 %v1890
    %1908 = vmatprep.subr.mxu0 0.0
    %1909 = vmatpush1.msra.mxu0 %v1891
    %1910 = vmatprep.subr.mxu0 0.0
    %1911 = vmatpush1.msra.mxu0 %v1892
    %1912 = vmatprep.subr.mxu0 0.0
    %1913 = vmatpush1.msra.mxu0 %v1893
    %1914 = vmatprep.subr.mxu0 0.0
    %1915 = vmatpush1.msra.mxu0 %v1894
    %1916 = vmatprep.subr.mxu0 0.0
    %1917 = vmatpush1.msra.mxu0 %v1895
    %1918 = vmatprep.subr.mxu0 0.0
    %1919 = vmatpush1.msra.mxu0 %v1896
    %1920 = vmatprep.subr.mxu0 0.0
    %1921 = vmatpush1.msra.mxu0 %v1897
    %1922 = vmatprep.subr.mxu0 0.0
    %1923 = vmatpush1.msra.mxu0 %v1898
    %1924 = vmatprep.subr.mxu0 0.0
    %1925 = vmatpush1.msra.mxu0 %v1899
    %1926 = vmatprep.subr.mxu0 0.0
    %1927 = vmatpush1.msra.mxu0 %v1900
    %1928 = vmatprep.subr.mxu0 0.0
    %1929 = vmatpush1.msra.mxu0 %v1901
    %1930 = vmatprep.subr.mxu0 0.0
    %1931 = vmatpush1.msra.mxu0 %v1902
    %1932 = vmatprep.subr.mxu0 0.0
    %1933 = vmatpush1.msra.mxu0 %v1903
    %1934 = vmatprep.subr.mxu0 0.0
    %1935 = vmatpush1.msra.mxu0 %v1904
    %1936 = vmatprep.subr.mxu0 0.0
    %1937 = vmatpush1.msra.mxu0 %v1905
    %1938 = vmatprep.subr.mxu0 0.0
    %1939 = vmatpush1.msra.mxu0 0.0
    %1940 = vmatprep.subr.mxu0 0.0
    %1941 = vmatpush1.msra.mxu0 0.0
    %1942 = vmatprep.subr.mxu0 0.0
    %1943 = vmatpush1.msra.mxu0 0.0
    %1944 = vmatprep.subr.mxu0 0.0
    %1945 = vmatpush1.msra.mxu0 0.0
    %1946 = vmatprep.subr.mxu0 0.0
    %1947 = vmatpush1.msra.mxu0 0.0
    %1948 = vmatprep.subr.mxu0 0.0
    %1949 = vmatpush1.msra.mxu0 0.0
    %1950 = vmatprep.subr.mxu0 0.0
    %1951 = vmatpush1.msra.mxu0 0.0
    %1952 = vmatprep.subr.mxu0 0.0
    %1953 = vmatpush1.msra.mxu0 0.0
    %1954 = vmatprep.subr.mxu0 0.0
    %1955 = vmatpush1.msra.mxu0 0.0
    %1956 = vmatprep.subr.mxu0 0.0
    %1957 = vmatpush1.msra.mxu0 0.0
    %1958 = vmatprep.subr.mxu0 0.0
    %1959 = vmatpush1.msra.mxu0 0.0
    %1960 = vmatprep.subr.mxu0 0.0
    %1961 = vmatpush1.msra.mxu0 0.0
    %1962 = vmatprep.subr.mxu0 0.0
    %1963 = vmatpush1.msra.mxu0 0.0
    %1964 = vmatprep.subr.mxu0 0.0
    %1965 = vmatpush1.msra.mxu0 0.0
    %1966 = vmatprep.subr.mxu0 0.0
    %1967 = vmatpush1.msra.mxu0 0.0
    %1968 = vmatprep.subr.mxu0 0.0
    %1969 = vmatpush1.msra.mxu0 0.0
    %1970 = vmatprep.mubr.f32.mxu0 0.0
    %1971 = vmatmul.mubr.f32.gmra.mrb[0].mxu0 %v1275
    %v1972 = vpop.f32.mrb[0].mxu0
    %v1973 = vadd.f32 0.0, %v1972
    %v1974 = vpop.f32.mrb[0].mxu0
    %1975 = vdwg.mxu0
    %v1976 = vadd.f32 %v1889, %v1973
    %v1977 = vld [vmem:[%s1030] sm:$0xff]
    %v1978 = vld [vmem:[%s1030 + $0x8] sm:$0xff]
    %v1979 = vld [vmem:[%s1030 + $0x10] sm:$0xff]
    %v1980 = vld [vmem:[%s1030 + $0x18] sm:$0xff]
    %v1981 = vld [vmem:[%s1030 + $0x20] sm:$0xff]
    %v1982 = vld [vmem:[%s1030 + $0x28] sm:$0xff]
    %v1983 = vld [vmem:[%s1030 + $0x30] sm:$0xff]
    %v1984 = vld [vmem:[%s1030 + $0x38] sm:$0xff]
    %v1985 = vld [vmem:[%s1030 + $0x40] sm:$0xff]
    %v1986 = vld [vmem:[%s1030 + $0x48] sm:$0xff]
    %v1987 = vld [vmem:[%s1030 + $0x50] sm:$0xff]
    %v1988 = vld [vmem:[%s1030 + $0x58] sm:$0xff]
    %v1989 = vld [vmem:[%s1030 + $0x60] sm:$0xff]
    %v1990 = vld [vmem:[%s1030 + $0x68] sm:$0xff]
    %v1991 = vld [vmem:[%s1030 + $0x70] sm:$0xff]
    %v1992 = vld [vmem:[%s1030 + $0x78] sm:$0xff]
    %1993 = vmatprep.subr.mxu0 0.0
    %1994 = vmatpush1.msra.mxu0 %v1977
    %1995 = vmatprep.subr.mxu0 0.0
    %1996 = vmatpush1.msra.mxu0 %v1978
    %1997 = vmatprep.subr.mxu0 0.0
    %1998 = vmatpush1.msra.mxu0 %v1979
    %1999 = vmatprep.subr.mxu0 0.0
    %2000 = vmatpush1.msra.mxu0 %v1980
    %2001 = vmatprep.subr.mxu0 0.0
    %2002 = vmatpush1.msra.mxu0 %v1981
    %2003 = vmatprep.subr.mxu0 0.0
    %2004 = vmatpush1.msra.mxu0 %v1982
    %2005 = vmatprep.subr.mxu0 0.0
    %2006 = vmatpush1.msra.mxu0 %v1983
    %2007 = vmatprep.subr.mxu0 0.0
    %2008 = vmatpush1.msra.mxu0 %v1984
    %2009 = vmatprep.subr.mxu0 0.0
    %2010 = vmatpush1.msra.mxu0 %v1985
    %2011 = vmatprep.subr.mxu0 0.0
    %2012 = vmatpush1.msra.mxu0 %v1986
    %2013 = vmatprep.subr.mxu0 0.0
    %2014 = vmatpush1.msra.mxu0 %v1987
    %2015 = vmatprep.subr.mxu0 0.0
    %2016 = vmatpush1.msra.mxu0 %v1988
    %2017 = vmatprep.subr.mxu0 0.0
    %2018 = vmatpush1.msra.mxu0 %v1989
    %2019 = vmatprep.subr.mxu0 0.0
    %2020 = vmatpush1.msra.mxu0 %v1990
    %2021 = vmatprep.subr.mxu0 0.0
    %2022 = vmatpush1.msra.mxu0 %v1991
    %2023 = vmatprep.subr.mxu0 0.0
    %2024 = vmatpush1.msra.mxu0 %v1992
    %2025 = vmatprep.subr.mxu0 0.0
    %2026 = vmatpush1.msra.mxu0 0.0
    %2027 = vmatprep.subr.mxu0 0.0
    %2028 = vmatpush1.msra.mxu0 0.0
    %2029 = vmatprep.subr.mxu0 0.0
    %2030 = vmatpush1.msra.mxu0 0.0
    %2031 = vmatprep.subr.mxu0 0.0
    %2032 = vmatpush1.msra.mxu0 0.0
    %2033 = vmatprep.subr.mxu0 0.0
    %2034 = vmatpush1.msra.mxu0 0.0
    %2035 = vmatprep.subr.mxu0 0.0
    %2036 = vmatpush1.msra.mxu0 0.0
    %2037 = vmatprep.subr.mxu0 0.0
    %2038 = vmatpush1.msra.mxu0 0.0
    %2039 = vmatprep.subr.mxu0 0.0
    %2040 = vmatpush1.msra.mxu0 0.0
    %2041 = vmatprep.subr.mxu0 0.0
    %2042 = vmatpush1.msra.mxu0 0.0
    %2043 = vmatprep.subr.mxu0 0.0
    %2044 = vmatpush1.msra.mxu0 0.0
    %2045 = vmatprep.subr.mxu0 0.0
    %2046 = vmatpush1.msra.mxu0 0.0
    %2047 = vmatprep.subr.mxu0 0.0
    %2048 = vmatpush1.msra.mxu0 0.0
    %2049 = vmatprep.subr.mxu0 0.0
    %2050 = vmatpush1.msra.mxu0 0.0
    %2051 = vmatprep.subr.mxu0 0.0
    %2052 = vmatpush1.msra.mxu0 0.0
    %2053 = vmatprep.subr.mxu0 0.0
    %2054 = vmatpush1.msra.mxu0 0.0
    %2055 = vmatprep.subr.mxu0 0.0
    %2056 = vmatpush1.msra.mxu0 0.0
    %2057 = vmatprep.mubr.f32.mxu0 0.0
    %2058 = vmatmul.mubr.f32.gmra.mrb[0].mxu0 %v1280
    %v2059 = vpop.f32.mrb[0].mxu0
    %v2060 = vadd.f32 0.0, %v2059
    %v2061 = vpop.f32.mrb[0].mxu0
    %2062 = vdwg.mxu0
    %v2063 = vadd.f32 %v1976, %v2060
    %s2064 = scalar_lea.vmem %s6, 8
    %v2065 = vld [vmem:[%s2064] sm:$0xff]
    %2067 = vset.pattern.permute.xlu0 0
    %2068 = vperm.xlu0 %2067, %v2065
    %v2069 = vpop.permute.xlu0 %2068
    %v2071 = vadd.f32 %v2063, %v2069
    %v2072 = vmax.f32 %v2071, 0.0
    %2073 = vst [vmem:[#allocation2 + $0x18] sm:$0xff] %v2072
    %v2074 = vld [vmem:[#allocation2] sm:$0xff]
    %v2075 = vld [vmem:[#allocation2 + $0x8] sm:$0xff]
    %v2076 = vld [vmem:[#allocation2 + $0x10] sm:$0xff]
    %v2077 = vld [vmem:[#allocation2 + $0x18] sm:$0xff]
    %v2078 = vld [vmem:[#allocation2 + $0x20] sm:$0xff]
    %v2079 = vld [vmem:[#allocation2 + $0x28] sm:$0xff]
    %v2080 = vld [vmem:[#allocation2 + $0x30] sm:$0xff]
    %v2081 = vld [vmem:[#allocation2 + $0x38] sm:$0xff]
    %v2082 = vld [vmem:[#allocation2 + $0x40] sm:$0xff]
    %s2083 = scalar_lea.vmem [#allocation5], 144
    %v2084 = vld [vmem:[%s2083] sm:$0xff]
    %v2085 = vld [vmem:[%s2083 + $0x8] sm:$0xff]
    %v2086 = vld [vmem:[%s2083 + $0x10] sm:$0xff]
    %v2087 = vld [vmem:[%s2083 + $0x18] sm:$0xff]
    %v2088 = vld [vmem:[%s2083 + $0x20] sm:$0xff]
    %v2089 = vld [vmem:[%s2083 + $0x28] sm:$0xff]
    %v2090 = vld [vmem:[%s2083 + $0x30] sm:$0xff]
    %v2091 = vld [vmem:[%s2083 + $0x38] sm:$0xff]
    %v2092 = vld [vmem:[%s2083 + $0x40] sm:$0xff]
    %v2094 = vsel %vm191, %v2084, 0
    %v2097 = vsel %vm191, %v2085, 0
    %v2100 = vsel %vm191, %v2086, 0
    %v2103 = vsel %vm191, %v2087, 0
    %v2106 = vsel %vm191, %v2088, 0
    %v2109 = vsel %vm191, %v2089, 0
    %v2112 = vsel %vm191, %v2090, 0
    %v2115 = vsel %vm191, %v2091, 0
    %v2118 = vsel %vm191, %v2092, 0
    %2120 = vmatprep.subr.mxu0 0.0
    %2121 = vmatpush1.msra.mxu0 %v2074
    %2122 = vmatprep.subr.mxu0 0.0
    %2123 = vmatpush1.msra.mxu0 %v2075
    %2124 = vmatprep.subr.mxu0 0.0
    %2125 = vmatpush1.msra.mxu0 %v2076
    %2126 = vmatprep.subr.mxu0 0.0
    %2127 = vmatpush1.msra.mxu0 %v2077
    %2128 = vmatprep.subr.mxu0 0.0
    %2129 = vmatpush1.msra.mxu0 %v2078
    %2130 = vmatprep.subr.mxu0 0.0
    %2131 = vmatpush1.msra.mxu0 %v2079
    %2132 = vmatprep.subr.mxu0 0.0
    %2133 = vmatpush1.msra.mxu0 %v2080
    %2134 = vmatprep.subr.mxu0 0.0
    %2135 = vmatpush1.msra.mxu0 %v2081
    %2136 = vmatprep.subr.mxu0 0.0
    %2137 = vmatpush1.msra.mxu0 %v2082
    %2138 = vmatprep.subr.mxu0 0.0
    %2139 = vmatpush1.msra.mxu0 0.0
    %2140 = vmatprep.subr.mxu0 0.0
    %2141 = vmatpush1.msra.mxu0 0.0
    %2142 = vmatprep.subr.mxu0 0.0
    %2143 = vmatpush1.msra.mxu0 0.0
    %2144 = vmatprep.subr.mxu0 0.0
    %2145 = vmatpush1.msra.mxu0 0.0
    %2146 = vmatprep.subr.mxu0 0.0
    %2147 = vmatpush1.msra.mxu0 0.0
    %2148 = vmatprep.subr.mxu0 0.0
    %2149 = vmatpush1.msra.mxu0 0.0
    %2150 = vmatprep.subr.mxu0 0.0
    %2151 = vmatpush1.msra.mxu0 0.0
    %2152 = vmatprep.subr.mxu0 0.0
    %2153 = vmatpush1.msra.mxu0 0.0
    %2154 = vmatprep.subr.mxu0 0.0
    %2155 = vmatpush1.msra.mxu0 0.0
    %2156 = vmatprep.subr.mxu0 0.0
    %2157 = vmatpush1.msra.mxu0 0.0
    %2158 = vmatprep.subr.mxu0 0.0
    %2159 = vmatpush1.msra.mxu0 0.0
    %2160 = vmatprep.subr.mxu0 0.0
    %2161 = vmatpush1.msra.mxu0 0.0
    %2162 = vmatprep.subr.mxu0 0.0
    %2163 = vmatpush1.msra.mxu0 0.0
    %2164 = vmatprep.subr.mxu0 0.0
    %2165 = vmatpush1.msra.mxu0 0.0
    %2166 = vmatprep.subr.mxu0 0.0
    %2167 = vmatpush1.msra.mxu0 0.0
    %2168 = vmatprep.subr.mxu0 0.0
    %2169 = vmatpush1.msra.mxu0 0.0
    %2170 = vmatprep.subr.mxu0 0.0
    %2171 = vmatpush1.msra.mxu0 0.0
    %2172 = vmatprep.subr.mxu0 0.0
    %2173 = vmatpush1.msra.mxu0 0.0
    %2174 = vmatprep.subr.mxu0 0.0
    %2175 = vmatpush1.msra.mxu0 0.0
    %2176 = vmatprep.subr.mxu0 0.0
    %2177 = vmatpush1.msra.mxu0 0.0
    %2178 = vmatprep.subr.mxu0 0.0
    %2179 = vmatpush1.msra.mxu0 0.0
    %2180 = vmatprep.subr.mxu0 0.0
    %2181 = vmatpush1.msra.mxu0 0.0
    %2182 = vmatprep.subr.mxu0 0.0
    %2183 = vmatpush1.msra.mxu0 0.0
    %2184 = vmatprep.mubr.f32.mxu0 0.0
    %2185 = vmatmul.mubr.f32.gmra.mrb[0].mxu0 %v2094
    %v2186 = vpop.f32.mrb[0].mxu0
    %v2187 = vadd.f32 0.0, %v2186
    %v2188 = vpop.f32.mrb[0].mxu0
    %2189 = vmatprep.mubr.f32.mxu0 0.0
    %2190 = vmatmul.mubr.f32.gmra.mrb[0].mxu0 %v2097
    %v2191 = vpop.f32.mrb[0].mxu0
    %v2192 = vadd.f32 0.0, %v2191
    %v2193 = vpop.f32.mrb[0].mxu0
    %2194 = vmatprep.mubr.f32.mxu0 0.0
    %2195 = vmatmul.mubr.f32.gmra.mrb[0].mxu0 %v2100
    %v2196 = vpop.f32.mrb[0].mxu0
    %v2197 = vadd.f32 0.0, %v2196
    %v2198 = vpop.f32.mrb[0].mxu0
    %2199 = vmatprep.mubr.f32.mxu0 0.0
    %2200 = vmatmul.mubr.f32.gmra.mrb[0].mxu0 %v2103
    %v2201 = vpop.f32.mrb[0].mxu0
    %v2202 = vadd.f32 0.0, %v2201
    %v2203 = vpop.f32.mrb[0].mxu0
    %2204 = vmatprep.mubr.f32.mxu0 0.0
    %2205 = vmatmul.mubr.f32.gmra.mrb[0].mxu0 %v2106
    %v2206 = vpop.f32.mrb[0].mxu0
    %v2207 = vadd.f32 0.0, %v2206
    %v2208 = vpop.f32.mrb[0].mxu0
    %2209 = vmatprep.mubr.f32.mxu0 0.0
    %2210 = vmatmul.mubr.f32.gmra.mrb[0].mxu0 %v2109
    %v2211 = vpop.f32.mrb[0].mxu0
    %v2212 = vadd.f32 0.0, %v2211
    %v2213 = vpop.f32.mrb[0].mxu0
    %2214 = vmatprep.mubr.f32.mxu0 0.0
    %2215 = vmatmul.mubr.f32.gmra.mrb[0].mxu0 %v2112
    %v2216 = vpop.f32.mrb[0].mxu0
    %v2217 = vadd.f32 0.0, %v2216
    %v2218 = vpop.f32.mrb[0].mxu0
    %2219 = vmatprep.mubr.f32.mxu0 0.0
    %2220 = vmatmul.mubr.f32.gmra.mrb[0].mxu0 %v2115
    %v2221 = vpop.f32.mrb[0].mxu0
    %v2222 = vadd.f32 0.0, %v2221
    %v2223 = vpop.f32.mrb[0].mxu0
    %2224 = vmatprep.mubr.f32.mxu0 0.0
    %2225 = vmatmul.mubr.f32.gmra.mrb[0].mxu0 %v2118
    %v2226 = vpop.f32.mrb[0].mxu0
    %v2227 = vadd.f32 0.0, %v2226
    %v2228 = vpop.f32.mrb[0].mxu0
    %2229 = vdwg.mxu0
    %v2230 = vld [vmem:[#allocation3] sm:$0xff]
    %v2231 = vld [vmem:[#allocation3 + $0x8] sm:$0xff]
    %v2232 = vld [vmem:[#allocation3 + $0x10] sm:$0xff]
    %v2233 = vld [vmem:[#allocation3 + $0x18] sm:$0xff]
    %v2234 = vld [vmem:[#allocation3 + $0x20] sm:$0xff]
    %v2235 = vld [vmem:[#allocation3 + $0x28] sm:$0xff]
    %v2236 = vld [vmem:[#allocation3 + $0x30] sm:$0xff]
    %v2237 = vld [vmem:[#allocation3 + $0x38] sm:$0xff]
    %v2238 = vld [vmem:[#allocation3 + $0x40] sm:$0xff]
    %v2239 = vld [vmem:[#allocation3 + $0x48] sm:$0xff]
    %v2240 = vld [vmem:[#allocation3 + $0x50] sm:$0xff]
    %v2241 = vld [vmem:[#allocation3 + $0x58] sm:$0xff]
    %v2242 = vld [vmem:[#allocation3 + $0x60] sm:$0xff]
    %v2243 = vld [vmem:[#allocation3 + $0x68] sm:$0xff]
    %v2244 = vld [vmem:[#allocation3 + $0x70] sm:$0xff]
    %v2245 = vld [vmem:[#allocation3 + $0x78] sm:$0xff]
    %v2246 = vld [vmem:[%s345] sm:$0xff]
    %v2247 = vld [vmem:[%s345 + $0x8] sm:$0xff]
    %v2248 = vld [vmem:[%s345 + $0x10] sm:$0xff]
    %v2249 = vld [vmem:[%s345 + $0x18] sm:$0xff]
    %v2250 = vld [vmem:[%s345 + $0x20] sm:$0xff]
    %v2251 = vld [vmem:[%s345 + $0x28] sm:$0xff]
    %v2252 = vld [vmem:[%s345 + $0x30] sm:$0xff]
    %v2253 = vld [vmem:[%s345 + $0x38] sm:$0xff]
    %v2254 = vld [vmem:[%s345 + $0x40] sm:$0xff]
    %v2255 = vld [vmem:[%s345 + $0x48] sm:$0xff]
    %v2256 = vld [vmem:[%s345 + $0x50] sm:$0xff]
    %v2257 = vld [vmem:[%s345 + $0x58] sm:$0xff]
    %v2258 = vld [vmem:[%s345 + $0x60] sm:$0xff]
    %v2259 = vld [vmem:[%s345 + $0x68] sm:$0xff]
    %v2260 = vld [vmem:[%s345 + $0x70] sm:$0xff]
    %v2261 = vld [vmem:[%s345 + $0x78] sm:$0xff]
    %2262 = vmatprep.subr.mxu0 0.0
    %2263 = vmatpush1.msra.mxu0 %v2246
    %2264 = vmatprep.subr.mxu0 0.0
    %2265 = vmatpush1.msra.mxu0 %v2247
    %2266 = vmatprep.subr.mxu0 0.0
    %2267 = vmatpush1.msra.mxu0 %v2248
    %2268 = vmatprep.subr.mxu0 0.0
    %2269 = vmatpush1.msra.mxu0 %v2249
    %2270 = vmatprep.subr.mxu0 0.0
    %2271 = vmatpush1.msra.mxu0 %v2250
    %2272 = vmatprep.subr.mxu0 0.0
    %2273 = vmatpush1.msra.mxu0 %v2251
    %2274 = vmatprep.subr.mxu0 0.0
    %2275 = vmatpush1.msra.mxu0 %v2252
    %2276 = vmatprep.subr.mxu0 0.0
    %2277 = vmatpush1.msra.mxu0 %v2253
    %2278 = vmatprep.subr.mxu0 0.0
    %2279 = vmatpush1.msra.mxu0 %v2254
    %2280 = vmatprep.subr.mxu0 0.0
    %2281 = vmatpush1.msra.mxu0 %v2255
    %2282 = vmatprep.subr.mxu0 0.0
    %2283 = vmatpush1.msra.mxu0 %v2256
    %2284 = vmatprep.subr.mxu0 0.0
    %2285 = vmatpush1.msra.mxu0 %v2257
    %2286 = vmatprep.subr.mxu0 0.0
    %2287 = vmatpush1.msra.mxu0 %v2258
    %2288 = vmatprep.subr.mxu0 0.0
    %2289 = vmatpush1.msra.mxu0 %v2259
    %2290 = vmatprep.subr.mxu0 0.0
    %2291 = vmatpush1.msra.mxu0 %v2260
    %2292 = vmatprep.subr.mxu0 0.0
    %2293 = vmatpush1.msra.mxu0 %v2261
    %2294 = vmatprep.subr.mxu0 0.0
    %2295 = vmatpush1.msra.mxu0 0.0
    %2296 = vmatprep.subr.mxu0 0.0
    %2297 = vmatpush1.msra.mxu0 0.0
    %2298 = vmatprep.subr.mxu0 0.0
    %2299 = vmatpush1.msra.mxu0 0.0
    %2300 = vmatprep.subr.mxu0 0.0
    %2301 = vmatpush1.msra.mxu0 0.0
    %2302 = vmatprep.subr.mxu0 0.0
    %2303 = vmatpush1.msra.mxu0 0.0
    %2304 = vmatprep.subr.mxu0 0.0
    %2305 = vmatpush1.msra.mxu0 0.0
    %2306 = vmatprep.subr.mxu0 0.0
    %2307 = vmatpush1.msra.mxu0 0.0
    %2308 = vmatprep.subr.mxu0 0.0
    %2309 = vmatpush1.msra.mxu0 0.0
    %2310 = vmatprep.subr.mxu0 0.0
    %2311 = vmatpush1.msra.mxu0 0.0
    %2312 = vmatprep.subr.mxu0 0.0
    %2313 = vmatpush1.msra.mxu0 0.0
    %2314 = vmatprep.subr.mxu0 0.0
    %2315 = vmatpush1.msra.mxu0 0.0
    %2316 = vmatprep.subr.mxu0 0.0
    %2317 = vmatpush1.msra.mxu0 0.0
    %2318 = vmatprep.subr.mxu0 0.0
    %2319 = vmatpush1.msra.mxu0 0.0
    %2320 = vmatprep.subr.mxu0 0.0
    %2321 = vmatpush1.msra.mxu0 0.0
    %2322 = vmatprep.subr.mxu0 0.0
    %2323 = vmatpush1.msra.mxu0 0.0
    %2324 = vmatprep.subr.mxu0 0.0
    %2325 = vmatpush1.msra.mxu0 0.0
    %2326 = vmatprep.mubr.f32.mxu0 0.0
    %2327 = vmatmul.mubr.f32.gmra.mrb[0].mxu0 %v2192
    %v2328 = vpop.f32.mrb[0].mxu0
    %v2329 = vadd.f32 0.0, %v2328
    %v2330 = vpop.f32.mrb[0].mxu0
    %2331 = vdwg.mxu0
    %2332 = vmatprep.subr.mxu0 0.0
    %2333 = vmatpush1.msra.mxu0 %v2230
    %2334 = vmatprep.subr.mxu0 0.0
    %2335 = vmatpush1.msra.mxu0 %v2231
    %2336 = vmatprep.subr.mxu0 0.0
    %2337 = vmatpush1.msra.mxu0 %v2232
    %2338 = vmatprep.subr.mxu0 0.0
    %2339 = vmatpush1.msra.mxu0 %v2233
    %2340 = vmatprep.subr.mxu0 0.0
    %2341 = vmatpush1.msra.mxu0 %v2234
    %2342 = vmatprep.subr.mxu0 0.0
    %2343 = vmatpush1.msra.mxu0 %v2235
    %2344 = vmatprep.subr.mxu0 0.0
    %2345 = vmatpush1.msra.mxu0 %v2236
    %2346 = vmatprep.subr.mxu0 0.0
    %2347 = vmatpush1.msra.mxu0 %v2237
    %2348 = vmatprep.subr.mxu0 0.0
    %2349 = vmatpush1.msra.mxu0 %v2238
    %2350 = vmatprep.subr.mxu0 0.0
    %2351 = vmatpush1.msra.mxu0 %v2239
    %2352 = vmatprep.subr.mxu0 0.0
    %2353 = vmatpush1.msra.mxu0 %v2240
    %2354 = vmatprep.subr.mxu0 0.0
    %2355 = vmatpush1.msra.mxu0 %v2241
    %2356 = vmatprep.subr.mxu0 0.0
    %2357 = vmatpush1.msra.mxu0 %v2242
    %2358 = vmatprep.subr.mxu0 0.0
    %2359 = vmatpush1.msra.mxu0 %v2243
    %2360 = vmatprep.subr.mxu0 0.0
    %2361 = vmatpush1.msra.mxu0 %v2244
    %2362 = vmatprep.subr.mxu0 0.0
    %2363 = vmatpush1.msra.mxu0 %v2245
    %2364 = vmatprep.subr.mxu0 0.0
    %2365 = vmatpush1.msra.mxu0 0.0
    %2366 = vmatprep.subr.mxu0 0.0
    %2367 = vmatpush1.msra.mxu0 0.0
    %2368 = vmatprep.subr.mxu0 0.0
    %2369 = vmatpush1.msra.mxu0 0.0
    %2370 = vmatprep.subr.mxu0 0.0
    %2371 = vmatpush1.msra.mxu0 0.0
    %2372 = vmatprep.subr.mxu0 0.0
    %2373 = vmatpush1.msra.mxu0 0.0
    %2374 = vmatprep.subr.mxu0 0.0
    %2375 = vmatpush1.msra.mxu0 0.0
    %2376 = vmatprep.subr.mxu0 0.0
    %2377 = vmatpush1.msra.mxu0 0.0
    %2378 = vmatprep.subr.mxu0 0.0
    %2379 = vmatpush1.msra.mxu0 0.0
    %2380 = vmatprep.subr.mxu0 0.0
    %2381 = vmatpush1.msra.mxu0 0.0
    %2382 = vmatprep.subr.mxu0 0.0
    %2383 = vmatpush1.msra.mxu0 0.0
    %2384 = vmatprep.subr.mxu0 0.0
    %2385 = vmatpush1.msra.mxu0 0.0
    %2386 = vmatprep.subr.mxu0 0.0
    %2387 = vmatpush1.msra.mxu0 0.0
    %2388 = vmatprep.subr.mxu0 0.0
    %2389 = vmatpush1.msra.mxu0 0.0
    %2390 = vmatprep.subr.mxu0 0.0
    %2391 = vmatpush1.msra.mxu0 0.0
    %2392 = vmatprep.subr.mxu0 0.0
    %2393 = vmatpush1.msra.mxu0 0.0
    %2394 = vmatprep.subr.mxu0 0.0
    %2395 = vmatpush1.msra.mxu0 0.0
    %2396 = vmatprep.mubr.f32.mxu0 0.0
    %2397 = vmatmul.mubr.f32.gmra.mrb[0].mxu0 %v2187
    %v2398 = vpop.f32.mrb[0].mxu0
    %v2399 = vadd.f32 %v2329, %v2398
    %v2400 = vpop.f32.mrb[0].mxu0
    %2401 = vdwg.mxu0
    %v2402 = vld [vmem:[%s502] sm:$0xff]
    %v2403 = vld [vmem:[%s502 + $0x8] sm:$0xff]
    %v2404 = vld [vmem:[%s502 + $0x10] sm:$0xff]
    %v2405 = vld [vmem:[%s502 + $0x18] sm:$0xff]
    %v2406 = vld [vmem:[%s502 + $0x20] sm:$0xff]
    %v2407 = vld [vmem:[%s502 + $0x28] sm:$0xff]
    %v2408 = vld [vmem:[%s502 + $0x30] sm:$0xff]
    %v2409 = vld [vmem:[%s502 + $0x38] sm:$0xff]
    %v2410 = vld [vmem:[%s502 + $0x40] sm:$0xff]
    %v2411 = vld [vmem:[%s502 + $0x48] sm:$0xff]
    %v2412 = vld [vmem:[%s502 + $0x50] sm:$0xff]
    %v2413 = vld [vmem:[%s502 + $0x58] sm:$0xff]
    %v2414 = vld [vmem:[%s502 + $0x60] sm:$0xff]
    %v2415 = vld [vmem:[%s502 + $0x68] sm:$0xff]
    %v2416 = vld [vmem:[%s502 + $0x70] sm:$0xff]
    %v2417 = vld [vmem:[%s502 + $0x78] sm:$0xff]
    %2418 = vmatprep.subr.mxu0 0.0
    %2419 = vmatpush1.msra.mxu0 %v2402
    %2420 = vmatprep.subr.mxu0 0.0
    %2421 = vmatpush1.msra.mxu0 %v2403
    %2422 = vmatprep.subr.mxu0 0.0
    %2423 = vmatpush1.msra.mxu0 %v2404
    %2424 = vmatprep.subr.mxu0 0.0
    %2425 = vmatpush1.msra.mxu0 %v2405
    %2426 = vmatprep.subr.mxu0 0.0
    %2427 = vmatpush1.msra.mxu0 %v2406
    %2428 = vmatprep.subr.mxu0 0.0
    %2429 = vmatpush1.msra.mxu0 %v2407
    %2430 = vmatprep.subr.mxu0 0.0
    %2431 = vmatpush1.msra.mxu0 %v2408
    %2432 = vmatprep.subr.mxu0 0.0
    %2433 = vmatpush1.msra.mxu0 %v2409
    %2434 = vmatprep.subr.mxu0 0.0
    %2435 = vmatpush1.msra.mxu0 %v2410
    %2436 = vmatprep.subr.mxu0 0.0
    %2437 = vmatpush1.msra.mxu0 %v2411
    %2438 = vmatprep.subr.mxu0 0.0
    %2439 = vmatpush1.msra.mxu0 %v2412
    %2440 = vmatprep.subr.mxu0 0.0
    %2441 = vmatpush1.msra.mxu0 %v2413
    %2442 = vmatprep.subr.mxu0 0.0
    %2443 = vmatpush1.msra.mxu0 %v2414
    %2444 = vmatprep.subr.mxu0 0.0
    %2445 = vmatpush1.msra.mxu0 %v2415
    %2446 = vmatprep.subr.mxu0 0.0
    %2447 = vmatpush1.msra.mxu0 %v2416
    %2448 = vmatprep.subr.mxu0 0.0
    %2449 = vmatpush1.msra.mxu0 %v2417
    %2450 = vmatprep.subr.mxu0 0.0
    %2451 = vmatpush1.msra.mxu0 0.0
    %2452 = vmatprep.subr.mxu0 0.0
    %2453 = vmatpush1.msra.mxu0 0.0
    %2454 = vmatprep.subr.mxu0 0.0
    %2455 = vmatpush1.msra.mxu0 0.0
    %2456 = vmatprep.subr.mxu0 0.0
    %2457 = vmatpush1.msra.mxu0 0.0
    %2458 = vmatprep.subr.mxu0 0.0
    %2459 = vmatpush1.msra.mxu0 0.0
    %2460 = vmatprep.subr.mxu0 0.0
    %2461 = vmatpush1.msra.mxu0 0.0
    %2462 = vmatprep.subr.mxu0 0.0
    %2463 = vmatpush1.msra.mxu0 0.0
    %2464 = vmatprep.subr.mxu0 0.0
    %2465 = vmatpush1.msra.mxu0 0.0
    %2466 = vmatprep.subr.mxu0 0.0
    %2467 = vmatpush1.msra.mxu0 0.0
    %2468 = vmatprep.subr.mxu0 0.0
    %2469 = vmatpush1.msra.mxu0 0.0
    %2470 = vmatprep.subr.mxu0 0.0
    %2471 = vmatpush1.msra.mxu0 0.0
    %2472 = vmatprep.subr.mxu0 0.0
    %2473 = vmatpush1.msra.mxu0 0.0
    %2474 = vmatprep.subr.mxu0 0.0
    %2475 = vmatpush1.msra.mxu0 0.0
    %2476 = vmatprep.subr.mxu0 0.0
    %2477 = vmatpush1.msra.mxu0 0.0
    %2478 = vmatprep.subr.mxu0 0.0
    %2479 = vmatpush1.msra.mxu0 0.0
    %2480 = vmatprep.subr.mxu0 0.0
    %2481 = vmatpush1.msra.mxu0 0.0
    %2482 = vmatprep.mubr.f32.mxu0 0.0
    %2483 = vmatmul.mubr.f32.gmra.mrb[0].mxu0 %v2197
    %v2484 = vpop.f32.mrb[0].mxu0
    %v2485 = vadd.f32 0.0, %v2484
    %v2486 = vpop.f32.mrb[0].mxu0
    %2487 = vdwg.mxu0
    %v2488 = vadd.f32 %v2399, %v2485
    %v2489 = vld [vmem:[%s590] sm:$0xff]
    %v2490 = vld [vmem:[%s590 + $0x8] sm:$0xff]
    %v2491 = vld [vmem:[%s590 + $0x10] sm:$0xff]
    %v2492 = vld [vmem:[%s590 + $0x18] sm:$0xff]
    %v2493 = vld [vmem:[%s590 + $0x20] sm:$0xff]
    %v2494 = vld [vmem:[%s590 + $0x28] sm:$0xff]
    %v2495 = vld [vmem:[%s590 + $0x30] sm:$0xff]
    %v2496 = vld [vmem:[%s590 + $0x38] sm:$0xff]
    %v2497 = vld [vmem:[%s590 + $0x40] sm:$0xff]
    %v2498 = vld [vmem:[%s590 + $0x48] sm:$0xff]
    %v2499 = vld [vmem:[%s590 + $0x50] sm:$0xff]
    %v2500 = vld [vmem:[%s590 + $0x58] sm:$0xff]
    %v2501 = vld [vmem:[%s590 + $0x60] sm:$0xff]
    %v2502 = vld [vmem:[%s590 + $0x68] sm:$0xff]
    %v2503 = vld [vmem:[%s590 + $0x70] sm:$0xff]
    %v2504 = vld [vmem:[%s590 + $0x78] sm:$0xff]
    %2505 = vmatprep.subr.mxu0 0.0
    %2506 = vmatpush1.msra.mxu0 %v2489
    %2507 = vmatprep.subr.mxu0 0.0
    %2508 = vmatpush1.msra.mxu0 %v2490
    %2509 = vmatprep.subr.mxu0 0.0
    %2510 = vmatpush1.msra.mxu0 %v2491
    %2511 = vmatprep.subr.mxu0 0.0
    %2512 = vmatpush1.msra.mxu0 %v2492
    %2513 = vmatprep.subr.mxu0 0.0
    %2514 = vmatpush1.msra.mxu0 %v2493
    %2515 = vmatprep.subr.mxu0 0.0
    %2516 = vmatpush1.msra.mxu0 %v2494
    %2517 = vmatprep.subr.mxu0 0.0
    %2518 = vmatpush1.msra.mxu0 %v2495
    %2519 = vmatprep.subr.mxu0 0.0
    %2520 = vmatpush1.msra.mxu0 %v2496
    %2521 = vmatprep.subr.mxu0 0.0
    %2522 = vmatpush1.msra.mxu0 %v2497
    %2523 = vmatprep.subr.mxu0 0.0
    %2524 = vmatpush1.msra.mxu0 %v2498
    %2525 = vmatprep.subr.mxu0 0.0
    %2526 = vmatpush1.msra.mxu0 %v2499
    %2527 = vmatprep.subr.mxu0 0.0
    %2528 = vmatpush1.msra.mxu0 %v2500
    %2529 = vmatprep.subr.mxu0 0.0
    %2530 = vmatpush1.msra.mxu0 %v2501
    %2531 = vmatprep.subr.mxu0 0.0
    %2532 = vmatpush1.msra.mxu0 %v2502
    %2533 = vmatprep.subr.mxu0 0.0
    %2534 = vmatpush1.msra.mxu0 %v2503
    %2535 = vmatprep.subr.mxu0 0.0
    %2536 = vmatpush1.msra.mxu0 %v2504
    %2537 = vmatprep.subr.mxu0 0.0
    %2538 = vmatpush1.msra.mxu0 0.0
    %2539 = vmatprep.subr.mxu0 0.0
    %2540 = vmatpush1.msra.mxu0 0.0
    %2541 = vmatprep.subr.mxu0 0.0
    %2542 = vmatpush1.msra.mxu0 0.0
    %2543 = vmatprep.subr.mxu0 0.0
    %2544 = vmatpush1.msra.mxu0 0.0
    %2545 = vmatprep.subr.mxu0 0.0
    %2546 = vmatpush1.msra.mxu0 0.0
    %2547 = vmatprep.subr.mxu0 0.0
    %2548 = vmatpush1.msra.mxu0 0.0
    %2549 = vmatprep.subr.mxu0 0.0
    %2550 = vmatpush1.msra.mxu0 0.0
    %2551 = vmatprep.subr.mxu0 0.0
    %2552 = vmatpush1.msra.mxu0 0.0
    %2553 = vmatprep.subr.mxu0 0.0
    %2554 = vmatpush1.msra.mxu0 0.0
    %2555 = vmatprep.subr.mxu0 0.0
    %2556 = vmatpush1.msra.mxu0 0.0
    %2557 = vmatprep.subr.mxu0 0.0
    %2558 = vmatpush1.msra.mxu0 0.0
    %2559 = vmatprep.subr.mxu0 0.0
    %2560 = vmatpush1.msra.mxu0 0.0
    %2561 = vmatprep.subr.mxu0 0.0
    %2562 = vmatpush1.msra.mxu0 0.0
    %2563 = vmatprep.subr.mxu0 0.0
    %2564 = vmatpush1.msra.mxu0 0.0
    %2565 = vmatprep.subr.mxu0 0.0
    %2566 = vmatpush1.msra.mxu0 0.0
    %2567 = vmatprep.subr.mxu0 0.0
    %2568 = vmatpush1.msra.mxu0 0.0
    %2569 = vmatprep.mubr.f32.mxu0 0.0
    %2570 = vmatmul.mubr.f32.gmra.mrb[0].mxu0 %v2202
    %v2571 = vpop.f32.mrb[0].mxu0
    %v2572 = vadd.f32 0.0, %v2571
    %v2573 = vpop.f32.mrb[0].mxu0
    %2574 = vdwg.mxu0
    %v2575 = vadd.f32 %v2488, %v2572
    %v2576 = vld [vmem:[%s678] sm:$0xff]
    %v2577 = vld [vmem:[%s678 + $0x8] sm:$0xff]
    %v2578 = vld [vmem:[%s678 + $0x10] sm:$0xff]
    %v2579 = vld [vmem:[%s678 + $0x18] sm:$0xff]
    %v2580 = vld [vmem:[%s678 + $0x20] sm:$0xff]
    %v2581 = vld [vmem:[%s678 + $0x28] sm:$0xff]
    %v2582 = vld [vmem:[%s678 + $0x30] sm:$0xff]
    %v2583 = vld [vmem:[%s678 + $0x38] sm:$0xff]
    %v2584 = vld [vmem:[%s678 + $0x40] sm:$0xff]
    %v2585 = vld [vmem:[%s678 + $0x48] sm:$0xff]
    %v2586 = vld [vmem:[%s678 + $0x50] sm:$0xff]
    %v2587 = vld [vmem:[%s678 + $0x58] sm:$0xff]
    %v2588 = vld [vmem:[%s678 + $0x60] sm:$0xff]
    %v2589 = vld [vmem:[%s678 + $0x68] sm:$0xff]
    %v2590 = vld [vmem:[%s678 + $0x70] sm:$0xff]
    %v2591 = vld [vmem:[%s678 + $0x78] sm:$0xff]
    %2592 = vmatprep.subr.mxu0 0.0
    %2593 = vmatpush1.msra.mxu0 %v2576
    %2594 = vmatprep.subr.mxu0 0.0
    %2595 = vmatpush1.msra.mxu0 %v2577
    %2596 = vmatprep.subr.mxu0 0.0
    %2597 = vmatpush1.msra.mxu0 %v2578
    %2598 = vmatprep.subr.mxu0 0.0
    %2599 = vmatpush1.msra.mxu0 %v2579
    %2600 = vmatprep.subr.mxu0 0.0
    %2601 = vmatpush1.msra.mxu0 %v2580
    %2602 = vmatprep.subr.mxu0 0.0
    %2603 = vmatpush1.msra.mxu0 %v2581
    %2604 = vmatprep.subr.mxu0 0.0
    %2605 = vmatpush1.msra.mxu0 %v2582
    %2606 = vmatprep.subr.mxu0 0.0
    %2607 = vmatpush1.msra.mxu0 %v2583
    %2608 = vmatprep.subr.mxu0 0.0
    %2609 = vmatpush1.msra.mxu0 %v2584
    %2610 = vmatprep.subr.mxu0 0.0
    %2611 = vmatpush1.msra.mxu0 %v2585
    %2612 = vmatprep.subr.mxu0 0.0
    %2613 = vmatpush1.msra.mxu0 %v2586
    %2614 = vmatprep.subr.mxu0 0.0
    %2615 = vmatpush1.msra.mxu0 %v2587
    %2616 = vmatprep.subr.mxu0 0.0
    %2617 = vmatpush1.msra.mxu0 %v2588
    %2618 = vmatprep.subr.mxu0 0.0
    %2619 = vmatpush1.msra.mxu0 %v2589
    %2620 = vmatprep.subr.mxu0 0.0
    %2621 = vmatpush1.msra.mxu0 %v2590
    %2622 = vmatprep.subr.mxu0 0.0
    %2623 = vmatpush1.msra.mxu0 %v2591
    %2624 = vmatprep.subr.mxu0 0.0
    %2625 = vmatpush1.msra.mxu0 0.0
    %2626 = vmatprep.subr.mxu0 0.0
    %2627 = vmatpush1.msra.mxu0 0.0
    %2628 = vmatprep.subr.mxu0 0.0
    %2629 = vmatpush1.msra.mxu0 0.0
    %2630 = vmatprep.subr.mxu0 0.0
    %2631 = vmatpush1.msra.mxu0 0.0
    %2632 = vmatprep.subr.mxu0 0.0
    %2633 = vmatpush1.msra.mxu0 0.0
    %2634 = vmatprep.subr.mxu0 0.0
    %2635 = vmatpush1.msra.mxu0 0.0
    %2636 = vmatprep.subr.mxu0 0.0
    %2637 = vmatpush1.msra.mxu0 0.0
    %2638 = vmatprep.subr.mxu0 0.0
    %2639 = vmatpush1.msra.mxu0 0.0
    %2640 = vmatprep.subr.mxu0 0.0
    %2641 = vmatpush1.msra.mxu0 0.0
    %2642 = vmatprep.subr.mxu0 0.0
    %2643 = vmatpush1.msra.mxu0 0.0
    %2644 = vmatprep.subr.mxu0 0.0
    %2645 = vmatpush1.msra.mxu0 0.0
    %2646 = vmatprep.subr.mxu0 0.0
    %2647 = vmatpush1.msra.mxu0 0.0
    %2648 = vmatprep.subr.mxu0 0.0
    %2649 = vmatpush1.msra.mxu0 0.0
    %2650 = vmatprep.subr.mxu0 0.0
    %2651 = vmatpush1.msra.mxu0 0.0
    %2652 = vmatprep.subr.mxu0 0.0
    %2653 = vmatpush1.msra.mxu0 0.0
    %2654 = vmatprep.subr.mxu0 0.0
    %2655 = vmatpush1.msra.mxu0 0.0
    %2656 = vmatprep.mubr.f32.mxu0 0.0
    %2657 = vmatmul.mubr.f32.gmra.mrb[0].mxu0 %v2207
    %v2658 = vpop.f32.mrb[0].mxu0
    %v2659 = vadd.f32 0.0, %v2658
    %v2660 = vpop.f32.mrb[0].mxu0
    %2661 = vdwg.mxu0
    %v2662 = vadd.f32 %v2575, %v2659
    %v2663 = vld [vmem:[%s766] sm:$0xff]
    %v2664 = vld [vmem:[%s766 + $0x8] sm:$0xff]
    %v2665 = vld [vmem:[%s766 + $0x10] sm:$0xff]
    %v2666 = vld [vmem:[%s766 + $0x18] sm:$0xff]
    %v2667 = vld [vmem:[%s766 + $0x20] sm:$0xff]
    %v2668 = vld [vmem:[%s766 + $0x28] sm:$0xff]
    %v2669 = vld [vmem:[%s766 + $0x30] sm:$0xff]
    %v2670 = vld [vmem:[%s766 + $0x38] sm:$0xff]
    %v2671 = vld [vmem:[%s766 + $0x40] sm:$0xff]
    %v2672 = vld [vmem:[%s766 + $0x48] sm:$0xff]
    %v2673 = vld [vmem:[%s766 + $0x50] sm:$0xff]
    %v2674 = vld [vmem:[%s766 + $0x58] sm:$0xff]
    %v2675 = vld [vmem:[%s766 + $0x60] sm:$0xff]
    %v2676 = vld [vmem:[%s766 + $0x68] sm:$0xff]
    %v2677 = vld [vmem:[%s766 + $0x70] sm:$0xff]
    %v2678 = vld [vmem:[%s766 + $0x78] sm:$0xff]
    %2679 = vmatprep.subr.mxu0 0.0
    %2680 = vmatpush1.msra.mxu0 %v2663
    %2681 = vmatprep.subr.mxu0 0.0
    %2682 = vmatpush1.msra.mxu0 %v2664
    %2683 = vmatprep.subr.mxu0 0.0
    %2684 = vmatpush1.msra.mxu0 %v2665
    %2685 = vmatprep.subr.mxu0 0.0
    %2686 = vmatpush1.msra.mxu0 %v2666
    %2687 = vmatprep.subr.mxu0 0.0
    %2688 = vmatpush1.msra.mxu0 %v2667
    %2689 = vmatprep.subr.mxu0 0.0
    %2690 = vmatpush1.msra.mxu0 %v2668
    %2691 = vmatprep.subr.mxu0 0.0
    %2692 = vmatpush1.msra.mxu0 %v2669
    %2693 = vmatprep.subr.mxu0 0.0
    %2694 = vmatpush1.msra.mxu0 %v2670
    %2695 = vmatprep.subr.mxu0 0.0
    %2696 = vmatpush1.msra.mxu0 %v2671
    %2697 = vmatprep.subr.mxu0 0.0
    %2698 = vmatpush1.msra.mxu0 %v2672
    %2699 = vmatprep.subr.mxu0 0.0
    %2700 = vmatpush1.msra.mxu0 %v2673
    %2701 = vmatprep.subr.mxu0 0.0
    %2702 = vmatpush1.msra.mxu0 %v2674
    %2703 = vmatprep.subr.mxu0 0.0
    %2704 = vmatpush1.msra.mxu0 %v2675
    %2705 = vmatprep.subr.mxu0 0.0
    %2706 = vmatpush1.msra.mxu0 %v2676
    %2707 = vmatprep.subr.mxu0 0.0
    %2708 = vmatpush1.msra.mxu0 %v2677
    %2709 = vmatprep.subr.mxu0 0.0
    %2710 = vmatpush1.msra.mxu0 %v2678
    %2711 = vmatprep.subr.mxu0 0.0
    %2712 = vmatpush1.msra.mxu0 0.0
    %2713 = vmatprep.subr.mxu0 0.0
    %2714 = vmatpush1.msra.mxu0 0.0
    %2715 = vmatprep.subr.mxu0 0.0
    %2716 = vmatpush1.msra.mxu0 0.0
    %2717 = vmatprep.subr.mxu0 0.0
    %2718 = vmatpush1.msra.mxu0 0.0
    %2719 = vmatprep.subr.mxu0 0.0
    %2720 = vmatpush1.msra.mxu0 0.0
    %2721 = vmatprep.subr.mxu0 0.0
    %2722 = vmatpush1.msra.mxu0 0.0
    %2723 = vmatprep.subr.mxu0 0.0
    %2724 = vmatpush1.msra.mxu0 0.0
    %2725 = vmatprep.subr.mxu0 0.0
    %2726 = vmatpush1.msra.mxu0 0.0
    %2727 = vmatprep.subr.mxu0 0.0
    %2728 = vmatpush1.msra.mxu0 0.0
    %2729 = vmatprep.subr.mxu0 0.0
    %2730 = vmatpush1.msra.mxu0 0.0
    %2731 = vmatprep.subr.mxu0 0.0
    %2732 = vmatpush1.msra.mxu0 0.0
    %2733 = vmatprep.subr.mxu0 0.0
    %2734 = vmatpush1.msra.mxu0 0.0
    %2735 = vmatprep.subr.mxu0 0.0
    %2736 = vmatpush1.msra.mxu0 0.0
    %2737 = vmatprep.subr.mxu0 0.0
    %2738 = vmatpush1.msra.mxu0 0.0
    %2739 = vmatprep.subr.mxu0 0.0
    %2740 = vmatpush1.msra.mxu0 0.0
    %2741 = vmatprep.subr.mxu0 0.0
    %2742 = vmatpush1.msra.mxu0 0.0
    %2743 = vmatprep.mubr.f32.mxu0 0.0
    %2744 = vmatmul.mubr.f32.gmra.mrb[0].mxu0 %v2212
    %v2745 = vpop.f32.mrb[0].mxu0
    %v2746 = vadd.f32 0.0, %v2745
    %v2747 = vpop.f32.mrb[0].mxu0
    %2748 = vdwg.mxu0
    %v2749 = vadd.f32 %v2662, %v2746
    %v2750 = vld [vmem:[%s854] sm:$0xff]
    %v2751 = vld [vmem:[%s854 + $0x8] sm:$0xff]
    %v2752 = vld [vmem:[%s854 + $0x10] sm:$0xff]
    %v2753 = vld [vmem:[%s854 + $0x18] sm:$0xff]
    %v2754 = vld [vmem:[%s854 + $0x20] sm:$0xff]
    %v2755 = vld [vmem:[%s854 + $0x28] sm:$0xff]
    %v2756 = vld [vmem:[%s854 + $0x30] sm:$0xff]
    %v2757 = vld [vmem:[%s854 + $0x38] sm:$0xff]
    %v2758 = vld [vmem:[%s854 + $0x40] sm:$0xff]
    %v2759 = vld [vmem:[%s854 + $0x48] sm:$0xff]
    %v2760 = vld [vmem:[%s854 + $0x50] sm:$0xff]
    %v2761 = vld [vmem:[%s854 + $0x58] sm:$0xff]
    %v2762 = vld [vmem:[%s854 + $0x60] sm:$0xff]
    %v2763 = vld [vmem:[%s854 + $0x68] sm:$0xff]
    %v2764 = vld [vmem:[%s854 + $0x70] sm:$0xff]
    %v2765 = vld [vmem:[%s854 + $0x78] sm:$0xff]
    %2766 = vmatprep.subr.mxu0 0.0
    %2767 = vmatpush1.msra.mxu0 %v2750
    %2768 = vmatprep.subr.mxu0 0.0
    %2769 = vmatpush1.msra.mxu0 %v2751
    %2770 = vmatprep.subr.mxu0 0.0
    %2771 = vmatpush1.msra.mxu0 %v2752
    %2772 = vmatprep.subr.mxu0 0.0
    %2773 = vmatpush1.msra.mxu0 %v2753
    %2774 = vmatprep.subr.mxu0 0.0
    %2775 = vmatpush1.msra.mxu0 %v2754
    %2776 = vmatprep.subr.mxu0 0.0
    %2777 = vmatpush1.msra.mxu0 %v2755
    %2778 = vmatprep.subr.mxu0 0.0
    %2779 = vmatpush1.msra.mxu0 %v2756
    %2780 = vmatprep.subr.mxu0 0.0
    %2781 = vmatpush1.msra.mxu0 %v2757
    %2782 = vmatprep.subr.mxu0 0.0
    %2783 = vmatpush1.msra.mxu0 %v2758
    %2784 = vmatprep.subr.mxu0 0.0
    %2785 = vmatpush1.msra.mxu0 %v2759
    %2786 = vmatprep.subr.mxu0 0.0
    %2787 = vmatpush1.msra.mxu0 %v2760
    %2788 = vmatprep.subr.mxu0 0.0
    %2789 = vmatpush1.msra.mxu0 %v2761
    %2790 = vmatprep.subr.mxu0 0.0
    %2791 = vmatpush1.msra.mxu0 %v2762
    %2792 = vmatprep.subr.mxu0 0.0
    %2793 = vmatpush1.msra.mxu0 %v2763
    %2794 = vmatprep.subr.mxu0 0.0
    %2795 = vmatpush1.msra.mxu0 %v2764
    %2796 = vmatprep.subr.mxu0 0.0
    %2797 = vmatpush1.msra.mxu0 %v2765
    %2798 = vmatprep.subr.mxu0 0.0
    %2799 = vmatpush1.msra.mxu0 0.0
    %2800 = vmatprep.subr.mxu0 0.0
    %2801 = vmatpush1.msra.mxu0 0.0
    %2802 = vmatprep.subr.mxu0 0.0
    %2803 = vmatpush1.msra.mxu0 0.0
    %2804 = vmatprep.subr.mxu0 0.0
    %2805 = vmatpush1.msra.mxu0 0.0
    %2806 = vmatprep.subr.mxu0 0.0
    %2807 = vmatpush1.msra.mxu0 0.0
    %2808 = vmatprep.subr.mxu0 0.0
    %2809 = vmatpush1.msra.mxu0 0.0
    %2810 = vmatprep.subr.mxu0 0.0
    %2811 = vmatpush1.msra.mxu0 0.0
    %2812 = vmatprep.subr.mxu0 0.0
    %2813 = vmatpush1.msra.mxu0 0.0
    %2814 = vmatprep.subr.mxu0 0.0
    %2815 = vmatpush1.msra.mxu0 0.0
    %2816 = vmatprep.subr.mxu0 0.0
    %2817 = vmatpush1.msra.mxu0 0.0
    %2818 = vmatprep.subr.mxu0 0.0
    %2819 = vmatpush1.msra.mxu0 0.0
    %2820 = vmatprep.subr.mxu0 0.0
    %2821 = vmatpush1.msra.mxu0 0.0
    %2822 = vmatprep.subr.mxu0 0.0
    %2823 = vmatpush1.msra.mxu0 0.0
    %2824 = vmatprep.subr.mxu0 0.0
    %2825 = vmatpush1.msra.mxu0 0.0
    %2826 = vmatprep.subr.mxu0 0.0
    %2827 = vmatpush1.msra.mxu0 0.0
    %2828 = vmatprep.subr.mxu0 0.0
    %2829 = vmatpush1.msra.mxu0 0.0
    %2830 = vmatprep.mubr.f32.mxu0 0.0
    %2831 = vmatmul.mubr.f32.gmra.mrb[0].mxu0 %v2217
    %v2832 = vpop.f32.mrb[0].mxu0
    %v2833 = vadd.f32 0.0, %v2832
    %v2834 = vpop.f32.mrb[0].mxu0
    %2835 = vdwg.mxu0
    %v2836 = vadd.f32 %v2749, %v2833
    %v2837 = vld [vmem:[%s942] sm:$0xff]
    %v2838 = vld [vmem:[%s942 + $0x8] sm:$0xff]
    %v2839 = vld [vmem:[%s942 + $0x10] sm:$0xff]
    %v2840 = vld [vmem:[%s942 + $0x18] sm:$0xff]
    %v2841 = vld [vmem:[%s942 + $0x20] sm:$0xff]
    %v2842 = vld [vmem:[%s942 + $0x28] sm:$0xff]
    %v2843 = vld [vmem:[%s942 + $0x30] sm:$0xff]
    %v2844 = vld [vmem:[%s942 + $0x38] sm:$0xff]
    %v2845 = vld [vmem:[%s942 + $0x40] sm:$0xff]
    %v2846 = vld [vmem:[%s942 + $0x48] sm:$0xff]
    %v2847 = vld [vmem:[%s942 + $0x50] sm:$0xff]
    %v2848 = vld [vmem:[%s942 + $0x58] sm:$0xff]
    %v2849 = vld [vmem:[%s942 + $0x60] sm:$0xff]
    %v2850 = vld [vmem:[%s942 + $0x68] sm:$0xff]
    %v2851 = vld [vmem:[%s942 + $0x70] sm:$0xff]
    %v2852 = vld [vmem:[%s942 + $0x78] sm:$0xff]
    %2853 = vmatprep.subr.mxu0 0.0
    %2854 = vmatpush1.msra.mxu0 %v2837
    %2855 = vmatprep.subr.mxu0 0.0
    %2856 = vmatpush1.msra.mxu0 %v2838
    %2857 = vmatprep.subr.mxu0 0.0
    %2858 = vmatpush1.msra.mxu0 %v2839
    %2859 = vmatprep.subr.mxu0 0.0
    %2860 = vmatpush1.msra.mxu0 %v2840
    %2861 = vmatprep.subr.mxu0 0.0
    %2862 = vmatpush1.msra.mxu0 %v2841
    %2863 = vmatprep.subr.mxu0 0.0
    %2864 = vmatpush1.msra.mxu0 %v2842
    %2865 = vmatprep.subr.mxu0 0.0
    %2866 = vmatpush1.msra.mxu0 %v2843
    %2867 = vmatprep.subr.mxu0 0.0
    %2868 = vmatpush1.msra.mxu0 %v2844
    %2869 = vmatprep.subr.mxu0 0.0
    %2870 = vmatpush1.msra.mxu0 %v2845
    %2871 = vmatprep.subr.mxu0 0.0
    %2872 = vmatpush1.msra.mxu0 %v2846
    %2873 = vmatprep.subr.mxu0 0.0
    %2874 = vmatpush1.msra.mxu0 %v2847
    %2875 = vmatprep.subr.mxu0 0.0
    %2876 = vmatpush1.msra.mxu0 %v2848
    %2877 = vmatprep.subr.mxu0 0.0
    %2878 = vmatpush1.msra.mxu0 %v2849
    %2879 = vmatprep.subr.mxu0 0.0
    %2880 = vmatpush1.msra.mxu0 %v2850
    %2881 = vmatprep.subr.mxu0 0.0
    %2882 = vmatpush1.msra.mxu0 %v2851
    %2883 = vmatprep.subr.mxu0 0.0
    %2884 = vmatpush1.msra.mxu0 %v2852
    %2885 = vmatprep.subr.mxu0 0.0
    %2886 = vmatpush1.msra.mxu0 0.0
    %2887 = vmatprep.subr.mxu0 0.0
    %2888 = vmatpush1.msra.mxu0 0.0
    %2889 = vmatprep.subr.mxu0 0.0
    %2890 = vmatpush1.msra.mxu0 0.0
    %2891 = vmatprep.subr.mxu0 0.0
    %2892 = vmatpush1.msra.mxu0 0.0
    %2893 = vmatprep.subr.mxu0 0.0
    %2894 = vmatpush1.msra.mxu0 0.0
    %2895 = vmatprep.subr.mxu0 0.0
    %2896 = vmatpush1.msra.mxu0 0.0
    %2897 = vmatprep.subr.mxu0 0.0
    %2898 = vmatpush1.msra.mxu0 0.0
    %2899 = vmatprep.subr.mxu0 0.0
    %2900 = vmatpush1.msra.mxu0 0.0
    %2901 = vmatprep.subr.mxu0 0.0
    %2902 = vmatpush1.msra.mxu0 0.0
    %2903 = vmatprep.subr.mxu0 0.0
    %2904 = vmatpush1.msra.mxu0 0.0
    %2905 = vmatprep.subr.mxu0 0.0
    %2906 = vmatpush1.msra.mxu0 0.0
    %2907 = vmatprep.subr.mxu0 0.0
    %2908 = vmatpush1.msra.mxu0 0.0
    %2909 = vmatprep.subr.mxu0 0.0
    %2910 = vmatpush1.msra.mxu0 0.0
    %2911 = vmatprep.subr.mxu0 0.0
    %2912 = vmatpush1.msra.mxu0 0.0
    %2913 = vmatprep.subr.mxu0 0.0
    %2914 = vmatpush1.msra.mxu0 0.0
    %2915 = vmatprep.subr.mxu0 0.0
    %2916 = vmatpush1.msra.mxu0 0.0
    %2917 = vmatprep.mubr.f32.mxu0 0.0
    %2918 = vmatmul.mubr.f32.gmra.mrb[0].mxu0 %v2222
    %v2919 = vpop.f32.mrb[0].mxu0
    %v2920 = vadd.f32 0.0, %v2919
    %v2921 = vpop.f32.mrb[0].mxu0
    %2922 = vdwg.mxu0
    %v2923 = vadd.f32 %v2836, %v2920
    %v2924 = vld [vmem:[%s1030] sm:$0xff]
    %v2925 = vld [vmem:[%s1030 + $0x8] sm:$0xff]
    %v2926 = vld [vmem:[%s1030 + $0x10] sm:$0xff]
    %v2927 = vld [vmem:[%s1030 + $0x18] sm:$0xff]
    %v2928 = vld [vmem:[%s1030 + $0x20] sm:$0xff]
    %v2929 = vld [vmem:[%s1030 + $0x28] sm:$0xff]
    %v2930 = vld [vmem:[%s1030 + $0x30] sm:$0xff]
    %v2931 = vld [vmem:[%s1030 + $0x38] sm:$0xff]
    %v2932 = vld [vmem:[%s1030 + $0x40] sm:$0xff]
    %v2933 = vld [vmem:[%s1030 + $0x48] sm:$0xff]
    %v2934 = vld [vmem:[%s1030 + $0x50] sm:$0xff]
    %v2935 = vld [vmem:[%s1030 + $0x58] sm:$0xff]
    %v2936 = vld [vmem:[%s1030 + $0x60] sm:$0xff]
    %v2937 = vld [vmem:[%s1030 + $0x68] sm:$0xff]
    %v2938 = vld [vmem:[%s1030 + $0x70] sm:$0xff]
    %v2939 = vld [vmem:[%s1030 + $0x78] sm:$0xff]
    %2940 = vmatprep.subr.mxu0 0.0
    %2941 = vmatpush1.msra.mxu0 %v2924
    %2942 = vmatprep.subr.mxu0 0.0
    %2943 = vmatpush1.msra.mxu0 %v2925
    %2944 = vmatprep.subr.mxu0 0.0
    %2945 = vmatpush1.msra.mxu0 %v2926
    %2946 = vmatprep.subr.mxu0 0.0
    %2947 = vmatpush1.msra.mxu0 %v2927
    %2948 = vmatprep.subr.mxu0 0.0
    %2949 = vmatpush1.msra.mxu0 %v2928
    %2950 = vmatprep.subr.mxu0 0.0
    %2951 = vmatpush1.msra.mxu0 %v2929
    %2952 = vmatprep.subr.mxu0 0.0
    %2953 = vmatpush1.msra.mxu0 %v2930
    %2954 = vmatprep.subr.mxu0 0.0
    %2955 = vmatpush1.msra.mxu0 %v2931
    %2956 = vmatprep.subr.mxu0 0.0
    %2957 = vmatpush1.msra.mxu0 %v2932
    %2958 = vmatprep.subr.mxu0 0.0
    %2959 = vmatpush1.msra.mxu0 %v2933
    %2960 = vmatprep.subr.mxu0 0.0
    %2961 = vmatpush1.msra.mxu0 %v2934
    %2962 = vmatprep.subr.mxu0 0.0
    %2963 = vmatpush1.msra.mxu0 %v2935
    %2964 = vmatprep.subr.mxu0 0.0
    %2965 = vmatpush1.msra.mxu0 %v2936
    %2966 = vmatprep.subr.mxu0 0.0
    %2967 = vmatpush1.msra.mxu0 %v2937
    %2968 = vmatprep.subr.mxu0 0.0
    %2969 = vmatpush1.msra.mxu0 %v2938
    %2970 = vmatprep.subr.mxu0 0.0
    %2971 = vmatpush1.msra.mxu0 %v2939
    %2972 = vmatprep.subr.mxu0 0.0
    %2973 = vmatpush1.msra.mxu0 0.0
    %2974 = vmatprep.subr.mxu0 0.0
    %2975 = vmatpush1.msra.mxu0 0.0
    %2976 = vmatprep.subr.mxu0 0.0
    %2977 = vmatpush1.msra.mxu0 0.0
    %2978 = vmatprep.subr.mxu0 0.0
    %2979 = vmatpush1.msra.mxu0 0.0
    %2980 = vmatprep.subr.mxu0 0.0
    %2981 = vmatpush1.msra.mxu0 0.0
    %2982 = vmatprep.subr.mxu0 0.0
    %2983 = vmatpush1.msra.mxu0 0.0
    %2984 = vmatprep.subr.mxu0 0.0
    %2985 = vmatpush1.msra.mxu0 0.0
    %2986 = vmatprep.subr.mxu0 0.0
    %2987 = vmatpush1.msra.mxu0 0.0
    %2988 = vmatprep.subr.mxu0 0.0
    %2989 = vmatpush1.msra.mxu0 0.0
    %2990 = vmatprep.subr.mxu0 0.0
    %2991 = vmatpush1.msra.mxu0 0.0
    %2992 = vmatprep.subr.mxu0 0.0
    %2993 = vmatpush1.msra.mxu0 0.0
    %2994 = vmatprep.subr.mxu0 0.0
    %2995 = vmatpush1.msra.mxu0 0.0
    %2996 = vmatprep.subr.mxu0 0.0
    %2997 = vmatpush1.msra.mxu0 0.0
    %2998 = vmatprep.subr.mxu0 0.0
    %2999 = vmatpush1.msra.mxu0 0.0
    %3000 = vmatprep.subr.mxu0 0.0
    %3001 = vmatpush1.msra.mxu0 0.0
    %3002 = vmatprep.subr.mxu0 0.0
    %3003 = vmatpush1.msra.mxu0 0.0
    %3004 = vmatprep.mubr.f32.mxu0 0.0
    %3005 = vmatmul.mubr.f32.gmra.mrb[0].mxu0 %v2227
    %v3006 = vpop.f32.mrb[0].mxu0
    %v3007 = vadd.f32 0.0, %v3006
    %v3008 = vpop.f32.mrb[0].mxu0
    %3009 = vdwg.mxu0
    %v3010 = vadd.f32 %v2923, %v3007
    %s3011 = scalar_lea.vmem %s6, 16
    %v3012 = vld [vmem:[%s3011] sm:$0xff]
    %3014 = vset.pattern.permute.xlu0 0
    %3015 = vperm.xlu0 %3014, %v3012
    %v3016 = vpop.permute.xlu0 %3015
    %v3018 = vadd.f32 %v3010, %v3016
    %v3019 = vmax.f32 %v3018, 0.0
    %3020 = vst [vmem:[#allocation2 + $0x10] sm:$0xff] %v3019
    %v3021 = vld [vmem:[#allocation2] sm:$0xff]
    %v3022 = vld [vmem:[#allocation2 + $0x8] sm:$0xff]
    %v3023 = vld [vmem:[#allocation2 + $0x10] sm:$0xff]
    %v3024 = vld [vmem:[#allocation2 + $0x18] sm:$0xff]
    %v3025 = vld [vmem:[#allocation2 + $0x20] sm:$0xff]
    %v3026 = vld [vmem:[#allocation2 + $0x28] sm:$0xff]
    %v3027 = vld [vmem:[#allocation2 + $0x30] sm:$0xff]
    %v3028 = vld [vmem:[#allocation2 + $0x38] sm:$0xff]
    %v3029 = vld [vmem:[#allocation2 + $0x40] sm:$0xff]
    %s3030 = scalar_lea.vmem [#allocation5], 216
    %v3031 = vld [vmem:[%s3030] sm:$0xff]
    %v3032 = vld [vmem:[%s3030 + $0x8] sm:$0xff]
    %v3033 = vld [vmem:[%s3030 + $0x10] sm:$0xff]
    %v3034 = vld [vmem:[%s3030 + $0x18] sm:$0xff]
    %v3035 = vld [vmem:[%s3030 + $0x20] sm:$0xff]
    %v3036 = vld [vmem:[%s3030 + $0x28] sm:$0xff]
    %v3037 = vld [vmem:[%s3030 + $0x30] sm:$0xff]
    %v3038 = vld [vmem:[%s3030 + $0x38] sm:$0xff]
    %v3039 = vld [vmem:[%s3030 + $0x40] sm:$0xff]
    %v3041 = vsel %vm191, %v3031, 0
    %v3044 = vsel %vm191, %v3032, 0
    %v3047 = vsel %vm191, %v3033, 0
    %v3050 = vsel %vm191, %v3034, 0
    %v3053 = vsel %vm191, %v3035, 0
    %v3056 = vsel %vm191, %v3036, 0
    %v3059 = vsel %vm191, %v3037, 0
    %v3062 = vsel %vm191, %v3038, 0
    %v3065 = vsel %vm191, %v3039, 0
    %3067 = vmatprep.subr.mxu0 0.0
    %3068 = vmatpush1.msra.mxu0 %v3021
    %3069 = vmatprep.subr.mxu0 0.0
    %3070 = vmatpush1.msra.mxu0 %v3022
    %3071 = vmatprep.subr.mxu0 0.0
    %3072 = vmatpush1.msra.mxu0 %v3023
    %3073 = vmatprep.subr.mxu0 0.0
    %3074 = vmatpush1.msra.mxu0 %v3024
    %3075 = vmatprep.subr.mxu0 0.0
    %3076 = vmatpush1.msra.mxu0 %v3025
    %3077 = vmatprep.subr.mxu0 0.0
    %3078 = vmatpush1.msra.mxu0 %v3026
    %3079 = vmatprep.subr.mxu0 0.0
    %3080 = vmatpush1.msra.mxu0 %v3027
    %3081 = vmatprep.subr.mxu0 0.0
    %3082 = vmatpush1.msra.mxu0 %v3028
    %3083 = vmatprep.subr.mxu0 0.0
    %3084 = vmatpush1.msra.mxu0 %v3029
    %3085 = vmatprep.subr.mxu0 0.0
    %3086 = vmatpush1.msra.mxu0 0.0
    %3087 = vmatprep.subr.mxu0 0.0
    %3088 = vmatpush1.msra.mxu0 0.0
    %3089 = vmatprep.subr.mxu0 0.0
    %3090 = vmatpush1.msra.mxu0 0.0
    %3091 = vmatprep.subr.mxu0 0.0
    %3092 = vmatpush1.msra.mxu0 0.0
    %3093 = vmatprep.subr.mxu0 0.0
    %3094 = vmatpush1.msra.mxu0 0.0
    %3095 = vmatprep.subr.mxu0 0.0
    %3096 = vmatpush1.msra.mxu0 0.0
    %3097 = vmatprep.subr.mxu0 0.0
    %3098 = vmatpush1.msra.mxu0 0.0
    %3099 = vmatprep.subr.mxu0 0.0
    %3100 = vmatpush1.msra.mxu0 0.0
    %3101 = vmatprep.subr.mxu0 0.0
    %3102 = vmatpush1.msra.mxu0 0.0
    %3103 = vmatprep.subr.mxu0 0.0
    %3104 = vmatpush1.msra.mxu0 0.0
    %3105 = vmatprep.subr.mxu0 0.0
    %3106 = vmatpush1.msra.mxu0 0.0
    %3107 = vmatprep.subr.mxu0 0.0
    %3108 = vmatpush1.msra.mxu0 0.0
    %3109 = vmatprep.subr.mxu0 0.0
    %3110 = vmatpush1.msra.mxu0 0.0
    %3111 = vmatprep.subr.mxu0 0.0
    %3112 = vmatpush1.msra.mxu0 0.0
    %3113 = vmatprep.subr.mxu0 0.0
    %3114 = vmatpush1.msra.mxu0 0.0
    %3115 = vmatprep.subr.mxu0 0.0
    %3116 = vmatpush1.msra.mxu0 0.0
    %3117 = vmatprep.subr.mxu0 0.0
    %3118 = vmatpush1.msra.mxu0 0.0
    %3119 = vmatprep.subr.mxu0 0.0
    %3120 = vmatpush1.msra.mxu0 0.0
    %3121 = vmatprep.subr.mxu0 0.0
    %3122 = vmatpush1.msra.mxu0 0.0
    %3123 = vmatprep.subr.mxu0 0.0
    %3124 = vmatpush1.msra.mxu0 0.0
    %3125 = vmatprep.subr.mxu0 0.0
    %3126 = vmatpush1.msra.mxu0 0.0
    %3127 = vmatprep.subr.mxu0 0.0
    %3128 = vmatpush1.msra.mxu0 0.0
    %3129 = vmatprep.subr.mxu0 0.0
    %3130 = vmatpush1.msra.mxu0 0.0
    %3131 = vmatprep.mubr.f32.mxu0 0.0
    %3132 = vmatmul.mubr.f32.gmra.mrb[0].mxu0 %v3041
    %v3133 = vpop.f32.mrb[0].mxu0
    %v3134 = vadd.f32 0.0, %v3133
    %v3135 = vpop.f32.mrb[0].mxu0
    %3136 = vmatprep.mubr.f32.mxu0 0.0
    %3137 = vmatmul.mubr.f32.gmra.mrb[0].mxu0 %v3044
    %v3138 = vpop.f32.mrb[0].mxu0
    %v3139 = vadd.f32 0.0, %v3138
    %v3140 = vpop.f32.mrb[0].mxu0
    %3141 = vmatprep.mubr.f32.mxu0 0.0
    %3142 = vmatmul.mubr.f32.gmra.mrb[0].mxu0 %v3047
    %v3143 = vpop.f32.mrb[0].mxu0
    %v3144 = vadd.f32 0.0, %v3143
    %v3145 = vpop.f32.mrb[0].mxu0
    %3146 = vmatprep.mubr.f32.mxu0 0.0
    %3147 = vmatmul.mubr.f32.gmra.mrb[0].mxu0 %v3050
    %v3148 = vpop.f32.mrb[0].mxu0
    %v3149 = vadd.f32 0.0, %v3148
    %v3150 = vpop.f32.mrb[0].mxu0
    %3151 = vmatprep.mubr.f32.mxu0 0.0
    %3152 = vmatmul.mubr.f32.gmra.mrb[0].mxu0 %v3053
    %v3153 = vpop.f32.mrb[0].mxu0
    %v3154 = vadd.f32 0.0, %v3153
    %v3155 = vpop.f32.mrb[0].mxu0
    %3156 = vmatprep.mubr.f32.mxu0 0.0
    %3157 = vmatmul.mubr.f32.gmra.mrb[0].mxu0 %v3056
    %v3158 = vpop.f32.mrb[0].mxu0
    %v3159 = vadd.f32 0.0, %v3158
    %v3160 = vpop.f32.mrb[0].mxu0
    %3161 = vmatprep.mubr.f32.mxu0 0.0
    %3162 = vmatmul.mubr.f32.gmra.mrb[0].mxu0 %v3059
    %v3163 = vpop.f32.mrb[0].mxu0
    %v3164 = vadd.f32 0.0, %v3163
    %v3165 = vpop.f32.mrb[0].mxu0
    %3166 = vmatprep.mubr.f32.mxu0 0.0
    %3167 = vmatmul.mubr.f32.gmra.mrb[0].mxu0 %v3062
    %v3168 = vpop.f32.mrb[0].mxu0
    %v3169 = vadd.f32 0.0, %v3168
    %v3170 = vpop.f32.mrb[0].mxu0
    %3171 = vmatprep.mubr.f32.mxu0 0.0
    %3172 = vmatmul.mubr.f32.gmra.mrb[0].mxu0 %v3065
    %v3173 = vpop.f32.mrb[0].mxu0
    %v3174 = vadd.f32 0.0, %v3173
    %v3175 = vpop.f32.mrb[0].mxu0
    %3176 = vdwg.mxu0
    %v3177 = vld [vmem:[#allocation3] sm:$0xff]
    %v3178 = vld [vmem:[#allocation3 + $0x8] sm:$0xff]
    %v3179 = vld [vmem:[#allocation3 + $0x10] sm:$0xff]
    %v3180 = vld [vmem:[#allocation3 + $0x18] sm:$0xff]
    %v3181 = vld [vmem:[#allocation3 + $0x20] sm:$0xff]
    %v3182 = vld [vmem:[#allocation3 + $0x28] sm:$0xff]
    %v3183 = vld [vmem:[#allocation3 + $0x30] sm:$0xff]
    %v3184 = vld [vmem:[#allocation3 + $0x38] sm:$0xff]
    %v3185 = vld [vmem:[#allocation3 + $0x40] sm:$0xff]
    %v3186 = vld [vmem:[#allocation3 + $0x48] sm:$0xff]
    %v3187 = vld [vmem:[#allocation3 + $0x50] sm:$0xff]
    %v3188 = vld [vmem:[#allocation3 + $0x58] sm:$0xff]
    %v3189 = vld [vmem:[#allocation3 + $0x60] sm:$0xff]
    %v3190 = vld [vmem:[#allocation3 + $0x68] sm:$0xff]
    %v3191 = vld [vmem:[#allocation3 + $0x70] sm:$0xff]
    %v3192 = vld [vmem:[#allocation3 + $0x78] sm:$0xff]
    %v3193 = vld [vmem:[%s345] sm:$0xff]
    %v3194 = vld [vmem:[%s345 + $0x8] sm:$0xff]
    %v3195 = vld [vmem:[%s345 + $0x10] sm:$0xff]
    %v3196 = vld [vmem:[%s345 + $0x18] sm:$0xff]
    %v3197 = vld [vmem:[%s345 + $0x20] sm:$0xff]
    %v3198 = vld [vmem:[%s345 + $0x28] sm:$0xff]
    %v3199 = vld [vmem:[%s345 + $0x30] sm:$0xff]
    %v3200 = vld [vmem:[%s345 + $0x38] sm:$0xff]
    %v3201 = vld [vmem:[%s345 + $0x40] sm:$0xff]
    %v3202 = vld [vmem:[%s345 + $0x48] sm:$0xff]
    %v3203 = vld [vmem:[%s345 + $0x50] sm:$0xff]
    %v3204 = vld [vmem:[%s345 + $0x58] sm:$0xff]
    %v3205 = vld [vmem:[%s345 + $0x60] sm:$0xff]
    %v3206 = vld [vmem:[%s345 + $0x68] sm:$0xff]
    %v3207 = vld [vmem:[%s345 + $0x70] sm:$0xff]
    %v3208 = vld [vmem:[%s345 + $0x78] sm:$0xff]
    %3209 = vmatprep.subr.mxu0 0.0
    %3210 = vmatpush1.msra.mxu0 %v3193
    %3211 = vmatprep.subr.mxu0 0.0
    %3212 = vmatpush1.msra.mxu0 %v3194
    %3213 = vmatprep.subr.mxu0 0.0
    %3214 = vmatpush1.msra.mxu0 %v3195
    %3215 = vmatprep.subr.mxu0 0.0
    %3216 = vmatpush1.msra.mxu0 %v3196
    %3217 = vmatprep.subr.mxu0 0.0
    %3218 = vmatpush1.msra.mxu0 %v3197
    %3219 = vmatprep.subr.mxu0 0.0
    %3220 = vmatpush1.msra.mxu0 %v3198
    %3221 = vmatprep.subr.mxu0 0.0
    %3222 = vmatpush1.msra.mxu0 %v3199
    %3223 = vmatprep.subr.mxu0 0.0
    %3224 = vmatpush1.msra.mxu0 %v3200
    %3225 = vmatprep.subr.mxu0 0.0
    %3226 = vmatpush1.msra.mxu0 %v3201
    %3227 = vmatprep.subr.mxu0 0.0
    %3228 = vmatpush1.msra.mxu0 %v3202
    %3229 = vmatprep.subr.mxu0 0.0
    %3230 = vmatpush1.msra.mxu0 %v3203
    %3231 = vmatprep.subr.mxu0 0.0
    %3232 = vmatpush1.msra.mxu0 %v3204
    %3233 = vmatprep.subr.mxu0 0.0
    %3234 = vmatpush1.msra.mxu0 %v3205
    %3235 = vmatprep.subr.mxu0 0.0
    %3236 = vmatpush1.msra.mxu0 %v3206
    %3237 = vmatprep.subr.mxu0 0.0
    %3238 = vmatpush1.msra.mxu0 %v3207
    %3239 = vmatprep.subr.mxu0 0.0
    %3240 = vmatpush1.msra.mxu0 %v3208
    %3241 = vmatprep.subr.mxu0 0.0
    %3242 = vmatpush1.msra.mxu0 0.0
    %3243 = vmatprep.subr.mxu0 0.0
    %3244 = vmatpush1.msra.mxu0 0.0
    %3245 = vmatprep.subr.mxu0 0.0
    %3246 = vmatpush1.msra.mxu0 0.0
    %3247 = vmatprep.subr.mxu0 0.0
    %3248 = vmatpush1.msra.mxu0 0.0
    %3249 = vmatprep.subr.mxu0 0.0
    %3250 = vmatpush1.msra.mxu0 0.0
    %3251 = vmatprep.subr.mxu0 0.0
    %3252 = vmatpush1.msra.mxu0 0.0
    %3253 = vmatprep.subr.mxu0 0.0
    %3254 = vmatpush1.msra.mxu0 0.0
    %3255 = vmatprep.subr.mxu0 0.0
    %3256 = vmatpush1.msra.mxu0 0.0
    %3257 = vmatprep.subr.mxu0 0.0
    %3258 = vmatpush1.msra.mxu0 0.0
    %3259 = vmatprep.subr.mxu0 0.0
    %3260 = vmatpush1.msra.mxu0 0.0
    %3261 = vmatprep.subr.mxu0 0.0
    %3262 = vmatpush1.msra.mxu0 0.0
    %3263 = vmatprep.subr.mxu0 0.0
    %3264 = vmatpush1.msra.mxu0 0.0
    %3265 = vmatprep.subr.mxu0 0.0
    %3266 = vmatpush1.msra.mxu0 0.0
    %3267 = vmatprep.subr.mxu0 0.0
    %3268 = vmatpush1.msra.mxu0 0.0
    %3269 = vmatprep.subr.mxu0 0.0
    %3270 = vmatpush1.msra.mxu0 0.0
    %3271 = vmatprep.subr.mxu0 0.0
    %3272 = vmatpush1.msra.mxu0 0.0
    %3273 = vmatprep.mubr.f32.mxu0 0.0
    %3274 = vmatmul.mubr.f32.gmra.mrb[0].mxu0 %v3139
    %v3275 = vpop.f32.mrb[0].mxu0
    %v3276 = vadd.f32 0.0, %v3275
    %v3277 = vpop.f32.mrb[0].mxu0
    %3278 = vdwg.mxu0
    %3279 = vmatprep.subr.mxu0 0.0
    %3280 = vmatpush1.msra.mxu0 %v3177
    %3281 = vmatprep.subr.mxu0 0.0
    %3282 = vmatpush1.msra.mxu0 %v3178
    %3283 = vmatprep.subr.mxu0 0.0
    %3284 = vmatpush1.msra.mxu0 %v3179
    %3285 = vmatprep.subr.mxu0 0.0
    %3286 = vmatpush1.msra.mxu0 %v3180
    %3287 = vmatprep.subr.mxu0 0.0
    %3288 = vmatpush1.msra.mxu0 %v3181
    %3289 = vmatprep.subr.mxu0 0.0
    %3290 = vmatpush1.msra.mxu0 %v3182
    %3291 = vmatprep.subr.mxu0 0.0
    %3292 = vmatpush1.msra.mxu0 %v3183
    %3293 = vmatprep.subr.mxu0 0.0
    %3294 = vmatpush1.msra.mxu0 %v3184
    %3295 = vmatprep.subr.mxu0 0.0
    %3296 = vmatpush1.msra.mxu0 %v3185
    %3297 = vmatprep.subr.mxu0 0.0
    %3298 = vmatpush1.msra.mxu0 %v3186
    %3299 = vmatprep.subr.mxu0 0.0
    %3300 = vmatpush1.msra.mxu0 %v3187
    %3301 = vmatprep.subr.mxu0 0.0
    %3302 = vmatpush1.msra.mxu0 %v3188
    %3303 = vmatprep.subr.mxu0 0.0
    %3304 = vmatpush1.msra.mxu0 %v3189
    %3305 = vmatprep.subr.mxu0 0.0
    %3306 = vmatpush1.msra.mxu0 %v3190
    %3307 = vmatprep.subr.mxu0 0.0
    %3308 = vmatpush1.msra.mxu0 %v3191
    %3309 = vmatprep.subr.mxu0 0.0
    %3310 = vmatpush1.msra.mxu0 %v3192
    %3311 = vmatprep.subr.mxu0 0.0
    %3312 = vmatpush1.msra.mxu0 0.0
    %3313 = vmatprep.subr.mxu0 0.0
    %3314 = vmatpush1.msra.mxu0 0.0
    %3315 = vmatprep.subr.mxu0 0.0
    %3316 = vmatpush1.msra.mxu0 0.0
    %3317 = vmatprep.subr.mxu0 0.0
    %3318 = vmatpush1.msra.mxu0 0.0
    %3319 = vmatprep.subr.mxu0 0.0
    %3320 = vmatpush1.msra.mxu0 0.0
    %3321 = vmatprep.subr.mxu0 0.0
    %3322 = vmatpush1.msra.mxu0 0.0
    %3323 = vmatprep.subr.mxu0 0.0
    %3324 = vmatpush1.msra.mxu0 0.0
    %3325 = vmatprep.subr.mxu0 0.0
    %3326 = vmatpush1.msra.mxu0 0.0
    %3327 = vmatprep.subr.mxu0 0.0
    %3328 = vmatpush1.msra.mxu0 0.0
    %3329 = vmatprep.subr.mxu0 0.0
    %3330 = vmatpush1.msra.mxu0 0.0
    %3331 = vmatprep.subr.mxu0 0.0
    %3332 = vmatpush1.msra.mxu0 0.0
    %3333 = vmatprep.subr.mxu0 0.0
    %3334 = vmatpush1.msra.mxu0 0.0
    %3335 = vmatprep.subr.mxu0 0.0
    %3336 = vmatpush1.msra.mxu0 0.0
    %3337 = vmatprep.subr.mxu0 0.0
    %3338 = vmatpush1.msra.mxu0 0.0
    %3339 = vmatprep.subr.mxu0 0.0
    %3340 = vmatpush1.msra.mxu0 0.0
    %3341 = vmatprep.subr.mxu0 0.0
    %3342 = vmatpush1.msra.mxu0 0.0
    %3343 = vmatprep.mubr.f32.mxu0 0.0
    %3344 = vmatmul.mubr.f32.gmra.mrb[0].mxu0 %v3134
    %v3345 = vpop.f32.mrb[0].mxu0
    %v3346 = vadd.f32 %v3276, %v3345
    %v3347 = vpop.f32.mrb[0].mxu0
    %3348 = vdwg.mxu0
    %v3349 = vld [vmem:[%s502] sm:$0xff]
    %v3350 = vld [vmem:[%s502 + $0x8] sm:$0xff]
    %v3351 = vld [vmem:[%s502 + $0x10] sm:$0xff]
    %v3352 = vld [vmem:[%s502 + $0x18] sm:$0xff]
    %v3353 = vld [vmem:[%s502 + $0x20] sm:$0xff]
    %v3354 = vld [vmem:[%s502 + $0x28] sm:$0xff]
    %v3355 = vld [vmem:[%s502 + $0x30] sm:$0xff]
    %v3356 = vld [vmem:[%s502 + $0x38] sm:$0xff]
    %v3357 = vld [vmem:[%s502 + $0x40] sm:$0xff]
    %v3358 = vld [vmem:[%s502 + $0x48] sm:$0xff]
    %v3359 = vld [vmem:[%s502 + $0x50] sm:$0xff]
    %v3360 = vld [vmem:[%s502 + $0x58] sm:$0xff]
    %v3361 = vld [vmem:[%s502 + $0x60] sm:$0xff]
    %v3362 = vld [vmem:[%s502 + $0x68] sm:$0xff]
    %v3363 = vld [vmem:[%s502 + $0x70] sm:$0xff]
    %v3364 = vld [vmem:[%s502 + $0x78] sm:$0xff]
    %3365 = vmatprep.subr.mxu0 0.0
    %3366 = vmatpush1.msra.mxu0 %v3349
    %3367 = vmatprep.subr.mxu0 0.0
    %3368 = vmatpush1.msra.mxu0 %v3350
    %3369 = vmatprep.subr.mxu0 0.0
    %3370 = vmatpush1.msra.mxu0 %v3351
    %3371 = vmatprep.subr.mxu0 0.0
    %3372 = vmatpush1.msra.mxu0 %v3352
    %3373 = vmatprep.subr.mxu0 0.0
    %3374 = vmatpush1.msra.mxu0 %v3353
    %3375 = vmatprep.subr.mxu0 0.0
    %3376 = vmatpush1.msra.mxu0 %v3354
    %3377 = vmatprep.subr.mxu0 0.0
    %3378 = vmatpush1.msra.mxu0 %v3355
    %3379 = vmatprep.subr.mxu0 0.0
    %3380 = vmatpush1.msra.mxu0 %v3356
    %3381 = vmatprep.subr.mxu0 0.0
    %3382 = vmatpush1.msra.mxu0 %v3357
    %3383 = vmatprep.subr.mxu0 0.0
    %3384 = vmatpush1.msra.mxu0 %v3358
    %3385 = vmatprep.subr.mxu0 0.0
    %3386 = vmatpush1.msra.mxu0 %v3359
    %3387 = vmatprep.subr.mxu0 0.0
    %3388 = vmatpush1.msra.mxu0 %v3360
    %3389 = vmatprep.subr.mxu0 0.0
    %3390 = vmatpush1.msra.mxu0 %v3361
    %3391 = vmatprep.subr.mxu0 0.0
    %3392 = vmatpush1.msra.mxu0 %v3362
    %3393 = vmatprep.subr.mxu0 0.0
    %3394 = vmatpush1.msra.mxu0 %v3363
    %3395 = vmatprep.subr.mxu0 0.0
    %3396 = vmatpush1.msra.mxu0 %v3364
    %3397 = vmatprep.subr.mxu0 0.0
    %3398 = vmatpush1.msra.mxu0 0.0
    %3399 = vmatprep.subr.mxu0 0.0
    %3400 = vmatpush1.msra.mxu0 0.0
    %3401 = vmatprep.subr.mxu0 0.0
    %3402 = vmatpush1.msra.mxu0 0.0
    %3403 = vmatprep.subr.mxu0 0.0
    %3404 = vmatpush1.msra.mxu0 0.0
    %3405 = vmatprep.subr.mxu0 0.0
    %3406 = vmatpush1.msra.mxu0 0.0
    %3407 = vmatprep.subr.mxu0 0.0
    %3408 = vmatpush1.msra.mxu0 0.0
    %3409 = vmatprep.subr.mxu0 0.0
    %3410 = vmatpush1.msra.mxu0 0.0
    %3411 = vmatprep.subr.mxu0 0.0
    %3412 = vmatpush1.msra.mxu0 0.0
    %3413 = vmatprep.subr.mxu0 0.0
    %3414 = vmatpush1.msra.mxu0 0.0
    %3415 = vmatprep.subr.mxu0 0.0
    %3416 = vmatpush1.msra.mxu0 0.0
    %3417 = vmatprep.subr.mxu0 0.0
    %3418 = vmatpush1.msra.mxu0 0.0
    %3419 = vmatprep.subr.mxu0 0.0
    %3420 = vmatpush1.msra.mxu0 0.0
    %3421 = vmatprep.subr.mxu0 0.0
    %3422 = vmatpush1.msra.mxu0 0.0
    %3423 = vmatprep.subr.mxu0 0.0
    %3424 = vmatpush1.msra.mxu0 0.0
    %3425 = vmatprep.subr.mxu0 0.0
    %3426 = vmatpush1.msra.mxu0 0.0
    %3427 = vmatprep.subr.mxu0 0.0
    %3428 = vmatpush1.msra.mxu0 0.0
    %3429 = vmatprep.mubr.f32.mxu0 0.0
    %3430 = vmatmul.mubr.f32.gmra.mrb[0].mxu0 %v3144
    %v3431 = vpop.f32.mrb[0].mxu0
    %v3432 = vadd.f32 0.0, %v3431
    %v3433 = vpop.f32.mrb[0].mxu0
    %3434 = vdwg.mxu0
    %v3435 = vadd.f32 %v3346, %v3432
    %v3436 = vld [vmem:[%s590] sm:$0xff]
    %v3437 = vld [vmem:[%s590 + $0x8] sm:$0xff]
    %v3438 = vld [vmem:[%s590 + $0x10] sm:$0xff]
    %v3439 = vld [vmem:[%s590 + $0x18] sm:$0xff]
    %v3440 = vld [vmem:[%s590 + $0x20] sm:$0xff]
    %v3441 = vld [vmem:[%s590 + $0x28] sm:$0xff]
    %v3442 = vld [vmem:[%s590 + $0x30] sm:$0xff]
    %v3443 = vld [vmem:[%s590 + $0x38] sm:$0xff]
    %v3444 = vld [vmem:[%s590 + $0x40] sm:$0xff]
    %v3445 = vld [vmem:[%s590 + $0x48] sm:$0xff]
    %v3446 = vld [vmem:[%s590 + $0x50] sm:$0xff]
    %v3447 = vld [vmem:[%s590 + $0x58] sm:$0xff]
    %v3448 = vld [vmem:[%s590 + $0x60] sm:$0xff]
    %v3449 = vld [vmem:[%s590 + $0x68] sm:$0xff]
    %v3450 = vld [vmem:[%s590 + $0x70] sm:$0xff]
    %v3451 = vld [vmem:[%s590 + $0x78] sm:$0xff]
    %3452 = vmatprep.subr.mxu0 0.0
    %3453 = vmatpush1.msra.mxu0 %v3436
    %3454 = vmatprep.subr.mxu0 0.0
    %3455 = vmatpush1.msra.mxu0 %v3437
    %3456 = vmatprep.subr.mxu0 0.0
    %3457 = vmatpush1.msra.mxu0 %v3438
    %3458 = vmatprep.subr.mxu0 0.0
    %3459 = vmatpush1.msra.mxu0 %v3439
    %3460 = vmatprep.subr.mxu0 0.0
    %3461 = vmatpush1.msra.mxu0 %v3440
    %3462 = vmatprep.subr.mxu0 0.0
    %3463 = vmatpush1.msra.mxu0 %v3441
    %3464 = vmatprep.subr.mxu0 0.0
    %3465 = vmatpush1.msra.mxu0 %v3442
    %3466 = vmatprep.subr.mxu0 0.0
    %3467 = vmatpush1.msra.mxu0 %v3443
    %3468 = vmatprep.subr.mxu0 0.0
    %3469 = vmatpush1.msra.mxu0 %v3444
    %3470 = vmatprep.subr.mxu0 0.0
    %3471 = vmatpush1.msra.mxu0 %v3445
    %3472 = vmatprep.subr.mxu0 0.0
    %3473 = vmatpush1.msra.mxu0 %v3446
    %3474 = vmatprep.subr.mxu0 0.0
    %3475 = vmatpush1.msra.mxu0 %v3447
    %3476 = vmatprep.subr.mxu0 0.0
    %3477 = vmatpush1.msra.mxu0 %v3448
    %3478 = vmatprep.subr.mxu0 0.0
    %3479 = vmatpush1.msra.mxu0 %v3449
    %3480 = vmatprep.subr.mxu0 0.0
    %3481 = vmatpush1.msra.mxu0 %v3450
    %3482 = vmatprep.subr.mxu0 0.0
    %3483 = vmatpush1.msra.mxu0 %v3451
    %3484 = vmatprep.subr.mxu0 0.0
    %3485 = vmatpush1.msra.mxu0 0.0
    %3486 = vmatprep.subr.mxu0 0.0
    %3487 = vmatpush1.msra.mxu0 0.0
    %3488 = vmatprep.subr.mxu0 0.0
    %3489 = vmatpush1.msra.mxu0 0.0
    %3490 = vmatprep.subr.mxu0 0.0
    %3491 = vmatpush1.msra.mxu0 0.0
    %3492 = vmatprep.subr.mxu0 0.0
    %3493 = vmatpush1.msra.mxu0 0.0
    %3494 = vmatprep.subr.mxu0 0.0
    %3495 = vmatpush1.msra.mxu0 0.0
    %3496 = vmatprep.subr.mxu0 0.0
    %3497 = vmatpush1.msra.mxu0 0.0
    %3498 = vmatprep.subr.mxu0 0.0
    %3499 = vmatpush1.msra.mxu0 0.0
    %3500 = vmatprep.subr.mxu0 0.0
    %3501 = vmatpush1.msra.mxu0 0.0
    %3502 = vmatprep.subr.mxu0 0.0
    %3503 = vmatpush1.msra.mxu0 0.0
    %3504 = vmatprep.subr.mxu0 0.0
    %3505 = vmatpush1.msra.mxu0 0.0
    %3506 = vmatprep.subr.mxu0 0.0
    %3507 = vmatpush1.msra.mxu0 0.0
    %3508 = vmatprep.subr.mxu0 0.0
    %3509 = vmatpush1.msra.mxu0 0.0
    %3510 = vmatprep.subr.mxu0 0.0
    %3511 = vmatpush1.msra.mxu0 0.0
    %3512 = vmatprep.subr.mxu0 0.0
    %3513 = vmatpush1.msra.mxu0 0.0
    %3514 = vmatprep.subr.mxu0 0.0
    %3515 = vmatpush1.msra.mxu0 0.0
    %3516 = vmatprep.mubr.f32.mxu0 0.0
    %3517 = vmatmul.mubr.f32.gmra.mrb[0].mxu0 %v3149
    %v3518 = vpop.f32.mrb[0].mxu0
    %v3519 = vadd.f32 0.0, %v3518
    %v3520 = vpop.f32.mrb[0].mxu0
    %3521 = vdwg.mxu0
    %v3522 = vadd.f32 %v3435, %v3519
    %v3523 = vld [vmem:[%s678] sm:$0xff]
    %v3524 = vld [vmem:[%s678 + $0x8] sm:$0xff]
    %v3525 = vld [vmem:[%s678 + $0x10] sm:$0xff]
    %v3526 = vld [vmem:[%s678 + $0x18] sm:$0xff]
    %v3527 = vld [vmem:[%s678 + $0x20] sm:$0xff]
    %v3528 = vld [vmem:[%s678 + $0x28] sm:$0xff]
    %v3529 = vld [vmem:[%s678 + $0x30] sm:$0xff]
    %v3530 = vld [vmem:[%s678 + $0x38] sm:$0xff]
    %v3531 = vld [vmem:[%s678 + $0x40] sm:$0xff]
    %v3532 = vld [vmem:[%s678 + $0x48] sm:$0xff]
    %v3533 = vld [vmem:[%s678 + $0x50] sm:$0xff]
    %v3534 = vld [vmem:[%s678 + $0x58] sm:$0xff]
    %v3535 = vld [vmem:[%s678 + $0x60] sm:$0xff]
    %v3536 = vld [vmem:[%s678 + $0x68] sm:$0xff]
    %v3537 = vld [vmem:[%s678 + $0x70] sm:$0xff]
    %v3538 = vld [vmem:[%s678 + $0x78] sm:$0xff]
    %3539 = vmatprep.subr.mxu0 0.0
    %3540 = vmatpush1.msra.mxu0 %v3523
    %3541 = vmatprep.subr.mxu0 0.0
    %3542 = vmatpush1.msra.mxu0 %v3524
    %3543 = vmatprep.subr.mxu0 0.0
    %3544 = vmatpush1.msra.mxu0 %v3525
    %3545 = vmatprep.subr.mxu0 0.0
    %3546 = vmatpush1.msra.mxu0 %v3526
    %3547 = vmatprep.subr.mxu0 0.0
    %3548 = vmatpush1.msra.mxu0 %v3527
    %3549 = vmatprep.subr.mxu0 0.0
    %3550 = vmatpush1.msra.mxu0 %v3528
    %3551 = vmatprep.subr.mxu0 0.0
    %3552 = vmatpush1.msra.mxu0 %v3529
    %3553 = vmatprep.subr.mxu0 0.0
    %3554 = vmatpush1.msra.mxu0 %v3530
    %3555 = vmatprep.subr.mxu0 0.0
    %3556 = vmatpush1.msra.mxu0 %v3531
    %3557 = vmatprep.subr.mxu0 0.0
    %3558 = vmatpush1.msra.mxu0 %v3532
    %3559 = vmatprep.subr.mxu0 0.0
    %3560 = vmatpush1.msra.mxu0 %v3533
    %3561 = vmatprep.subr.mxu0 0.0
    %3562 = vmatpush1.msra.mxu0 %v3534
    %3563 = vmatprep.subr.mxu0 0.0
    %3564 = vmatpush1.msra.mxu0 %v3535
    %3565 = vmatprep.subr.mxu0 0.0
    %3566 = vmatpush1.msra.mxu0 %v3536
    %3567 = vmatprep.subr.mxu0 0.0
    %3568 = vmatpush1.msra.mxu0 %v3537
    %3569 = vmatprep.subr.mxu0 0.0
    %3570 = vmatpush1.msra.mxu0 %v3538
    %3571 = vmatprep.subr.mxu0 0.0
    %3572 = vmatpush1.msra.mxu0 0.0
    %3573 = vmatprep.subr.mxu0 0.0
    %3574 = vmatpush1.msra.mxu0 0.0
    %3575 = vmatprep.subr.mxu0 0.0
    %3576 = vmatpush1.msra.mxu0 0.0
    %3577 = vmatprep.subr.mxu0 0.0
    %3578 = vmatpush1.msra.mxu0 0.0
    %3579 = vmatprep.subr.mxu0 0.0
    %3580 = vmatpush1.msra.mxu0 0.0
    %3581 = vmatprep.subr.mxu0 0.0
    %3582 = vmatpush1.msra.mxu0 0.0
    %3583 = vmatprep.subr.mxu0 0.0
    %3584 = vmatpush1.msra.mxu0 0.0
    %3585 = vmatprep.subr.mxu0 0.0
    %3586 = vmatpush1.msra.mxu0 0.0
    %3587 = vmatprep.subr.mxu0 0.0
    %3588 = vmatpush1.msra.mxu0 0.0
    %3589 = vmatprep.subr.mxu0 0.0
    %3590 = vmatpush1.msra.mxu0 0.0
    %3591 = vmatprep.subr.mxu0 0.0
    %3592 = vmatpush1.msra.mxu0 0.0
    %3593 = vmatprep.subr.mxu0 0.0
    %3594 = vmatpush1.msra.mxu0 0.0
    %3595 = vmatprep.subr.mxu0 0.0
    %3596 = vmatpush1.msra.mxu0 0.0
    %3597 = vmatprep.subr.mxu0 0.0
    %3598 = vmatpush1.msra.mxu0 0.0
    %3599 = vmatprep.subr.mxu0 0.0
    %3600 = vmatpush1.msra.mxu0 0.0
    %3601 = vmatprep.subr.mxu0 0.0
    %3602 = vmatpush1.msra.mxu0 0.0
    %3603 = vmatprep.mubr.f32.mxu0 0.0
    %3604 = vmatmul.mubr.f32.gmra.mrb[0].mxu0 %v3154
    %v3605 = vpop.f32.mrb[0].mxu0
    %v3606 = vadd.f32 0.0, %v3605
    %v3607 = vpop.f32.mrb[0].mxu0
    %3608 = vdwg.mxu0
    %v3609 = vadd.f32 %v3522, %v3606
    %v3610 = vld [vmem:[%s766] sm:$0xff]
    %v3611 = vld [vmem:[%s766 + $0x8] sm:$0xff]
    %v3612 = vld [vmem:[%s766 + $0x10] sm:$0xff]
    %v3613 = vld [vmem:[%s766 + $0x18] sm:$0xff]
    %v3614 = vld [vmem:[%s766 + $0x20] sm:$0xff]
    %v3615 = vld [vmem:[%s766 + $0x28] sm:$0xff]
    %v3616 = vld [vmem:[%s766 + $0x30] sm:$0xff]
    %v3617 = vld [vmem:[%s766 + $0x38] sm:$0xff]
    %v3618 = vld [vmem:[%s766 + $0x40] sm:$0xff]
    %v3619 = vld [vmem:[%s766 + $0x48] sm:$0xff]
    %v3620 = vld [vmem:[%s766 + $0x50] sm:$0xff]
    %v3621 = vld [vmem:[%s766 + $0x58] sm:$0xff]
    %v3622 = vld [vmem:[%s766 + $0x60] sm:$0xff]
    %v3623 = vld [vmem:[%s766 + $0x68] sm:$0xff]
    %v3624 = vld [vmem:[%s766 + $0x70] sm:$0xff]
    %v3625 = vld [vmem:[%s766 + $0x78] sm:$0xff]
    %3626 = vmatprep.subr.mxu0 0.0
    %3627 = vmatpush1.msra.mxu0 %v3610
    %3628 = vmatprep.subr.mxu0 0.0
    %3629 = vmatpush1.msra.mxu0 %v3611
    %3630 = vmatprep.subr.mxu0 0.0
    %3631 = vmatpush1.msra.mxu0 %v3612
    %3632 = vmatprep.subr.mxu0 0.0
    %3633 = vmatpush1.msra.mxu0 %v3613
    %3634 = vmatprep.subr.mxu0 0.0
    %3635 = vmatpush1.msra.mxu0 %v3614
    %3636 = vmatprep.subr.mxu0 0.0
    %3637 = vmatpush1.msra.mxu0 %v3615
    %3638 = vmatprep.subr.mxu0 0.0
    %3639 = vmatpush1.msra.mxu0 %v3616
    %3640 = vmatprep.subr.mxu0 0.0
    %3641 = vmatpush1.msra.mxu0 %v3617
    %3642 = vmatprep.subr.mxu0 0.0
    %3643 = vmatpush1.msra.mxu0 %v3618
    %3644 = vmatprep.subr.mxu0 0.0
    %3645 = vmatpush1.msra.mxu0 %v3619
    %3646 = vmatprep.subr.mxu0 0.0
    %3647 = vmatpush1.msra.mxu0 %v3620
    %3648 = vmatprep.subr.mxu0 0.0
    %3649 = vmatpush1.msra.mxu0 %v3621
    %3650 = vmatprep.subr.mxu0 0.0
    %3651 = vmatpush1.msra.mxu0 %v3622
    %3652 = vmatprep.subr.mxu0 0.0
    %3653 = vmatpush1.msra.mxu0 %v3623
    %3654 = vmatprep.subr.mxu0 0.0
    %3655 = vmatpush1.msra.mxu0 %v3624
    %3656 = vmatprep.subr.mxu0 0.0
    %3657 = vmatpush1.msra.mxu0 %v3625
    %3658 = vmatprep.subr.mxu0 0.0
    %3659 = vmatpush1.msra.mxu0 0.0
    %3660 = vmatprep.subr.mxu0 0.0
    %3661 = vmatpush1.msra.mxu0 0.0
    %3662 = vmatprep.subr.mxu0 0.0
    %3663 = vmatpush1.msra.mxu0 0.0
    %3664 = vmatprep.subr.mxu0 0.0
    %3665 = vmatpush1.msra.mxu0 0.0
    %3666 = vmatprep.subr.mxu0 0.0
    %3667 = vmatpush1.msra.mxu0 0.0
    %3668 = vmatprep.subr.mxu0 0.0
    %3669 = vmatpush1.msra.mxu0 0.0
    %3670 = vmatprep.subr.mxu0 0.0
    %3671 = vmatpush1.msra.mxu0 0.0
    %3672 = vmatprep.subr.mxu0 0.0
    %3673 = vmatpush1.msra.mxu0 0.0
    %3674 = vmatprep.subr.mxu0 0.0
    %3675 = vmatpush1.msra.mxu0 0.0
    %3676 = vmatprep.subr.mxu0 0.0
    %3677 = vmatpush1.msra.mxu0 0.0
    %3678 = vmatprep.subr.mxu0 0.0
    %3679 = vmatpush1.msra.mxu0 0.0
    %3680 = vmatprep.subr.mxu0 0.0
    %3681 = vmatpush1.msra.mxu0 0.0
    %3682 = vmatprep.subr.mxu0 0.0
    %3683 = vmatpush1.msra.mxu0 0.0
    %3684 = vmatprep.subr.mxu0 0.0
    %3685 = vmatpush1.msra.mxu0 0.0
    %3686 = vmatprep.subr.mxu0 0.0
    %3687 = vmatpush1.msra.mxu0 0.0
    %3688 = vmatprep.subr.mxu0 0.0
    %3689 = vmatpush1.msra.mxu0 0.0
    %3690 = vmatprep.mubr.f32.mxu0 0.0
    %3691 = vmatmul.mubr.f32.gmra.mrb[0].mxu0 %v3159
    %v3692 = vpop.f32.mrb[0].mxu0
    %v3693 = vadd.f32 0.0, %v3692
    %v3694 = vpop.f32.mrb[0].mxu0
    %3695 = vdwg.mxu0
    %v3696 = vadd.f32 %v3609, %v3693
    %v3697 = vld [vmem:[%s854] sm:$0xff]
    %v3698 = vld [vmem:[%s854 + $0x8] sm:$0xff]
    %v3699 = vld [vmem:[%s854 + $0x10] sm:$0xff]
    %v3700 = vld [vmem:[%s854 + $0x18] sm:$0xff]
    %v3701 = vld [vmem:[%s854 + $0x20] sm:$0xff]
    %v3702 = vld [vmem:[%s854 + $0x28] sm:$0xff]
    %v3703 = vld [vmem:[%s854 + $0x30] sm:$0xff]
    %v3704 = vld [vmem:[%s854 + $0x38] sm:$0xff]
    %v3705 = vld [vmem:[%s854 + $0x40] sm:$0xff]
    %v3706 = vld [vmem:[%s854 + $0x48] sm:$0xff]
    %v3707 = vld [vmem:[%s854 + $0x50] sm:$0xff]
    %v3708 = vld [vmem:[%s854 + $0x58] sm:$0xff]
    %v3709 = vld [vmem:[%s854 + $0x60] sm:$0xff]
    %v3710 = vld [vmem:[%s854 + $0x68] sm:$0xff]
    %v3711 = vld [vmem:[%s854 + $0x70] sm:$0xff]
    %v3712 = vld [vmem:[%s854 + $0x78] sm:$0xff]
    %3713 = vmatprep.subr.mxu0 0.0
    %3714 = vmatpush1.msra.mxu0 %v3697
    %3715 = vmatprep.subr.mxu0 0.0
    %3716 = vmatpush1.msra.mxu0 %v3698
    %3717 = vmatprep.subr.mxu0 0.0
    %3718 = vmatpush1.msra.mxu0 %v3699
    %3719 = vmatprep.subr.mxu0 0.0
    %3720 = vmatpush1.msra.mxu0 %v3700
    %3721 = vmatprep.subr.mxu0 0.0
    %3722 = vmatpush1.msra.mxu0 %v3701
    %3723 = vmatprep.subr.mxu0 0.0
    %3724 = vmatpush1.msra.mxu0 %v3702
    %3725 = vmatprep.subr.mxu0 0.0
    %3726 = vmatpush1.msra.mxu0 %v3703
    %3727 = vmatprep.subr.mxu0 0.0
    %3728 = vmatpush1.msra.mxu0 %v3704
    %3729 = vmatprep.subr.mxu0 0.0
    %3730 = vmatpush1.msra.mxu0 %v3705
    %3731 = vmatprep.subr.mxu0 0.0
    %3732 = vmatpush1.msra.mxu0 %v3706
    %3733 = vmatprep.subr.mxu0 0.0
    %3734 = vmatpush1.msra.mxu0 %v3707
    %3735 = vmatprep.subr.mxu0 0.0
    %3736 = vmatpush1.msra.mxu0 %v3708
    %3737 = vmatprep.subr.mxu0 0.0
    %3738 = vmatpush1.msra.mxu0 %v3709
    %3739 = vmatprep.subr.mxu0 0.0
    %3740 = vmatpush1.msra.mxu0 %v3710
    %3741 = vmatprep.subr.mxu0 0.0
    %3742 = vmatpush1.msra.mxu0 %v3711
    %3743 = vmatprep.subr.mxu0 0.0
    %3744 = vmatpush1.msra.mxu0 %v3712
    %3745 = vmatprep.subr.mxu0 0.0
    %3746 = vmatpush1.msra.mxu0 0.0
    %3747 = vmatprep.subr.mxu0 0.0
    %3748 = vmatpush1.msra.mxu0 0.0
    %3749 = vmatprep.subr.mxu0 0.0
    %3750 = vmatpush1.msra.mxu0 0.0
    %3751 = vmatprep.subr.mxu0 0.0
    %3752 = vmatpush1.msra.mxu0 0.0
    %3753 = vmatprep.subr.mxu0 0.0
    %3754 = vmatpush1.msra.mxu0 0.0
    %3755 = vmatprep.subr.mxu0 0.0
    %3756 = vmatpush1.msra.mxu0 0.0
    %3757 = vmatprep.subr.mxu0 0.0
    %3758 = vmatpush1.msra.mxu0 0.0
    %3759 = vmatprep.subr.mxu0 0.0
    %3760 = vmatpush1.msra.mxu0 0.0
    %3761 = vmatprep.subr.mxu0 0.0
    %3762 = vmatpush1.msra.mxu0 0.0
    %3763 = vmatprep.subr.mxu0 0.0
    %3764 = vmatpush1.msra.mxu0 0.0
    %3765 = vmatprep.subr.mxu0 0.0
    %3766 = vmatpush1.msra.mxu0 0.0
    %3767 = vmatprep.subr.mxu0 0.0
    %3768 = vmatpush1.msra.mxu0 0.0
    %3769 = vmatprep.subr.mxu0 0.0
    %3770 = vmatpush1.msra.mxu0 0.0
    %3771 = vmatprep.subr.mxu0 0.0
    %3772 = vmatpush1.msra.mxu0 0.0
    %3773 = vmatprep.subr.mxu0 0.0
    %3774 = vmatpush1.msra.mxu0 0.0
    %3775 = vmatprep.subr.mxu0 0.0
    %3776 = vmatpush1.msra.mxu0 0.0
    %3777 = vmatprep.mubr.f32.mxu0 0.0
    %3778 = vmatmul.mubr.f32.gmra.mrb[0].mxu0 %v3164
    %v3779 = vpop.f32.mrb[0].mxu0
    %v3780 = vadd.f32 0.0, %v3779
    %v3781 = vpop.f32.mrb[0].mxu0
    %3782 = vdwg.mxu0
    %v3783 = vadd.f32 %v3696, %v3780
    %v3784 = vld [vmem:[%s942] sm:$0xff]
    %v3785 = vld [vmem:[%s942 + $0x8] sm:$0xff]
    %v3786 = vld [vmem:[%s942 + $0x10] sm:$0xff]
    %v3787 = vld [vmem:[%s942 + $0x18] sm:$0xff]
    %v3788 = vld [vmem:[%s942 + $0x20] sm:$0xff]
    %v3789 = vld [vmem:[%s942 + $0x28] sm:$0xff]
    %v3790 = vld [vmem:[%s942 + $0x30] sm:$0xff]
    %v3791 = vld [vmem:[%s942 + $0x38] sm:$0xff]
    %v3792 = vld [vmem:[%s942 + $0x40] sm:$0xff]
    %v3793 = vld [vmem:[%s942 + $0x48] sm:$0xff]
    %v3794 = vld [vmem:[%s942 + $0x50] sm:$0xff]
    %v3795 = vld [vmem:[%s942 + $0x58] sm:$0xff]
    %v3796 = vld [vmem:[%s942 + $0x60] sm:$0xff]
    %v3797 = vld [vmem:[%s942 + $0x68] sm:$0xff]
    %v3798 = vld [vmem:[%s942 + $0x70] sm:$0xff]
    %v3799 = vld [vmem:[%s942 + $0x78] sm:$0xff]
    %3800 = vmatprep.subr.mxu0 0.0
    %3801 = vmatpush1.msra.mxu0 %v3784
    %3802 = vmatprep.subr.mxu0 0.0
    %3803 = vmatpush1.msra.mxu0 %v3785
    %3804 = vmatprep.subr.mxu0 0.0
    %3805 = vmatpush1.msra.mxu0 %v3786
    %3806 = vmatprep.subr.mxu0 0.0
    %3807 = vmatpush1.msra.mxu0 %v3787
    %3808 = vmatprep.subr.mxu0 0.0
    %3809 = vmatpush1.msra.mxu0 %v3788
    %3810 = vmatprep.subr.mxu0 0.0
    %3811 = vmatpush1.msra.mxu0 %v3789
    %3812 = vmatprep.subr.mxu0 0.0
    %3813 = vmatpush1.msra.mxu0 %v3790
    %3814 = vmatprep.subr.mxu0 0.0
    %3815 = vmatpush1.msra.mxu0 %v3791
    %3816 = vmatprep.subr.mxu0 0.0
    %3817 = vmatpush1.msra.mxu0 %v3792
    %3818 = vmatprep.subr.mxu0 0.0
    %3819 = vmatpush1.msra.mxu0 %v3793
    %3820 = vmatprep.subr.mxu0 0.0
    %3821 = vmatpush1.msra.mxu0 %v3794
    %3822 = vmatprep.subr.mxu0 0.0
    %3823 = vmatpush1.msra.mxu0 %v3795
    %3824 = vmatprep.subr.mxu0 0.0
    %3825 = vmatpush1.msra.mxu0 %v3796
    %3826 = vmatprep.subr.mxu0 0.0
    %3827 = vmatpush1.msra.mxu0 %v3797
    %3828 = vmatprep.subr.mxu0 0.0
    %3829 = vmatpush1.msra.mxu0 %v3798
    %3830 = vmatprep.subr.mxu0 0.0
    %3831 = vmatpush1.msra.mxu0 %v3799
    %3832 = vmatprep.subr.mxu0 0.0
    %3833 = vmatpush1.msra.mxu0 0.0
    %3834 = vmatprep.subr.mxu0 0.0
    %3835 = vmatpush1.msra.mxu0 0.0
    %3836 = vmatprep.subr.mxu0 0.0
    %3837 = vmatpush1.msra.mxu0 0.0
    %3838 = vmatprep.subr.mxu0 0.0
    %3839 = vmatpush1.msra.mxu0 0.0
    %3840 = vmatprep.subr.mxu0 0.0
    %3841 = vmatpush1.msra.mxu0 0.0
    %3842 = vmatprep.subr.mxu0 0.0
    %3843 = vmatpush1.msra.mxu0 0.0
    %3844 = vmatprep.subr.mxu0 0.0
    %3845 = vmatpush1.msra.mxu0 0.0
    %3846 = vmatprep.subr.mxu0 0.0
    %3847 = vmatpush1.msra.mxu0 0.0
    %3848 = vmatprep.subr.mxu0 0.0
    %3849 = vmatpush1.msra.mxu0 0.0
    %3850 = vmatprep.subr.mxu0 0.0
    %3851 = vmatpush1.msra.mxu0 0.0
    %3852 = vmatprep.subr.mxu0 0.0
    %3853 = vmatpush1.msra.mxu0 0.0
    %3854 = vmatprep.subr.mxu0 0.0
    %3855 = vmatpush1.msra.mxu0 0.0
    %3856 = vmatprep.subr.mxu0 0.0
    %3857 = vmatpush1.msra.mxu0 0.0
    %3858 = vmatprep.subr.mxu0 0.0
    %3859 = vmatpush1.msra.mxu0 0.0
    %3860 = vmatprep.subr.mxu0 0.0
    %3861 = vmatpush1.msra.mxu0 0.0
    %3862 = vmatprep.subr.mxu0 0.0
    %3863 = vmatpush1.msra.mxu0 0.0
    %3864 = vmatprep.mubr.f32.mxu0 0.0
    %3865 = vmatmul.mubr.f32.gmra.mrb[0].mxu0 %v3169
    %v3866 = vpop.f32.mrb[0].mxu0
    %v3867 = vadd.f32 0.0, %v3866
    %v3868 = vpop.f32.mrb[0].mxu0
    %3869 = vdwg.mxu0
    %v3870 = vadd.f32 %v3783, %v3867
    %v3871 = vld [vmem:[%s1030] sm:$0xff]
    %v3872 = vld [vmem:[%s1030 + $0x8] sm:$0xff]
    %v3873 = vld [vmem:[%s1030 + $0x10] sm:$0xff]
    %v3874 = vld [vmem:[%s1030 + $0x18] sm:$0xff]
    %v3875 = vld [vmem:[%s1030 + $0x20] sm:$0xff]
    %v3876 = vld [vmem:[%s1030 + $0x28] sm:$0xff]
    %v3877 = vld [vmem:[%s1030 + $0x30] sm:$0xff]
    %v3878 = vld [vmem:[%s1030 + $0x38] sm:$0xff]
    %v3879 = vld [vmem:[%s1030 + $0x40] sm:$0xff]
    %v3880 = vld [vmem:[%s1030 + $0x48] sm:$0xff]
    %v3881 = vld [vmem:[%s1030 + $0x50] sm:$0xff]
    %v3882 = vld [vmem:[%s1030 + $0x58] sm:$0xff]
    %v3883 = vld [vmem:[%s1030 + $0x60] sm:$0xff]
    %v3884 = vld [vmem:[%s1030 + $0x68] sm:$0xff]
    %v3885 = vld [vmem:[%s1030 + $0x70] sm:$0xff]
    %v3886 = vld [vmem:[%s1030 + $0x78] sm:$0xff]
    %3887 = vmatprep.subr.mxu0 0.0
    %3888 = vmatpush1.msra.mxu0 %v3871
    %3889 = vmatprep.subr.mxu0 0.0
    %3890 = vmatpush1.msra.mxu0 %v3872
    %3891 = vmatprep.subr.mxu0 0.0
    %3892 = vmatpush1.msra.mxu0 %v3873
    %3893 = vmatprep.subr.mxu0 0.0
    %3894 = vmatpush1.msra.mxu0 %v3874
    %3895 = vmatprep.subr.mxu0 0.0
    %3896 = vmatpush1.msra.mxu0 %v3875
    %3897 = vmatprep.subr.mxu0 0.0
    %3898 = vmatpush1.msra.mxu0 %v3876
    %3899 = vmatprep.subr.mxu0 0.0
    %3900 = vmatpush1.msra.mxu0 %v3877
    %3901 = vmatprep.subr.mxu0 0.0
    %3902 = vmatpush1.msra.mxu0 %v3878
    %3903 = vmatprep.subr.mxu0 0.0
    %3904 = vmatpush1.msra.mxu0 %v3879
    %3905 = vmatprep.subr.mxu0 0.0
    %3906 = vmatpush1.msra.mxu0 %v3880
    %3907 = vmatprep.subr.mxu0 0.0
    %3908 = vmatpush1.msra.mxu0 %v3881
    %3909 = vmatprep.subr.mxu0 0.0
    %3910 = vmatpush1.msra.mxu0 %v3882
    %3911 = vmatprep.subr.mxu0 0.0
    %3912 = vmatpush1.msra.mxu0 %v3883
    %3913 = vmatprep.subr.mxu0 0.0
    %3914 = vmatpush1.msra.mxu0 %v3884
    %3915 = vmatprep.subr.mxu0 0.0
    %3916 = vmatpush1.msra.mxu0 %v3885
    %3917 = vmatprep.subr.mxu0 0.0
    %3918 = vmatpush1.msra.mxu0 %v3886
    %3919 = vmatprep.subr.mxu0 0.0
    %3920 = vmatpush1.msra.mxu0 0.0
    %3921 = vmatprep.subr.mxu0 0.0
    %3922 = vmatpush1.msra.mxu0 0.0
    %3923 = vmatprep.subr.mxu0 0.0
    %3924 = vmatpush1.msra.mxu0 0.0
    %3925 = vmatprep.subr.mxu0 0.0
    %3926 = vmatpush1.msra.mxu0 0.0
    %3927 = vmatprep.subr.mxu0 0.0
    %3928 = vmatpush1.msra.mxu0 0.0
    %3929 = vmatprep.subr.mxu0 0.0
    %3930 = vmatpush1.msra.mxu0 0.0
    %3931 = vmatprep.subr.mxu0 0.0
    %3932 = vmatpush1.msra.mxu0 0.0
    %3933 = vmatprep.subr.mxu0 0.0
    %3934 = vmatpush1.msra.mxu0 0.0
    %3935 = vmatprep.subr.mxu0 0.0
    %3936 = vmatpush1.msra.mxu0 0.0
    %3937 = vmatprep.subr.mxu0 0.0
    %3938 = vmatpush1.msra.mxu0 0.0
    %3939 = vmatprep.subr.mxu0 0.0
    %3940 = vmatpush1.msra.mxu0 0.0
    %3941 = vmatprep.subr.mxu0 0.0
    %3942 = vmatpush1.msra.mxu0 0.0
    %3943 = vmatprep.subr.mxu0 0.0
    %3944 = vmatpush1.msra.mxu0 0.0
    %3945 = vmatprep.subr.mxu0 0.0
    %3946 = vmatpush1.msra.mxu0 0.0
    %3947 = vmatprep.subr.mxu0 0.0
    %3948 = vmatpush1.msra.mxu0 0.0
    %3949 = vmatprep.subr.mxu0 0.0
    %3950 = vmatpush1.msra.mxu0 0.0
    %3951 = vmatprep.mubr.f32.mxu0 0.0
    %3952 = vmatmul.mubr.f32.gmra.mrb[0].mxu0 %v3174
    %v3953 = vpop.f32.mrb[0].mxu0
    %v3954 = vadd.f32 0.0, %v3953
    %v3955 = vpop.f32.mrb[0].mxu0
    %3956 = vdwg.mxu0
    %v3957 = vadd.f32 %v3870, %v3954
    %s3958 = scalar_lea.vmem %s6, 24
    %v3959 = vld [vmem:[%s3958] sm:$0xff]
    %3961 = vset.pattern.permute.xlu0 0
    %3962 = vperm.xlu0 %3961, %v3959
    %v3963 = vpop.permute.xlu0 %3962
    %v3965 = vadd.f32 %v3957, %v3963
    %v3966 = vmax.f32 %v3965, 0.0
    %3967 = vst [vmem:[#allocation2 + $0x8] sm:$0xff] %v3966
    %v3968 = vld [vmem:[#allocation2] sm:$0xff]
    %v3969 = vld [vmem:[#allocation2 + $0x8] sm:$0xff]
    %v3970 = vld [vmem:[#allocation2 + $0x10] sm:$0xff]
    %v3971 = vld [vmem:[#allocation2 + $0x18] sm:$0xff]
    %v3972 = vld [vmem:[#allocation2 + $0x20] sm:$0xff]
    %v3973 = vld [vmem:[#allocation2 + $0x28] sm:$0xff]
    %v3974 = vld [vmem:[#allocation2 + $0x30] sm:$0xff]
    %v3975 = vld [vmem:[#allocation2 + $0x38] sm:$0xff]
    %v3976 = vld [vmem:[#allocation2 + $0x40] sm:$0xff]
    %s3977 = scalar_lea.vmem [#allocation5], 288
    %v3978 = vld [vmem:[%s3977] sm:$0xff]
    %v3979 = vld [vmem:[%s3977 + $0x8] sm:$0xff]
    %v3980 = vld [vmem:[%s3977 + $0x10] sm:$0xff]
    %v3981 = vld [vmem:[%s3977 + $0x18] sm:$0xff]
    %v3982 = vld [vmem:[%s3977 + $0x20] sm:$0xff]
    %v3983 = vld [vmem:[%s3977 + $0x28] sm:$0xff]
    %v3984 = vld [vmem:[%s3977 + $0x30] sm:$0xff]
    %v3985 = vld [vmem:[%s3977 + $0x38] sm:$0xff]
    %v3986 = vld [vmem:[%s3977 + $0x40] sm:$0xff]
    %v3988 = vsel %vm191, %v3978, 0
    %v3991 = vsel %vm191, %v3979, 0
    %v3994 = vsel %vm191, %v3980, 0
    %v3997 = vsel %vm191, %v3981, 0
    %v4000 = vsel %vm191, %v3982, 0
    %v4003 = vsel %vm191, %v3983, 0
    %v4006 = vsel %vm191, %v3984, 0
    %v4009 = vsel %vm191, %v3985, 0
    %v4012 = vsel %vm191, %v3986, 0
    %4014 = vmatprep.subr.mxu0 0.0
    %4015 = vmatpush1.msra.mxu0 %v3968
    %4016 = vmatprep.subr.mxu0 0.0
    %4017 = vmatpush1.msra.mxu0 %v3969
    %4018 = vmatprep.subr.mxu0 0.0
    %4019 = vmatpush1.msra.mxu0 %v3970
    %4020 = vmatprep.subr.mxu0 0.0
    %4021 = vmatpush1.msra.mxu0 %v3971
    %4022 = vmatprep.subr.mxu0 0.0
    %4023 = vmatpush1.msra.mxu0 %v3972
    %4024 = vmatprep.subr.mxu0 0.0
    %4025 = vmatpush1.msra.mxu0 %v3973
    %4026 = vmatprep.subr.mxu0 0.0
    %4027 = vmatpush1.msra.mxu0 %v3974
    %4028 = vmatprep.subr.mxu0 0.0
    %4029 = vmatpush1.msra.mxu0 %v3975
    %4030 = vmatprep.subr.mxu0 0.0
    %4031 = vmatpush1.msra.mxu0 %v3976
    %4032 = vmatprep.subr.mxu0 0.0
    %4033 = vmatpush1.msra.mxu0 0.0
    %4034 = vmatprep.subr.mxu0 0.0
    %4035 = vmatpush1.msra.mxu0 0.0
    %4036 = vmatprep.subr.mxu0 0.0
    %4037 = vmatpush1.msra.mxu0 0.0
    %4038 = vmatprep.subr.mxu0 0.0
    %4039 = vmatpush1.msra.mxu0 0.0
    %4040 = vmatprep.subr.mxu0 0.0
    %4041 = vmatpush1.msra.mxu0 0.0
    %4042 = vmatprep.subr.mxu0 0.0
    %4043 = vmatpush1.msra.mxu0 0.0
    %4044 = vmatprep.subr.mxu0 0.0
    %4045 = vmatpush1.msra.mxu0 0.0
    %4046 = vmatprep.subr.mxu0 0.0
    %4047 = vmatpush1.msra.mxu0 0.0
    %4048 = vmatprep.subr.mxu0 0.0
    %4049 = vmatpush1.msra.mxu0 0.0
    %4050 = vmatprep.subr.mxu0 0.0
    %4051 = vmatpush1.msra.mxu0 0.0
    %4052 = vmatprep.subr.mxu0 0.0
    %4053 = vmatpush1.msra.mxu0 0.0
    %4054 = vmatprep.subr.mxu0 0.0
    %4055 = vmatpush1.msra.mxu0 0.0
    %4056 = vmatprep.subr.mxu0 0.0
    %4057 = vmatpush1.msra.mxu0 0.0
    %4058 = vmatprep.subr.mxu0 0.0
    %4059 = vmatpush1.msra.mxu0 0.0
    %4060 = vmatprep.subr.mxu0 0.0
    %4061 = vmatpush1.msra.mxu0 0.0
    %4062 = vmatprep.subr.mxu0 0.0
    %4063 = vmatpush1.msra.mxu0 0.0
    %4064 = vmatprep.subr.mxu0 0.0
    %4065 = vmatpush1.msra.mxu0 0.0
    %4066 = vmatprep.subr.mxu0 0.0
    %4067 = vmatpush1.msra.mxu0 0.0
    %4068 = vmatprep.subr.mxu0 0.0
    %4069 = vmatpush1.msra.mxu0 0.0
    %4070 = vmatprep.subr.mxu0 0.0
    %4071 = vmatpush1.msra.mxu0 0.0
    %4072 = vmatprep.subr.mxu0 0.0
    %4073 = vmatpush1.msra.mxu0 0.0
    %4074 = vmatprep.subr.mxu0 0.0
    %4075 = vmatpush1.msra.mxu0 0.0
    %4076 = vmatprep.subr.mxu0 0.0
    %4077 = vmatpush1.msra.mxu0 0.0
    %4078 = vmatprep.mubr.f32.mxu0 0.0
    %4079 = vmatmul.mubr.f32.gmra.mrb[0].mxu0 %v3988
    %v4080 = vpop.f32.mrb[0].mxu0
    %v4081 = vadd.f32 0.0, %v4080
    %v4082 = vpop.f32.mrb[0].mxu0
    %4083 = vmatprep.mubr.f32.mxu0 0.0
    %4084 = vmatmul.mubr.f32.gmra.mrb[0].mxu0 %v3991
    %v4085 = vpop.f32.mrb[0].mxu0
    %v4086 = vadd.f32 0.0, %v4085
    %v4087 = vpop.f32.mrb[0].mxu0
    %4088 = vmatprep.mubr.f32.mxu0 0.0
    %4089 = vmatmul.mubr.f32.gmra.mrb[0].mxu0 %v3994
    %v4090 = vpop.f32.mrb[0].mxu0
    %v4091 = vadd.f32 0.0, %v4090
    %v4092 = vpop.f32.mrb[0].mxu0
    %4093 = vmatprep.mubr.f32.mxu0 0.0
    %4094 = vmatmul.mubr.f32.gmra.mrb[0].mxu0 %v3997
    %v4095 = vpop.f32.mrb[0].mxu0
    %v4096 = vadd.f32 0.0, %v4095
    %v4097 = vpop.f32.mrb[0].mxu0
    %4098 = vmatprep.mubr.f32.mxu0 0.0
    %4099 = vmatmul.mubr.f32.gmra.mrb[0].mxu0 %v4000
    %v4100 = vpop.f32.mrb[0].mxu0
    %v4101 = vadd.f32 0.0, %v4100
    %v4102 = vpop.f32.mrb[0].mxu0
    %4103 = vmatprep.mubr.f32.mxu0 0.0
    %4104 = vmatmul.mubr.f32.gmra.mrb[0].mxu0 %v4003
    %v4105 = vpop.f32.mrb[0].mxu0
    %v4106 = vadd.f32 0.0, %v4105
    %v4107 = vpop.f32.mrb[0].mxu0
    %4108 = vmatprep.mubr.f32.mxu0 0.0
    %4109 = vmatmul.mubr.f32.gmra.mrb[0].mxu0 %v4006
    %v4110 = vpop.f32.mrb[0].mxu0
    %v4111 = vadd.f32 0.0, %v4110
    %v4112 = vpop.f32.mrb[0].mxu0
    %4113 = vmatprep.mubr.f32.mxu0 0.0
    %4114 = vmatmul.mubr.f32.gmra.mrb[0].mxu0 %v4009
    %v4115 = vpop.f32.mrb[0].mxu0
    %v4116 = vadd.f32 0.0, %v4115
    %v4117 = vpop.f32.mrb[0].mxu0
    %4118 = vmatprep.mubr.f32.mxu0 0.0
    %4119 = vmatmul.mubr.f32.gmra.mrb[0].mxu0 %v4012
    %v4120 = vpop.f32.mrb[0].mxu0
    %v4121 = vadd.f32 0.0, %v4120
    %v4122 = vpop.f32.mrb[0].mxu0
    %4123 = vdwg.mxu0
    %v4124 = vld [vmem:[#allocation3] sm:$0xff]
    %v4125 = vld [vmem:[#allocation3 + $0x8] sm:$0xff]
    %v4126 = vld [vmem:[#allocation3 + $0x10] sm:$0xff]
    %v4127 = vld [vmem:[#allocation3 + $0x18] sm:$0xff]
    %v4128 = vld [vmem:[#allocation3 + $0x20] sm:$0xff]
    %v4129 = vld [vmem:[#allocation3 + $0x28] sm:$0xff]
    %v4130 = vld [vmem:[#allocation3 + $0x30] sm:$0xff]
    %v4131 = vld [vmem:[#allocation3 + $0x38] sm:$0xff]
    %v4132 = vld [vmem:[#allocation3 + $0x40] sm:$0xff]
    %v4133 = vld [vmem:[#allocation3 + $0x48] sm:$0xff]
    %v4134 = vld [vmem:[#allocation3 + $0x50] sm:$0xff]
    %v4135 = vld [vmem:[#allocation3 + $0x58] sm:$0xff]
    %v4136 = vld [vmem:[#allocation3 + $0x60] sm:$0xff]
    %v4137 = vld [vmem:[#allocation3 + $0x68] sm:$0xff]
    %v4138 = vld [vmem:[#allocation3 + $0x70] sm:$0xff]
    %v4139 = vld [vmem:[#allocation3 + $0x78] sm:$0xff]
    %v4140 = vld [vmem:[%s345] sm:$0xff]
    %v4141 = vld [vmem:[%s345 + $0x8] sm:$0xff]
    %v4142 = vld [vmem:[%s345 + $0x10] sm:$0xff]
    %v4143 = vld [vmem:[%s345 + $0x18] sm:$0xff]
    %v4144 = vld [vmem:[%s345 + $0x20] sm:$0xff]
    %v4145 = vld [vmem:[%s345 + $0x28] sm:$0xff]
    %v4146 = vld [vmem:[%s345 + $0x30] sm:$0xff]
    %v4147 = vld [vmem:[%s345 + $0x38] sm:$0xff]
    %v4148 = vld [vmem:[%s345 + $0x40] sm:$0xff]
    %v4149 = vld [vmem:[%s345 + $0x48] sm:$0xff]
    %v4150 = vld [vmem:[%s345 + $0x50] sm:$0xff]
    %v4151 = vld [vmem:[%s345 + $0x58] sm:$0xff]
    %v4152 = vld [vmem:[%s345 + $0x60] sm:$0xff]
    %v4153 = vld [vmem:[%s345 + $0x68] sm:$0xff]
    %v4154 = vld [vmem:[%s345 + $0x70] sm:$0xff]
    %v4155 = vld [vmem:[%s345 + $0x78] sm:$0xff]
    %4156 = vmatprep.subr.mxu0 0.0
    %4157 = vmatpush1.msra.mxu0 %v4140
    %4158 = vmatprep.subr.mxu0 0.0
    %4159 = vmatpush1.msra.mxu0 %v4141
    %4160 = vmatprep.subr.mxu0 0.0
    %4161 = vmatpush1.msra.mxu0 %v4142
    %4162 = vmatprep.subr.mxu0 0.0
    %4163 = vmatpush1.msra.mxu0 %v4143
    %4164 = vmatprep.subr.mxu0 0.0
    %4165 = vmatpush1.msra.mxu0 %v4144
    %4166 = vmatprep.subr.mxu0 0.0
    %4167 = vmatpush1.msra.mxu0 %v4145
    %4168 = vmatprep.subr.mxu0 0.0
    %4169 = vmatpush1.msra.mxu0 %v4146
    %4170 = vmatprep.subr.mxu0 0.0
    %4171 = vmatpush1.msra.mxu0 %v4147
    %4172 = vmatprep.subr.mxu0 0.0
    %4173 = vmatpush1.msra.mxu0 %v4148
    %4174 = vmatprep.subr.mxu0 0.0
    %4175 = vmatpush1.msra.mxu0 %v4149
    %4176 = vmatprep.subr.mxu0 0.0
    %4177 = vmatpush1.msra.mxu0 %v4150
    %4178 = vmatprep.subr.mxu0 0.0
    %4179 = vmatpush1.msra.mxu0 %v4151
    %4180 = vmatprep.subr.mxu0 0.0
    %4181 = vmatpush1.msra.mxu0 %v4152
    %4182 = vmatprep.subr.mxu0 0.0
    %4183 = vmatpush1.msra.mxu0 %v4153
    %4184 = vmatprep.subr.mxu0 0.0
    %4185 = vmatpush1.msra.mxu0 %v4154
    %4186 = vmatprep.subr.mxu0 0.0
    %4187 = vmatpush1.msra.mxu0 %v4155
    %4188 = vmatprep.subr.mxu0 0.0
    %4189 = vmatpush1.msra.mxu0 0.0
    %4190 = vmatprep.subr.mxu0 0.0
    %4191 = vmatpush1.msra.mxu0 0.0
    %4192 = vmatprep.subr.mxu0 0.0
    %4193 = vmatpush1.msra.mxu0 0.0
    %4194 = vmatprep.subr.mxu0 0.0
    %4195 = vmatpush1.msra.mxu0 0.0
    %4196 = vmatprep.subr.mxu0 0.0
    %4197 = vmatpush1.msra.mxu0 0.0
    %4198 = vmatprep.subr.mxu0 0.0
    %4199 = vmatpush1.msra.mxu0 0.0
    %4200 = vmatprep.subr.mxu0 0.0
    %4201 = vmatpush1.msra.mxu0 0.0
    %4202 = vmatprep.subr.mxu0 0.0
    %4203 = vmatpush1.msra.mxu0 0.0
    %4204 = vmatprep.subr.mxu0 0.0
    %4205 = vmatpush1.msra.mxu0 0.0
    %4206 = vmatprep.subr.mxu0 0.0
    %4207 = vmatpush1.msra.mxu0 0.0
    %4208 = vmatprep.subr.mxu0 0.0
    %4209 = vmatpush1.msra.mxu0 0.0
    %4210 = vmatprep.subr.mxu0 0.0
    %4211 = vmatpush1.msra.mxu0 0.0
    %4212 = vmatprep.subr.mxu0 0.0
    %4213 = vmatpush1.msra.mxu0 0.0
    %4214 = vmatprep.subr.mxu0 0.0
    %4215 = vmatpush1.msra.mxu0 0.0
    %4216 = vmatprep.subr.mxu0 0.0
    %4217 = vmatpush1.msra.mxu0 0.0
    %4218 = vmatprep.subr.mxu0 0.0
    %4219 = vmatpush1.msra.mxu0 0.0
    %4220 = vmatprep.mubr.f32.mxu0 0.0
    %4221 = vmatmul.mubr.f32.gmra.mrb[0].mxu0 %v4086
    %v4222 = vpop.f32.mrb[0].mxu0
    %v4223 = vadd.f32 0.0, %v4222
    %v4224 = vpop.f32.mrb[0].mxu0
    %4225 = vdwg.mxu0
    %4226 = vmatprep.subr.mxu0 0.0
    %4227 = vmatpush1.msra.mxu0 %v4124
    %4228 = vmatprep.subr.mxu0 0.0
    %4229 = vmatpush1.msra.mxu0 %v4125
    %4230 = vmatprep.subr.mxu0 0.0
    %4231 = vmatpush1.msra.mxu0 %v4126
    %4232 = vmatprep.subr.mxu0 0.0
    %4233 = vmatpush1.msra.mxu0 %v4127
    %4234 = vmatprep.subr.mxu0 0.0
    %4235 = vmatpush1.msra.mxu0 %v4128
    %4236 = vmatprep.subr.mxu0 0.0
    %4237 = vmatpush1.msra.mxu0 %v4129
    %4238 = vmatprep.subr.mxu0 0.0
    %4239 = vmatpush1.msra.mxu0 %v4130
    %4240 = vmatprep.subr.mxu0 0.0
    %4241 = vmatpush1.msra.mxu0 %v4131
    %4242 = vmatprep.subr.mxu0 0.0
    %4243 = vmatpush1.msra.mxu0 %v4132
    %4244 = vmatprep.subr.mxu0 0.0
    %4245 = vmatpush1.msra.mxu0 %v4133
    %4246 = vmatprep.subr.mxu0 0.0
    %4247 = vmatpush1.msra.mxu0 %v4134
    %4248 = vmatprep.subr.mxu0 0.0
    %4249 = vmatpush1.msra.mxu0 %v4135
    %4250 = vmatprep.subr.mxu0 0.0
    %4251 = vmatpush1.msra.mxu0 %v4136
    %4252 = vmatprep.subr.mxu0 0.0
    %4253 = vmatpush1.msra.mxu0 %v4137
    %4254 = vmatprep.subr.mxu0 0.0
    %4255 = vmatpush1.msra.mxu0 %v4138
    %4256 = vmatprep.subr.mxu0 0.0
    %4257 = vmatpush1.msra.mxu0 %v4139
    %4258 = vmatprep.subr.mxu0 0.0
    %4259 = vmatpush1.msra.mxu0 0.0
    %4260 = vmatprep.subr.mxu0 0.0
    %4261 = vmatpush1.msra.mxu0 0.0
    %4262 = vmatprep.subr.mxu0 0.0
    %4263 = vmatpush1.msra.mxu0 0.0
    %4264 = vmatprep.subr.mxu0 0.0
    %4265 = vmatpush1.msra.mxu0 0.0
    %4266 = vmatprep.subr.mxu0 0.0
    %4267 = vmatpush1.msra.mxu0 0.0
    %4268 = vmatprep.subr.mxu0 0.0
    %4269 = vmatpush1.msra.mxu0 0.0
    %4270 = vmatprep.subr.mxu0 0.0
    %4271 = vmatpush1.msra.mxu0 0.0
    %4272 = vmatprep.subr.mxu0 0.0
    %4273 = vmatpush1.msra.mxu0 0.0
    %4274 = vmatprep.subr.mxu0 0.0
    %4275 = vmatpush1.msra.mxu0 0.0
    %4276 = vmatprep.subr.mxu0 0.0
    %4277 = vmatpush1.msra.mxu0 0.0
    %4278 = vmatprep.subr.mxu0 0.0
    %4279 = vmatpush1.msra.mxu0 0.0
    %4280 = vmatprep.subr.mxu0 0.0
    %4281 = vmatpush1.msra.mxu0 0.0
    %4282 = vmatprep.subr.mxu0 0.0
    %4283 = vmatpush1.msra.mxu0 0.0
    %4284 = vmatprep.subr.mxu0 0.0
    %4285 = vmatpush1.msra.mxu0 0.0
    %4286 = vmatprep.subr.mxu0 0.0
    %4287 = vmatpush1.msra.mxu0 0.0
    %4288 = vmatprep.subr.mxu0 0.0
    %4289 = vmatpush1.msra.mxu0 0.0
    %4290 = vmatprep.mubr.f32.mxu0 0.0
    %4291 = vmatmul.mubr.f32.gmra.mrb[0].mxu0 %v4081
    %v4292 = vpop.f32.mrb[0].mxu0
    %v4293 = vadd.f32 %v4223, %v4292
    %v4294 = vpop.f32.mrb[0].mxu0
    %4295 = vdwg.mxu0
    %v4296 = vld [vmem:[%s502] sm:$0xff]
    %v4297 = vld [vmem:[%s502 + $0x8] sm:$0xff]
    %v4298 = vld [vmem:[%s502 + $0x10] sm:$0xff]
    %v4299 = vld [vmem:[%s502 + $0x18] sm:$0xff]
    %v4300 = vld [vmem:[%s502 + $0x20] sm:$0xff]
    %v4301 = vld [vmem:[%s502 + $0x28] sm:$0xff]
    %v4302 = vld [vmem:[%s502 + $0x30] sm:$0xff]
    %v4303 = vld [vmem:[%s502 + $0x38] sm:$0xff]
    %v4304 = vld [vmem:[%s502 + $0x40] sm:$0xff]
    %v4305 = vld [vmem:[%s502 + $0x48] sm:$0xff]
    %v4306 = vld [vmem:[%s502 + $0x50] sm:$0xff]
    %v4307 = vld [vmem:[%s502 + $0x58] sm:$0xff]
    %v4308 = vld [vmem:[%s502 + $0x60] sm:$0xff]
    %v4309 = vld [vmem:[%s502 + $0x68] sm:$0xff]
    %v4310 = vld [vmem:[%s502 + $0x70] sm:$0xff]
    %v4311 = vld [vmem:[%s502 + $0x78] sm:$0xff]
    %4312 = vmatprep.subr.mxu0 0.0
    %4313 = vmatpush1.msra.mxu0 %v4296
    %4314 = vmatprep.subr.mxu0 0.0
    %4315 = vmatpush1.msra.mxu0 %v4297
    %4316 = vmatprep.subr.mxu0 0.0
    %4317 = vmatpush1.msra.mxu0 %v4298
    %4318 = vmatprep.subr.mxu0 0.0
    %4319 = vmatpush1.msra.mxu0 %v4299
    %4320 = vmatprep.subr.mxu0 0.0
    %4321 = vmatpush1.msra.mxu0 %v4300
    %4322 = vmatprep.subr.mxu0 0.0
    %4323 = vmatpush1.msra.mxu0 %v4301
    %4324 = vmatprep.subr.mxu0 0.0
    %4325 = vmatpush1.msra.mxu0 %v4302
    %4326 = vmatprep.subr.mxu0 0.0
    %4327 = vmatpush1.msra.mxu0 %v4303
    %4328 = vmatprep.subr.mxu0 0.0
    %4329 = vmatpush1.msra.mxu0 %v4304
    %4330 = vmatprep.subr.mxu0 0.0
    %4331 = vmatpush1.msra.mxu0 %v4305
    %4332 = vmatprep.subr.mxu0 0.0
    %4333 = vmatpush1.msra.mxu0 %v4306
    %4334 = vmatprep.subr.mxu0 0.0
    %4335 = vmatpush1.msra.mxu0 %v4307
    %4336 = vmatprep.subr.mxu0 0.0
    %4337 = vmatpush1.msra.mxu0 %v4308
    %4338 = vmatprep.subr.mxu0 0.0
    %4339 = vmatpush1.msra.mxu0 %v4309
    %4340 = vmatprep.subr.mxu0 0.0
    %4341 = vmatpush1.msra.mxu0 %v4310
    %4342 = vmatprep.subr.mxu0 0.0
    %4343 = vmatpush1.msra.mxu0 %v4311
    %4344 = vmatprep.subr.mxu0 0.0
    %4345 = vmatpush1.msra.mxu0 0.0
    %4346 = vmatprep.subr.mxu0 0.0
    %4347 = vmatpush1.msra.mxu0 0.0
    %4348 = vmatprep.subr.mxu0 0.0
    %4349 = vmatpush1.msra.mxu0 0.0
    %4350 = vmatprep.subr.mxu0 0.0
    %4351 = vmatpush1.msra.mxu0 0.0
    %4352 = vmatprep.subr.mxu0 0.0
    %4353 = vmatpush1.msra.mxu0 0.0
    %4354 = vmatprep.subr.mxu0 0.0
    %4355 = vmatpush1.msra.mxu0 0.0
    %4356 = vmatprep.subr.mxu0 0.0
    %4357 = vmatpush1.msra.mxu0 0.0
    %4358 = vmatprep.subr.mxu0 0.0
    %4359 = vmatpush1.msra.mxu0 0.0
    %4360 = vmatprep.subr.mxu0 0.0
    %4361 = vmatpush1.msra.mxu0 0.0
    %4362 = vmatprep.subr.mxu0 0.0
    %4363 = vmatpush1.msra.mxu0 0.0
    %4364 = vmatprep.subr.mxu0 0.0
    %4365 = vmatpush1.msra.mxu0 0.0
    %4366 = vmatprep.subr.mxu0 0.0
    %4367 = vmatpush1.msra.mxu0 0.0
    %4368 = vmatprep.subr.mxu0 0.0
    %4369 = vmatpush1.msra.mxu0 0.0
    %4370 = vmatprep.subr.mxu0 0.0
    %4371 = vmatpush1.msra.mxu0 0.0
    %4372 = vmatprep.subr.mxu0 0.0
    %4373 = vmatpush1.msra.mxu0 0.0
    %4374 = vmatprep.subr.mxu0 0.0
    %4375 = vmatpush1.msra.mxu0 0.0
    %4376 = vmatprep.mubr.f32.mxu0 0.0
    %4377 = vmatmul.mubr.f32.gmra.mrb[0].mxu0 %v4091
    %v4378 = vpop.f32.mrb[0].mxu0
    %v4379 = vadd.f32 0.0, %v4378
    %v4380 = vpop.f32.mrb[0].mxu0
    %4381 = vdwg.mxu0
    %v4382 = vadd.f32 %v4293, %v4379
    %v4383 = vld [vmem:[%s590] sm:$0xff]
    %v4384 = vld [vmem:[%s590 + $0x8] sm:$0xff]
    %v4385 = vld [vmem:[%s590 + $0x10] sm:$0xff]
    %v4386 = vld [vmem:[%s590 + $0x18] sm:$0xff]
    %v4387 = vld [vmem:[%s590 + $0x20] sm:$0xff]
    %v4388 = vld [vmem:[%s590 + $0x28] sm:$0xff]
    %v4389 = vld [vmem:[%s590 + $0x30] sm:$0xff]
    %v4390 = vld [vmem:[%s590 + $0x38] sm:$0xff]
    %v4391 = vld [vmem:[%s590 + $0x40] sm:$0xff]
    %v4392 = vld [vmem:[%s590 + $0x48] sm:$0xff]
    %v4393 = vld [vmem:[%s590 + $0x50] sm:$0xff]
    %v4394 = vld [vmem:[%s590 + $0x58] sm:$0xff]
    %v4395 = vld [vmem:[%s590 + $0x60] sm:$0xff]
    %v4396 = vld [vmem:[%s590 + $0x68] sm:$0xff]
    %v4397 = vld [vmem:[%s590 + $0x70] sm:$0xff]
    %v4398 = vld [vmem:[%s590 + $0x78] sm:$0xff]
    %4399 = vmatprep.subr.mxu0 0.0
    %4400 = vmatpush1.msra.mxu0 %v4383
    %4401 = vmatprep.subr.mxu0 0.0
    %4402 = vmatpush1.msra.mxu0 %v4384
    %4403 = vmatprep.subr.mxu0 0.0
    %4404 = vmatpush1.msra.mxu0 %v4385
    %4405 = vmatprep.subr.mxu0 0.0
    %4406 = vmatpush1.msra.mxu0 %v4386
    %4407 = vmatprep.subr.mxu0 0.0
    %4408 = vmatpush1.msra.mxu0 %v4387
    %4409 = vmatprep.subr.mxu0 0.0
    %4410 = vmatpush1.msra.mxu0 %v4388
    %4411 = vmatprep.subr.mxu0 0.0
    %4412 = vmatpush1.msra.mxu0 %v4389
    %4413 = vmatprep.subr.mxu0 0.0
    %4414 = vmatpush1.msra.mxu0 %v4390
    %4415 = vmatprep.subr.mxu0 0.0
    %4416 = vmatpush1.msra.mxu0 %v4391
    %4417 = vmatprep.subr.mxu0 0.0
    %4418 = vmatpush1.msra.mxu0 %v4392
    %4419 = vmatprep.subr.mxu0 0.0
    %4420 = vmatpush1.msra.mxu0 %v4393
    %4421 = vmatprep.subr.mxu0 0.0
    %4422 = vmatpush1.msra.mxu0 %v4394
    %4423 = vmatprep.subr.mxu0 0.0
    %4424 = vmatpush1.msra.mxu0 %v4395
    %4425 = vmatprep.subr.mxu0 0.0
    %4426 = vmatpush1.msra.mxu0 %v4396
    %4427 = vmatprep.subr.mxu0 0.0
    %4428 = vmatpush1.msra.mxu0 %v4397
    %4429 = vmatprep.subr.mxu0 0.0
    %4430 = vmatpush1.msra.mxu0 %v4398
    %4431 = vmatprep.subr.mxu0 0.0
    %4432 = vmatpush1.msra.mxu0 0.0
    %4433 = vmatprep.subr.mxu0 0.0
    %4434 = vmatpush1.msra.mxu0 0.0
    %4435 = vmatprep.subr.mxu0 0.0
    %4436 = vmatpush1.msra.mxu0 0.0
    %4437 = vmatprep.subr.mxu0 0.0
    %4438 = vmatpush1.msra.mxu0 0.0
    %4439 = vmatprep.subr.mxu0 0.0
    %4440 = vmatpush1.msra.mxu0 0.0
    %4441 = vmatprep.subr.mxu0 0.0
    %4442 = vmatpush1.msra.mxu0 0.0
    %4443 = vmatprep.subr.mxu0 0.0
    %4444 = vmatpush1.msra.mxu0 0.0
    %4445 = vmatprep.subr.mxu0 0.0
    %4446 = vmatpush1.msra.mxu0 0.0
    %4447 = vmatprep.subr.mxu0 0.0
    %4448 = vmatpush1.msra.mxu0 0.0
    %4449 = vmatprep.subr.mxu0 0.0
    %4450 = vmatpush1.msra.mxu0 0.0
    %4451 = vmatprep.subr.mxu0 0.0
    %4452 = vmatpush1.msra.mxu0 0.0
    %4453 = vmatprep.subr.mxu0 0.0
    %4454 = vmatpush1.msra.mxu0 0.0
    %4455 = vmatprep.subr.mxu0 0.0
    %4456 = vmatpush1.msra.mxu0 0.0
    %4457 = vmatprep.subr.mxu0 0.0
    %4458 = vmatpush1.msra.mxu0 0.0
    %4459 = vmatprep.subr.mxu0 0.0
    %4460 = vmatpush1.msra.mxu0 0.0
    %4461 = vmatprep.subr.mxu0 0.0
    %4462 = vmatpush1.msra.mxu0 0.0
    %4463 = vmatprep.mubr.f32.mxu0 0.0
    %4464 = vmatmul.mubr.f32.gmra.mrb[0].mxu0 %v4096
    %v4465 = vpop.f32.mrb[0].mxu0
    %v4466 = vadd.f32 0.0, %v4465
    %v4467 = vpop.f32.mrb[0].mxu0
    %4468 = vdwg.mxu0
    %v4469 = vadd.f32 %v4382, %v4466
    %v4470 = vld [vmem:[%s678] sm:$0xff]
    %v4471 = vld [vmem:[%s678 + $0x8] sm:$0xff]
    %v4472 = vld [vmem:[%s678 + $0x10] sm:$0xff]
    %v4473 = vld [vmem:[%s678 + $0x18] sm:$0xff]
    %v4474 = vld [vmem:[%s678 + $0x20] sm:$0xff]
    %v4475 = vld [vmem:[%s678 + $0x28] sm:$0xff]
    %v4476 = vld [vmem:[%s678 + $0x30] sm:$0xff]
    %v4477 = vld [vmem:[%s678 + $0x38] sm:$0xff]
    %v4478 = vld [vmem:[%s678 + $0x40] sm:$0xff]
    %v4479 = vld [vmem:[%s678 + $0x48] sm:$0xff]
    %v4480 = vld [vmem:[%s678 + $0x50] sm:$0xff]
    %v4481 = vld [vmem:[%s678 + $0x58] sm:$0xff]
    %v4482 = vld [vmem:[%s678 + $0x60] sm:$0xff]
    %v4483 = vld [vmem:[%s678 + $0x68] sm:$0xff]
    %v4484 = vld [vmem:[%s678 + $0x70] sm:$0xff]
    %v4485 = vld [vmem:[%s678 + $0x78] sm:$0xff]
    %4486 = vmatprep.subr.mxu0 0.0
    %4487 = vmatpush1.msra.mxu0 %v4470
    %4488 = vmatprep.subr.mxu0 0.0
    %4489 = vmatpush1.msra.mxu0 %v4471
    %4490 = vmatprep.subr.mxu0 0.0
    %4491 = vmatpush1.msra.mxu0 %v4472
    %4492 = vmatprep.subr.mxu0 0.0
    %4493 = vmatpush1.msra.mxu0 %v4473
    %4494 = vmatprep.subr.mxu0 0.0
    %4495 = vmatpush1.msra.mxu0 %v4474
    %4496 = vmatprep.subr.mxu0 0.0
    %4497 = vmatpush1.msra.mxu0 %v4475
    %4498 = vmatprep.subr.mxu0 0.0
    %4499 = vmatpush1.msra.mxu0 %v4476
    %4500 = vmatprep.subr.mxu0 0.0
    %4501 = vmatpush1.msra.mxu0 %v4477
    %4502 = vmatprep.subr.mxu0 0.0
    %4503 = vmatpush1.msra.mxu0 %v4478
    %4504 = vmatprep.subr.mxu0 0.0
    %4505 = vmatpush1.msra.mxu0 %v4479
    %4506 = vmatprep.subr.mxu0 0.0
    %4507 = vmatpush1.msra.mxu0 %v4480
    %4508 = vmatprep.subr.mxu0 0.0
    %4509 = vmatpush1.msra.mxu0 %v4481
    %4510 = vmatprep.subr.mxu0 0.0
    %4511 = vmatpush1.msra.mxu0 %v4482
    %4512 = vmatprep.subr.mxu0 0.0
    %4513 = vmatpush1.msra.mxu0 %v4483
    %4514 = vmatprep.subr.mxu0 0.0
    %4515 = vmatpush1.msra.mxu0 %v4484
    %4516 = vmatprep.subr.mxu0 0.0
    %4517 = vmatpush1.msra.mxu0 %v4485
    %4518 = vmatprep.subr.mxu0 0.0
    %4519 = vmatpush1.msra.mxu0 0.0
    %4520 = vmatprep.subr.mxu0 0.0
    %4521 = vmatpush1.msra.mxu0 0.0
    %4522 = vmatprep.subr.mxu0 0.0
    %4523 = vmatpush1.msra.mxu0 0.0
    %4524 = vmatprep.subr.mxu0 0.0
    %4525 = vmatpush1.msra.mxu0 0.0
    %4526 = vmatprep.subr.mxu0 0.0
    %4527 = vmatpush1.msra.mxu0 0.0
    %4528 = vmatprep.subr.mxu0 0.0
    %4529 = vmatpush1.msra.mxu0 0.0
    %4530 = vmatprep.subr.mxu0 0.0
    %4531 = vmatpush1.msra.mxu0 0.0
    %4532 = vmatprep.subr.mxu0 0.0
    %4533 = vmatpush1.msra.mxu0 0.0
    %4534 = vmatprep.subr.mxu0 0.0
    %4535 = vmatpush1.msra.mxu0 0.0
    %4536 = vmatprep.subr.mxu0 0.0
    %4537 = vmatpush1.msra.mxu0 0.0
    %4538 = vmatprep.subr.mxu0 0.0
    %4539 = vmatpush1.msra.mxu0 0.0
    %4540 = vmatprep.subr.mxu0 0.0
    %4541 = vmatpush1.msra.mxu0 0.0
    %4542 = vmatprep.subr.mxu0 0.0
    %4543 = vmatpush1.msra.mxu0 0.0
    %4544 = vmatprep.subr.mxu0 0.0
    %4545 = vmatpush1.msra.mxu0 0.0
    %4546 = vmatprep.subr.mxu0 0.0
    %4547 = vmatpush1.msra.mxu0 0.0
    %4548 = vmatprep.subr.mxu0 0.0
    %4549 = vmatpush1.msra.mxu0 0.0
    %4550 = vmatprep.mubr.f32.mxu0 0.0
    %4551 = vmatmul.mubr.f32.gmra.mrb[0].mxu0 %v4101
    %v4552 = vpop.f32.mrb[0].mxu0
    %v4553 = vadd.f32 0.0, %v4552
    %v4554 = vpop.f32.mrb[0].mxu0
    %4555 = vdwg.mxu0
    %v4556 = vadd.f32 %v4469, %v4553
    %v4557 = vld [vmem:[%s766] sm:$0xff]
    %v4558 = vld [vmem:[%s766 + $0x8] sm:$0xff]
    %v4559 = vld [vmem:[%s766 + $0x10] sm:$0xff]
    %v4560 = vld [vmem:[%s766 + $0x18] sm:$0xff]
    %v4561 = vld [vmem:[%s766 + $0x20] sm:$0xff]
    %v4562 = vld [vmem:[%s766 + $0x28] sm:$0xff]
    %v4563 = vld [vmem:[%s766 + $0x30] sm:$0xff]
    %v4564 = vld [vmem:[%s766 + $0x38] sm:$0xff]
    %v4565 = vld [vmem:[%s766 + $0x40] sm:$0xff]
    %v4566 = vld [vmem:[%s766 + $0x48] sm:$0xff]
    %v4567 = vld [vmem:[%s766 + $0x50] sm:$0xff]
    %v4568 = vld [vmem:[%s766 + $0x58] sm:$0xff]
    %v4569 = vld [vmem:[%s766 + $0x60] sm:$0xff]
    %v4570 = vld [vmem:[%s766 + $0x68] sm:$0xff]
    %v4571 = vld [vmem:[%s766 + $0x70] sm:$0xff]
    %v4572 = vld [vmem:[%s766 + $0x78] sm:$0xff]
    %4573 = vmatprep.subr.mxu0 0.0
    %4574 = vmatpush1.msra.mxu0 %v4557
    %4575 = vmatprep.subr.mxu0 0.0
    %4576 = vmatpush1.msra.mxu0 %v4558
    %4577 = vmatprep.subr.mxu0 0.0
    %4578 = vmatpush1.msra.mxu0 %v4559
    %4579 = vmatprep.subr.mxu0 0.0
    %4580 = vmatpush1.msra.mxu0 %v4560
    %4581 = vmatprep.subr.mxu0 0.0
    %4582 = vmatpush1.msra.mxu0 %v4561
    %4583 = vmatprep.subr.mxu0 0.0
    %4584 = vmatpush1.msra.mxu0 %v4562
    %4585 = vmatprep.subr.mxu0 0.0
    %4586 = vmatpush1.msra.mxu0 %v4563
    %4587 = vmatprep.subr.mxu0 0.0
    %4588 = vmatpush1.msra.mxu0 %v4564
    %4589 = vmatprep.subr.mxu0 0.0
    %4590 = vmatpush1.msra.mxu0 %v4565
    %4591 = vmatprep.subr.mxu0 0.0
    %4592 = vmatpush1.msra.mxu0 %v4566
    %4593 = vmatprep.subr.mxu0 0.0
    %4594 = vmatpush1.msra.mxu0 %v4567
    %4595 = vmatprep.subr.mxu0 0.0
    %4596 = vmatpush1.msra.mxu0 %v4568
    %4597 = vmatprep.subr.mxu0 0.0
    %4598 = vmatpush1.msra.mxu0 %v4569
    %4599 = vmatprep.subr.mxu0 0.0
    %4600 = vmatpush1.msra.mxu0 %v4570
    %4601 = vmatprep.subr.mxu0 0.0
    %4602 = vmatpush1.msra.mxu0 %v4571
    %4603 = vmatprep.subr.mxu0 0.0
    %4604 = vmatpush1.msra.mxu0 %v4572
    %4605 = vmatprep.subr.mxu0 0.0
    %4606 = vmatpush1.msra.mxu0 0.0
    %4607 = vmatprep.subr.mxu0 0.0
    %4608 = vmatpush1.msra.mxu0 0.0
    %4609 = vmatprep.subr.mxu0 0.0
    %4610 = vmatpush1.msra.mxu0 0.0
    %4611 = vmatprep.subr.mxu0 0.0
    %4612 = vmatpush1.msra.mxu0 0.0
    %4613 = vmatprep.subr.mxu0 0.0
    %4614 = vmatpush1.msra.mxu0 0.0
    %4615 = vmatprep.subr.mxu0 0.0
    %4616 = vmatpush1.msra.mxu0 0.0
    %4617 = vmatprep.subr.mxu0 0.0
    %4618 = vmatpush1.msra.mxu0 0.0
    %4619 = vmatprep.subr.mxu0 0.0
    %4620 = vmatpush1.msra.mxu0 0.0
    %4621 = vmatprep.subr.mxu0 0.0
    %4622 = vmatpush1.msra.mxu0 0.0
    %4623 = vmatprep.subr.mxu0 0.0
    %4624 = vmatpush1.msra.mxu0 0.0
    %4625 = vmatprep.subr.mxu0 0.0
    %4626 = vmatpush1.msra.mxu0 0.0
    %4627 = vmatprep.subr.mxu0 0.0
    %4628 = vmatpush1.msra.mxu0 0.0
    %4629 = vmatprep.subr.mxu0 0.0
    %4630 = vmatpush1.msra.mxu0 0.0
    %4631 = vmatprep.subr.mxu0 0.0
    %4632 = vmatpush1.msra.mxu0 0.0
    %4633 = vmatprep.subr.mxu0 0.0
    %4634 = vmatpush1.msra.mxu0 0.0
    %4635 = vmatprep.subr.mxu0 0.0
    %4636 = vmatpush1.msra.mxu0 0.0
    %4637 = vmatprep.mubr.f32.mxu0 0.0
    %4638 = vmatmul.mubr.f32.gmra.mrb[0].mxu0 %v4106
    %v4639 = vpop.f32.mrb[0].mxu0
    %v4640 = vadd.f32 0.0, %v4639
    %v4641 = vpop.f32.mrb[0].mxu0
    %4642 = vdwg.mxu0
    %v4643 = vadd.f32 %v4556, %v4640
    %v4644 = vld [vmem:[%s854] sm:$0xff]
    %v4645 = vld [vmem:[%s854 + $0x8] sm:$0xff]
    %v4646 = vld [vmem:[%s854 + $0x10] sm:$0xff]
    %v4647 = vld [vmem:[%s854 + $0x18] sm:$0xff]
    %v4648 = vld [vmem:[%s854 + $0x20] sm:$0xff]
    %v4649 = vld [vmem:[%s854 + $0x28] sm:$0xff]
    %v4650 = vld [vmem:[%s854 + $0x30] sm:$0xff]
    %v4651 = vld [vmem:[%s854 + $0x38] sm:$0xff]
    %v4652 = vld [vmem:[%s854 + $0x40] sm:$0xff]
    %v4653 = vld [vmem:[%s854 + $0x48] sm:$0xff]
    %v4654 = vld [vmem:[%s854 + $0x50] sm:$0xff]
    %v4655 = vld [vmem:[%s854 + $0x58] sm:$0xff]
    %v4656 = vld [vmem:[%s854 + $0x60] sm:$0xff]
    %v4657 = vld [vmem:[%s854 + $0x68] sm:$0xff]
    %v4658 = vld [vmem:[%s854 + $0x70] sm:$0xff]
    %v4659 = vld [vmem:[%s854 + $0x78] sm:$0xff]
    %4660 = vmatprep.subr.mxu0 0.0
    %4661 = vmatpush1.msra.mxu0 %v4644
    %4662 = vmatprep.subr.mxu0 0.0
    %4663 = vmatpush1.msra.mxu0 %v4645
    %4664 = vmatprep.subr.mxu0 0.0
    %4665 = vmatpush1.msra.mxu0 %v4646
    %4666 = vmatprep.subr.mxu0 0.0
    %4667 = vmatpush1.msra.mxu0 %v4647
    %4668 = vmatprep.subr.mxu0 0.0
    %4669 = vmatpush1.msra.mxu0 %v4648
    %4670 = vmatprep.subr.mxu0 0.0
    %4671 = vmatpush1.msra.mxu0 %v4649
    %4672 = vmatprep.subr.mxu0 0.0
    %4673 = vmatpush1.msra.mxu0 %v4650
    %4674 = vmatprep.subr.mxu0 0.0
    %4675 = vmatpush1.msra.mxu0 %v4651
    %4676 = vmatprep.subr.mxu0 0.0
    %4677 = vmatpush1.msra.mxu0 %v4652
    %4678 = vmatprep.subr.mxu0 0.0
    %4679 = vmatpush1.msra.mxu0 %v4653
    %4680 = vmatprep.subr.mxu0 0.0
    %4681 = vmatpush1.msra.mxu0 %v4654
    %4682 = vmatprep.subr.mxu0 0.0
    %4683 = vmatpush1.msra.mxu0 %v4655
    %4684 = vmatprep.subr.mxu0 0.0
    %4685 = vmatpush1.msra.mxu0 %v4656
    %4686 = vmatprep.subr.mxu0 0.0
    %4687 = vmatpush1.msra.mxu0 %v4657
    %4688 = vmatprep.subr.mxu0 0.0
    %4689 = vmatpush1.msra.mxu0 %v4658
    %4690 = vmatprep.subr.mxu0 0.0
    %4691 = vmatpush1.msra.mxu0 %v4659
    %4692 = vmatprep.subr.mxu0 0.0
    %4693 = vmatpush1.msra.mxu0 0.0
    %4694 = vmatprep.subr.mxu0 0.0
    %4695 = vmatpush1.msra.mxu0 0.0
    %4696 = vmatprep.subr.mxu0 0.0
    %4697 = vmatpush1.msra.mxu0 0.0
    %4698 = vmatprep.subr.mxu0 0.0
    %4699 = vmatpush1.msra.mxu0 0.0
    %4700 = vmatprep.subr.mxu0 0.0
    %4701 = vmatpush1.msra.mxu0 0.0
    %4702 = vmatprep.subr.mxu0 0.0
    %4703 = vmatpush1.msra.mxu0 0.0
    %4704 = vmatprep.subr.mxu0 0.0
    %4705 = vmatpush1.msra.mxu0 0.0
    %4706 = vmatprep.subr.mxu0 0.0
    %4707 = vmatpush1.msra.mxu0 0.0
    %4708 = vmatprep.subr.mxu0 0.0
    %4709 = vmatpush1.msra.mxu0 0.0
    %4710 = vmatprep.subr.mxu0 0.0
    %4711 = vmatpush1.msra.mxu0 0.0
    %4712 = vmatprep.subr.mxu0 0.0
    %4713 = vmatpush1.msra.mxu0 0.0
    %4714 = vmatprep.subr.mxu0 0.0
    %4715 = vmatpush1.msra.mxu0 0.0
    %4716 = vmatprep.subr.mxu0 0.0
    %4717 = vmatpush1.msra.mxu0 0.0
    %4718 = vmatprep.subr.mxu0 0.0
    %4719 = vmatpush1.msra.mxu0 0.0
    %4720 = vmatprep.subr.mxu0 0.0
    %4721 = vmatpush1.msra.mxu0 0.0
    %4722 = vmatprep.subr.mxu0 0.0
    %4723 = vmatpush1.msra.mxu0 0.0
    %4724 = vmatprep.mubr.f32.mxu0 0.0
    %4725 = vmatmul.mubr.f32.gmra.mrb[0].mxu0 %v4111
    %v4726 = vpop.f32.mrb[0].mxu0
    %v4727 = vadd.f32 0.0, %v4726
    %v4728 = vpop.f32.mrb[0].mxu0
    %4729 = vdwg.mxu0
    %v4730 = vadd.f32 %v4643, %v4727
    %v4731 = vld [vmem:[%s942] sm:$0xff]
    %v4732 = vld [vmem:[%s942 + $0x8] sm:$0xff]
    %v4733 = vld [vmem:[%s942 + $0x10] sm:$0xff]
    %v4734 = vld [vmem:[%s942 + $0x18] sm:$0xff]
    %v4735 = vld [vmem:[%s942 + $0x20] sm:$0xff]
    %v4736 = vld [vmem:[%s942 + $0x28] sm:$0xff]
    %v4737 = vld [vmem:[%s942 + $0x30] sm:$0xff]
    %v4738 = vld [vmem:[%s942 + $0x38] sm:$0xff]
    %v4739 = vld [vmem:[%s942 + $0x40] sm:$0xff]
    %v4740 = vld [vmem:[%s942 + $0x48] sm:$0xff]
    %v4741 = vld [vmem:[%s942 + $0x50] sm:$0xff]
    %v4742 = vld [vmem:[%s942 + $0x58] sm:$0xff]
    %v4743 = vld [vmem:[%s942 + $0x60] sm:$0xff]
    %v4744 = vld [vmem:[%s942 + $0x68] sm:$0xff]
    %v4745 = vld [vmem:[%s942 + $0x70] sm:$0xff]
    %v4746 = vld [vmem:[%s942 + $0x78] sm:$0xff]
    %4747 = vmatprep.subr.mxu0 0.0
    %4748 = vmatpush1.msra.mxu0 %v4731
    %4749 = vmatprep.subr.mxu0 0.0
    %4750 = vmatpush1.msra.mxu0 %v4732
    %4751 = vmatprep.subr.mxu0 0.0
    %4752 = vmatpush1.msra.mxu0 %v4733
    %4753 = vmatprep.subr.mxu0 0.0
    %4754 = vmatpush1.msra.mxu0 %v4734
    %4755 = vmatprep.subr.mxu0 0.0
    %4756 = vmatpush1.msra.mxu0 %v4735
    %4757 = vmatprep.subr.mxu0 0.0
    %4758 = vmatpush1.msra.mxu0 %v4736
    %4759 = vmatprep.subr.mxu0 0.0
    %4760 = vmatpush1.msra.mxu0 %v4737
    %4761 = vmatprep.subr.mxu0 0.0
    %4762 = vmatpush1.msra.mxu0 %v4738
    %4763 = vmatprep.subr.mxu0 0.0
    %4764 = vmatpush1.msra.mxu0 %v4739
    %4765 = vmatprep.subr.mxu0 0.0
    %4766 = vmatpush1.msra.mxu0 %v4740
    %4767 = vmatprep.subr.mxu0 0.0
    %4768 = vmatpush1.msra.mxu0 %v4741
    %4769 = vmatprep.subr.mxu0 0.0
    %4770 = vmatpush1.msra.mxu0 %v4742
    %4771 = vmatprep.subr.mxu0 0.0
    %4772 = vmatpush1.msra.mxu0 %v4743
    %4773 = vmatprep.subr.mxu0 0.0
    %4774 = vmatpush1.msra.mxu0 %v4744
    %4775 = vmatprep.subr.mxu0 0.0
    %4776 = vmatpush1.msra.mxu0 %v4745
    %4777 = vmatprep.subr.mxu0 0.0
    %4778 = vmatpush1.msra.mxu0 %v4746
    %4779 = vmatprep.subr.mxu0 0.0
    %4780 = vmatpush1.msra.mxu0 0.0
    %4781 = vmatprep.subr.mxu0 0.0
    %4782 = vmatpush1.msra.mxu0 0.0
    %4783 = vmatprep.subr.mxu0 0.0
    %4784 = vmatpush1.msra.mxu0 0.0
    %4785 = vmatprep.subr.mxu0 0.0
    %4786 = vmatpush1.msra.mxu0 0.0
    %4787 = vmatprep.subr.mxu0 0.0
    %4788 = vmatpush1.msra.mxu0 0.0
    %4789 = vmatprep.subr.mxu0 0.0
    %4790 = vmatpush1.msra.mxu0 0.0
    %4791 = vmatprep.subr.mxu0 0.0
    %4792 = vmatpush1.msra.mxu0 0.0
    %4793 = vmatprep.subr.mxu0 0.0
    %4794 = vmatpush1.msra.mxu0 0.0
    %4795 = vmatprep.subr.mxu0 0.0
    %4796 = vmatpush1.msra.mxu0 0.0
    %4797 = vmatprep.subr.mxu0 0.0
    %4798 = vmatpush1.msra.mxu0 0.0
    %4799 = vmatprep.subr.mxu0 0.0
    %4800 = vmatpush1.msra.mxu0 0.0
    %4801 = vmatprep.subr.mxu0 0.0
    %4802 = vmatpush1.msra.mxu0 0.0
    %4803 = vmatprep.subr.mxu0 0.0
    %4804 = vmatpush1.msra.mxu0 0.0
    %4805 = vmatprep.subr.mxu0 0.0
    %4806 = vmatpush1.msra.mxu0 0.0
    %4807 = vmatprep.subr.mxu0 0.0
    %4808 = vmatpush1.msra.mxu0 0.0
    %4809 = vmatprep.subr.mxu0 0.0
    %4810 = vmatpush1.msra.mxu0 0.0
    %4811 = vmatprep.mubr.f32.mxu0 0.0
    %4812 = vmatmul.mubr.f32.gmra.mrb[0].mxu0 %v4116
    %v4813 = vpop.f32.mrb[0].mxu0
    %v4814 = vadd.f32 0.0, %v4813
    %v4815 = vpop.f32.mrb[0].mxu0
    %4816 = vdwg.mxu0
    %v4817 = vadd.f32 %v4730, %v4814
    %v4818 = vld [vmem:[%s1030] sm:$0xff]
    %v4819 = vld [vmem:[%s1030 + $0x8] sm:$0xff]
    %v4820 = vld [vmem:[%s1030 + $0x10] sm:$0xff]
    %v4821 = vld [vmem:[%s1030 + $0x18] sm:$0xff]
    %v4822 = vld [vmem:[%s1030 + $0x20] sm:$0xff]
    %v4823 = vld [vmem:[%s1030 + $0x28] sm:$0xff]
    %v4824 = vld [vmem:[%s1030 + $0x30] sm:$0xff]
    %v4825 = vld [vmem:[%s1030 + $0x38] sm:$0xff]
    %v4826 = vld [vmem:[%s1030 + $0x40] sm:$0xff]
    %v4827 = vld [vmem:[%s1030 + $0x48] sm:$0xff]
    %v4828 = vld [vmem:[%s1030 + $0x50] sm:$0xff]
    %v4829 = vld [vmem:[%s1030 + $0x58] sm:$0xff]
    %v4830 = vld [vmem:[%s1030 + $0x60] sm:$0xff]
    %v4831 = vld [vmem:[%s1030 + $0x68] sm:$0xff]
    %v4832 = vld [vmem:[%s1030 + $0x70] sm:$0xff]
    %v4833 = vld [vmem:[%s1030 + $0x78] sm:$0xff]
    %4834 = vmatprep.subr.mxu0 0.0
    %4835 = vmatpush1.msra.mxu0 %v4818
    %4836 = vmatprep.subr.mxu0 0.0
    %4837 = vmatpush1.msra.mxu0 %v4819
    %4838 = vmatprep.subr.mxu0 0.0
    %4839 = vmatpush1.msra.mxu0 %v4820
    %4840 = vmatprep.subr.mxu0 0.0
    %4841 = vmatpush1.msra.mxu0 %v4821
    %4842 = vmatprep.subr.mxu0 0.0
    %4843 = vmatpush1.msra.mxu0 %v4822
    %4844 = vmatprep.subr.mxu0 0.0
    %4845 = vmatpush1.msra.mxu0 %v4823
    %4846 = vmatprep.subr.mxu0 0.0
    %4847 = vmatpush1.msra.mxu0 %v4824
    %4848 = vmatprep.subr.mxu0 0.0
    %4849 = vmatpush1.msra.mxu0 %v4825
    %4850 = vmatprep.subr.mxu0 0.0
    %4851 = vmatpush1.msra.mxu0 %v4826
    %4852 = vmatprep.subr.mxu0 0.0
    %4853 = vmatpush1.msra.mxu0 %v4827
    %4854 = vmatprep.subr.mxu0 0.0
    %4855 = vmatpush1.msra.mxu0 %v4828
    %4856 = vmatprep.subr.mxu0 0.0
    %4857 = vmatpush1.msra.mxu0 %v4829
    %4858 = vmatprep.subr.mxu0 0.0
    %4859 = vmatpush1.msra.mxu0 %v4830
    %4860 = vmatprep.subr.mxu0 0.0
    %4861 = vmatpush1.msra.mxu0 %v4831
    %4862 = vmatprep.subr.mxu0 0.0
    %4863 = vmatpush1.msra.mxu0 %v4832
    %4864 = vmatprep.subr.mxu0 0.0
    %4865 = vmatpush1.msra.mxu0 %v4833
    %4866 = vmatprep.subr.mxu0 0.0
    %4867 = vmatpush1.msra.mxu0 0.0
    %4868 = vmatprep.subr.mxu0 0.0
    %4869 = vmatpush1.msra.mxu0 0.0
    %4870 = vmatprep.subr.mxu0 0.0
    %4871 = vmatpush1.msra.mxu0 0.0
    %4872 = vmatprep.subr.mxu0 0.0
    %4873 = vmatpush1.msra.mxu0 0.0
    %4874 = vmatprep.subr.mxu0 0.0
    %4875 = vmatpush1.msra.mxu0 0.0
    %4876 = vmatprep.subr.mxu0 0.0
    %4877 = vmatpush1.msra.mxu0 0.0
    %4878 = vmatprep.subr.mxu0 0.0
    %4879 = vmatpush1.msra.mxu0 0.0
    %4880 = vmatprep.subr.mxu0 0.0
    %4881 = vmatpush1.msra.mxu0 0.0
    %4882 = vmatprep.subr.mxu0 0.0
    %4883 = vmatpush1.msra.mxu0 0.0
    %4884 = vmatprep.subr.mxu0 0.0
    %4885 = vmatpush1.msra.mxu0 0.0
    %4886 = vmatprep.subr.mxu0 0.0
    %4887 = vmatpush1.msra.mxu0 0.0
    %4888 = vmatprep.subr.mxu0 0.0
    %4889 = vmatpush1.msra.mxu0 0.0
    %4890 = vmatprep.subr.mxu0 0.0
    %4891 = vmatpush1.msra.mxu0 0.0
    %4892 = vmatprep.subr.mxu0 0.0
    %4893 = vmatpush1.msra.mxu0 0.0
    %4894 = vmatprep.subr.mxu0 0.0
    %4895 = vmatpush1.msra.mxu0 0.0
    %4896 = vmatprep.subr.mxu0 0.0
    %4897 = vmatpush1.msra.mxu0 0.0
    %4898 = vmatprep.mubr.f32.mxu0 0.0
    %4899 = vmatmul.mubr.f32.gmra.mrb[0].mxu0 %v4121
    %v4900 = vpop.f32.mrb[0].mxu0
    %v4901 = vadd.f32 0.0, %v4900
    %v4902 = vpop.f32.mrb[0].mxu0
    %4903 = vdwg.mxu0
    %v4904 = vadd.f32 %v4817, %v4901
    %s4905 = scalar_lea.vmem %s6, 32
    %v4906 = vld [vmem:[%s4905] sm:$0xff]
    %4908 = vset.pattern.permute.xlu0 0
    %4909 = vperm.xlu0 %4908, %v4906
    %v4910 = vpop.permute.xlu0 %4909
    %v4912 = vadd.f32 %v4904, %v4910
    %v4913 = vmax.f32 %v4912, 0.0
    %4914 = vst [vmem:[#allocation2] sm:$0xff] %v4913
    %v4915 = vld [vmem:[#allocation2] sm:$0xff]
    %v4916 = vld [vmem:[#allocation2 + $0x8] sm:$0xff]
    %v4917 = vld [vmem:[#allocation2 + $0x10] sm:$0xff]
    %v4918 = vld [vmem:[#allocation2 + $0x18] sm:$0xff]
    %v4919 = vld [vmem:[#allocation2 + $0x20] sm:$0xff]
    %v4920 = vld [vmem:[#allocation2 + $0x28] sm:$0xff]
    %v4921 = vld [vmem:[#allocation2 + $0x30] sm:$0xff]
    %v4922 = vld [vmem:[#allocation2 + $0x38] sm:$0xff]
    %v4923 = vld [vmem:[#allocation2 + $0x40] sm:$0xff]
    %s4924 = scalar_lea.vmem [#allocation5], 360
    %v4925 = vld [vmem:[%s4924] sm:$0xff]
    %v4926 = vld [vmem:[%s4924 + $0x8] sm:$0xff]
    %v4927 = vld [vmem:[%s4924 + $0x10] sm:$0xff]
    %v4928 = vld [vmem:[%s4924 + $0x18] sm:$0xff]
    %v4929 = vld [vmem:[%s4924 + $0x20] sm:$0xff]
    %v4930 = vld [vmem:[%s4924 + $0x28] sm:$0xff]
    %v4931 = vld [vmem:[%s4924 + $0x30] sm:$0xff]
    %v4932 = vld [vmem:[%s4924 + $0x38] sm:$0xff]
    %v4933 = vld [vmem:[%s4924 + $0x40] sm:$0xff]
    %v4935 = vsel %vm191, %v4925, 0
    %v4938 = vsel %vm191, %v4926, 0
    %v4941 = vsel %vm191, %v4927, 0
    %v4944 = vsel %vm191, %v4928, 0
    %v4947 = vsel %vm191, %v4929, 0
    %v4950 = vsel %vm191, %v4930, 0
    %v4953 = vsel %vm191, %v4931, 0
    %v4956 = vsel %vm191, %v4932, 0
    %v4959 = vsel %vm191, %v4933, 0
    %4961 = vmatprep.subr.mxu0 0.0
    %4962 = vmatpush1.msra.mxu0 %v4915
    %4963 = vmatprep.subr.mxu0 0.0
    %4964 = vmatpush1.msra.mxu0 %v4916
    %4965 = vmatprep.subr.mxu0 0.0
    %4966 = vmatpush1.msra.mxu0 %v4917
    %4967 = vmatprep.subr.mxu0 0.0
    %4968 = vmatpush1.msra.mxu0 %v4918
    %4969 = vmatprep.subr.mxu0 0.0
    %4970 = vmatpush1.msra.mxu0 %v4919
    %4971 = vmatprep.subr.mxu0 0.0
    %4972 = vmatpush1.msra.mxu0 %v4920
    %4973 = vmatprep.subr.mxu0 0.0
    %4974 = vmatpush1.msra.mxu0 %v4921
    %4975 = vmatprep.subr.mxu0 0.0
    %4976 = vmatpush1.msra.mxu0 %v4922
    %4977 = vmatprep.subr.mxu0 0.0
    %4978 = vmatpush1.msra.mxu0 %v4923
    %4979 = vmatprep.subr.mxu0 0.0
    %4980 = vmatpush1.msra.mxu0 0.0
    %4981 = vmatprep.subr.mxu0 0.0
    %4982 = vmatpush1.msra.mxu0 0.0
    %4983 = vmatprep.subr.mxu0 0.0
    %4984 = vmatpush1.msra.mxu0 0.0
    %4985 = vmatprep.subr.mxu0 0.0
    %4986 = vmatpush1.msra.mxu0 0.0
    %4987 = vmatprep.subr.mxu0 0.0
    %4988 = vmatpush1.msra.mxu0 0.0
    %4989 = vmatprep.subr.mxu0 0.0
    %4990 = vmatpush1.msra.mxu0 0.0
    %4991 = vmatprep.subr.mxu0 0.0
    %4992 = vmatpush1.msra.mxu0 0.0
    %4993 = vmatprep.subr.mxu0 0.0
    %4994 = vmatpush1.msra.mxu0 0.0
    %4995 = vmatprep.subr.mxu0 0.0
    %4996 = vmatpush1.msra.mxu0 0.0
    %4997 = vmatprep.subr.mxu0 0.0
    %4998 = vmatpush1.msra.mxu0 0.0
    %4999 = vmatprep.subr.mxu0 0.0
    %5000 = vmatpush1.msra.mxu0 0.0
    %5001 = vmatprep.subr.mxu0 0.0
    %5002 = vmatpush1.msra.mxu0 0.0
    %5003 = vmatprep.subr.mxu0 0.0
    %5004 = vmatpush1.msra.mxu0 0.0
    %5005 = vmatprep.subr.mxu0 0.0
    %5006 = vmatpush1.msra.mxu0 0.0
    %5007 = vmatprep.subr.mxu0 0.0
    %5008 = vmatpush1.msra.mxu0 0.0
    %5009 = vmatprep.subr.mxu0 0.0
    %5010 = vmatpush1.msra.mxu0 0.0
    %5011 = vmatprep.subr.mxu0 0.0
    %5012 = vmatpush1.msra.mxu0 0.0
    %5013 = vmatprep.subr.mxu0 0.0
    %5014 = vmatpush1.msra.mxu0 0.0
    %5015 = vmatprep.subr.mxu0 0.0
    %5016 = vmatpush1.msra.mxu0 0.0
    %5017 = vmatprep.subr.mxu0 0.0
    %5018 = vmatpush1.msra.mxu0 0.0
    %5019 = vmatprep.subr.mxu0 0.0
    %5020 = vmatpush1.msra.mxu0 0.0
    %5021 = vmatprep.subr.mxu0 0.0
    %5022 = vmatpush1.msra.mxu0 0.0
    %5023 = vmatprep.subr.mxu0 0.0
    %5024 = vmatpush1.msra.mxu0 0.0
    %5025 = vmatprep.mubr.f32.mxu0 0.0
    %5026 = vmatmul.mubr.f32.gmra.mrb[0].mxu0 %v4935
    %v5027 = vpop.f32.mrb[0].mxu0
    %v5028 = vadd.f32 0.0, %v5027
    %v5029 = vpop.f32.mrb[0].mxu0
    %5030 = vmatprep.mubr.f32.mxu0 0.0
    %5031 = vmatmul.mubr.f32.gmra.mrb[0].mxu0 %v4938
    %v5032 = vpop.f32.mrb[0].mxu0
    %v5033 = vadd.f32 0.0, %v5032
    %v5034 = vpop.f32.mrb[0].mxu0
    %5035 = vmatprep.mubr.f32.mxu0 0.0
    %5036 = vmatmul.mubr.f32.gmra.mrb[0].mxu0 %v4941
    %v5037 = vpop.f32.mrb[0].mxu0
    %v5038 = vadd.f32 0.0, %v5037
    %v5039 = vpop.f32.mrb[0].mxu0
    %5040 = vmatprep.mubr.f32.mxu0 0.0
    %5041 = vmatmul.mubr.f32.gmra.mrb[0].mxu0 %v4944
    %v5042 = vpop.f32.mrb[0].mxu0
    %v5043 = vadd.f32 0.0, %v5042
    %v5044 = vpop.f32.mrb[0].mxu0
    %5045 = vmatprep.mubr.f32.mxu0 0.0
    %5046 = vmatmul.mubr.f32.gmra.mrb[0].mxu0 %v4947
    %v5047 = vpop.f32.mrb[0].mxu0
    %v5048 = vadd.f32 0.0, %v5047
    %v5049 = vpop.f32.mrb[0].mxu0
    %5050 = vmatprep.mubr.f32.mxu0 0.0
    %5051 = vmatmul.mubr.f32.gmra.mrb[0].mxu0 %v4950
    %v5052 = vpop.f32.mrb[0].mxu0
    %v5053 = vadd.f32 0.0, %v5052
    %v5054 = vpop.f32.mrb[0].mxu0
    %5055 = vmatprep.mubr.f32.mxu0 0.0
    %5056 = vmatmul.mubr.f32.gmra.mrb[0].mxu0 %v4953
    %v5057 = vpop.f32.mrb[0].mxu0
    %v5058 = vadd.f32 0.0, %v5057
    %v5059 = vpop.f32.mrb[0].mxu0
    %5060 = vmatprep.mubr.f32.mxu0 0.0
    %5061 = vmatmul.mubr.f32.gmra.mrb[0].mxu0 %v4956
    %v5062 = vpop.f32.mrb[0].mxu0
    %v5063 = vadd.f32 0.0, %v5062
    %v5064 = vpop.f32.mrb[0].mxu0
    %5065 = vmatprep.mubr.f32.mxu0 0.0
    %5066 = vmatmul.mubr.f32.gmra.mrb[0].mxu0 %v4959
    %v5067 = vpop.f32.mrb[0].mxu0
    %v5068 = vadd.f32 0.0, %v5067
    %v5069 = vpop.f32.mrb[0].mxu0
    %5070 = vdwg.mxu0
    %v5071 = vld [vmem:[#allocation3] sm:$0xff]
    %v5072 = vld [vmem:[#allocation3 + $0x8] sm:$0xff]
    %v5073 = vld [vmem:[#allocation3 + $0x10] sm:$0xff]
    %v5074 = vld [vmem:[#allocation3 + $0x18] sm:$0xff]
    %v5075 = vld [vmem:[#allocation3 + $0x20] sm:$0xff]
    %v5076 = vld [vmem:[#allocation3 + $0x28] sm:$0xff]
    %v5077 = vld [vmem:[#allocation3 + $0x30] sm:$0xff]
    %v5078 = vld [vmem:[#allocation3 + $0x38] sm:$0xff]
    %v5079 = vld [vmem:[#allocation3 + $0x40] sm:$0xff]
    %v5080 = vld [vmem:[#allocation3 + $0x48] sm:$0xff]
    %v5081 = vld [vmem:[#allocation3 + $0x50] sm:$0xff]
    %v5082 = vld [vmem:[#allocation3 + $0x58] sm:$0xff]
    %v5083 = vld [vmem:[#allocation3 + $0x60] sm:$0xff]
    %v5084 = vld [vmem:[#allocation3 + $0x68] sm:$0xff]
    %v5085 = vld [vmem:[#allocation3 + $0x70] sm:$0xff]
    %v5086 = vld [vmem:[#allocation3 + $0x78] sm:$0xff]
    %v5087 = vld [vmem:[%s345] sm:$0xff]
    %v5088 = vld [vmem:[%s345 + $0x8] sm:$0xff]
    %v5089 = vld [vmem:[%s345 + $0x10] sm:$0xff]
    %v5090 = vld [vmem:[%s345 + $0x18] sm:$0xff]
    %v5091 = vld [vmem:[%s345 + $0x20] sm:$0xff]
    %v5092 = vld [vmem:[%s345 + $0x28] sm:$0xff]
    %v5093 = vld [vmem:[%s345 + $0x30] sm:$0xff]
    %v5094 = vld [vmem:[%s345 + $0x38] sm:$0xff]
    %v5095 = vld [vmem:[%s345 + $0x40] sm:$0xff]
    %v5096 = vld [vmem:[%s345 + $0x48] sm:$0xff]
    %v5097 = vld [vmem:[%s345 + $0x50] sm:$0xff]
    %v5098 = vld [vmem:[%s345 + $0x58] sm:$0xff]
    %v5099 = vld [vmem:[%s345 + $0x60] sm:$0xff]
    %v5100 = vld [vmem:[%s345 + $0x68] sm:$0xff]
    %v5101 = vld [vmem:[%s345 + $0x70] sm:$0xff]
    %v5102 = vld [vmem:[%s345 + $0x78] sm:$0xff]
    %5103 = vmatprep.subr.mxu0 0.0
    %5104 = vmatpush1.msra.mxu0 %v5087
    %5105 = vmatprep.subr.mxu0 0.0
    %5106 = vmatpush1.msra.mxu0 %v5088
    %5107 = vmatprep.subr.mxu0 0.0
    %5108 = vmatpush1.msra.mxu0 %v5089
    %5109 = vmatprep.subr.mxu0 0.0
    %5110 = vmatpush1.msra.mxu0 %v5090
    %5111 = vmatprep.subr.mxu0 0.0
    %5112 = vmatpush1.msra.mxu0 %v5091
    %5113 = vmatprep.subr.mxu0 0.0
    %5114 = vmatpush1.msra.mxu0 %v5092
    %5115 = vmatprep.subr.mxu0 0.0
    %5116 = vmatpush1.msra.mxu0 %v5093
    %5117 = vmatprep.subr.mxu0 0.0
    %5118 = vmatpush1.msra.mxu0 %v5094
    %5119 = vmatprep.subr.mxu0 0.0
    %5120 = vmatpush1.msra.mxu0 %v5095
    %5121 = vmatprep.subr.mxu0 0.0
    %5122 = vmatpush1.msra.mxu0 %v5096
    %5123 = vmatprep.subr.mxu0 0.0
    %5124 = vmatpush1.msra.mxu0 %v5097
    %5125 = vmatprep.subr.mxu0 0.0
    %5126 = vmatpush1.msra.mxu0 %v5098
    %5127 = vmatprep.subr.mxu0 0.0
    %5128 = vmatpush1.msra.mxu0 %v5099
    %5129 = vmatprep.subr.mxu0 0.0
    %5130 = vmatpush1.msra.mxu0 %v5100
    %5131 = vmatprep.subr.mxu0 0.0
    %5132 = vmatpush1.msra.mxu0 %v5101
    %5133 = vmatprep.subr.mxu0 0.0
    %5134 = vmatpush1.msra.mxu0 %v5102
    %5135 = vmatprep.subr.mxu0 0.0
    %5136 = vmatpush1.msra.mxu0 0.0
    %5137 = vmatprep.subr.mxu0 0.0
    %5138 = vmatpush1.msra.mxu0 0.0
    %5139 = vmatprep.subr.mxu0 0.0
    %5140 = vmatpush1.msra.mxu0 0.0
    %5141 = vmatprep.subr.mxu0 0.0
    %5142 = vmatpush1.msra.mxu0 0.0
    %5143 = vmatprep.subr.mxu0 0.0
    %5144 = vmatpush1.msra.mxu0 0.0
    %5145 = vmatprep.subr.mxu0 0.0
    %5146 = vmatpush1.msra.mxu0 0.0
    %5147 = vmatprep.subr.mxu0 0.0
    %5148 = vmatpush1.msra.mxu0 0.0
    %5149 = vmatprep.subr.mxu0 0.0
    %5150 = vmatpush1.msra.mxu0 0.0
    %5151 = vmatprep.subr.mxu0 0.0
    %5152 = vmatpush1.msra.mxu0 0.0
    %5153 = vmatprep.subr.mxu0 0.0
    %5154 = vmatpush1.msra.mxu0 0.0
    %5155 = vmatprep.subr.mxu0 0.0
    %5156 = vmatpush1.msra.mxu0 0.0
    %5157 = vmatprep.subr.mxu0 0.0
    %5158 = vmatpush1.msra.mxu0 0.0
    %5159 = vmatprep.subr.mxu0 0.0
    %5160 = vmatpush1.msra.mxu0 0.0
    %5161 = vmatprep.subr.mxu0 0.0
    %5162 = vmatpush1.msra.mxu0 0.0
    %5163 = vmatprep.subr.mxu0 0.0
    %5164 = vmatpush1.msra.mxu0 0.0
    %5165 = vmatprep.subr.mxu0 0.0
    %5166 = vmatpush1.msra.mxu0 0.0
    %5167 = vmatprep.mubr.f32.mxu0 0.0
    %5168 = vmatmul.mubr.f32.gmra.mrb[0].mxu0 %v5033
    %v5169 = vpop.f32.mrb[0].mxu0
    %v5170 = vadd.f32 0.0, %v5169
    %v5171 = vpop.f32.mrb[0].mxu0
    %5172 = vdwg.mxu0
    %5173 = vmatprep.subr.mxu0 0.0
    %5174 = vmatpush1.msra.mxu0 %v5071
    %5175 = vmatprep.subr.mxu0 0.0
    %5176 = vmatpush1.msra.mxu0 %v5072
    %5177 = vmatprep.subr.mxu0 0.0
    %5178 = vmatpush1.msra.mxu0 %v5073
    %5179 = vmatprep.subr.mxu0 0.0
    %5180 = vmatpush1.msra.mxu0 %v5074
    %5181 = vmatprep.subr.mxu0 0.0
    %5182 = vmatpush1.msra.mxu0 %v5075
    %5183 = vmatprep.subr.mxu0 0.0
    %5184 = vmatpush1.msra.mxu0 %v5076
    %5185 = vmatprep.subr.mxu0 0.0
    %5186 = vmatpush1.msra.mxu0 %v5077
    %5187 = vmatprep.subr.mxu0 0.0
    %5188 = vmatpush1.msra.mxu0 %v5078
    %5189 = vmatprep.subr.mxu0 0.0
    %5190 = vmatpush1.msra.mxu0 %v5079
    %5191 = vmatprep.subr.mxu0 0.0
    %5192 = vmatpush1.msra.mxu0 %v5080
    %5193 = vmatprep.subr.mxu0 0.0
    %5194 = vmatpush1.msra.mxu0 %v5081
    %5195 = vmatprep.subr.mxu0 0.0
    %5196 = vmatpush1.msra.mxu0 %v5082
    %5197 = vmatprep.subr.mxu0 0.0
    %5198 = vmatpush1.msra.mxu0 %v5083
    %5199 = vmatprep.subr.mxu0 0.0
    %5200 = vmatpush1.msra.mxu0 %v5084
    %5201 = vmatprep.subr.mxu0 0.0
    %5202 = vmatpush1.msra.mxu0 %v5085
    %5203 = vmatprep.subr.mxu0 0.0
    %5204 = vmatpush1.msra.mxu0 %v5086
    %5205 = vmatprep.subr.mxu0 0.0
    %5206 = vmatpush1.msra.mxu0 0.0
    %5207 = vmatprep.subr.mxu0 0.0
    %5208 = vmatpush1.msra.mxu0 0.0
    %5209 = vmatprep.subr.mxu0 0.0
    %5210 = vmatpush1.msra.mxu0 0.0
    %5211 = vmatprep.subr.mxu0 0.0
    %5212 = vmatpush1.msra.mxu0 0.0
    %5213 = vmatprep.subr.mxu0 0.0
    %5214 = vmatpush1.msra.mxu0 0.0
    %5215 = vmatprep.subr.mxu0 0.0
    %5216 = vmatpush1.msra.mxu0 0.0
    %5217 = vmatprep.subr.mxu0 0.0
    %5218 = vmatpush1.msra.mxu0 0.0
    %5219 = vmatprep.subr.mxu0 0.0
    %5220 = vmatpush1.msra.mxu0 0.0
    %5221 = vmatprep.subr.mxu0 0.0
    %5222 = vmatpush1.msra.mxu0 0.0
    %5223 = vmatprep.subr.mxu0 0.0
    %5224 = vmatpush1.msra.mxu0 0.0
    %5225 = vmatprep.subr.mxu0 0.0
    %5226 = vmatpush1.msra.mxu0 0.0
    %5227 = vmatprep.subr.mxu0 0.0
    %5228 = vmatpush1.msra.mxu0 0.0
    %5229 = vmatprep.subr.mxu0 0.0
    %5230 = vmatpush1.msra.mxu0 0.0
    %5231 = vmatprep.subr.mxu0 0.0
    %5232 = vmatpush1.msra.mxu0 0.0
    %5233 = vmatprep.subr.mxu0 0.0
    %5234 = vmatpush1.msra.mxu0 0.0
    %5235 = vmatprep.subr.mxu0 0.0
    %5236 = vmatpush1.msra.mxu0 0.0
    %5237 = vmatprep.mubr.f32.mxu0 0.0
    %5238 = vmatmul.mubr.f32.gmra.mrb[0].mxu0 %v5028
    %v5239 = vpop.f32.mrb[0].mxu0
    %v5240 = vadd.f32 %v5170, %v5239
    %v5241 = vpop.f32.mrb[0].mxu0
    %5242 = vdwg.mxu0
    %v5243 = vld [vmem:[%s502] sm:$0xff]
    %v5244 = vld [vmem:[%s502 + $0x8] sm:$0xff]
    %v5245 = vld [vmem:[%s502 + $0x10] sm:$0xff]
    %v5246 = vld [vmem:[%s502 + $0x18] sm:$0xff]
    %v5247 = vld [vmem:[%s502 + $0x20] sm:$0xff]
    %v5248 = vld [vmem:[%s502 + $0x28] sm:$0xff]
    %v5249 = vld [vmem:[%s502 + $0x30] sm:$0xff]
    %v5250 = vld [vmem:[%s502 + $0x38] sm:$0xff]
    %v5251 = vld [vmem:[%s502 + $0x40] sm:$0xff]
    %v5252 = vld [vmem:[%s502 + $0x48] sm:$0xff]
    %v5253 = vld [vmem:[%s502 + $0x50] sm:$0xff]
    %v5254 = vld [vmem:[%s502 + $0x58] sm:$0xff]
    %v5255 = vld [vmem:[%s502 + $0x60] sm:$0xff]
    %v5256 = vld [vmem:[%s502 + $0x68] sm:$0xff]
    %v5257 = vld [vmem:[%s502 + $0x70] sm:$0xff]
    %v5258 = vld [vmem:[%s502 + $0x78] sm:$0xff]
    %5259 = vmatprep.subr.mxu0 0.0
    %5260 = vmatpush1.msra.mxu0 %v5243
    %5261 = vmatprep.subr.mxu0 0.0
    %5262 = vmatpush1.msra.mxu0 %v5244
    %5263 = vmatprep.subr.mxu0 0.0
    %5264 = vmatpush1.msra.mxu0 %v5245
    %5265 = vmatprep.subr.mxu0 0.0
    %5266 = vmatpush1.msra.mxu0 %v5246
    %5267 = vmatprep.subr.mxu0 0.0
    %5268 = vmatpush1.msra.mxu0 %v5247
    %5269 = vmatprep.subr.mxu0 0.0
    %5270 = vmatpush1.msra.mxu0 %v5248
    %5271 = vmatprep.subr.mxu0 0.0
    %5272 = vmatpush1.msra.mxu0 %v5249
    %5273 = vmatprep.subr.mxu0 0.0
    %5274 = vmatpush1.msra.mxu0 %v5250
    %5275 = vmatprep.subr.mxu0 0.0
    %5276 = vmatpush1.msra.mxu0 %v5251
    %5277 = vmatprep.subr.mxu0 0.0
    %5278 = vmatpush1.msra.mxu0 %v5252
    %5279 = vmatprep.subr.mxu0 0.0
    %5280 = vmatpush1.msra.mxu0 %v5253
    %5281 = vmatprep.subr.mxu0 0.0
    %5282 = vmatpush1.msra.mxu0 %v5254
    %5283 = vmatprep.subr.mxu0 0.0
    %5284 = vmatpush1.msra.mxu0 %v5255
    %5285 = vmatprep.subr.mxu0 0.0
    %5286 = vmatpush1.msra.mxu0 %v5256
    %5287 = vmatprep.subr.mxu0 0.0
    %5288 = vmatpush1.msra.mxu0 %v5257
    %5289 = vmatprep.subr.mxu0 0.0
    %5290 = vmatpush1.msra.mxu0 %v5258
    %5291 = vmatprep.subr.mxu0 0.0
    %5292 = vmatpush1.msra.mxu0 0.0
    %5293 = vmatprep.subr.mxu0 0.0
    %5294 = vmatpush1.msra.mxu0 0.0
    %5295 = vmatprep.subr.mxu0 0.0
    %5296 = vmatpush1.msra.mxu0 0.0
    %5297 = vmatprep.subr.mxu0 0.0
    %5298 = vmatpush1.msra.mxu0 0.0
    %5299 = vmatprep.subr.mxu0 0.0
    %5300 = vmatpush1.msra.mxu0 0.0
    %5301 = vmatprep.subr.mxu0 0.0
    %5302 = vmatpush1.msra.mxu0 0.0
    %5303 = vmatprep.subr.mxu0 0.0
    %5304 = vmatpush1.msra.mxu0 0.0
    %5305 = vmatprep.subr.mxu0 0.0
    %5306 = vmatpush1.msra.mxu0 0.0
    %5307 = vmatprep.subr.mxu0 0.0
    %5308 = vmatpush1.msra.mxu0 0.0
    %5309 = vmatprep.subr.mxu0 0.0
    %5310 = vmatpush1.msra.mxu0 0.0
    %5311 = vmatprep.subr.mxu0 0.0
    %5312 = vmatpush1.msra.mxu0 0.0
    %5313 = vmatprep.subr.mxu0 0.0
    %5314 = vmatpush1.msra.mxu0 0.0
    %5315 = vmatprep.subr.mxu0 0.0
    %5316 = vmatpush1.msra.mxu0 0.0
    %5317 = vmatprep.subr.mxu0 0.0
    %5318 = vmatpush1.msra.mxu0 0.0
    %5319 = vmatprep.subr.mxu0 0.0
    %5320 = vmatpush1.msra.mxu0 0.0
    %5321 = vmatprep.subr.mxu0 0.0
    %5322 = vmatpush1.msra.mxu0 0.0
    %5323 = vmatprep.mubr.f32.mxu0 0.0
    %5324 = vmatmul.mubr.f32.gmra.mrb[0].mxu0 %v5038
    %v5325 = vpop.f32.mrb[0].mxu0
    %v5326 = vadd.f32 0.0, %v5325
    %v5327 = vpop.f32.mrb[0].mxu0
    %5328 = vdwg.mxu0
    %v5329 = vadd.f32 %v5240, %v5326
    %v5330 = vld [vmem:[%s590] sm:$0xff]
    %v5331 = vld [vmem:[%s590 + $0x8] sm:$0xff]
    %v5332 = vld [vmem:[%s590 + $0x10] sm:$0xff]
    %v5333 = vld [vmem:[%s590 + $0x18] sm:$0xff]
    %v5334 = vld [vmem:[%s590 + $0x20] sm:$0xff]
    %v5335 = vld [vmem:[%s590 + $0x28] sm:$0xff]
    %v5336 = vld [vmem:[%s590 + $0x30] sm:$0xff]
    %v5337 = vld [vmem:[%s590 + $0x38] sm:$0xff]
    %v5338 = vld [vmem:[%s590 + $0x40] sm:$0xff]
    %v5339 = vld [vmem:[%s590 + $0x48] sm:$0xff]
    %v5340 = vld [vmem:[%s590 + $0x50] sm:$0xff]
    %v5341 = vld [vmem:[%s590 + $0x58] sm:$0xff]
    %v5342 = vld [vmem:[%s590 + $0x60] sm:$0xff]
    %v5343 = vld [vmem:[%s590 + $0x68] sm:$0xff]
    %v5344 = vld [vmem:[%s590 + $0x70] sm:$0xff]
    %v5345 = vld [vmem:[%s590 + $0x78] sm:$0xff]
    %5346 = vmatprep.subr.mxu0 0.0
    %5347 = vmatpush1.msra.mxu0 %v5330
    %5348 = vmatprep.subr.mxu0 0.0
    %5349 = vmatpush1.msra.mxu0 %v5331
    %5350 = vmatprep.subr.mxu0 0.0
    %5351 = vmatpush1.msra.mxu0 %v5332
    %5352 = vmatprep.subr.mxu0 0.0
    %5353 = vmatpush1.msra.mxu0 %v5333
    %5354 = vmatprep.subr.mxu0 0.0
    %5355 = vmatpush1.msra.mxu0 %v5334
    %5356 = vmatprep.subr.mxu0 0.0
    %5357 = vmatpush1.msra.mxu0 %v5335
    %5358 = vmatprep.subr.mxu0 0.0
    %5359 = vmatpush1.msra.mxu0 %v5336
    %5360 = vmatprep.subr.mxu0 0.0
    %5361 = vmatpush1.msra.mxu0 %v5337
    %5362 = vmatprep.subr.mxu0 0.0
    %5363 = vmatpush1.msra.mxu0 %v5338
    %5364 = vmatprep.subr.mxu0 0.0
    %5365 = vmatpush1.msra.mxu0 %v5339
    %5366 = vmatprep.subr.mxu0 0.0
    %5367 = vmatpush1.msra.mxu0 %v5340
    %5368 = vmatprep.subr.mxu0 0.0
    %5369 = vmatpush1.msra.mxu0 %v5341
    %5370 = vmatprep.subr.mxu0 0.0
    %5371 = vmatpush1.msra.mxu0 %v5342
    %5372 = vmatprep.subr.mxu0 0.0
    %5373 = vmatpush1.msra.mxu0 %v5343
    %5374 = vmatprep.subr.mxu0 0.0
    %5375 = vmatpush1.msra.mxu0 %v5344
    %5376 = vmatprep.subr.mxu0 0.0
    %5377 = vmatpush1.msra.mxu0 %v5345
    %5378 = vmatprep.subr.mxu0 0.0
    %5379 = vmatpush1.msra.mxu0 0.0
    %5380 = vmatprep.subr.mxu0 0.0
    %5381 = vmatpush1.msra.mxu0 0.0
    %5382 = vmatprep.subr.mxu0 0.0
    %5383 = vmatpush1.msra.mxu0 0.0
    %5384 = vmatprep.subr.mxu0 0.0
    %5385 = vmatpush1.msra.mxu0 0.0
    %5386 = vmatprep.subr.mxu0 0.0
    %5387 = vmatpush1.msra.mxu0 0.0
    %5388 = vmatprep.subr.mxu0 0.0
    %5389 = vmatpush1.msra.mxu0 0.0
    %5390 = vmatprep.subr.mxu0 0.0
    %5391 = vmatpush1.msra.mxu0 0.0
    %5392 = vmatprep.subr.mxu0 0.0
    %5393 = vmatpush1.msra.mxu0 0.0
    %5394 = vmatprep.subr.mxu0 0.0
    %5395 = vmatpush1.msra.mxu0 0.0
    %5396 = vmatprep.subr.mxu0 0.0
    %5397 = vmatpush1.msra.mxu0 0.0
    %5398 = vmatprep.subr.mxu0 0.0
    %5399 = vmatpush1.msra.mxu0 0.0
    %5400 = vmatprep.subr.mxu0 0.0
    %5401 = vmatpush1.msra.mxu0 0.0
    %5402 = vmatprep.subr.mxu0 0.0
    %5403 = vmatpush1.msra.mxu0 0.0
    %5404 = vmatprep.subr.mxu0 0.0
    %5405 = vmatpush1.msra.mxu0 0.0
    %5406 = vmatprep.subr.mxu0 0.0
    %5407 = vmatpush1.msra.mxu0 0.0
    %5408 = vmatprep.subr.mxu0 0.0
    %5409 = vmatpush1.msra.mxu0 0.0
    %5410 = vmatprep.mubr.f32.mxu0 0.0
    %5411 = vmatmul.mubr.f32.gmra.mrb[0].mxu0 %v5043
    %v5412 = vpop.f32.mrb[0].mxu0
    %v5413 = vadd.f32 0.0, %v5412
    %v5414 = vpop.f32.mrb[0].mxu0
    %5415 = vdwg.mxu0
    %v5416 = vadd.f32 %v5329, %v5413
    %v5417 = vld [vmem:[%s678] sm:$0xff]
    %v5418 = vld [vmem:[%s678 + $0x8] sm:$0xff]
    %v5419 = vld [vmem:[%s678 + $0x10] sm:$0xff]
    %v5420 = vld [vmem:[%s678 + $0x18] sm:$0xff]
    %v5421 = vld [vmem:[%s678 + $0x20] sm:$0xff]
    %v5422 = vld [vmem:[%s678 + $0x28] sm:$0xff]
    %v5423 = vld [vmem:[%s678 + $0x30] sm:$0xff]
    %v5424 = vld [vmem:[%s678 + $0x38] sm:$0xff]
    %v5425 = vld [vmem:[%s678 + $0x40] sm:$0xff]
    %v5426 = vld [vmem:[%s678 + $0x48] sm:$0xff]
    %v5427 = vld [vmem:[%s678 + $0x50] sm:$0xff]
    %v5428 = vld [vmem:[%s678 + $0x58] sm:$0xff]
    %v5429 = vld [vmem:[%s678 + $0x60] sm:$0xff]
    %v5430 = vld [vmem:[%s678 + $0x68] sm:$0xff]
    %v5431 = vld [vmem:[%s678 + $0x70] sm:$0xff]
    %v5432 = vld [vmem:[%s678 + $0x78] sm:$0xff]
    %5433 = vmatprep.subr.mxu0 0.0
    %5434 = vmatpush1.msra.mxu0 %v5417
    %5435 = vmatprep.subr.mxu0 0.0
    %5436 = vmatpush1.msra.mxu0 %v5418
    %5437 = vmatprep.subr.mxu0 0.0
    %5438 = vmatpush1.msra.mxu0 %v5419
    %5439 = vmatprep.subr.mxu0 0.0
    %5440 = vmatpush1.msra.mxu0 %v5420
    %5441 = vmatprep.subr.mxu0 0.0
    %5442 = vmatpush1.msra.mxu0 %v5421
    %5443 = vmatprep.subr.mxu0 0.0
    %5444 = vmatpush1.msra.mxu0 %v5422
    %5445 = vmatprep.subr.mxu0 0.0
    %5446 = vmatpush1.msra.mxu0 %v5423
    %5447 = vmatprep.subr.mxu0 0.0
    %5448 = vmatpush1.msra.mxu0 %v5424
    %5449 = vmatprep.subr.mxu0 0.0
    %5450 = vmatpush1.msra.mxu0 %v5425
    %5451 = vmatprep.subr.mxu0 0.0
    %5452 = vmatpush1.msra.mxu0 %v5426
    %5453 = vmatprep.subr.mxu0 0.0
    %5454 = vmatpush1.msra.mxu0 %v5427
    %5455 = vmatprep.subr.mxu0 0.0
    %5456 = vmatpush1.msra.mxu0 %v5428
    %5457 = vmatprep.subr.mxu0 0.0
    %5458 = vmatpush1.msra.mxu0 %v5429
    %5459 = vmatprep.subr.mxu0 0.0
    %5460 = vmatpush1.msra.mxu0 %v5430
    %5461 = vmatprep.subr.mxu0 0.0
    %5462 = vmatpush1.msra.mxu0 %v5431
    %5463 = vmatprep.subr.mxu0 0.0
    %5464 = vmatpush1.msra.mxu0 %v5432
    %5465 = vmatprep.subr.mxu0 0.0
    %5466 = vmatpush1.msra.mxu0 0.0
    %5467 = vmatprep.subr.mxu0 0.0
    %5468 = vmatpush1.msra.mxu0 0.0
    %5469 = vmatprep.subr.mxu0 0.0
    %5470 = vmatpush1.msra.mxu0 0.0
    %5471 = vmatprep.subr.mxu0 0.0
    %5472 = vmatpush1.msra.mxu0 0.0
    %5473 = vmatprep.subr.mxu0 0.0
    %5474 = vmatpush1.msra.mxu0 0.0
    %5475 = vmatprep.subr.mxu0 0.0
    %5476 = vmatpush1.msra.mxu0 0.0
    %5477 = vmatprep.subr.mxu0 0.0
    %5478 = vmatpush1.msra.mxu0 0.0
    %5479 = vmatprep.subr.mxu0 0.0
    %5480 = vmatpush1.msra.mxu0 0.0
    %5481 = vmatprep.subr.mxu0 0.0
    %5482 = vmatpush1.msra.mxu0 0.0
    %5483 = vmatprep.subr.mxu0 0.0
    %5484 = vmatpush1.msra.mxu0 0.0
    %5485 = vmatprep.subr.mxu0 0.0
    %5486 = vmatpush1.msra.mxu0 0.0
    %5487 = vmatprep.subr.mxu0 0.0
    %5488 = vmatpush1.msra.mxu0 0.0
    %5489 = vmatprep.subr.mxu0 0.0
    %5490 = vmatpush1.msra.mxu0 0.0
    %5491 = vmatprep.subr.mxu0 0.0
    %5492 = vmatpush1.msra.mxu0 0.0
    %5493 = vmatprep.subr.mxu0 0.0
    %5494 = vmatpush1.msra.mxu0 0.0
    %5495 = vmatprep.subr.mxu0 0.0
    %5496 = vmatpush1.msra.mxu0 0.0
    %5497 = vmatprep.mubr.f32.mxu0 0.0
    %5498 = vmatmul.mubr.f32.gmra.mrb[0].mxu0 %v5048
    %v5499 = vpop.f32.mrb[0].mxu0
    %v5500 = vadd.f32 0.0, %v5499
    %v5501 = vpop.f32.mrb[0].mxu0
    %5502 = vdwg.mxu0
    %v5503 = vadd.f32 %v5416, %v5500
    %v5504 = vld [vmem:[%s766] sm:$0xff]
    %v5505 = vld [vmem:[%s766 + $0x8] sm:$0xff]
    %v5506 = vld [vmem:[%s766 + $0x10] sm:$0xff]
    %v5507 = vld [vmem:[%s766 + $0x18] sm:$0xff]
    %v5508 = vld [vmem:[%s766 + $0x20] sm:$0xff]
    %v5509 = vld [vmem:[%s766 + $0x28] sm:$0xff]
    %v5510 = vld [vmem:[%s766 + $0x30] sm:$0xff]
    %v5511 = vld [vmem:[%s766 + $0x38] sm:$0xff]
    %v5512 = vld [vmem:[%s766 + $0x40] sm:$0xff]
    %v5513 = vld [vmem:[%s766 + $0x48] sm:$0xff]
    %v5514 = vld [vmem:[%s766 + $0x50] sm:$0xff]
    %v5515 = vld [vmem:[%s766 + $0x58] sm:$0xff]
    %v5516 = vld [vmem:[%s766 + $0x60] sm:$0xff]
    %v5517 = vld [vmem:[%s766 + $0x68] sm:$0xff]
    %v5518 = vld [vmem:[%s766 + $0x70] sm:$0xff]
    %v5519 = vld [vmem:[%s766 + $0x78] sm:$0xff]
    %5520 = vmatprep.subr.mxu0 0.0
    %5521 = vmatpush1.msra.mxu0 %v5504
    %5522 = vmatprep.subr.mxu0 0.0
    %5523 = vmatpush1.msra.mxu0 %v5505
    %5524 = vmatprep.subr.mxu0 0.0
    %5525 = vmatpush1.msra.mxu0 %v5506
    %5526 = vmatprep.subr.mxu0 0.0
    %5527 = vmatpush1.msra.mxu0 %v5507
    %5528 = vmatprep.subr.mxu0 0.0
    %5529 = vmatpush1.msra.mxu0 %v5508
    %5530 = vmatprep.subr.mxu0 0.0
    %5531 = vmatpush1.msra.mxu0 %v5509
    %5532 = vmatprep.subr.mxu0 0.0
    %5533 = vmatpush1.msra.mxu0 %v5510
    %5534 = vmatprep.subr.mxu0 0.0
    %5535 = vmatpush1.msra.mxu0 %v5511
    %5536 = vmatprep.subr.mxu0 0.0
    %5537 = vmatpush1.msra.mxu0 %v5512
    %5538 = vmatprep.subr.mxu0 0.0
    %5539 = vmatpush1.msra.mxu0 %v5513
    %5540 = vmatprep.subr.mxu0 0.0
    %5541 = vmatpush1.msra.mxu0 %v5514
    %5542 = vmatprep.subr.mxu0 0.0
    %5543 = vmatpush1.msra.mxu0 %v5515
    %5544 = vmatprep.subr.mxu0 0.0
    %5545 = vmatpush1.msra.mxu0 %v5516
    %5546 = vmatprep.subr.mxu0 0.0
    %5547 = vmatpush1.msra.mxu0 %v5517
    %5548 = vmatprep.subr.mxu0 0.0
    %5549 = vmatpush1.msra.mxu0 %v5518
    %5550 = vmatprep.subr.mxu0 0.0
    %5551 = vmatpush1.msra.mxu0 %v5519
    %5552 = vmatprep.subr.mxu0 0.0
    %5553 = vmatpush1.msra.mxu0 0.0
    %5554 = vmatprep.subr.mxu0 0.0
    %5555 = vmatpush1.msra.mxu0 0.0
    %5556 = vmatprep.subr.mxu0 0.0
    %5557 = vmatpush1.msra.mxu0 0.0
    %5558 = vmatprep.subr.mxu0 0.0
    %5559 = vmatpush1.msra.mxu0 0.0
    %5560 = vmatprep.subr.mxu0 0.0
    %5561 = vmatpush1.msra.mxu0 0.0
    %5562 = vmatprep.subr.mxu0 0.0
    %5563 = vmatpush1.msra.mxu0 0.0
    %5564 = vmatprep.subr.mxu0 0.0
    %5565 = vmatpush1.msra.mxu0 0.0
    %5566 = vmatprep.subr.mxu0 0.0
    %5567 = vmatpush1.msra.mxu0 0.0
    %5568 = vmatprep.subr.mxu0 0.0
    %5569 = vmatpush1.msra.mxu0 0.0
    %5570 = vmatprep.subr.mxu0 0.0
    %5571 = vmatpush1.msra.mxu0 0.0
    %5572 = vmatprep.subr.mxu0 0.0
    %5573 = vmatpush1.msra.mxu0 0.0
    %5574 = vmatprep.subr.mxu0 0.0
    %5575 = vmatpush1.msra.mxu0 0.0
    %5576 = vmatprep.subr.mxu0 0.0
    %5577 = vmatpush1.msra.mxu0 0.0
    %5578 = vmatprep.subr.mxu0 0.0
    %5579 = vmatpush1.msra.mxu0 0.0
    %5580 = vmatprep.subr.mxu0 0.0
    %5581 = vmatpush1.msra.mxu0 0.0
    %5582 = vmatprep.subr.mxu0 0.0
    %5583 = vmatpush1.msra.mxu0 0.0
    %5584 = vmatprep.mubr.f32.mxu0 0.0
    %5585 = vmatmul.mubr.f32.gmra.mrb[0].mxu0 %v5053
    %v5586 = vpop.f32.mrb[0].mxu0
    %v5587 = vadd.f32 0.0, %v5586
    %v5588 = vpop.f32.mrb[0].mxu0
    %5589 = vdwg.mxu0
    %v5590 = vadd.f32 %v5503, %v5587
    %v5591 = vld [vmem:[%s854] sm:$0xff]
    %v5592 = vld [vmem:[%s854 + $0x8] sm:$0xff]
    %v5593 = vld [vmem:[%s854 + $0x10] sm:$0xff]
    %v5594 = vld [vmem:[%s854 + $0x18] sm:$0xff]
    %v5595 = vld [vmem:[%s854 + $0x20] sm:$0xff]
    %v5596 = vld [vmem:[%s854 + $0x28] sm:$0xff]
    %v5597 = vld [vmem:[%s854 + $0x30] sm:$0xff]
    %v5598 = vld [vmem:[%s854 + $0x38] sm:$0xff]
    %v5599 = vld [vmem:[%s854 + $0x40] sm:$0xff]
    %v5600 = vld [vmem:[%s854 + $0x48] sm:$0xff]
    %v5601 = vld [vmem:[%s854 + $0x50] sm:$0xff]
    %v5602 = vld [vmem:[%s854 + $0x58] sm:$0xff]
    %v5603 = vld [vmem:[%s854 + $0x60] sm:$0xff]
    %v5604 = vld [vmem:[%s854 + $0x68] sm:$0xff]
    %v5605 = vld [vmem:[%s854 + $0x70] sm:$0xff]
    %v5606 = vld [vmem:[%s854 + $0x78] sm:$0xff]
    %5607 = vmatprep.subr.mxu0 0.0
    %5608 = vmatpush1.msra.mxu0 %v5591
    %5609 = vmatprep.subr.mxu0 0.0
    %5610 = vmatpush1.msra.mxu0 %v5592
    %5611 = vmatprep.subr.mxu0 0.0
    %5612 = vmatpush1.msra.mxu0 %v5593
    %5613 = vmatprep.subr.mxu0 0.0
    %5614 = vmatpush1.msra.mxu0 %v5594
    %5615 = vmatprep.subr.mxu0 0.0
    %5616 = vmatpush1.msra.mxu0 %v5595
    %5617 = vmatprep.subr.mxu0 0.0
    %5618 = vmatpush1.msra.mxu0 %v5596
    %5619 = vmatprep.subr.mxu0 0.0
    %5620 = vmatpush1.msra.mxu0 %v5597
    %5621 = vmatprep.subr.mxu0 0.0
    %5622 = vmatpush1.msra.mxu0 %v5598
    %5623 = vmatprep.subr.mxu0 0.0
    %5624 = vmatpush1.msra.mxu0 %v5599
    %5625 = vmatprep.subr.mxu0 0.0
    %5626 = vmatpush1.msra.mxu0 %v5600
    %5627 = vmatprep.subr.mxu0 0.0
    %5628 = vmatpush1.msra.mxu0 %v5601
    %5629 = vmatprep.subr.mxu0 0.0
    %5630 = vmatpush1.msra.mxu0 %v5602
    %5631 = vmatprep.subr.mxu0 0.0
    %5632 = vmatpush1.msra.mxu0 %v5603
    %5633 = vmatprep.subr.mxu0 0.0
    %5634 = vmatpush1.msra.mxu0 %v5604
    %5635 = vmatprep.subr.mxu0 0.0
    %5636 = vmatpush1.msra.mxu0 %v5605
    %5637 = vmatprep.subr.mxu0 0.0
    %5638 = vmatpush1.msra.mxu0 %v5606
    %5639 = vmatprep.subr.mxu0 0.0
    %5640 = vmatpush1.msra.mxu0 0.0
    %5641 = vmatprep.subr.mxu0 0.0
    %5642 = vmatpush1.msra.mxu0 0.0
    %5643 = vmatprep.subr.mxu0 0.0
    %5644 = vmatpush1.msra.mxu0 0.0
    %5645 = vmatprep.subr.mxu0 0.0
    %5646 = vmatpush1.msra.mxu0 0.0
    %5647 = vmatprep.subr.mxu0 0.0
    %5648 = vmatpush1.msra.mxu0 0.0
    %5649 = vmatprep.subr.mxu0 0.0
    %5650 = vmatpush1.msra.mxu0 0.0
    %5651 = vmatprep.subr.mxu0 0.0
    %5652 = vmatpush1.msra.mxu0 0.0
    %5653 = vmatprep.subr.mxu0 0.0
    %5654 = vmatpush1.msra.mxu0 0.0
    %5655 = vmatprep.subr.mxu0 0.0
    %5656 = vmatpush1.msra.mxu0 0.0
    %5657 = vmatprep.subr.mxu0 0.0
    %5658 = vmatpush1.msra.mxu0 0.0
    %5659 = vmatprep.subr.mxu0 0.0
    %5660 = vmatpush1.msra.mxu0 0.0
    %5661 = vmatprep.subr.mxu0 0.0
    %5662 = vmatpush1.msra.mxu0 0.0
    %5663 = vmatprep.subr.mxu0 0.0
    %5664 = vmatpush1.msra.mxu0 0.0
    %5665 = vmatprep.subr.mxu0 0.0
    %5666 = vmatpush1.msra.mxu0 0.0
    %5667 = vmatprep.subr.mxu0 0.0
    %5668 = vmatpush1.msra.mxu0 0.0
    %5669 = vmatprep.subr.mxu0 0.0
    %5670 = vmatpush1.msra.mxu0 0.0
    %5671 = vmatprep.mubr.f32.mxu0 0.0
    %5672 = vmatmul.mubr.f32.gmra.mrb[0].mxu0 %v5058
    %v5673 = vpop.f32.mrb[0].mxu0
    %v5674 = vadd.f32 0.0, %v5673
    %v5675 = vpop.f32.mrb[0].mxu0
    %5676 = vdwg.mxu0
    %v5677 = vadd.f32 %v5590, %v5674
    %v5678 = vld [vmem:[%s942] sm:$0xff]
    %v5679 = vld [vmem:[%s942 + $0x8] sm:$0xff]
    %v5680 = vld [vmem:[%s942 + $0x10] sm:$0xff]
    %v5681 = vld [vmem:[%s942 + $0x18] sm:$0xff]
    %v5682 = vld [vmem:[%s942 + $0x20] sm:$0xff]
    %v5683 = vld [vmem:[%s942 + $0x28] sm:$0xff]
    %v5684 = vld [vmem:[%s942 + $0x30] sm:$0xff]
    %v5685 = vld [vmem:[%s942 + $0x38] sm:$0xff]
    %v5686 = vld [vmem:[%s942 + $0x40] sm:$0xff]
    %v5687 = vld [vmem:[%s942 + $0x48] sm:$0xff]
    %v5688 = vld [vmem:[%s942 + $0x50] sm:$0xff]
    %v5689 = vld [vmem:[%s942 + $0x58] sm:$0xff]
    %v5690 = vld [vmem:[%s942 + $0x60] sm:$0xff]
    %v5691 = vld [vmem:[%s942 + $0x68] sm:$0xff]
    %v5692 = vld [vmem:[%s942 + $0x70] sm:$0xff]
    %v5693 = vld [vmem:[%s942 + $0x78] sm:$0xff]
    %5694 = vmatprep.subr.mxu0 0.0
    %5695 = vmatpush1.msra.mxu0 %v5678
    %5696 = vmatprep.subr.mxu0 0.0
    %5697 = vmatpush1.msra.mxu0 %v5679
    %5698 = vmatprep.subr.mxu0 0.0
    %5699 = vmatpush1.msra.mxu0 %v5680
    %5700 = vmatprep.subr.mxu0 0.0
    %5701 = vmatpush1.msra.mxu0 %v5681
    %5702 = vmatprep.subr.mxu0 0.0
    %5703 = vmatpush1.msra.mxu0 %v5682
    %5704 = vmatprep.subr.mxu0 0.0
    %5705 = vmatpush1.msra.mxu0 %v5683
    %5706 = vmatprep.subr.mxu0 0.0
    %5707 = vmatpush1.msra.mxu0 %v5684
    %5708 = vmatprep.subr.mxu0 0.0
    %5709 = vmatpush1.msra.mxu0 %v5685
    %5710 = vmatprep.subr.mxu0 0.0
    %5711 = vmatpush1.msra.mxu0 %v5686
    %5712 = vmatprep.subr.mxu0 0.0
    %5713 = vmatpush1.msra.mxu0 %v5687
    %5714 = vmatprep.subr.mxu0 0.0
    %5715 = vmatpush1.msra.mxu0 %v5688
    %5716 = vmatprep.subr.mxu0 0.0
    %5717 = vmatpush1.msra.mxu0 %v5689
    %5718 = vmatprep.subr.mxu0 0.0
    %5719 = vmatpush1.msra.mxu0 %v5690
    %5720 = vmatprep.subr.mxu0 0.0
    %5721 = vmatpush1.msra.mxu0 %v5691
    %5722 = vmatprep.subr.mxu0 0.0
    %5723 = vmatpush1.msra.mxu0 %v5692
    %5724 = vmatprep.subr.mxu0 0.0
    %5725 = vmatpush1.msra.mxu0 %v5693
    %5726 = vmatprep.subr.mxu0 0.0
    %5727 = vmatpush1.msra.mxu0 0.0
    %5728 = vmatprep.subr.mxu0 0.0
    %5729 = vmatpush1.msra.mxu0 0.0
    %5730 = vmatprep.subr.mxu0 0.0
    %5731 = vmatpush1.msra.mxu0 0.0
    %5732 = vmatprep.subr.mxu0 0.0
    %5733 = vmatpush1.msra.mxu0 0.0
    %5734 = vmatprep.subr.mxu0 0.0
    %5735 = vmatpush1.msra.mxu0 0.0
    %5736 = vmatprep.subr.mxu0 0.0
    %5737 = vmatpush1.msra.mxu0 0.0
    %5738 = vmatprep.subr.mxu0 0.0
    %5739 = vmatpush1.msra.mxu0 0.0
    %5740 = vmatprep.subr.mxu0 0.0
    %5741 = vmatpush1.msra.mxu0 0.0
    %5742 = vmatprep.subr.mxu0 0.0
    %5743 = vmatpush1.msra.mxu0 0.0
    %5744 = vmatprep.subr.mxu0 0.0
    %5745 = vmatpush1.msra.mxu0 0.0
    %5746 = vmatprep.subr.mxu0 0.0
    %5747 = vmatpush1.msra.mxu0 0.0
    %5748 = vmatprep.subr.mxu0 0.0
    %5749 = vmatpush1.msra.mxu0 0.0
    %5750 = vmatprep.subr.mxu0 0.0
    %5751 = vmatpush1.msra.mxu0 0.0
    %5752 = vmatprep.subr.mxu0 0.0
    %5753 = vmatpush1.msra.mxu0 0.0
    %5754 = vmatprep.subr.mxu0 0.0
    %5755 = vmatpush1.msra.mxu0 0.0
    %5756 = vmatprep.subr.mxu0 0.0
    %5757 = vmatpush1.msra.mxu0 0.0
    %5758 = vmatprep.mubr.f32.mxu0 0.0
    %5759 = vmatmul.mubr.f32.gmra.mrb[0].mxu0 %v5063
    %v5760 = vpop.f32.mrb[0].mxu0
    %v5761 = vadd.f32 0.0, %v5760
    %v5762 = vpop.f32.mrb[0].mxu0
    %5763 = vdwg.mxu0
    %v5764 = vadd.f32 %v5677, %v5761
    %v5765 = vld [vmem:[%s1030] sm:$0xff]
    %v5766 = vld [vmem:[%s1030 + $0x8] sm:$0xff]
    %v5767 = vld [vmem:[%s1030 + $0x10] sm:$0xff]
    %v5768 = vld [vmem:[%s1030 + $0x18] sm:$0xff]
    %v5769 = vld [vmem:[%s1030 + $0x20] sm:$0xff]
    %v5770 = vld [vmem:[%s1030 + $0x28] sm:$0xff]
    %v5771 = vld [vmem:[%s1030 + $0x30] sm:$0xff]
    %v5772 = vld [vmem:[%s1030 + $0x38] sm:$0xff]
    %v5773 = vld [vmem:[%s1030 + $0x40] sm:$0xff]
    %v5774 = vld [vmem:[%s1030 + $0x48] sm:$0xff]
    %v5775 = vld [vmem:[%s1030 + $0x50] sm:$0xff]
    %v5776 = vld [vmem:[%s1030 + $0x58] sm:$0xff]
    %v5777 = vld [vmem:[%s1030 + $0x60] sm:$0xff]
    %v5778 = vld [vmem:[%s1030 + $0x68] sm:$0xff]
    %v5779 = vld [vmem:[%s1030 + $0x70] sm:$0xff]
    %v5780 = vld [vmem:[%s1030 + $0x78] sm:$0xff]
    %5781 = vmatprep.subr.mxu0 0.0
    %5782 = vmatpush1.msra.mxu0 %v5765
    %5783 = vmatprep.subr.mxu0 0.0
    %5784 = vmatpush1.msra.mxu0 %v5766
    %5785 = vmatprep.subr.mxu0 0.0
    %5786 = vmatpush1.msra.mxu0 %v5767
    %5787 = vmatprep.subr.mxu0 0.0
    %5788 = vmatpush1.msra.mxu0 %v5768
    %5789 = vmatprep.subr.mxu0 0.0
    %5790 = vmatpush1.msra.mxu0 %v5769
    %5791 = vmatprep.subr.mxu0 0.0
    %5792 = vmatpush1.msra.mxu0 %v5770
    %5793 = vmatprep.subr.mxu0 0.0
    %5794 = vmatpush1.msra.mxu0 %v5771
    %5795 = vmatprep.subr.mxu0 0.0
    %5796 = vmatpush1.msra.mxu0 %v5772
    %5797 = vmatprep.subr.mxu0 0.0
    %5798 = vmatpush1.msra.mxu0 %v5773
    %5799 = vmatprep.subr.mxu0 0.0
    %5800 = vmatpush1.msra.mxu0 %v5774
    %5801 = vmatprep.subr.mxu0 0.0
    %5802 = vmatpush1.msra.mxu0 %v5775
    %5803 = vmatprep.subr.mxu0 0.0
    %5804 = vmatpush1.msra.mxu0 %v5776
    %5805 = vmatprep.subr.mxu0 0.0
    %5806 = vmatpush1.msra.mxu0 %v5777
    %5807 = vmatprep.subr.mxu0 0.0
    %5808 = vmatpush1.msra.mxu0 %v5778
    %5809 = vmatprep.subr.mxu0 0.0
    %5810 = vmatpush1.msra.mxu0 %v5779
    %5811 = vmatprep.subr.mxu0 0.0
    %5812 = vmatpush1.msra.mxu0 %v5780
    %5813 = vmatprep.subr.mxu0 0.0
    %5814 = vmatpush1.msra.mxu0 0.0
    %5815 = vmatprep.subr.mxu0 0.0
    %5816 = vmatpush1.msra.mxu0 0.0
    %5817 = vmatprep.subr.mxu0 0.0
    %5818 = vmatpush1.msra.mxu0 0.0
    %5819 = vmatprep.subr.mxu0 0.0
    %5820 = vmatpush1.msra.mxu0 0.0
    %5821 = vmatprep.subr.mxu0 0.0
    %5822 = vmatpush1.msra.mxu0 0.0
    %5823 = vmatprep.subr.mxu0 0.0
    %5824 = vmatpush1.msra.mxu0 0.0
    %5825 = vmatprep.subr.mxu0 0.0
    %5826 = vmatpush1.msra.mxu0 0.0
    %5827 = vmatprep.subr.mxu0 0.0
    %5828 = vmatpush1.msra.mxu0 0.0
    %5829 = vmatprep.subr.mxu0 0.0
    %5830 = vmatpush1.msra.mxu0 0.0
    %5831 = vmatprep.subr.mxu0 0.0
    %5832 = vmatpush1.msra.mxu0 0.0
    %5833 = vmatprep.subr.mxu0 0.0
    %5834 = vmatpush1.msra.mxu0 0.0
    %5835 = vmatprep.subr.mxu0 0.0
    %5836 = vmatpush1.msra.mxu0 0.0
    %5837 = vmatprep.subr.mxu0 0.0
    %5838 = vmatpush1.msra.mxu0 0.0
    %5839 = vmatprep.subr.mxu0 0.0
    %5840 = vmatpush1.msra.mxu0 0.0
    %5841 = vmatprep.subr.mxu0 0.0
    %5842 = vmatpush1.msra.mxu0 0.0
    %5843 = vmatprep.subr.mxu0 0.0
    %5844 = vmatpush1.msra.mxu0 0.0
    %5845 = vmatprep.mubr.f32.mxu0 0.0
    %5846 = vmatmul.mubr.f32.gmra.mrb[0].mxu0 %v5068
    %v5847 = vpop.f32.mrb[0].mxu0
    %v5848 = vadd.f32 0.0, %v5847
    %v5849 = vpop.f32.mrb[0].mxu0
    %5850 = vdwg.mxu0
    %v5851 = vadd.f32 %v5764, %v5848
    %s5852 = scalar_lea.vmem %s6, 40
    %v5853 = vld [vmem:[%s5852] sm:$0xff]
    %5855 = vset.pattern.permute.xlu0 0
    %5856 = vperm.xlu0 %5855, %v5853
    %v5857 = vpop.permute.xlu0 %5856
    %v5859 = vadd.f32 %v5851, %v5857
    %5860 = vst [vmem:[%s7] sm:$0xff] %v5859
    // Predicated region
    $region38: #{forward.1} parent=1 // pred_check
      _
    $region39: #{forward.1} parent=1 // pred_check_branch
      %5862 = sbr.rel (0) target = $region41
    $region40: #{forward.1} parent=1 // pred_region
      _
    $region41: #{forward.1} parent=1 // pred_fallthru
      _
    // Predicated region
    $region42: #{forward.1} parent=1 // pred_check
      _
    $region43: #{forward.1} parent=1 // pred_check_branch
      %5864 = sbr.rel (0) target = $region45
    $region44: #{forward.1} parent=1 // pred_region
      _
    $region45: #{forward.1} parent=1 // pred_fallthru
      _
    %5865 = vsyncpa [#allocation4], 1
    %5866 = vsyncpa [#allocation6], 1

</llo_original>
